<compile_context>
chip_gen: v7x
topology: tpu7x:2x2x1
jax: 0.10.0
libtpu: 0.0.40
codegen_flags: <defaults>
</compile_context>

<pallas_src>
from functools import partial

import jax
import jax.numpy as jnp
from jax.experimental import pallas as pl
from jax.experimental.pallas import tpu as pltpu


def _basic_block_kernel(xflat_ref, w1_ref, s1_ref, b1_ref, w2_ref, s2_ref, b2_ref,
                        out_ref, ypad_ref, *, H, W, C, NPAD):
    # xflat_ref: (1, NPAD, C) f32  zero-padded input image, flattened over (H+2, W+2) rows
    #                              (plus >=2 zero safety rows so every tap slice is in-bounds)
    # w1_ref/w2_ref: (9, C, C) bf16  3x3 conv weights, tap = kh*3+kw, (Cin, Cout) per tap
    # s*_ref/b*_ref: (1, C) f32      folded BN scale / bias
    # out_ref: (1, L, C)             output slab, L = H*(W+2) (2 garbage cols/row, dropped outside)
    # ypad_ref: (NPAD, C) f32        scratch holding the zero-padded conv1 activation (flat rows)
    Wp = W + 2
    L = H * Wp                 # slab rows
    OFF = Wp + 1               # flat offset of padded-interior pixel (1, 1)

    # ---- conv1: 9 taps, each a dense contiguous row-slice matmul (bf16 MXU, f32 accumulate) ----
    acc1 = jnp.zeros((L, C), jnp.float32)
    for kh in range(3):
        for kw in range(3):
            off = kh * Wp + kw
            xs = xflat_ref[0, pl.ds(off, L), :].astype(jnp.bfloat16)
            acc1 = acc1 + jnp.dot(xs, w1_ref[kh * 3 + kw],
                                  preferred_element_type=jnp.float32)

    # ---- bn1 + relu; zero the 2 garbage columns per row so ypad's borders stay zero ----
    y1 = jnp.maximum(acc1 * s1_ref[...] + b1_ref[...], 0.0)
    col = jax.lax.broadcasted_iota(jnp.int32, (L, C), 0) % Wp
    y1 = jnp.where(col < W, y1, 0.0)

    # ---- write padded conv1 activation: interior (+ touched border cells, which receive the
    #      masked zeros) as ONE dense slab store; only the small untouched prefix/suffix rows
    #      are re-zeroed (cheap, and safe under megacore batch sharding) ----
    ypad_ref[pl.ds(0, OFF), :] = jnp.zeros((OFF, C), jnp.float32)
    ypad_ref[pl.ds(OFF, L), :] = y1
    ypad_ref[pl.ds(OFF + L, NPAD - OFF - L), :] = jnp.zeros((NPAD - OFF - L, C), jnp.float32)

    # ---- conv2: same flattened-tap scheme ----
    acc2 = jnp.zeros((L, C), jnp.float32)
    for kh in range(3):
        for kw in range(3):
            off = kh * Wp + kw
            ys = ypad_ref[pl.ds(off, L), :].astype(jnp.bfloat16)
            acc2 = acc2 + jnp.dot(ys, w2_ref[kh * 3 + kw],
                                  preferred_element_type=jnp.float32)

    # ---- bn2 + identity residual (exact f32, read from the resident padded input), no relu ----
    resid = xflat_ref[0, pl.ds(OFF, L), :]
    out_ref[0] = (acc2 * s2_ref[...] + b2_ref[...] + resid).astype(out_ref.dtype)


def _fold_bn(gamma, beta, mean, var, eps=1e-5):
    scale = gamma / jnp.sqrt(var + eps)
    bias = beta - mean * scale
    return scale.reshape(1, -1).astype(jnp.float32), bias.reshape(1, -1).astype(jnp.float32)


def basic_block_no_relu(x_nchw, params, eps=1e-5):
    """x_nchw: (N, C, H, W) float32. Returns (N, C, H, W)."""
    N, C, H, W = x_nchw.shape
    Wp = W + 2
    L = H * Wp
    NPIX = (H + 2) * Wp
    NPAD = ((NPIX + 2 + 7) // 8) * 8     # >= NPIX + 2 safety rows, sublane-aligned

    # Single fused HBM pass: NCHW->NHWC transpose + zero pad + flatten + safety-row pad.
    x = jnp.transpose(x_nchw, (0, 2, 3, 1))
    xpad = jnp.pad(x, ((0, 0), (1, 1), (1, 1), (0, 0)))
    xflat = jnp.pad(xpad.reshape(N, NPIX, C), ((0, 0), (0, NPAD - NPIX), (0, 0)))

    # torch conv weight (Cout, Cin, 3, 3) -> (3, 3, Cin, Cout) -> (9, Cin, Cout), bf16 for the MXU
    def prep_w(w):
        return jnp.transpose(w, (2, 3, 1, 0)).reshape(9, C, C).astype(jnp.bfloat16)

    w1r = prep_w(params["conv1_w"])
    w2r = prep_w(params["conv2_w"])
    s1, b1 = _fold_bn(params["bn1_g"], params["bn1_b"], params["bn1_m"], params["bn1_v"], eps)
    s2, b2 = _fold_bn(params["bn2_g"], params["bn2_b"], params["bn2_m"], params["bn2_v"], eps)

    # Size the scoped VMEM limit from the actual per-step working set (with headroom).
    est = (2 * NPAD * C * 4          # double-buffered input block
           + 2 * L * C * 4           # double-buffered output block
           + 2 * 2 * 9 * C * C * 2   # conv weights (bf16)
           + NPAD * C * 4            # ypad scratch
           + 2 * L * C * 4           # live accumulators / spill headroom
           + 8 * C * 4)              # scale / bias
    vmem_limit = int(min(max(4 * est, 8 * 2 ** 20), 64 * 2 ** 20))

    out_slab = pl.pallas_call(
        partial(_basic_block_kernel, H=H, W=W, C=C, NPAD=NPAD),
        out_shape=jax.ShapeDtypeStruct((N, L, C), x_nchw.dtype),
        grid_spec=pltpu.PrefetchScalarGridSpec(
            num_scalar_prefetch=0,
            grid=(N,),
            in_specs=[
                pl.BlockSpec((1, NPAD, C), lambda n: (n, 0, 0)),
                pl.BlockSpec((9, C, C), lambda n: (0, 0, 0)),
                pl.BlockSpec((1, C), lambda n: (0, 0)),
                pl.BlockSpec((1, C), lambda n: (0, 0)),
                pl.BlockSpec((9, C, C), lambda n: (0, 0, 0)),
                pl.BlockSpec((1, C), lambda n: (0, 0)),
                pl.BlockSpec((1, C), lambda n: (0, 0)),
            ],
            out_specs=pl.BlockSpec((1, L, C), lambda n: (n, 0, 0)),
            scratch_shapes=[pltpu.VMEM((NPAD, C), jnp.float32)],
        ),
        compiler_params=pltpu.CompilerParams(
            dimension_semantics=("parallel",),      # batch elements independent -> both v7x cores
            vmem_limit_bytes=vmem_limit,
        ),
    )(xflat, w1r, s1, b1, w2r, s2, b2)

    # Drop the 2 garbage columns per row and go back to NCHW (fuses into one XLA pass).
    out_nhwc = out_slab.reshape(N, H, Wp, C)[:, :, :W, :]
    return jnp.transpose(out_nhwc, (0, 3, 1, 2))


def _reference(x_nchw, params, eps=1e-5):
    """Pure-JAX f32 reference (eval-mode BN) for correctness checking."""
    x = jnp.transpose(x_nchw, (0, 2, 3, 1))

    def conv(y, w):
        w_hwio = jnp.transpose(w, (2, 3, 1, 0))
        return jax.lax.conv_general_dilated(
            y, w_hwio, (1, 1), "SAME",
            dimension_numbers=("NHWC", "HWIO", "NHWC"),
            precision=jax.lax.Precision.HIGHEST)

    def bn(y, g, b, m, v):
        return (y - m) * (g / jnp.sqrt(v + eps)) + b

    out = jax.nn.relu(bn(conv(x, params["conv1_w"]),
                         params["bn1_g"], params["bn1_b"], params["bn1_m"], params["bn1_v"]))
    out = bn(conv(out, params["conv2_w"]),
             params["bn2_g"], params["bn2_b"], params["bn2_m"], params["bn2_v"])
    out = out + x
    return jnp.transpose(out, (0, 3, 1, 2))


if __name__ == "__main__":
    N, C, H, W = 2, 4, 16, 16
    key = jax.random.PRNGKey(0)
    keys = jax.random.split(key, 11)

    x = jax.random.normal(keys[0], (N, C, H, W), jnp.float32)
    params = {
        "conv1_w": 0.2 * jax.random.normal(keys[1], (C, C, 3, 3), jnp.float32),
        "conv2_w": 0.2 * jax.random.normal(keys[2], (C, C, 3, 3), jnp.float32),
        "bn1_g": 1.0 + 0.1 * jax.random.normal(keys[3], (C,), jnp.float32),
        "bn1_b": 0.1 * jax.random.normal(keys[4], (C,), jnp.float32),
        "bn1_m": 0.1 * jax.random.normal(keys[5], (C,), jnp.float32),
        "bn1_v": jax.random.uniform(keys[6], (C,), jnp.float32, 0.5, 1.5),
        "bn2_g": 1.0 + 0.1 * jax.random.normal(keys[7], (C,), jnp.float32),
        "bn2_b": 0.1 * jax.random.normal(keys[8], (C,), jnp.float32),
        "bn2_m": 0.1 * jax.random.normal(keys[9], (C,), jnp.float32),
        "bn2_v": jax.random.uniform(keys[10], (C,), jnp.float32, 0.5, 1.5),
    }

    out = basic_block_no_relu(x, params)
    out = jax.block_until_ready(out)

    ref = _reference(x, params)
    assert out.shape == (N, C, H, W)
    # bf16 MXU operands -> compare against the f32 reference with a bf16-appropriate tolerance.
    assert jnp.allclose(out, ref, rtol=3e-2, atol=3e-2), "mismatch vs reference"

    print("KERNEL_OK")
</pallas_src>

<mosaic_0001>
module attributes {stable_mosaic.version = 11 : i64} {
  func.func @_basic_block_kernel(%arg0: i32, %arg1: memref<1x328x4xf32, #tpu.memory_space<vmem>>, %arg2: memref<9x4x4xbf16, #tpu.memory_space<vmem>>, %arg3: memref<1x4xf32, #tpu.memory_space<vmem>>, %arg4: memref<1x4xf32, #tpu.memory_space<vmem>>, %arg5: memref<9x4x4xbf16, #tpu.memory_space<vmem>>, %arg6: memref<1x4xf32, #tpu.memory_space<vmem>>, %arg7: memref<1x4xf32, #tpu.memory_space<vmem>>, %arg8: memref<1x288x4xf32, #tpu.memory_space<vmem>>, %arg9: memref<328x4xf32, #tpu.memory_space<vmem>>) attributes {dimension_semantics = [#tpu.dimension_semantics<parallel>], iteration_bounds = array<i64: 2>, scalar_prefetch = 0 : i64, scratch_operands = 1 : i64, tpu.core_type = #tpu.core_type<tc>, window_params = [{transform_indices = @transform_0, window_bounds = array<i64: 1, 328, 4>}, {pipeline_mode = #tpu.pipeline_mode<synchronous>, transform_indices = @transform_1, window_bounds = array<i64: 9, 4, 4>}, {pipeline_mode = #tpu.pipeline_mode<synchronous>, transform_indices = @transform_2, window_bounds = array<i64: 1, 4>}, {pipeline_mode = #tpu.pipeline_mode<synchronous>, transform_indices = @transform_3, window_bounds = array<i64: 1, 4>}, {pipeline_mode = #tpu.pipeline_mode<synchronous>, transform_indices = @transform_4, window_bounds = array<i64: 9, 4, 4>}, {pipeline_mode = #tpu.pipeline_mode<synchronous>, transform_indices = @transform_5, window_bounds = array<i64: 1, 4>}, {pipeline_mode = #tpu.pipeline_mode<synchronous>, transform_indices = @transform_6, window_bounds = array<i64: 1, 4>}, {transform_indices = @transform_7, window_bounds = array<i64: 1, 288, 4>}]} {
    %cst = arith.constant 0.000000e+00 : f32
    %0 = vector.broadcast %cst : f32 to vector<288x4xf32>
    %c0 = arith.constant 0 : index
    %c0_0 = arith.constant 0 : index
    %c0_1 = arith.constant 0 : index
    %1 = vector.load %arg1[%c0, %c0_0, %c0_1] : memref<1x328x4xf32, #tpu.memory_space<vmem>>, vector<1x288x4xf32>
    %2 = vector.shape_cast %1 : vector<1x288x4xf32> to vector<288x4xf32>
    %3 = arith.truncf %2 : vector<288x4xf32> to vector<288x4xbf16>
    %c0_2 = arith.constant 0 : index
    %c0_3 = arith.constant 0 : index
    %c0_4 = arith.constant 0 : index
    %4 = vector.load %arg2[%c0_2, %c0_3, %c0_4] : memref<9x4x4xbf16, #tpu.memory_space<vmem>>, vector<1x4x4xbf16>
    %5 = vector.shape_cast %4 : vector<1x4x4xbf16> to vector<4x4xbf16>
    %cst_5 = arith.constant dense<0.000000e+00> : vector<288x4xf32>
    %6 = tpu.matmul %3, %5, %cst_5 {dimension_numbers = #tpu.dot_dimension_numbers<[1], [0], [0], [1], [0, 0, 1, 1], [], []>} : vector<288x4xbf16>, vector<4x4xbf16>, vector<288x4xf32> -> vector<288x4xf32>
    %7 = arith.addf %0, %6 : vector<288x4xf32>
    %c0_6 = arith.constant 0 : index
    %c1 = arith.constant 1 : index
    %c0_7 = arith.constant 0 : index
    %8 = vector.load %arg1[%c0_6, %c1, %c0_7] : memref<1x328x4xf32, #tpu.memory_space<vmem>>, vector<1x288x4xf32>
    %9 = vector.shape_cast %8 : vector<1x288x4xf32> to vector<288x4xf32>
    %10 = arith.truncf %9 : vector<288x4xf32> to vector<288x4xbf16>
    %c1_8 = arith.constant 1 : index
    %c0_9 = arith.constant 0 : index
    %c0_10 = arith.constant 0 : index
    %11 = vector.load %arg2[%c1_8, %c0_9, %c0_10] : memref<9x4x4xbf16, #tpu.memory_space<vmem>>, vector<1x4x4xbf16>
    %12 = vector.shape_cast %11 : vector<1x4x4xbf16> to vector<4x4xbf16>
    %cst_11 = arith.constant dense<0.000000e+00> : vector<288x4xf32>
    %13 = tpu.matmul %10, %12, %cst_11 {dimension_numbers = #tpu.dot_dimension_numbers<[1], [0], [0], [1], [0, 0, 1, 1], [], []>} : vector<288x4xbf16>, vector<4x4xbf16>, vector<288x4xf32> -> vector<288x4xf32>
    %14 = arith.addf %7, %13 : vector<288x4xf32>
    %c0_12 = arith.constant 0 : index
    %c2 = arith.constant 2 : index
    %c0_13 = arith.constant 0 : index
    %15 = vector.load %arg1[%c0_12, %c2, %c0_13] : memref<1x328x4xf32, #tpu.memory_space<vmem>>, vector<1x288x4xf32>
    %16 = vector.shape_cast %15 : vector<1x288x4xf32> to vector<288x4xf32>
    %17 = arith.truncf %16 : vector<288x4xf32> to vector<288x4xbf16>
    %c2_14 = arith.constant 2 : index
    %c0_15 = arith.constant 0 : index
    %c0_16 = arith.constant 0 : index
    %18 = vector.load %arg2[%c2_14, %c0_15, %c0_16] : memref<9x4x4xbf16, #tpu.memory_space<vmem>>, vector<1x4x4xbf16>
    %19 = vector.shape_cast %18 : vector<1x4x4xbf16> to vector<4x4xbf16>
    %cst_17 = arith.constant dense<0.000000e+00> : vector<288x4xf32>
    %20 = tpu.matmul %17, %19, %cst_17 {dimension_numbers = #tpu.dot_dimension_numbers<[1], [0], [0], [1], [0, 0, 1, 1], [], []>} : vector<288x4xbf16>, vector<4x4xbf16>, vector<288x4xf32> -> vector<288x4xf32>
    %21 = arith.addf %14, %20 : vector<288x4xf32>
    %c0_18 = arith.constant 0 : index
    %c18 = arith.constant 18 : index
    %c0_19 = arith.constant 0 : index
    %22 = vector.load %arg1[%c0_18, %c18, %c0_19] : memref<1x328x4xf32, #tpu.memory_space<vmem>>, vector<1x288x4xf32>
    %23 = vector.shape_cast %22 : vector<1x288x4xf32> to vector<288x4xf32>
    %24 = arith.truncf %23 : vector<288x4xf32> to vector<288x4xbf16>
    %c3 = arith.constant 3 : index
    %c0_20 = arith.constant 0 : index
    %c0_21 = arith.constant 0 : index
    %25 = vector.load %arg2[%c3, %c0_20, %c0_21] : memref<9x4x4xbf16, #tpu.memory_space<vmem>>, vector<1x4x4xbf16>
    %26 = vector.shape_cast %25 : vector<1x4x4xbf16> to vector<4x4xbf16>
    %cst_22 = arith.constant dense<0.000000e+00> : vector<288x4xf32>
    %27 = tpu.matmul %24, %26, %cst_22 {dimension_numbers = #tpu.dot_dimension_numbers<[1], [0], [0], [1], [0, 0, 1, 1], [], []>} : vector<288x4xbf16>, vector<4x4xbf16>, vector<288x4xf32> -> vector<288x4xf32>
    %28 = arith.addf %21, %27 : vector<288x4xf32>
    %c0_23 = arith.constant 0 : index
    %c19 = arith.constant 19 : index
    %c0_24 = arith.constant 0 : index
    %29 = vector.load %arg1[%c0_23, %c19, %c0_24] : memref<1x328x4xf32, #tpu.memory_space<vmem>>, vector<1x288x4xf32>
    %30 = vector.shape_cast %29 : vector<1x288x4xf32> to vector<288x4xf32>
    %31 = arith.truncf %30 : vector<288x4xf32> to vector<288x4xbf16>
    %c4 = arith.constant 4 : index
    %c0_25 = arith.constant 0 : index
    %c0_26 = arith.constant 0 : index
    %32 = vector.load %arg2[%c4, %c0_25, %c0_26] : memref<9x4x4xbf16, #tpu.memory_space<vmem>>, vector<1x4x4xbf16>
    %33 = vector.shape_cast %32 : vector<1x4x4xbf16> to vector<4x4xbf16>
    %cst_27 = arith.constant dense<0.000000e+00> : vector<288x4xf32>
    %34 = tpu.matmul %31, %33, %cst_27 {dimension_numbers = #tpu.dot_dimension_numbers<[1], [0], [0], [1], [0, 0, 1, 1], [], []>} : vector<288x4xbf16>, vector<4x4xbf16>, vector<288x4xf32> -> vector<288x4xf32>
    %35 = arith.addf %28, %34 : vector<288x4xf32>
    %c0_28 = arith.constant 0 : index
    %c20 = arith.constant 20 : index
    %c0_29 = arith.constant 0 : index
    %36 = vector.load %arg1[%c0_28, %c20, %c0_29] : memref<1x328x4xf32, #tpu.memory_space<vmem>>, vector<1x288x4xf32>
    %37 = vector.shape_cast %36 : vector<1x288x4xf32> to vector<288x4xf32>
    %38 = arith.truncf %37 : vector<288x4xf32> to vector<288x4xbf16>
    %c5 = arith.constant 5 : index
    %c0_30 = arith.constant 0 : index
    %c0_31 = arith.constant 0 : index
    %39 = vector.load %arg2[%c5, %c0_30, %c0_31] : memref<9x4x4xbf16, #tpu.memory_space<vmem>>, vector<1x4x4xbf16>
    %40 = vector.shape_cast %39 : vector<1x4x4xbf16> to vector<4x4xbf16>
    %cst_32 = arith.constant dense<0.000000e+00> : vector<288x4xf32>
    %41 = tpu.matmul %38, %40, %cst_32 {dimension_numbers = #tpu.dot_dimension_numbers<[1], [0], [0], [1], [0, 0, 1, 1], [], []>} : vector<288x4xbf16>, vector<4x4xbf16>, vector<288x4xf32> -> vector<288x4xf32>
    %42 = arith.addf %35, %41 : vector<288x4xf32>
    %c0_33 = arith.constant 0 : index
    %c36 = arith.constant 36 : index
    %c0_34 = arith.constant 0 : index
    %43 = vector.load %arg1[%c0_33, %c36, %c0_34] : memref<1x328x4xf32, #tpu.memory_space<vmem>>, vector<1x288x4xf32>
    %44 = vector.shape_cast %43 : vector<1x288x4xf32> to vector<288x4xf32>
    %45 = arith.truncf %44 : vector<288x4xf32> to vector<288x4xbf16>
    %c6 = arith.constant 6 : index
    %c0_35 = arith.constant 0 : index
    %c0_36 = arith.constant 0 : index
    %46 = vector.load %arg2[%c6, %c0_35, %c0_36] : memref<9x4x4xbf16, #tpu.memory_space<vmem>>, vector<1x4x4xbf16>
    %47 = vector.shape_cast %46 : vector<1x4x4xbf16> to vector<4x4xbf16>
    %cst_37 = arith.constant dense<0.000000e+00> : vector<288x4xf32>
    %48 = tpu.matmul %45, %47, %cst_37 {dimension_numbers = #tpu.dot_dimension_numbers<[1], [0], [0], [1], [0, 0, 1, 1], [], []>} : vector<288x4xbf16>, vector<4x4xbf16>, vector<288x4xf32> -> vector<288x4xf32>
    %49 = arith.addf %42, %48 : vector<288x4xf32>
    %c0_38 = arith.constant 0 : index
    %c37 = arith.constant 37 : index
    %c0_39 = arith.constant 0 : index
    %50 = vector.load %arg1[%c0_38, %c37, %c0_39] : memref<1x328x4xf32, #tpu.memory_space<vmem>>, vector<1x288x4xf32>
    %51 = vector.shape_cast %50 : vector<1x288x4xf32> to vector<288x4xf32>
    %52 = arith.truncf %51 : vector<288x4xf32> to vector<288x4xbf16>
    %c7 = arith.constant 7 : index
    %c0_40 = arith.constant 0 : index
    %c0_41 = arith.constant 0 : index
    %53 = vector.load %arg2[%c7, %c0_40, %c0_41] : memref<9x4x4xbf16, #tpu.memory_space<vmem>>, vector<1x4x4xbf16>
    %54 = vector.shape_cast %53 : vector<1x4x4xbf16> to vector<4x4xbf16>
    %cst_42 = arith.constant dense<0.000000e+00> : vector<288x4xf32>
    %55 = tpu.matmul %52, %54, %cst_42 {dimension_numbers = #tpu.dot_dimension_numbers<[1], [0], [0], [1], [0, 0, 1, 1], [], []>} : vector<288x4xbf16>, vector<4x4xbf16>, vector<288x4xf32> -> vector<288x4xf32>
    %56 = arith.addf %49, %55 : vector<288x4xf32>
    %c0_43 = arith.constant 0 : index
    %c38 = arith.constant 38 : index
    %c0_44 = arith.constant 0 : index
    %57 = vector.load %arg1[%c0_43, %c38, %c0_44] : memref<1x328x4xf32, #tpu.memory_space<vmem>>, vector<1x288x4xf32>
    %58 = vector.shape_cast %57 : vector<1x288x4xf32> to vector<288x4xf32>
    %59 = arith.truncf %58 : vector<288x4xf32> to vector<288x4xbf16>
    %c8 = arith.constant 8 : index
    %c0_45 = arith.constant 0 : index
    %c0_46 = arith.constant 0 : index
    %60 = vector.load %arg2[%c8, %c0_45, %c0_46] : memref<9x4x4xbf16, #tpu.memory_space<vmem>>, vector<1x4x4xbf16>
    %61 = vector.shape_cast %60 : vector<1x4x4xbf16> to vector<4x4xbf16>
    %cst_47 = arith.constant dense<0.000000e+00> : vector<288x4xf32>
    %62 = tpu.matmul %59, %61, %cst_47 {dimension_numbers = #tpu.dot_dimension_numbers<[1], [0], [0], [1], [0, 0, 1, 1], [], []>} : vector<288x4xbf16>, vector<4x4xbf16>, vector<288x4xf32> -> vector<288x4xf32>
    %63 = arith.addf %56, %62 : vector<288x4xf32>
    %c0_48 = arith.constant 0 : index
    %c0_49 = arith.constant 0 : index
    %64 = vector.load %arg3[%c0_48, %c0_49] : memref<1x4xf32, #tpu.memory_space<vmem>>, vector<1x4xf32>
    %65 = vector.broadcast %64 : vector<1x4xf32> to vector<288x4xf32>
    %66 = arith.mulf %63, %65 : vector<288x4xf32>
    %c0_50 = arith.constant 0 : index
    %c0_51 = arith.constant 0 : index
    %67 = vector.load %arg4[%c0_50, %c0_51] : memref<1x4xf32, #tpu.memory_space<vmem>>, vector<1x4xf32>
    %68 = vector.broadcast %67 : vector<1x4xf32> to vector<288x4xf32>
    %69 = arith.addf %66, %68 : vector<288x4xf32>
    %cst_52 = arith.constant 0.000000e+00 : f32
    %70 = vector.broadcast %cst_52 : f32 to vector<288x4xf32>
    %71 = arith.maximumf %69, %70 : vector<288x4xf32>
    %72 = tpu.iota {dimensions = array<i32: 0>} : vector<288x4xi32>
    %c18_i32 = arith.constant 18 : i32
    %c0_i32 = arith.constant 0 : i32
    %73 = arith.cmpi eq, %c18_i32, %c0_i32 : i32
    %c1_i32 = arith.constant 1 : i32
    %74 = arith.select %73, %c1_i32, %c18_i32 : i32
    %75 = vector.broadcast %74 : i32 to vector<288x4xi32>
    %76 = arith.remsi %72, %75 : vector<288x4xi32>
    %c0_i32_53 = arith.constant 0 : i32
    %77 = vector.broadcast %c0_i32_53 : i32 to vector<288x4xi32>
    %78 = arith.cmpi ne, %76, %77 : vector<288x4xi32>
    %c0_i32_54 = arith.constant 0 : i32
    %79 = vector.broadcast %c0_i32_54 : i32 to vector<288x4xi32>
    %80 = arith.cmpi slt, %76, %79 : vector<288x4xi32>
    %c0_i32_55 = arith.constant 0 : i32
    %81 = arith.cmpi slt, %74, %c0_i32_55 : i32
    %82 = vector.broadcast %81 : i1 to vector<288x4xi1>
    %83 = vector.broadcast %82 : vector<288x4xi1> to vector<288x4xi1>
    %84 = arith.xori %80, %83 : vector<288x4xi1>
    %85 = arith.andi %84, %78 : vector<288x4xi1>
    %86 = vector.broadcast %74 : i32 to vector<288x4xi32>
    %87 = arith.addi %76, %86 : vector<288x4xi32>
    %88 = arith.select %85, %87, %76 : vector<288x4xi1>, vector<288x4xi32>
    %c16_i32 = arith.constant 16 : i32
    %89 = vector.broadcast %c16_i32 : i32 to vector<288x4xi32>
    %90 = arith.cmpi slt, %88, %89 : vector<288x4xi32>
    %cst_56 = arith.constant 0.000000e+00 : f32
    %91 = vector.broadcast %cst_56 : f32 to vector<288x4xf32>
    %92 = arith.select %90, %71, %91 : vector<288x4xi1>, vector<288x4xf32>
    %cst_57 = arith.constant 0.000000e+00 : f32
    %93 = vector.broadcast %cst_57 : f32 to vector<19x4xf32>
    %c0_58 = arith.constant 0 : index
    %c0_59 = arith.constant 0 : index
    %94 = vector.load %arg9[%c0_58, %c0_59] : memref<328x4xf32, #tpu.memory_space<vmem>>, vector<19x4xf32>
    tpu.vector_store %arg9[%c0_58, %c0_59], %93 {strides = array<i32>} : memref<328x4xf32, #tpu.memory_space<vmem>>, vector<19x4xf32>,
    %c19_60 = arith.constant 19 : index
    %c0_61 = arith.constant 0 : index
    %95 = vector.load %arg9[%c19_60, %c0_61] : memref<328x4xf32, #tpu.memory_space<vmem>>, vector<288x4xf32>
    tpu.vector_store %arg9[%c19_60, %c0_61], %92 {strides = array<i32>} : memref<328x4xf32, #tpu.memory_space<vmem>>, vector<288x4xf32>,
    %cst_62 = arith.constant 0.000000e+00 : f32
    %96 = vector.broadcast %cst_62 : f32 to vector<21x4xf32>
    %c307 = arith.constant 307 : index
    %c0_63 = arith.constant 0 : index
    %97 = vector.load %arg9[%c307, %c0_63] : memref<328x4xf32, #tpu.memory_space<vmem>>, vector<21x4xf32>
    tpu.vector_store %arg9[%c307, %c0_63], %96 {strides = array<i32>} : memref<328x4xf32, #tpu.memory_space<vmem>>, vector<21x4xf32>,
    %cst_64 = arith.constant 0.000000e+00 : f32
    %98 = vector.broadcast %cst_64 : f32 to vector<288x4xf32>
    %c0_65 = arith.constant 0 : index
    %c0_66 = arith.constant 0 : index
    %99 = vector.load %arg9[%c0_65, %c0_66] : memref<328x4xf32, #tpu.memory_space<vmem>>, vector<288x4xf32>
    %100 = arith.truncf %99 : vector<288x4xf32> to vector<288x4xbf16>
    %c0_67 = arith.constant 0 : index
    %c0_68 = arith.constant 0 : index
    %c0_69 = arith.constant 0 : index
    %101 = vector.load %arg5[%c0_67, %c0_68, %c0_69] : memref<9x4x4xbf16, #tpu.memory_space<vmem>>, vector<1x4x4xbf16>
    %102 = vector.shape_cast %101 : vector<1x4x4xbf16> to vector<4x4xbf16>
    %cst_70 = arith.constant dense<0.000000e+00> : vector<288x4xf32>
    %103 = tpu.matmul %100, %102, %cst_70 {dimension_numbers = #tpu.dot_dimension_numbers<[1], [0], [0], [1], [0, 0, 1, 1], [], []>} : vector<288x4xbf16>, vector<4x4xbf16>, vector<288x4xf32> -> vector<288x4xf32>
    %104 = arith.addf %98, %103 : vector<288x4xf32>
    %c1_71 = arith.constant 1 : index
    %c0_72 = arith.constant 0 : index
    %105 = vector.load %arg9[%c1_71, %c0_72] : memref<328x4xf32, #tpu.memory_space<vmem>>, vector<288x4xf32>
    %106 = arith.truncf %105 : vector<288x4xf32> to vector<288x4xbf16>
    %c1_73 = arith.constant 1 : index
    %c0_74 = arith.constant 0 : index
    %c0_75 = arith.constant 0 : index
    %107 = vector.load %arg5[%c1_73, %c0_74, %c0_75] : memref<9x4x4xbf16, #tpu.memory_space<vmem>>, vector<1x4x4xbf16>
    %108 = vector.shape_cast %107 : vector<1x4x4xbf16> to vector<4x4xbf16>
    %cst_76 = arith.constant dense<0.000000e+00> : vector<288x4xf32>
    %109 = tpu.matmul %106, %108, %cst_76 {dimension_numbers = #tpu.dot_dimension_numbers<[1], [0], [0], [1], [0, 0, 1, 1], [], []>} : vector<288x4xbf16>, vector<4x4xbf16>, vector<288x4xf32> -> vector<288x4xf32>
    %110 = arith.addf %104, %109 : vector<288x4xf32>
    %c2_77 = arith.constant 2 : index
    %c0_78 = arith.constant 0 : index
    %111 = vector.load %arg9[%c2_77, %c0_78] : memref<328x4xf32, #tpu.memory_space<vmem>>, vector<288x4xf32>
    %112 = arith.truncf %111 : vector<288x4xf32> to vector<288x4xbf16>
    %c2_79 = arith.constant 2 : index
    %c0_80 = arith.constant 0 : index
    %c0_81 = arith.constant 0 : index
    %113 = vector.load %arg5[%c2_79, %c0_80, %c0_81] : memref<9x4x4xbf16, #tpu.memory_space<vmem>>, vector<1x4x4xbf16>
    %114 = vector.shape_cast %113 : vector<1x4x4xbf16> to vector<4x4xbf16>
    %cst_82 = arith.constant dense<0.000000e+00> : vector<288x4xf32>
    %115 = tpu.matmul %112, %114, %cst_82 {dimension_numbers = #tpu.dot_dimension_numbers<[1], [0], [0], [1], [0, 0, 1, 1], [], []>} : vector<288x4xbf16>, vector<4x4xbf16>, vector<288x4xf32> -> vector<288x4xf32>
    %116 = arith.addf %110, %115 : vector<288x4xf32>
    %c18_83 = arith.constant 18 : index
    %c0_84 = arith.constant 0 : index
    %117 = vector.load %arg9[%c18_83, %c0_84] : memref<328x4xf32, #tpu.memory_space<vmem>>, vector<288x4xf32>
    %118 = arith.truncf %117 : vector<288x4xf32> to vector<288x4xbf16>
    %c3_85 = arith.constant 3 : index
    %c0_86 = arith.constant 0 : index
    %c0_87 = arith.constant 0 : index
    %119 = vector.load %arg5[%c3_85, %c0_86, %c0_87] : memref<9x4x4xbf16, #tpu.memory_space<vmem>>, vector<1x4x4xbf16>
    %120 = vector.shape_cast %119 : vector<1x4x4xbf16> to vector<4x4xbf16>
    %cst_88 = arith.constant dense<0.000000e+00> : vector<288x4xf32>
    %121 = tpu.matmul %118, %120, %cst_88 {dimension_numbers = #tpu.dot_dimension_numbers<[1], [0], [0], [1], [0, 0, 1, 1], [], []>} : vector<288x4xbf16>, vector<4x4xbf16>, vector<288x4xf32> -> vector<288x4xf32>
    %122 = arith.addf %116, %121 : vector<288x4xf32>
    %c19_89 = arith.constant 19 : index
    %c0_90 = arith.constant 0 : index
    %123 = vector.load %arg9[%c19_89, %c0_90] : memref<328x4xf32, #tpu.memory_space<vmem>>, vector<288x4xf32>
    %124 = arith.truncf %123 : vector<288x4xf32> to vector<288x4xbf16>
    %c4_91 = arith.constant 4 : index
    %c0_92 = arith.constant 0 : index
    %c0_93 = arith.constant 0 : index
    %125 = vector.load %arg5[%c4_91, %c0_92, %c0_93] : memref<9x4x4xbf16, #tpu.memory_space<vmem>>, vector<1x4x4xbf16>
    %126 = vector.shape_cast %125 : vector<1x4x4xbf16> to vector<4x4xbf16>
    %cst_94 = arith.constant dense<0.000000e+00> : vector<288x4xf32>
    %127 = tpu.matmul %124, %126, %cst_94 {dimension_numbers = #tpu.dot_dimension_numbers<[1], [0], [0], [1], [0, 0, 1, 1], [], []>} : vector<288x4xbf16>, vector<4x4xbf16>, vector<288x4xf32> -> vector<288x4xf32>
    %128 = arith.addf %122, %127 : vector<288x4xf32>
    %c20_95 = arith.constant 20 : index
    %c0_96 = arith.constant 0 : index
    %129 = vector.load %arg9[%c20_95, %c0_96] : memref<328x4xf32, #tpu.memory_space<vmem>>, vector<288x4xf32>
    %130 = arith.truncf %129 : vector<288x4xf32> to vector<288x4xbf16>
    %c5_97 = arith.constant 5 : index
    %c0_98 = arith.constant 0 : index
    %c0_99 = arith.constant 0 : index
    %131 = vector.load %arg5[%c5_97, %c0_98, %c0_99] : memref<9x4x4xbf16, #tpu.memory_space<vmem>>, vector<1x4x4xbf16>
    %132 = vector.shape_cast %131 : vector<1x4x4xbf16> to vector<4x4xbf16>
    %cst_100 = arith.constant dense<0.000000e+00> : vector<288x4xf32>
    %133 = tpu.matmul %130, %132, %cst_100 {dimension_numbers = #tpu.dot_dimension_numbers<[1], [0], [0], [1], [0, 0, 1, 1], [], []>} : vector<288x4xbf16>, vector<4x4xbf16>, vector<288x4xf32> -> vector<288x4xf32>
    %134 = arith.addf %128, %133 : vector<288x4xf32>
    %c36_101 = arith.constant 36 : index
    %c0_102 = arith.constant 0 : index
    %135 = vector.load %arg9[%c36_101, %c0_102] : memref<328x4xf32, #tpu.memory_space<vmem>>, vector<288x4xf32>
    %136 = arith.truncf %135 : vector<288x4xf32> to vector<288x4xbf16>
    %c6_103 = arith.constant 6 : index
    %c0_104 = arith.constant 0 : index
    %c0_105 = arith.constant 0 : index
    %137 = vector.load %arg5[%c6_103, %c0_104, %c0_105] : memref<9x4x4xbf16, #tpu.memory_space<vmem>>, vector<1x4x4xbf16>
    %138 = vector.shape_cast %137 : vector<1x4x4xbf16> to vector<4x4xbf16>
    %cst_106 = arith.constant dense<0.000000e+00> : vector<288x4xf32>
    %139 = tpu.matmul %136, %138, %cst_106 {dimension_numbers = #tpu.dot_dimension_numbers<[1], [0], [0], [1], [0, 0, 1, 1], [], []>} : vector<288x4xbf16>, vector<4x4xbf16>, vector<288x4xf32> -> vector<288x4xf32>
    %140 = arith.addf %134, %139 : vector<288x4xf32>
    %c37_107 = arith.constant 37 : index
    %c0_108 = arith.constant 0 : index
    %141 = vector.load %arg9[%c37_107, %c0_108] : memref<328x4xf32, #tpu.memory_space<vmem>>, vector<288x4xf32>
    %142 = arith.truncf %141 : vector<288x4xf32> to vector<288x4xbf16>
    %c7_109 = arith.constant 7 : index
    %c0_110 = arith.constant 0 : index
    %c0_111 = arith.constant 0 : index
    %143 = vector.load %arg5[%c7_109, %c0_110, %c0_111] : memref<9x4x4xbf16, #tpu.memory_space<vmem>>, vector<1x4x4xbf16>
    %144 = vector.shape_cast %143 : vector<1x4x4xbf16> to vector<4x4xbf16>
    %cst_112 = arith.constant dense<0.000000e+00> : vector<288x4xf32>
    %145 = tpu.matmul %142, %144, %cst_112 {dimension_numbers = #tpu.dot_dimension_numbers<[1], [0], [0], [1], [0, 0, 1, 1], [], []>} : vector<288x4xbf16>, vector<4x4xbf16>, vector<288x4xf32> -> vector<288x4xf32>
    %146 = arith.addf %140, %145 : vector<288x4xf32>
    %c38_113 = arith.constant 38 : index
    %c0_114 = arith.constant 0 : index
    %147 = vector.load %arg9[%c38_113, %c0_114] : memref<328x4xf32, #tpu.memory_space<vmem>>, vector<288x4xf32>
    %148 = arith.truncf %147 : vector<288x4xf32> to vector<288x4xbf16>
    %c8_115 = arith.constant 8 : index
    %c0_116 = arith.constant 0 : index
    %c0_117 = arith.constant 0 : index
    %149 = vector.load %arg5[%c8_115, %c0_116, %c0_117] : memref<9x4x4xbf16, #tpu.memory_space<vmem>>, vector<1x4x4xbf16>
    %150 = vector.shape_cast %149 : vector<1x4x4xbf16> to vector<4x4xbf16>
    %cst_118 = arith.constant dense<0.000000e+00> : vector<288x4xf32>
    %151 = tpu.matmul %148, %150, %cst_118 {dimension_numbers = #tpu.dot_dimension_numbers<[1], [0], [0], [1], [0, 0, 1, 1], [], []>} : vector<288x4xbf16>, vector<4x4xbf16>, vector<288x4xf32> -> vector<288x4xf32>
    %152 = arith.addf %146, %151 : vector<288x4xf32>
    %c0_119 = arith.constant 0 : index
    %c19_120 = arith.constant 19 : index
    %c0_121 = arith.constant 0 : index
    %153 = vector.load %arg1[%c0_119, %c19_120, %c0_121] : memref<1x328x4xf32, #tpu.memory_space<vmem>>, vector<1x288x4xf32>
    %154 = vector.shape_cast %153 : vector<1x288x4xf32> to vector<288x4xf32>
    %c0_122 = arith.constant 0 : index
    %c0_123 = arith.constant 0 : index
    %155 = vector.load %arg6[%c0_122, %c0_123] : memref<1x4xf32, #tpu.memory_space<vmem>>, vector<1x4xf32>
    %156 = vector.broadcast %155 : vector<1x4xf32> to vector<288x4xf32>
    %157 = arith.mulf %152, %156 : vector<288x4xf32>
    %c0_124 = arith.constant 0 : index
    %c0_125 = arith.constant 0 : index
    %158 = vector.load %arg7[%c0_124, %c0_125] : memref<1x4xf32, #tpu.memory_space<vmem>>, vector<1x4xf32>
    %159 = vector.broadcast %158 : vector<1x4xf32> to vector<288x4xf32>
    %160 = arith.addf %157, %159 : vector<288x4xf32>
    %161 = arith.addf %160, %154 : vector<288x4xf32>
    %c0_126 = arith.constant 0 : index
    %c0_127 = arith.constant 0 : index
    %c0_128 = arith.constant 0 : index
    %162 = vector.load %arg8[%c0_126, %c0_127, %c0_128] : memref<1x288x4xf32, #tpu.memory_space<vmem>>, vector<1x288x4xf32>
    %163 = vector.shape_cast %162 : vector<1x288x4xf32> to vector<288x4xf32>
    %164 = vector.shape_cast %161 : vector<288x4xf32> to vector<1x288x4xf32>
    tpu.vector_store %arg8[%c0_126, %c0_127, %c0_128], %164 {strides = array<i32>} : memref<1x288x4xf32, #tpu.memory_space<vmem>>, vector<1x288x4xf32>,
    return
  }
  func.func @transform_0(%arg0: i32) -> (i32, i32, i32) {
    %c0_i32 = arith.constant 0 : i32
    %c0_i32_0 = arith.constant 0 : i32
    %c0_i32_1 = arith.constant 0 : i32
    return %arg0, %c0_i32, %c0_i32_0 : i32, i32, i32
  }
  func.func @transform_1(%arg0: i32) -> (i32, i32, i32) {
    %c0_i32 = arith.constant 0 : i32
    %c0_i32_0 = arith.constant 0 : i32
    %c0_i32_1 = arith.constant 0 : i32
    %c0_i32_2 = arith.constant 0 : i32
    return %c0_i32, %c0_i32_0, %c0_i32_1 : i32, i32, i32
  }
  func.func @transform_2(%arg0: i32) -> (i32, i32) {
    %c0_i32 = arith.constant 0 : i32
    %c0_i32_0 = arith.constant 0 : i32
    %c0_i32_1 = arith.constant 0 : i32
    return %c0_i32, %c0_i32_0 : i32, i32
  }
  func.func @transform_3(%arg0: i32) -> (i32, i32) {
    %c0_i32 = arith.constant 0 : i32
    %c0_i32_0 = arith.constant 0 : i32
    %c0_i32_1 = arith.constant 0 : i32
    return %c0_i32, %c0_i32_0 : i32, i32
  }
  func.func @transform_4(%arg0: i32) -> (i32, i32, i32) {
    %c0_i32 = arith.constant 0 : i32
    %c0_i32_0 = arith.constant 0 : i32
    %c0_i32_1 = arith.constant 0 : i32
    %c0_i32_2 = arith.constant 0 : i32
    return %c0_i32, %c0_i32_0, %c0_i32_1 : i32, i32, i32
  }
  func.func @transform_5(%arg0: i32) -> (i32, i32) {
    %c0_i32 = arith.constant 0 : i32
    %c0_i32_0 = arith.constant 0 : i32
    %c0_i32_1 = arith.constant 0 : i32
    return %c0_i32, %c0_i32_0 : i32, i32
  }
  func.func @transform_6(%arg0: i32) -> (i32, i32) {
    %c0_i32 = arith.constant 0 : i32
    %c0_i32_0 = arith.constant 0 : i32
    %c0_i32_1 = arith.constant 0 : i32
    return %c0_i32, %c0_i32_0 : i32, i32
  }
  func.func @transform_7(%arg0: i32) -> (i32, i32, i32) {
    %c0_i32 = arith.constant 0 : i32
    %c0_i32_0 = arith.constant 0 : i32
    %c0_i32_1 = arith.constant 0 : i32
    return %arg0, %c0_i32, %c0_i32_0 : i32, i32, i32
  }
}

</mosaic_0001>

<llo_original>
// kernel: tpu_custom_call.1
$region0: #{tpu_custom_call.1}
  #allocation0 [shape = 'u32[]', space=smem, size = 0x4, offset = 0x4, fixed_abs, tag = 'smem constant byte address 0x4 - core index']
  #allocation1 [shape = 'u32[144,128]{1,0:T(1,128)}', space=vmem, size = 0x12000, scoped, tag = 'internal scratch']
  #allocation2 [shape = 'f32[328,4]{1,0:T(8,128)}', space=vmem, size = 0x29000, scoped, tag = 'scratch operand']
  %s0 = inlined_call_operand.vmem [shape: f32[2,328,4], index: 0, kind: input, shape index: {}]
  %s1 = inlined_call_operand.vmem [shape: bf16[9,4,4], index: 1, kind: input, shape index: {}]
  %s2 = inlined_call_operand.vmem [shape: f32[1,4], index: 2, kind: input, shape index: {}]
  %s3 = inlined_call_operand.vmem [shape: f32[1,4], index: 3, kind: input, shape index: {}]
  %s4 = inlined_call_operand.vmem [shape: bf16[9,4,4], index: 4, kind: input, shape index: {}]
  %s5 = inlined_call_operand.vmem [shape: f32[1,4], index: 5, kind: input, shape index: {}]
  %s6 = inlined_call_operand.vmem [shape: f32[1,4], index: 6, kind: input, shape index: {}]
  %s7 = inlined_call_operand.vmem [shape: f32[2,288,4], index: 7, kind: output, shape index: {}]
  %s8 = sld [smem:[#allocation0]]
  $region61: #{tpu_custom_call.1} parent=0
    _
  %s10 = ssub.s32 1, %s8
  %s11 = scalar_select 0, %s10, %s8
  loop: start=0, step=1, limit=4
  $region2: #{tpu_custom_call.1} parent=0 // loop_pre_header
    _
  $region3: #{tpu_custom_call.1} parent=0 // loop_header
    %s13 = sphi 0, %s17
    %p14 = scmp.ge.s32.totalorder %s13, 4
    %s23 = sphi 0, %s25
    %s26 = sphi 0, %s23
    %s27 = sphi 0, %s26
    %s43 = sphi 0, %s27
    %s47 = sphi 0, %s47
    %s49 = sphi 0, %s47
    %s50 = sphi 0, %s49
    %s64 = sphi 0, %s50
    %s68 = sphi 0, %s68
    %s70 = sphi 0, %s68
    %s71 = sphi 0, %s70
    %s85 = sphi 0, %s71
    %s89 = sphi 0, %s89
    %s91 = sphi 0, %s89
    %s92 = sphi 0, %s91
    %s106 = sphi 0, %s92
    %s110 = sphi 0, %s110
    %s112 = sphi 0, %s110
    %s113 = sphi 0, %s112
    %s127 = sphi 0, %s113
    %s131 = sphi 0, %s131
    %s133 = sphi 0, %s131
    %s134 = sphi 0, %s133
    %s148 = sphi 0, %s134
    %s152 = sphi 0, %s152
    %s154 = sphi 0, %s152
    %s155 = sphi 0, %s154
    %s169 = sphi 0, %s155
    %s175 = sphi 0, %s177
    %s178 = sphi 0, %s175
    %s179 = sphi 0, %s178
    %s195 = sphi 0, %s179
  $region4: #{tpu_custom_call.1} parent=0 // loop_header_branch
    %16 = sbr.rel (%p14) target = $region8
  $region5: #{tpu_custom_call.1} parent=0 // loop_body
    %s18 = ssub.s32 %s13, 1
    %s19 = ssub.s32 %s13, 2
    %s20 = sadd.s32 %s13, 1
    %s21 = ssub.s32 %s13, %s20
    %p22 = scmp.eq.s32.totalorder %s21, 0
    %s24 = sadd.s32 %s23, 1
    %s25 = scalar_select %p22, %s23, %s24
    %p28 = pneg %p22
    %p29 = scmp.eq.s32.totalorder %s13, 1
    %p30 = por %p28, %p29
    %p31 = scmp.ne.s32.totalorder %s23, %s26
    %p32 = scmp.eq.s32.totalorder %s13, 0
    %p33 = por %p31, %p32
    %p34 = scmp.ne.s32.totalorder %s23, %s26
    %p35 = scmp.eq.s32.totalorder %s18, 1
    %p36 = por %p34, %p35
    %p37 = scmp.ne.s32.totalorder %s26, %s27
    %p38 = scmp.eq.s32.totalorder %s18, 0
    %p39 = por %p37, %p38
    %p40 = scmp.ne.s32.totalorder %s26, %s27
    %p41 = scmp.eq.s32.totalorder %s19, 1
    %p42 = por %p40, %p41
    %p44 = scmp.ne.s32.totalorder %s27, %s43
    %p45 = scmp.eq.s32.totalorder %s19, 0
    %p46 = por %p44, %p45
    %s48 = sadd.s32 %s47, 1
    %p51 = scmp.eq.s32.totalorder %s13, 1
    %p52 = scmp.ne.s32.totalorder %s47, %s49
    %p53 = scmp.eq.s32.totalorder %s13, 0
    %p54 = por %p52, %p53
    %p55 = scmp.ne.s32.totalorder %s47, %s49
    %p56 = scmp.eq.s32.totalorder %s18, 1
    %p57 = por %p55, %p56
    %p58 = scmp.ne.s32.totalorder %s49, %s50
    %p59 = scmp.eq.s32.totalorder %s18, 0
    %p60 = por %p58, %p59
    %p61 = scmp.ne.s32.totalorder %s49, %s50
    %p62 = scmp.eq.s32.totalorder %s19, 1
    %p63 = por %p61, %p62
    %p65 = scmp.ne.s32.totalorder %s50, %s64
    %p66 = scmp.eq.s32.totalorder %s19, 0
    %p67 = por %p65, %p66
    %s69 = sadd.s32 %s68, 1
    %p72 = scmp.eq.s32.totalorder %s13, 1
    %p73 = scmp.ne.s32.totalorder %s68, %s70
    %p74 = scmp.eq.s32.totalorder %s13, 0
    %p75 = por %p73, %p74
    %p76 = scmp.ne.s32.totalorder %s68, %s70
    %p77 = scmp.eq.s32.totalorder %s18, 1
    %p78 = por %p76, %p77
    %p79 = scmp.ne.s32.totalorder %s70, %s71
    %p80 = scmp.eq.s32.totalorder %s18, 0
    %p81 = por %p79, %p80
    %p82 = scmp.ne.s32.totalorder %s70, %s71
    %p83 = scmp.eq.s32.totalorder %s19, 1
    %p84 = por %p82, %p83
    %p86 = scmp.ne.s32.totalorder %s71, %s85
    %p87 = scmp.eq.s32.totalorder %s19, 0
    %p88 = por %p86, %p87
    %s90 = sadd.s32 %s89, 1
    %p93 = scmp.eq.s32.totalorder %s13, 1
    %p94 = scmp.ne.s32.totalorder %s89, %s91
    %p95 = scmp.eq.s32.totalorder %s13, 0
    %p96 = por %p94, %p95
    %p97 = scmp.ne.s32.totalorder %s89, %s91
    %p98 = scmp.eq.s32.totalorder %s18, 1
    %p99 = por %p97, %p98
    %p100 = scmp.ne.s32.totalorder %s91, %s92
    %p101 = scmp.eq.s32.totalorder %s18, 0
    %p102 = por %p100, %p101
    %p103 = scmp.ne.s32.totalorder %s91, %s92
    %p104 = scmp.eq.s32.totalorder %s19, 1
    %p105 = por %p103, %p104
    %p107 = scmp.ne.s32.totalorder %s92, %s106
    %p108 = scmp.eq.s32.totalorder %s19, 0
    %p109 = por %p107, %p108
    %s111 = sadd.s32 %s110, 1
    %p114 = scmp.eq.s32.totalorder %s13, 1
    %p115 = scmp.ne.s32.totalorder %s110, %s112
    %p116 = scmp.eq.s32.totalorder %s13, 0
    %p117 = por %p115, %p116
    %p118 = scmp.ne.s32.totalorder %s110, %s112
    %p119 = scmp.eq.s32.totalorder %s18, 1
    %p120 = por %p118, %p119
    %p121 = scmp.ne.s32.totalorder %s112, %s113
    %p122 = scmp.eq.s32.totalorder %s18, 0
    %p123 = por %p121, %p122
    %p124 = scmp.ne.s32.totalorder %s112, %s113
    %p125 = scmp.eq.s32.totalorder %s19, 1
    %p126 = por %p124, %p125
    %p128 = scmp.ne.s32.totalorder %s113, %s127
    %p129 = scmp.eq.s32.totalorder %s19, 0
    %p130 = por %p128, %p129
    %s132 = sadd.s32 %s131, 1
    %p135 = scmp.eq.s32.totalorder %s13, 1
    %p136 = scmp.ne.s32.totalorder %s131, %s133
    %p137 = scmp.eq.s32.totalorder %s13, 0
    %p138 = por %p136, %p137
    %p139 = scmp.ne.s32.totalorder %s131, %s133
    %p140 = scmp.eq.s32.totalorder %s18, 1
    %p141 = por %p139, %p140
    %p142 = scmp.ne.s32.totalorder %s133, %s134
    %p143 = scmp.eq.s32.totalorder %s18, 0
    %p144 = por %p142, %p143
    %p145 = scmp.ne.s32.totalorder %s133, %s134
    %p146 = scmp.eq.s32.totalorder %s19, 1
    %p147 = por %p145, %p146
    %p149 = scmp.ne.s32.totalorder %s134, %s148
    %p150 = scmp.eq.s32.totalorder %s19, 0
    %p151 = por %p149, %p150
    %s153 = sadd.s32 %s152, 1
    %p156 = scmp.eq.s32.totalorder %s13, 1
    %p157 = scmp.ne.s32.totalorder %s152, %s154
    %p158 = scmp.eq.s32.totalorder %s13, 0
    %p159 = por %p157, %p158
    %p160 = scmp.ne.s32.totalorder %s152, %s154
    %p161 = scmp.eq.s32.totalorder %s18, 1
    %p162 = por %p160, %p161
    %p163 = scmp.ne.s32.totalorder %s154, %s155
    %p164 = scmp.eq.s32.totalorder %s18, 0
    %p165 = por %p163, %p164
    %p166 = scmp.ne.s32.totalorder %s154, %s155
    %p167 = scmp.eq.s32.totalorder %s19, 1
    %p168 = por %p166, %p167
    %p170 = scmp.ne.s32.totalorder %s155, %s169
    %p171 = scmp.eq.s32.totalorder %s19, 0
    %p172 = por %p170, %p171
    %s173 = ssub.s32 %s13, %s20
    %p174 = scmp.eq.s32.totalorder %s173, 0
    %s176 = sadd.s32 %s175, 1
    %s177 = scalar_select %p174, %s175, %s176
    %p180 = pneg %p174
    %p181 = scmp.eq.s32.totalorder %s13, 1
    %p182 = por %p180, %p181
    %p183 = scmp.ne.s32.totalorder %s175, %s178
    %p184 = scmp.eq.s32.totalorder %s13, 0
    %p185 = por %p183, %p184
    %p186 = scmp.ne.s32.totalorder %s175, %s178
    %p187 = scmp.eq.s32.totalorder %s18, 1
    %p188 = por %p186, %p187
    %p189 = scmp.ne.s32.totalorder %s178, %s179
    %p190 = scmp.eq.s32.totalorder %s18, 0
    %p191 = por %p189, %p190
    %p192 = scmp.ne.s32.totalorder %s178, %s179
    %p193 = scmp.eq.s32.totalorder %s19, 1
    %p194 = por %p192, %p193
    %p196 = scmp.ne.s32.totalorder %s179, %s195
    %p197 = scmp.eq.s32.totalorder %s19, 0
    %p198 = por %p196, %p197
    %p199 = scmp.le.s32.totalorder 1, %s13
    %p200 = scmp.lt.s32.totalorder %s13, 3
    %p201 = pnand %p199, %p200
    %p202 = pneg %p201
    // Predicated region
    $region9: #{tpu_custom_call.1} parent=5 // pred_check
      _
    $region10: #{tpu_custom_call.1} parent=5 // pred_check_branch
      %204 = sbr.rel (%p201) target = $region12
    $region11: #{tpu_custom_call.1} parent=5 // pred_region
      %s205 = ssub.s32 %s13, 1
      // Predicated region
      $region13: #{tpu_custom_call.1} parent=11 // pred_check
        %p206 = pneg %p60
      $region14: #{tpu_custom_call.1} parent=11 // pred_check_branch
        %208 = sbr.rel (%p206) target = $region16
      $region15: #{tpu_custom_call.1} parent=11 // pred_region
        _
      $region16: #{tpu_custom_call.1} parent=11 // pred_fallthru
        _
      // Predicated region
      $region17: #{tpu_custom_call.1} parent=11 // pred_check
        %p209 = pneg %p81
      $region18: #{tpu_custom_call.1} parent=11 // pred_check_branch
        %211 = sbr.rel (%p209) target = $region20
      $region19: #{tpu_custom_call.1} parent=11 // pred_region
        _
      $region20: #{tpu_custom_call.1} parent=11 // pred_fallthru
        _
      // Predicated region
      $region21: #{tpu_custom_call.1} parent=11 // pred_check
        %p212 = pneg %p102
      $region22: #{tpu_custom_call.1} parent=11 // pred_check_branch
        %214 = sbr.rel (%p212) target = $region24
      $region23: #{tpu_custom_call.1} parent=11 // pred_region
        _
      $region24: #{tpu_custom_call.1} parent=11 // pred_fallthru
        _
      // Predicated region
      $region25: #{tpu_custom_call.1} parent=11 // pred_check
        %p215 = pneg %p123
      $region26: #{tpu_custom_call.1} parent=11 // pred_check_branch
        %217 = sbr.rel (%p215) target = $region28
      $region27: #{tpu_custom_call.1} parent=11 // pred_region
        _
      $region28: #{tpu_custom_call.1} parent=11 // pred_fallthru
        _
      // Predicated region
      $region29: #{tpu_custom_call.1} parent=11 // pred_check
        %p218 = pneg %p144
      $region30: #{tpu_custom_call.1} parent=11 // pred_check_branch
        %220 = sbr.rel (%p218) target = $region32
      $region31: #{tpu_custom_call.1} parent=11 // pred_region
        _
      $region32: #{tpu_custom_call.1} parent=11 // pred_fallthru
        _
      // Predicated region
      $region33: #{tpu_custom_call.1} parent=11 // pred_check
        %p221 = pneg %p165
      $region34: #{tpu_custom_call.1} parent=11 // pred_check_branch
        %223 = sbr.rel (%p221) target = $region36
      $region35: #{tpu_custom_call.1} parent=11 // pred_region
        _
      $region36: #{tpu_custom_call.1} parent=11 // pred_fallthru
        _
    $region12: #{tpu_custom_call.1} parent=5 // pred_fallthru
      _
    %p224 = scmp.lt.s32.totalorder %s13, 2
    // Predicated region
    $region37: #{tpu_custom_call.1} parent=5 // pred_check
      %p225 = pneg %p224
    $region38: #{tpu_custom_call.1} parent=5 // pred_check_branch
      %227 = sbr.rel (%p225) target = $region40
    $region39: #{tpu_custom_call.1} parent=5 // pred_region
      // Predicated region
      $region41: #{tpu_custom_call.1} parent=39 // pred_check
        %p228 = pneg %p33
      $region42: #{tpu_custom_call.1} parent=39 // pred_check_branch
        %230 = sbr.rel (%p228) target = $region44
      $region43: #{tpu_custom_call.1} parent=39 // pred_region
        %p231 = scmp.lt.s32.totalorder %s13, 1
        %s232 = scalar_select %p231, %s13, 1
        %s233 = smul.addr %s232, 41
        %s234 = smul.addr %s233, 8
        %s235 = scalar_lea.vmem %s0, %s234
      $region44: #{tpu_custom_call.1} parent=39 // pred_fallthru
        _
    $region40: #{tpu_custom_call.1} parent=5 // pred_fallthru
      _
    %p236 = scmp.le.s32.totalorder 1, %s13
    %p237 = scmp.lt.s32.totalorder %s13, 3
    %p238 = pnand %p236, %p237
    %p239 = pneg %p238
    // Predicated region
    $region45: #{tpu_custom_call.1} parent=5 // pred_check
      _
    $region46: #{tpu_custom_call.1} parent=5 // pred_check_branch
      %241 = sbr.rel (%p238) target = $region48
    $region47: #{tpu_custom_call.1} parent=5 // pred_region
      %s242 = ssub.s32 %s13, 1
      %p243 = scmp.lt.s32.totalorder %s18, 1
      %s244 = scalar_select %p243, %s18, 1
      %s245 = smul.addr %s244, 41
      %s246 = smul.addr %s245, 8
      %s247 = scalar_lea.vmem %s0, %s246
      %p248 = pneg %p39
      %p249 = pneg %p36
      %p250 = pneg %p60
      %p251 = pneg %p57
      %p252 = pneg %p81
      %p253 = pneg %p78
      %p254 = pneg %p102
      %p255 = pneg %p99
      %p256 = pneg %p123
      %p257 = pneg %p120
      %p258 = pneg %p144
      %p259 = pneg %p141
      %p260 = pneg %p165
      %p261 = pneg %p162
      %p262 = pneg %p191
      %p263 = pneg %p188
      %p264 = scmp.lt.s32.totalorder %s18, 1
      %s265 = scalar_select %p264, %s18, 1
      %s266 = smul.addr %s265, 36
      %s267 = smul.addr %s266, 8
      %s268 = scalar_lea.vmem %s7, %s267
      %p269 = scmp.lt.s32.totalorder %s18, 1
      %s270 = scalar_select %p269, %s18, 1
      %s271 = smul.addr %s270, 41
      %s272 = smul.addr %s271, 8
      %s273 = scalar_lea.vmem %s0, %s272
      %p274 = scmp.lt.s32.totalorder %s18, 1
      %s275 = scalar_select %p274, %s18, 1
      %s276 = smul.addr %s275, 36
      %s277 = smul.addr %s276, 8
      %s278 = scalar_lea.vmem %s7, %s277
      %v280 = vld [vmem:[%s273] sm:$0xff]
      %v281 = vld [vmem:[%s273 + $0x8] sm:$0xff]
      %v282 = vld [vmem:[%s273 + $0x10] sm:$0xff]
      %v283 = vld [vmem:[%s273 + $0x18] sm:$0xff]
      %v284 = vld [vmem:[%s273 + $0x20] sm:$0xff]
      %v285 = vld [vmem:[%s273 + $0x28] sm:$0xff]
      %v286 = vld [vmem:[%s273 + $0x30] sm:$0xff]
      %v287 = vld [vmem:[%s273 + $0x38] sm:$0xff]
      %v288 = vld [vmem:[%s273 + $0x40] sm:$0xff]
      %v289 = vld [vmem:[%s273 + $0x48] sm:$0xff]
      %v290 = vld [vmem:[%s273 + $0x50] sm:$0xff]
      %v291 = vld [vmem:[%s273 + $0x58] sm:$0xff]
      %v292 = vld [vmem:[%s273 + $0x60] sm:$0xff]
      %v293 = vld [vmem:[%s273 + $0x68] sm:$0xff]
      %v294 = vld [vmem:[%s273 + $0x70] sm:$0xff]
      %v295 = vld [vmem:[%s273 + $0x78] sm:$0xff]
      %v296 = vld [vmem:[%s273 + $0x80] sm:$0xff]
      %v297 = vld [vmem:[%s273 + $0x88] sm:$0xff]
      %v298 = vld [vmem:[%s273 + $0x90] sm:$0xff]
      %v299 = vld [vmem:[%s273 + $0x98] sm:$0xff]
      %v300 = vld [vmem:[%s273 + $0xa0] sm:$0xff]
      %v301 = vld [vmem:[%s273 + $0xa8] sm:$0xff]
      %v302 = vld [vmem:[%s273 + $0xb0] sm:$0xff]
      %v303 = vld [vmem:[%s273 + $0xb8] sm:$0xff]
      %v304 = vld [vmem:[%s273 + $0xc0] sm:$0xff]
      %v305 = vld [vmem:[%s273 + $0xc8] sm:$0xff]
      %v306 = vld [vmem:[%s273 + $0xd0] sm:$0xff]
      %v307 = vld [vmem:[%s273 + $0xd8] sm:$0xff]
      %v308 = vld [vmem:[%s273 + $0xe0] sm:$0xff]
      %v309 = vld [vmem:[%s273 + $0xe8] sm:$0xff]
      %v310 = vld [vmem:[%s273 + $0xf0] sm:$0xff]
      %v311 = vld [vmem:[%s273 + $0xf8] sm:$0xff]
      %v312 = vld [vmem:[%s273 + $0x100] sm:$0xff]
      %v313 = vld [vmem:[%s273 + $0x108] sm:$0xff]
      %v314 = vld [vmem:[%s273 + $0x110] sm:$0xff]
      %v315 = vld [vmem:[%s273 + $0x118] sm:$0xff]
      %v316 = vpack.c.bf16 %v281, %v280
      %v317 = vpack.c.bf16 %v283, %v282
      %v318 = vpack.c.bf16 %v285, %v284
      %v319 = vpack.c.bf16 %v287, %v286
      %v320 = vpack.c.bf16 %v289, %v288
      %v321 = vpack.c.bf16 %v291, %v290
      %v322 = vpack.c.bf16 %v293, %v292
      %v323 = vpack.c.bf16 %v295, %v294
      %v324 = vpack.c.bf16 %v297, %v296
      %v325 = vpack.c.bf16 %v299, %v298
      %v326 = vpack.c.bf16 %v301, %v300
      %v327 = vpack.c.bf16 %v303, %v302
      %v328 = vpack.c.bf16 %v305, %v304
      %v329 = vpack.c.bf16 %v307, %v306
      %v330 = vpack.c.bf16 %v309, %v308
      %v331 = vpack.c.bf16 %v311, %v310
      %v332 = vpack.c.bf16 %v313, %v312
      %v333 = vpack.c.bf16 %v315, %v314
      %v334 = vld [vmem:[%s1] sm:$0x3]
      %v335 = vld [vmem:[%s273 + $0x1] sm:$0xff]
      %v336 = vld [vmem:[%s273 + $0x9] sm:$0xff]
      %v337 = vld [vmem:[%s273 + $0x11] sm:$0xff]
      %v338 = vld [vmem:[%s273 + $0x19] sm:$0xff]
      %v339 = vld [vmem:[%s273 + $0x21] sm:$0xff]
      %v340 = vld [vmem:[%s273 + $0x29] sm:$0xff]
      %v341 = vld [vmem:[%s273 + $0x31] sm:$0xff]
      %v342 = vld [vmem:[%s273 + $0x39] sm:$0xff]
      %v343 = vld [vmem:[%s273 + $0x41] sm:$0xff]
      %v344 = vld [vmem:[%s273 + $0x49] sm:$0xff]
      %v345 = vld [vmem:[%s273 + $0x51] sm:$0xff]
      %v346 = vld [vmem:[%s273 + $0x59] sm:$0xff]
      %v347 = vld [vmem:[%s273 + $0x61] sm:$0xff]
      %v348 = vld [vmem:[%s273 + $0x69] sm:$0xff]
      %v349 = vld [vmem:[%s273 + $0x71] sm:$0xff]
      %v350 = vld [vmem:[%s273 + $0x79] sm:$0xff]
      %v351 = vld [vmem:[%s273 + $0x81] sm:$0xff]
      %v352 = vld [vmem:[%s273 + $0x89] sm:$0xff]
      %v353 = vld [vmem:[%s273 + $0x91] sm:$0xff]
      %v354 = vld [vmem:[%s273 + $0x99] sm:$0xff]
      %v355 = vld [vmem:[%s273 + $0xa1] sm:$0xff]
      %v356 = vld [vmem:[%s273 + $0xa9] sm:$0xff]
      %v357 = vld [vmem:[%s273 + $0xb1] sm:$0xff]
      %v358 = vld [vmem:[%s273 + $0xb9] sm:$0xff]
      %v359 = vld [vmem:[%s273 + $0xc1] sm:$0xff]
      %v360 = vld [vmem:[%s273 + $0xc9] sm:$0xff]
      %v361 = vld [vmem:[%s273 + $0xd1] sm:$0xff]
      %v362 = vld [vmem:[%s273 + $0xd9] sm:$0xff]
      %v363 = vld [vmem:[%s273 + $0xe1] sm:$0xff]
      %v364 = vld [vmem:[%s273 + $0xe9] sm:$0xff]
      %v365 = vld [vmem:[%s273 + $0xf1] sm:$0xff]
      %v366 = vld [vmem:[%s273 + $0xf9] sm:$0xff]
      %v367 = vld [vmem:[%s273 + $0x101] sm:$0xff]
      %v368 = vld [vmem:[%s273 + $0x109] sm:$0xff]
      %v369 = vld [vmem:[%s273 + $0x111] sm:$0xff]
      %v370 = vld [vmem:[%s273 + $0x119] sm:$0xff]
      %v371 = vpack.c.bf16 %v336, %v335
      %v372 = vpack.c.bf16 %v338, %v337
      %v373 = vpack.c.bf16 %v340, %v339
      %v374 = vpack.c.bf16 %v342, %v341
      %v375 = vpack.c.bf16 %v344, %v343
      %v376 = vpack.c.bf16 %v346, %v345
      %v377 = vpack.c.bf16 %v348, %v347
      %v378 = vpack.c.bf16 %v350, %v349
      %v379 = vpack.c.bf16 %v352, %v351
      %v380 = vpack.c.bf16 %v354, %v353
      %v381 = vpack.c.bf16 %v356, %v355
      %v382 = vpack.c.bf16 %v358, %v357
      %v383 = vpack.c.bf16 %v360, %v359
      %v384 = vpack.c.bf16 %v362, %v361
      %v385 = vpack.c.bf16 %v364, %v363
      %v386 = vpack.c.bf16 %v366, %v365
      %v387 = vpack.c.bf16 %v368, %v367
      %v388 = vpack.c.bf16 %v370, %v369
      %s389 = scalar_lea.vmem %s1, 2
      %v390 = vld [vmem:[%s389] sm:$0x3]
      %vm391 = vcmask 31744
      %v393 = vsel %vm391, %v371, 0
      %v396 = vsel %vm391, %v372, 0
      %v399 = vsel %vm391, %v373, 0
      %v402 = vsel %vm391, %v374, 0
      %v405 = vsel %vm391, %v375, 0
      %v408 = vsel %vm391, %v376, 0
      %v411 = vsel %vm391, %v377, 0
      %v414 = vsel %vm391, %v378, 0
      %v417 = vsel %vm391, %v379, 0
      %v420 = vsel %vm391, %v380, 0
      %v423 = vsel %vm391, %v381, 0
      %v426 = vsel %vm391, %v382, 0
      %v429 = vsel %vm391, %v383, 0
      %v432 = vsel %vm391, %v384, 0
      %v435 = vsel %vm391, %v385, 0
      %v438 = vsel %vm391, %v386, 0
      %v441 = vsel %vm391, %v387, 0
      %v444 = vsel %vm391, %v388, 0
      %vm446 = vcmask 1041408
      %v448 = vsel %vm446, %v390, 0
      %450 = vmatprep.subr.bf16.mxu0 0
      %451 = vmatpush1.bf16.msra.mxu0 %v448
      %452 = vmatprep.subr.bf16.mxu0 0
      %453 = vmatpush1.bf16.msra.mxu0 0
      %454 = vmatprep.subr.bf16.mxu0 0
      %455 = vmatpush1.bf16.msra.mxu0 0
      %456 = vmatprep.subr.bf16.mxu0 0
      %457 = vmatpush1.bf16.msra.mxu0 0
      %458 = vmatprep.subr.bf16.mxu0 0
      %459 = vmatpush1.bf16.msra.mxu0 0
      %460 = vmatprep.subr.bf16.mxu0 0
      %461 = vmatpush1.bf16.msra.mxu0 0
      %462 = vmatprep.subr.bf16.mxu0 0
      %463 = vmatpush1.bf16.msra.mxu0 0
      %464 = vmatprep.subr.bf16.mxu0 0
      %465 = vmatpush1.bf16.msra.mxu0 0
      %466 = vmatprep.subr.bf16.mxu0 0
      %467 = vmatpush1.bf16.msra.mxu0 0
      %468 = vmatprep.subr.bf16.mxu0 0
      %469 = vmatpush1.bf16.msra.mxu0 0
      %470 = vmatprep.subr.bf16.mxu0 0
      %471 = vmatpush1.bf16.msra.mxu0 0
      %472 = vmatprep.subr.bf16.mxu0 0
      %473 = vmatpush1.bf16.msra.mxu0 0
      %474 = vmatprep.subr.bf16.mxu0 0
      %475 = vmatpush1.bf16.msra.mxu0 0
      %476 = vmatprep.subr.bf16.mxu0 0
      %477 = vmatpush1.bf16.msra.mxu0 0
      %478 = vmatprep.subr.bf16.mxu0 0
      %479 = vmatpush1.bf16.msra.mxu0 0
      %480 = vmatprep.subr.bf16.mxu0 0
      %481 = vmatpush1.bf16.msra.mxu0 0
      %482 = vmatprep.mubr.bf16.mxu0 0
      %483 = vmatmul.mubr.bf16.gmra.mrb[0].mxu0 %v393
      %v484 = vpop.f32.mrb[0].mxu0
      %v485 = vadd.f32 0.0, %v484
      %v486 = vpop.f32.mrb[0].mxu0
      %v487 = vpop.f32.mrb[0].mxu0
      %v488 = vadd.f32 0.0, %v487
      %v489 = vpop.f32.mrb[0].mxu0
      %490 = vmatprep.mubr.bf16.mxu0 0
      %491 = vmatmul.mubr.bf16.gmra.mrb[0].mxu0 %v396
      %v492 = vpop.f32.mrb[0].mxu0
      %v493 = vadd.f32 0.0, %v492
      %v494 = vpop.f32.mrb[0].mxu0
      %v495 = vpop.f32.mrb[0].mxu0
      %v496 = vadd.f32 0.0, %v495
      %v497 = vpop.f32.mrb[0].mxu0
      %498 = vmatprep.mubr.bf16.mxu0 0
      %499 = vmatmul.mubr.bf16.gmra.mrb[0].mxu0 %v399
      %v500 = vpop.f32.mrb[0].mxu0
      %v501 = vadd.f32 0.0, %v500
      %v502 = vpop.f32.mrb[0].mxu0
      %v503 = vpop.f32.mrb[0].mxu0
      %v504 = vadd.f32 0.0, %v503
      %v505 = vpop.f32.mrb[0].mxu0
      %506 = vmatprep.mubr.bf16.mxu0 0
      %507 = vmatmul.mubr.bf16.gmra.mrb[0].mxu0 %v402
      %v508 = vpop.f32.mrb[0].mxu0
      %v509 = vadd.f32 0.0, %v508
      %v510 = vpop.f32.mrb[0].mxu0
      %v511 = vpop.f32.mrb[0].mxu0
      %v512 = vadd.f32 0.0, %v511
      %v513 = vpop.f32.mrb[0].mxu0
      %514 = vmatprep.mubr.bf16.mxu0 0
      %515 = vmatmul.mubr.bf16.gmra.mrb[0].mxu0 %v405
      %v516 = vpop.f32.mrb[0].mxu0
      %v517 = vadd.f32 0.0, %v516
      %v518 = vpop.f32.mrb[0].mxu0
      %v519 = vpop.f32.mrb[0].mxu0
      %v520 = vadd.f32 0.0, %v519
      %v521 = vpop.f32.mrb[0].mxu0
      %522 = vmatprep.mubr.bf16.mxu0 0
      %523 = vmatmul.mubr.bf16.gmra.mrb[0].mxu0 %v408
      %v524 = vpop.f32.mrb[0].mxu0
      %v525 = vadd.f32 0.0, %v524
      %v526 = vpop.f32.mrb[0].mxu0
      %v527 = vpop.f32.mrb[0].mxu0
      %v528 = vadd.f32 0.0, %v527
      %v529 = vpop.f32.mrb[0].mxu0
      %530 = vmatprep.mubr.bf16.mxu0 0
      %531 = vmatmul.mubr.bf16.gmra.mrb[0].mxu0 %v411
      %v532 = vpop.f32.mrb[0].mxu0
      %v533 = vadd.f32 0.0, %v532
      %v534 = vpop.f32.mrb[0].mxu0
      %v535 = vpop.f32.mrb[0].mxu0
      %v536 = vadd.f32 0.0, %v535
      %v537 = vpop.f32.mrb[0].mxu0
      %538 = vmatprep.mubr.bf16.mxu0 0
      %539 = vmatmul.mubr.bf16.gmra.mrb[0].mxu0 %v414
      %v540 = vpop.f32.mrb[0].mxu0
      %v541 = vadd.f32 0.0, %v540
      %v542 = vpop.f32.mrb[0].mxu0
      %v543 = vpop.f32.mrb[0].mxu0
      %v544 = vadd.f32 0.0, %v543
      %v545 = vpop.f32.mrb[0].mxu0
      %546 = vmatprep.mubr.bf16.mxu0 0
      %547 = vmatmul.mubr.bf16.gmra.mrb[0].mxu0 %v417
      %v548 = vpop.f32.mrb[0].mxu0
      %v549 = vadd.f32 0.0, %v548
      %v550 = vpop.f32.mrb[0].mxu0
      %v551 = vpop.f32.mrb[0].mxu0
      %v552 = vadd.f32 0.0, %v551
      %v553 = vpop.f32.mrb[0].mxu0
      %554 = vmatprep.mubr.bf16.mxu0 0
      %555 = vmatmul.mubr.bf16.gmra.mrb[0].mxu0 %v420
      %v556 = vpop.f32.mrb[0].mxu0
      %v557 = vadd.f32 0.0, %v556
      %v558 = vpop.f32.mrb[0].mxu0
      %v559 = vpop.f32.mrb[0].mxu0
      %v560 = vadd.f32 0.0, %v559
      %v561 = vpop.f32.mrb[0].mxu0
      %562 = vmatprep.mubr.bf16.mxu0 0
      %563 = vmatmul.mubr.bf16.gmra.mrb[0].mxu0 %v423
      %v564 = vpop.f32.mrb[0].mxu0
      %v565 = vadd.f32 0.0, %v564
      %v566 = vpop.f32.mrb[0].mxu0
      %v567 = vpop.f32.mrb[0].mxu0
      %v568 = vadd.f32 0.0, %v567
      %v569 = vpop.f32.mrb[0].mxu0
      %570 = vmatprep.mubr.bf16.mxu0 0
      %571 = vmatmul.mubr.bf16.gmra.mrb[0].mxu0 %v426
      %v572 = vpop.f32.mrb[0].mxu0
      %v573 = vadd.f32 0.0, %v572
      %v574 = vpop.f32.mrb[0].mxu0
      %v575 = vpop.f32.mrb[0].mxu0
      %v576 = vadd.f32 0.0, %v575
      %v577 = vpop.f32.mrb[0].mxu0
      %578 = vmatprep.mubr.bf16.mxu0 0
      %579 = vmatmul.mubr.bf16.gmra.mrb[0].mxu0 %v429
      %v580 = vpop.f32.mrb[0].mxu0
      %v581 = vadd.f32 0.0, %v580
      %v582 = vpop.f32.mrb[0].mxu0
      %v583 = vpop.f32.mrb[0].mxu0
      %v584 = vadd.f32 0.0, %v583
      %v585 = vpop.f32.mrb[0].mxu0
      %586 = vmatprep.mubr.bf16.mxu0 0
      %587 = vmatmul.mubr.bf16.gmra.mrb[0].mxu0 %v432
      %v588 = vpop.f32.mrb[0].mxu0
      %v589 = vadd.f32 0.0, %v588
      %v590 = vpop.f32.mrb[0].mxu0
      %v591 = vpop.f32.mrb[0].mxu0
      %v592 = vadd.f32 0.0, %v591
      %v593 = vpop.f32.mrb[0].mxu0
      %594 = vmatprep.mubr.bf16.mxu0 0
      %595 = vmatmul.mubr.bf16.gmra.mrb[0].mxu0 %v435
      %v596 = vpop.f32.mrb[0].mxu0
      %v597 = vadd.f32 0.0, %v596
      %v598 = vpop.f32.mrb[0].mxu0
      %v599 = vpop.f32.mrb[0].mxu0
      %v600 = vadd.f32 0.0, %v599
      %v601 = vpop.f32.mrb[0].mxu0
      %602 = vmatprep.mubr.bf16.mxu0 0
      %603 = vmatmul.mubr.bf16.gmra.mrb[0].mxu0 %v438
      %v604 = vpop.f32.mrb[0].mxu0
      %v605 = vadd.f32 0.0, %v604
      %v606 = vpop.f32.mrb[0].mxu0
      %v607 = vpop.f32.mrb[0].mxu0
      %v608 = vadd.f32 0.0, %v607
      %v609 = vpop.f32.mrb[0].mxu0
      %610 = vmatprep.mubr.bf16.mxu0 0
      %611 = vmatmul.mubr.bf16.gmra.mrb[0].mxu0 %v441
      %v612 = vpop.f32.mrb[0].mxu0
      %v613 = vadd.f32 0.0, %v612
      %v614 = vpop.f32.mrb[0].mxu0
      %v615 = vpop.f32.mrb[0].mxu0
      %v616 = vadd.f32 0.0, %v615
      %v617 = vpop.f32.mrb[0].mxu0
      %618 = vmatprep.mubr.bf16.mxu0 0
      %619 = vmatmul.mubr.bf16.gmra.mrb[0].mxu0 %v444
      %v620 = vpop.f32.mrb[0].mxu0
      %v621 = vadd.f32 0.0, %v620
      %v622 = vpop.f32.mrb[0].mxu0
      %v623 = vpop.f32.mrb[0].mxu0
      %v624 = vadd.f32 0.0, %v623
      %v625 = vpop.f32.mrb[0].mxu0
      %626 = vdwg.mxu0
      %v628 = vsel %vm391, %v316, 0
      %v631 = vsel %vm391, %v317, 0
      %v634 = vsel %vm391, %v318, 0
      %v637 = vsel %vm391, %v319, 0
      %v640 = vsel %vm391, %v320, 0
      %v643 = vsel %vm391, %v321, 0
      %v646 = vsel %vm391, %v322, 0
      %v649 = vsel %vm391, %v323, 0
      %v652 = vsel %vm391, %v324, 0
      %v655 = vsel %vm391, %v325, 0
      %v658 = vsel %vm391, %v326, 0
      %v661 = vsel %vm391, %v327, 0
      %v664 = vsel %vm391, %v328, 0
      %v667 = vsel %vm391, %v329, 0
      %v670 = vsel %vm391, %v330, 0
      %v673 = vsel %vm391, %v331, 0
      %v676 = vsel %vm391, %v332, 0
      %v679 = vsel %vm391, %v333, 0
      %v682 = vsel %vm446, %v334, 0
      %684 = vmatprep.subr.bf16.mxu0 0
      %685 = vmatpush1.bf16.msra.mxu0 %v682
      %686 = vmatprep.subr.bf16.mxu0 0
      %687 = vmatpush1.bf16.msra.mxu0 0
      %688 = vmatprep.subr.bf16.mxu0 0
      %689 = vmatpush1.bf16.msra.mxu0 0
      %690 = vmatprep.subr.bf16.mxu0 0
      %691 = vmatpush1.bf16.msra.mxu0 0
      %692 = vmatprep.subr.bf16.mxu0 0
      %693 = vmatpush1.bf16.msra.mxu0 0
      %694 = vmatprep.subr.bf16.mxu0 0
      %695 = vmatpush1.bf16.msra.mxu0 0
      %696 = vmatprep.subr.bf16.mxu0 0
      %697 = vmatpush1.bf16.msra.mxu0 0
      %698 = vmatprep.subr.bf16.mxu0 0
      %699 = vmatpush1.bf16.msra.mxu0 0
      %700 = vmatprep.subr.bf16.mxu0 0
      %701 = vmatpush1.bf16.msra.mxu0 0
      %702 = vmatprep.subr.bf16.mxu0 0
      %703 = vmatpush1.bf16.msra.mxu0 0
      %704 = vmatprep.subr.bf16.mxu0 0
      %705 = vmatpush1.bf16.msra.mxu0 0
      %706 = vmatprep.subr.bf16.mxu0 0
      %707 = vmatpush1.bf16.msra.mxu0 0
      %708 = vmatprep.subr.bf16.mxu0 0
      %709 = vmatpush1.bf16.msra.mxu0 0
      %710 = vmatprep.subr.bf16.mxu0 0
      %711 = vmatpush1.bf16.msra.mxu0 0
      %712 = vmatprep.subr.bf16.mxu0 0
      %713 = vmatpush1.bf16.msra.mxu0 0
      %714 = vmatprep.subr.bf16.mxu0 0
      %715 = vmatpush1.bf16.msra.mxu0 0
      %716 = vmatprep.mubr.bf16.mxu0 0
      %717 = vmatmul.mubr.bf16.gmra.mrb[0].mxu0 %v628
      %v718 = vpop.f32.mrb[0].mxu0
      %v719 = vadd.f32 %v485, %v718
      %v720 = vpop.f32.mrb[0].mxu0
      %v721 = vpop.f32.mrb[0].mxu0
      %v722 = vadd.f32 %v488, %v721
      %v723 = vpop.f32.mrb[0].mxu0
      %724 = vmatprep.mubr.bf16.mxu0 0
      %725 = vmatmul.mubr.bf16.gmra.mrb[0].mxu0 %v631
      %v726 = vpop.f32.mrb[0].mxu0
      %v727 = vadd.f32 %v493, %v726
      %v728 = vpop.f32.mrb[0].mxu0
      %v729 = vpop.f32.mrb[0].mxu0
      %v730 = vadd.f32 %v496, %v729
      %v731 = vpop.f32.mrb[0].mxu0
      %732 = vmatprep.mubr.bf16.mxu0 0
      %733 = vmatmul.mubr.bf16.gmra.mrb[0].mxu0 %v634
      %v734 = vpop.f32.mrb[0].mxu0
      %v735 = vadd.f32 %v501, %v734
      %v736 = vpop.f32.mrb[0].mxu0
      %v737 = vpop.f32.mrb[0].mxu0
      %v738 = vadd.f32 %v504, %v737
      %v739 = vpop.f32.mrb[0].mxu0
      %740 = vmatprep.mubr.bf16.mxu0 0
      %741 = vmatmul.mubr.bf16.gmra.mrb[0].mxu0 %v637
      %v742 = vpop.f32.mrb[0].mxu0
      %v743 = vadd.f32 %v509, %v742
      %v744 = vpop.f32.mrb[0].mxu0
      %v745 = vpop.f32.mrb[0].mxu0
      %v746 = vadd.f32 %v512, %v745
      %v747 = vpop.f32.mrb[0].mxu0
      %748 = vmatprep.mubr.bf16.mxu0 0
      %749 = vmatmul.mubr.bf16.gmra.mrb[0].mxu0 %v640
      %v750 = vpop.f32.mrb[0].mxu0
      %v751 = vadd.f32 %v517, %v750
      %v752 = vpop.f32.mrb[0].mxu0
      %v753 = vpop.f32.mrb[0].mxu0
      %v754 = vadd.f32 %v520, %v753
      %v755 = vpop.f32.mrb[0].mxu0
      %756 = vmatprep.mubr.bf16.mxu0 0
      %757 = vmatmul.mubr.bf16.gmra.mrb[0].mxu0 %v643
      %v758 = vpop.f32.mrb[0].mxu0
      %v759 = vadd.f32 %v525, %v758
      %v760 = vpop.f32.mrb[0].mxu0
      %v761 = vpop.f32.mrb[0].mxu0
      %v762 = vadd.f32 %v528, %v761
      %v763 = vpop.f32.mrb[0].mxu0
      %764 = vmatprep.mubr.bf16.mxu0 0
      %765 = vmatmul.mubr.bf16.gmra.mrb[0].mxu0 %v646
      %v766 = vpop.f32.mrb[0].mxu0
      %v767 = vadd.f32 %v533, %v766
      %v768 = vpop.f32.mrb[0].mxu0
      %v769 = vpop.f32.mrb[0].mxu0
      %v770 = vadd.f32 %v536, %v769
      %v771 = vpop.f32.mrb[0].mxu0
      %772 = vmatprep.mubr.bf16.mxu0 0
      %773 = vmatmul.mubr.bf16.gmra.mrb[0].mxu0 %v649
      %v774 = vpop.f32.mrb[0].mxu0
      %v775 = vadd.f32 %v541, %v774
      %v776 = vpop.f32.mrb[0].mxu0
      %v777 = vpop.f32.mrb[0].mxu0
      %v778 = vadd.f32 %v544, %v777
      %v779 = vpop.f32.mrb[0].mxu0
      %780 = vmatprep.mubr.bf16.mxu0 0
      %781 = vmatmul.mubr.bf16.gmra.mrb[0].mxu0 %v652
      %v782 = vpop.f32.mrb[0].mxu0
      %v783 = vadd.f32 %v549, %v782
      %v784 = vpop.f32.mrb[0].mxu0
      %v785 = vpop.f32.mrb[0].mxu0
      %v786 = vadd.f32 %v552, %v785
      %v787 = vpop.f32.mrb[0].mxu0
      %788 = vmatprep.mubr.bf16.mxu0 0
      %789 = vmatmul.mubr.bf16.gmra.mrb[0].mxu0 %v655
      %v790 = vpop.f32.mrb[0].mxu0
      %v791 = vadd.f32 %v557, %v790
      %v792 = vpop.f32.mrb[0].mxu0
      %v793 = vpop.f32.mrb[0].mxu0
      %v794 = vadd.f32 %v560, %v793
      %v795 = vpop.f32.mrb[0].mxu0
      %796 = vmatprep.mubr.bf16.mxu0 0
      %797 = vmatmul.mubr.bf16.gmra.mrb[0].mxu0 %v658
      %v798 = vpop.f32.mrb[0].mxu0
      %v799 = vadd.f32 %v565, %v798
      %v800 = vpop.f32.mrb[0].mxu0
      %v801 = vpop.f32.mrb[0].mxu0
      %v802 = vadd.f32 %v568, %v801
      %v803 = vpop.f32.mrb[0].mxu0
      %804 = vmatprep.mubr.bf16.mxu0 0
      %805 = vmatmul.mubr.bf16.gmra.mrb[0].mxu0 %v661
      %v806 = vpop.f32.mrb[0].mxu0
      %v807 = vadd.f32 %v573, %v806
      %v808 = vpop.f32.mrb[0].mxu0
      %v809 = vpop.f32.mrb[0].mxu0
      %v810 = vadd.f32 %v576, %v809
      %v811 = vpop.f32.mrb[0].mxu0
      %812 = vmatprep.mubr.bf16.mxu0 0
      %813 = vmatmul.mubr.bf16.gmra.mrb[0].mxu0 %v664
      %v814 = vpop.f32.mrb[0].mxu0
      %v815 = vadd.f32 %v581, %v814
      %v816 = vpop.f32.mrb[0].mxu0
      %v817 = vpop.f32.mrb[0].mxu0
      %v818 = vadd.f32 %v584, %v817
      %v819 = vpop.f32.mrb[0].mxu0
      %820 = vmatprep.mubr.bf16.mxu0 0
      %821 = vmatmul.mubr.bf16.gmra.mrb[0].mxu0 %v667
      %v822 = vpop.f32.mrb[0].mxu0
      %v823 = vadd.f32 %v589, %v822
      %v824 = vpop.f32.mrb[0].mxu0
      %v825 = vpop.f32.mrb[0].mxu0
      %v826 = vadd.f32 %v592, %v825
      %v827 = vpop.f32.mrb[0].mxu0
      %828 = vmatprep.mubr.bf16.mxu0 0
      %829 = vmatmul.mubr.bf16.gmra.mrb[0].mxu0 %v670
      %v830 = vpop.f32.mrb[0].mxu0
      %v831 = vadd.f32 %v597, %v830
      %v832 = vpop.f32.mrb[0].mxu0
      %v833 = vpop.f32.mrb[0].mxu0
      %v834 = vadd.f32 %v600, %v833
      %v835 = vpop.f32.mrb[0].mxu0
      %836 = vmatprep.mubr.bf16.mxu0 0
      %837 = vmatmul.mubr.bf16.gmra.mrb[0].mxu0 %v673
      %v838 = vpop.f32.mrb[0].mxu0
      %v839 = vadd.f32 %v605, %v838
      %v840 = vpop.f32.mrb[0].mxu0
      %v841 = vpop.f32.mrb[0].mxu0
      %v842 = vadd.f32 %v608, %v841
      %v843 = vpop.f32.mrb[0].mxu0
      %844 = vmatprep.mubr.bf16.mxu0 0
      %845 = vmatmul.mubr.bf16.gmra.mrb[0].mxu0 %v676
      %v846 = vpop.f32.mrb[0].mxu0
      %v847 = vadd.f32 %v613, %v846
      %v848 = vpop.f32.mrb[0].mxu0
      %v849 = vpop.f32.mrb[0].mxu0
      %v850 = vadd.f32 %v616, %v849
      %v851 = vpop.f32.mrb[0].mxu0
      %852 = vmatprep.mubr.bf16.mxu0 0
      %853 = vmatmul.mubr.bf16.gmra.mrb[0].mxu0 %v679
      %v854 = vpop.f32.mrb[0].mxu0
      %v855 = vadd.f32 %v621, %v854
      %v856 = vpop.f32.mrb[0].mxu0
      %v857 = vpop.f32.mrb[0].mxu0
      %v858 = vadd.f32 %v624, %v857
      %v859 = vpop.f32.mrb[0].mxu0
      %860 = vdwg.mxu0
      %v861 = vld [vmem:[%s273 + $0x2] sm:$0xff]
      %v862 = vld [vmem:[%s273 + $0xa] sm:$0xff]
      %v863 = vld [vmem:[%s273 + $0x12] sm:$0xff]
      %v864 = vld [vmem:[%s273 + $0x1a] sm:$0xff]
      %v865 = vld [vmem:[%s273 + $0x22] sm:$0xff]
      %v866 = vld [vmem:[%s273 + $0x2a] sm:$0xff]
      %v867 = vld [vmem:[%s273 + $0x32] sm:$0xff]
      %v868 = vld [vmem:[%s273 + $0x3a] sm:$0xff]
      %v869 = vld [vmem:[%s273 + $0x42] sm:$0xff]
      %v870 = vld [vmem:[%s273 + $0x4a] sm:$0xff]
      %v871 = vld [vmem:[%s273 + $0x52] sm:$0xff]
      %v872 = vld [vmem:[%s273 + $0x5a] sm:$0xff]
      %v873 = vld [vmem:[%s273 + $0x62] sm:$0xff]
      %v874 = vld [vmem:[%s273 + $0x6a] sm:$0xff]
      %v875 = vld [vmem:[%s273 + $0x72] sm:$0xff]
      %v876 = vld [vmem:[%s273 + $0x7a] sm:$0xff]
      %v877 = vld [vmem:[%s273 + $0x82] sm:$0xff]
      %v878 = vld [vmem:[%s273 + $0x8a] sm:$0xff]
      %v879 = vld [vmem:[%s273 + $0x92] sm:$0xff]
      %v880 = vld [vmem:[%s273 + $0x9a] sm:$0xff]
      %v881 = vld [vmem:[%s273 + $0xa2] sm:$0xff]
      %v882 = vld [vmem:[%s273 + $0xaa] sm:$0xff]
      %v883 = vld [vmem:[%s273 + $0xb2] sm:$0xff]
      %v884 = vld [vmem:[%s273 + $0xba] sm:$0xff]
      %v885 = vld [vmem:[%s273 + $0xc2] sm:$0xff]
      %v886 = vld [vmem:[%s273 + $0xca] sm:$0xff]
      %v887 = vld [vmem:[%s273 + $0xd2] sm:$0xff]
      %v888 = vld [vmem:[%s273 + $0xda] sm:$0xff]
      %v889 = vld [vmem:[%s273 + $0xe2] sm:$0xff]
      %v890 = vld [vmem:[%s273 + $0xea] sm:$0xff]
      %v891 = vld [vmem:[%s273 + $0xf2] sm:$0xff]
      %v892 = vld [vmem:[%s273 + $0xfa] sm:$0xff]
      %v893 = vld [vmem:[%s273 + $0x102] sm:$0xff]
      %v894 = vld [vmem:[%s273 + $0x10a] sm:$0xff]
      %v895 = vld [vmem:[%s273 + $0x112] sm:$0xff]
      %v896 = vld [vmem:[%s273 + $0x11a] sm:$0xff]
      %v897 = vpack.c.bf16 %v862, %v861
      %v898 = vpack.c.bf16 %v864, %v863
      %v899 = vpack.c.bf16 %v866, %v865
      %v900 = vpack.c.bf16 %v868, %v867
      %v901 = vpack.c.bf16 %v870, %v869
      %v902 = vpack.c.bf16 %v872, %v871
      %v903 = vpack.c.bf16 %v874, %v873
      %v904 = vpack.c.bf16 %v876, %v875
      %v905 = vpack.c.bf16 %v878, %v877
      %v906 = vpack.c.bf16 %v880, %v879
      %v907 = vpack.c.bf16 %v882, %v881
      %v908 = vpack.c.bf16 %v884, %v883
      %v909 = vpack.c.bf16 %v886, %v885
      %v910 = vpack.c.bf16 %v888, %v887
      %v911 = vpack.c.bf16 %v890, %v889
      %v912 = vpack.c.bf16 %v892, %v891
      %v913 = vpack.c.bf16 %v894, %v893
      %v914 = vpack.c.bf16 %v896, %v895
      %s915 = scalar_lea.vmem %s1, 4
      %v916 = vld [vmem:[%s915] sm:$0x3]
      %v918 = vsel %vm391, %v897, 0
      %v921 = vsel %vm391, %v898, 0
      %v924 = vsel %vm391, %v899, 0
      %v927 = vsel %vm391, %v900, 0
      %v930 = vsel %vm391, %v901, 0
      %v933 = vsel %vm391, %v902, 0
      %v936 = vsel %vm391, %v903, 0
      %v939 = vsel %vm391, %v904, 0
      %v942 = vsel %vm391, %v905, 0
      %v945 = vsel %vm391, %v906, 0
      %v948 = vsel %vm391, %v907, 0
      %v951 = vsel %vm391, %v908, 0
      %v954 = vsel %vm391, %v909, 0
      %v957 = vsel %vm391, %v910, 0
      %v960 = vsel %vm391, %v911, 0
      %v963 = vsel %vm391, %v912, 0
      %v966 = vsel %vm391, %v913, 0
      %v969 = vsel %vm391, %v914, 0
      %v972 = vsel %vm446, %v916, 0
      %974 = vmatprep.subr.bf16.mxu0 0
      %975 = vmatpush1.bf16.msra.mxu0 %v972
      %976 = vmatprep.subr.bf16.mxu0 0
      %977 = vmatpush1.bf16.msra.mxu0 0
      %978 = vmatprep.subr.bf16.mxu0 0
      %979 = vmatpush1.bf16.msra.mxu0 0
      %980 = vmatprep.subr.bf16.mxu0 0
      %981 = vmatpush1.bf16.msra.mxu0 0
      %982 = vmatprep.subr.bf16.mxu0 0
      %983 = vmatpush1.bf16.msra.mxu0 0
      %984 = vmatprep.subr.bf16.mxu0 0
      %985 = vmatpush1.bf16.msra.mxu0 0
      %986 = vmatprep.subr.bf16.mxu0 0
      %987 = vmatpush1.bf16.msra.mxu0 0
      %988 = vmatprep.subr.bf16.mxu0 0
      %989 = vmatpush1.bf16.msra.mxu0 0
      %990 = vmatprep.subr.bf16.mxu0 0
      %991 = vmatpush1.bf16.msra.mxu0 0
      %992 = vmatprep.subr.bf16.mxu0 0
      %993 = vmatpush1.bf16.msra.mxu0 0
      %994 = vmatprep.subr.bf16.mxu0 0
      %995 = vmatpush1.bf16.msra.mxu0 0
      %996 = vmatprep.subr.bf16.mxu0 0
      %997 = vmatpush1.bf16.msra.mxu0 0
      %998 = vmatprep.subr.bf16.mxu0 0
      %999 = vmatpush1.bf16.msra.mxu0 0
      %1000 = vmatprep.subr.bf16.mxu0 0
      %1001 = vmatpush1.bf16.msra.mxu0 0
      %1002 = vmatprep.subr.bf16.mxu0 0
      %1003 = vmatpush1.bf16.msra.mxu0 0
      %1004 = vmatprep.subr.bf16.mxu0 0
      %1005 = vmatpush1.bf16.msra.mxu0 0
      %1006 = vmatprep.mubr.bf16.mxu0 0
      %1007 = vmatmul.mubr.bf16.gmra.mrb[0].mxu0 %v918
      %v1008 = vpop.f32.mrb[0].mxu0
      %v1009 = vadd.f32 0.0, %v1008
      %v1010 = vpop.f32.mrb[0].mxu0
      %v1011 = vpop.f32.mrb[0].mxu0
      %v1012 = vadd.f32 0.0, %v1011
      %v1013 = vpop.f32.mrb[0].mxu0
      %1014 = vmatprep.mubr.bf16.mxu0 0
      %1015 = vmatmul.mubr.bf16.gmra.mrb[0].mxu0 %v921
      %v1016 = vpop.f32.mrb[0].mxu0
      %v1017 = vadd.f32 0.0, %v1016
      %v1018 = vpop.f32.mrb[0].mxu0
      %v1019 = vpop.f32.mrb[0].mxu0
      %v1020 = vadd.f32 0.0, %v1019
      %v1021 = vpop.f32.mrb[0].mxu0
      %1022 = vmatprep.mubr.bf16.mxu0 0
      %1023 = vmatmul.mubr.bf16.gmra.mrb[0].mxu0 %v924
      %v1024 = vpop.f32.mrb[0].mxu0
      %v1025 = vadd.f32 0.0, %v1024
      %v1026 = vpop.f32.mrb[0].mxu0
      %v1027 = vpop.f32.mrb[0].mxu0
      %v1028 = vadd.f32 0.0, %v1027
      %v1029 = vpop.f32.mrb[0].mxu0
      %1030 = vmatprep.mubr.bf16.mxu0 0
      %1031 = vmatmul.mubr.bf16.gmra.mrb[0].mxu0 %v927
      %v1032 = vpop.f32.mrb[0].mxu0
      %v1033 = vadd.f32 0.0, %v1032
      %v1034 = vpop.f32.mrb[0].mxu0
      %v1035 = vpop.f32.mrb[0].mxu0
      %v1036 = vadd.f32 0.0, %v1035
      %v1037 = vpop.f32.mrb[0].mxu0
      %1038 = vmatprep.mubr.bf16.mxu0 0
      %1039 = vmatmul.mubr.bf16.gmra.mrb[0].mxu0 %v930
      %v1040 = vpop.f32.mrb[0].mxu0
      %v1041 = vadd.f32 0.0, %v1040
      %v1042 = vpop.f32.mrb[0].mxu0
      %v1043 = vpop.f32.mrb[0].mxu0
      %v1044 = vadd.f32 0.0, %v1043
      %v1045 = vpop.f32.mrb[0].mxu0
      %1046 = vmatprep.mubr.bf16.mxu0 0
      %1047 = vmatmul.mubr.bf16.gmra.mrb[0].mxu0 %v933
      %v1048 = vpop.f32.mrb[0].mxu0
      %v1049 = vadd.f32 0.0, %v1048
      %v1050 = vpop.f32.mrb[0].mxu0
      %v1051 = vpop.f32.mrb[0].mxu0
      %v1052 = vadd.f32 0.0, %v1051
      %v1053 = vpop.f32.mrb[0].mxu0
      %1054 = vmatprep.mubr.bf16.mxu0 0
      %1055 = vmatmul.mubr.bf16.gmra.mrb[0].mxu0 %v936
      %v1056 = vpop.f32.mrb[0].mxu0
      %v1057 = vadd.f32 0.0, %v1056
      %v1058 = vpop.f32.mrb[0].mxu0
      %v1059 = vpop.f32.mrb[0].mxu0
      %v1060 = vadd.f32 0.0, %v1059
      %v1061 = vpop.f32.mrb[0].mxu0
      %1062 = vmatprep.mubr.bf16.mxu0 0
      %1063 = vmatmul.mubr.bf16.gmra.mrb[0].mxu0 %v939
      %v1064 = vpop.f32.mrb[0].mxu0
      %v1065 = vadd.f32 0.0, %v1064
      %v1066 = vpop.f32.mrb[0].mxu0
      %v1067 = vpop.f32.mrb[0].mxu0
      %v1068 = vadd.f32 0.0, %v1067
      %v1069 = vpop.f32.mrb[0].mxu0
      %1070 = vmatprep.mubr.bf16.mxu0 0
      %1071 = vmatmul.mubr.bf16.gmra.mrb[0].mxu0 %v942
      %v1072 = vpop.f32.mrb[0].mxu0
      %v1073 = vadd.f32 0.0, %v1072
      %v1074 = vpop.f32.mrb[0].mxu0
      %v1075 = vpop.f32.mrb[0].mxu0
      %v1076 = vadd.f32 0.0, %v1075
      %v1077 = vpop.f32.mrb[0].mxu0
      %1078 = vmatprep.mubr.bf16.mxu0 0
      %1079 = vmatmul.mubr.bf16.gmra.mrb[0].mxu0 %v945
      %v1080 = vpop.f32.mrb[0].mxu0
      %v1081 = vadd.f32 0.0, %v1080
      %v1082 = vpop.f32.mrb[0].mxu0
      %v1083 = vpop.f32.mrb[0].mxu0
      %v1084 = vadd.f32 0.0, %v1083
      %v1085 = vpop.f32.mrb[0].mxu0
      %1086 = vmatprep.mubr.bf16.mxu0 0
      %1087 = vmatmul.mubr.bf16.gmra.mrb[0].mxu0 %v948
      %v1088 = vpop.f32.mrb[0].mxu0
      %v1089 = vadd.f32 0.0, %v1088
      %v1090 = vpop.f32.mrb[0].mxu0
      %v1091 = vpop.f32.mrb[0].mxu0
      %v1092 = vadd.f32 0.0, %v1091
      %v1093 = vpop.f32.mrb[0].mxu0
      %1094 = vmatprep.mubr.bf16.mxu0 0
      %1095 = vmatmul.mubr.bf16.gmra.mrb[0].mxu0 %v951
      %v1096 = vpop.f32.mrb[0].mxu0
      %v1097 = vadd.f32 0.0, %v1096
      %v1098 = vpop.f32.mrb[0].mxu0
      %v1099 = vpop.f32.mrb[0].mxu0
      %v1100 = vadd.f32 0.0, %v1099
      %v1101 = vpop.f32.mrb[0].mxu0
      %1102 = vmatprep.mubr.bf16.mxu0 0
      %1103 = vmatmul.mubr.bf16.gmra.mrb[0].mxu0 %v954
      %v1104 = vpop.f32.mrb[0].mxu0
      %v1105 = vadd.f32 0.0, %v1104
      %v1106 = vpop.f32.mrb[0].mxu0
      %v1107 = vpop.f32.mrb[0].mxu0
      %v1108 = vadd.f32 0.0, %v1107
      %v1109 = vpop.f32.mrb[0].mxu0
      %1110 = vmatprep.mubr.bf16.mxu0 0
      %1111 = vmatmul.mubr.bf16.gmra.mrb[0].mxu0 %v957
      %v1112 = vpop.f32.mrb[0].mxu0
      %v1113 = vadd.f32 0.0, %v1112
      %v1114 = vpop.f32.mrb[0].mxu0
      %v1115 = vpop.f32.mrb[0].mxu0
      %v1116 = vadd.f32 0.0, %v1115
      %v1117 = vpop.f32.mrb[0].mxu0
      %1118 = vmatprep.mubr.bf16.mxu0 0
      %1119 = vmatmul.mubr.bf16.gmra.mrb[0].mxu0 %v960
      %v1120 = vpop.f32.mrb[0].mxu0
      %v1121 = vadd.f32 0.0, %v1120
      %v1122 = vpop.f32.mrb[0].mxu0
      %v1123 = vpop.f32.mrb[0].mxu0
      %v1124 = vadd.f32 0.0, %v1123
      %v1125 = vpop.f32.mrb[0].mxu0
      %1126 = vmatprep.mubr.bf16.mxu0 0
      %1127 = vmatmul.mubr.bf16.gmra.mrb[0].mxu0 %v963
      %v1128 = vpop.f32.mrb[0].mxu0
      %v1129 = vadd.f32 0.0, %v1128
      %v1130 = vpop.f32.mrb[0].mxu0
      %v1131 = vpop.f32.mrb[0].mxu0
      %v1132 = vadd.f32 0.0, %v1131
      %v1133 = vpop.f32.mrb[0].mxu0
      %1134 = vmatprep.mubr.bf16.mxu0 0
      %1135 = vmatmul.mubr.bf16.gmra.mrb[0].mxu0 %v966
      %v1136 = vpop.f32.mrb[0].mxu0
      %v1137 = vadd.f32 0.0, %v1136
      %v1138 = vpop.f32.mrb[0].mxu0
      %v1139 = vpop.f32.mrb[0].mxu0
      %v1140 = vadd.f32 0.0, %v1139
      %v1141 = vpop.f32.mrb[0].mxu0
      %1142 = vmatprep.mubr.bf16.mxu0 0
      %1143 = vmatmul.mubr.bf16.gmra.mrb[0].mxu0 %v969
      %v1144 = vpop.f32.mrb[0].mxu0
      %v1145 = vadd.f32 0.0, %v1144
      %v1146 = vpop.f32.mrb[0].mxu0
      %v1147 = vpop.f32.mrb[0].mxu0
      %v1148 = vadd.f32 0.0, %v1147
      %v1149 = vpop.f32.mrb[0].mxu0
      %1150 = vdwg.mxu0
      %v1151 = vadd.f32 %v719, %v1009
      %v1152 = vadd.f32 %v722, %v1012
      %v1153 = vadd.f32 %v727, %v1017
      %v1154 = vadd.f32 %v730, %v1020
      %v1155 = vadd.f32 %v735, %v1025
      %v1156 = vadd.f32 %v738, %v1028
      %v1157 = vadd.f32 %v743, %v1033
      %v1158 = vadd.f32 %v746, %v1036
      %v1159 = vadd.f32 %v751, %v1041
      %v1160 = vadd.f32 %v754, %v1044
      %v1161 = vadd.f32 %v759, %v1049
      %v1162 = vadd.f32 %v762, %v1052
      %v1163 = vadd.f32 %v767, %v1057
      %v1164 = vadd.f32 %v770, %v1060
      %v1165 = vadd.f32 %v775, %v1065
      %v1166 = vadd.f32 %v778, %v1068
      %v1167 = vadd.f32 %v783, %v1073
      %v1168 = vadd.f32 %v786, %v1076
      %v1169 = vadd.f32 %v791, %v1081
      %v1170 = vadd.f32 %v794, %v1084
      %v1171 = vadd.f32 %v799, %v1089
      %v1172 = vadd.f32 %v802, %v1092
      %v1173 = vadd.f32 %v807, %v1097
      %v1174 = vadd.f32 %v810, %v1100
      %v1175 = vadd.f32 %v815, %v1105
      %v1176 = vadd.f32 %v818, %v1108
      %v1177 = vadd.f32 %v823, %v1113
      %v1178 = vadd.f32 %v826, %v1116
      %v1179 = vadd.f32 %v831, %v1121
      %v1180 = vadd.f32 %v834, %v1124
      %v1181 = vadd.f32 %v839, %v1129
      %v1182 = vadd.f32 %v842, %v1132
      %v1183 = vadd.f32 %v847, %v1137
      %v1184 = vadd.f32 %v850, %v1140
      %v1185 = vadd.f32 %v855, %v1145
      %v1186 = vadd.f32 %v858, %v1148
      %v1187 = vld [vmem:[%s273 + $0x12] sm:$0xff]
      %v1188 = vld [vmem:[%s273 + $0x1a] sm:$0xff]
      %v1189 = vld [vmem:[%s273 + $0x22] sm:$0xff]
      %v1190 = vld [vmem:[%s273 + $0x2a] sm:$0xff]
      %v1191 = vld [vmem:[%s273 + $0x32] sm:$0xff]
      %v1192 = vld [vmem:[%s273 + $0x3a] sm:$0xff]
      %v1193 = vld [vmem:[%s273 + $0x42] sm:$0xff]
      %v1194 = vld [vmem:[%s273 + $0x4a] sm:$0xff]
      %v1195 = vld [vmem:[%s273 + $0x52] sm:$0xff]
      %v1196 = vld [vmem:[%s273 + $0x5a] sm:$0xff]
      %v1197 = vld [vmem:[%s273 + $0x62] sm:$0xff]
      %v1198 = vld [vmem:[%s273 + $0x6a] sm:$0xff]
      %v1199 = vld [vmem:[%s273 + $0x72] sm:$0xff]
      %v1200 = vld [vmem:[%s273 + $0x7a] sm:$0xff]
      %v1201 = vld [vmem:[%s273 + $0x82] sm:$0xff]
      %v1202 = vld [vmem:[%s273 + $0x8a] sm:$0xff]
      %v1203 = vld [vmem:[%s273 + $0x92] sm:$0xff]
      %v1204 = vld [vmem:[%s273 + $0x9a] sm:$0xff]
      %v1205 = vld [vmem:[%s273 + $0xa2] sm:$0xff]
      %v1206 = vld [vmem:[%s273 + $0xaa] sm:$0xff]
      %v1207 = vld [vmem:[%s273 + $0xb2] sm:$0xff]
      %v1208 = vld [vmem:[%s273 + $0xba] sm:$0xff]
      %v1209 = vld [vmem:[%s273 + $0xc2] sm:$0xff]
      %v1210 = vld [vmem:[%s273 + $0xca] sm:$0xff]
      %v1211 = vld [vmem:[%s273 + $0xd2] sm:$0xff]
      %v1212 = vld [vmem:[%s273 + $0xda] sm:$0xff]
      %v1213 = vld [vmem:[%s273 + $0xe2] sm:$0xff]
      %v1214 = vld [vmem:[%s273 + $0xea] sm:$0xff]
      %v1215 = vld [vmem:[%s273 + $0xf2] sm:$0xff]
      %v1216 = vld [vmem:[%s273 + $0xfa] sm:$0xff]
      %v1217 = vld [vmem:[%s273 + $0x102] sm:$0xff]
      %v1218 = vld [vmem:[%s273 + $0x10a] sm:$0xff]
      %v1219 = vld [vmem:[%s273 + $0x112] sm:$0xff]
      %v1220 = vld [vmem:[%s273 + $0x11a] sm:$0xff]
      %v1221 = vld [vmem:[%s273 + $0x122] sm:$0xff]
      %v1222 = vld [vmem:[%s273 + $0x12a] sm:$0xff]
      %v1223 = vpack.c.bf16 %v1188, %v1187
      %v1224 = vpack.c.bf16 %v1190, %v1189
      %v1225 = vpack.c.bf16 %v1192, %v1191
      %v1226 = vpack.c.bf16 %v1194, %v1193
      %v1227 = vpack.c.bf16 %v1196, %v1195
      %v1228 = vpack.c.bf16 %v1198, %v1197
      %v1229 = vpack.c.bf16 %v1200, %v1199
      %v1230 = vpack.c.bf16 %v1202, %v1201
      %v1231 = vpack.c.bf16 %v1204, %v1203
      %v1232 = vpack.c.bf16 %v1206, %v1205
      %v1233 = vpack.c.bf16 %v1208, %v1207
      %v1234 = vpack.c.bf16 %v1210, %v1209
      %v1235 = vpack.c.bf16 %v1212, %v1211
      %v1236 = vpack.c.bf16 %v1214, %v1213
      %v1237 = vpack.c.bf16 %v1216, %v1215
      %v1238 = vpack.c.bf16 %v1218, %v1217
      %v1239 = vpack.c.bf16 %v1220, %v1219
      %v1240 = vpack.c.bf16 %v1222, %v1221
      %s1241 = scalar_lea.vmem %s1, 6
      %v1242 = vld [vmem:[%s1241] sm:$0x3]
      %v1244 = vsel %vm391, %v1223, 0
      %v1247 = vsel %vm391, %v1224, 0
      %v1250 = vsel %vm391, %v1225, 0
      %v1253 = vsel %vm391, %v1226, 0
      %v1256 = vsel %vm391, %v1227, 0
      %v1259 = vsel %vm391, %v1228, 0
      %v1262 = vsel %vm391, %v1229, 0
      %v1265 = vsel %vm391, %v1230, 0
      %v1268 = vsel %vm391, %v1231, 0
      %v1271 = vsel %vm391, %v1232, 0
      %v1274 = vsel %vm391, %v1233, 0
      %v1277 = vsel %vm391, %v1234, 0
      %v1280 = vsel %vm391, %v1235, 0
      %v1283 = vsel %vm391, %v1236, 0
      %v1286 = vsel %vm391, %v1237, 0
      %v1289 = vsel %vm391, %v1238, 0
      %v1292 = vsel %vm391, %v1239, 0
      %v1295 = vsel %vm391, %v1240, 0
      %v1298 = vsel %vm446, %v1242, 0
      %1300 = vmatprep.subr.bf16.mxu0 0
      %1301 = vmatpush1.bf16.msra.mxu0 %v1298
      %1302 = vmatprep.subr.bf16.mxu0 0
      %1303 = vmatpush1.bf16.msra.mxu0 0
      %1304 = vmatprep.subr.bf16.mxu0 0
      %1305 = vmatpush1.bf16.msra.mxu0 0
      %1306 = vmatprep.subr.bf16.mxu0 0
      %1307 = vmatpush1.bf16.msra.mxu0 0
      %1308 = vmatprep.subr.bf16.mxu0 0
      %1309 = vmatpush1.bf16.msra.mxu0 0
      %1310 = vmatprep.subr.bf16.mxu0 0
      %1311 = vmatpush1.bf16.msra.mxu0 0
      %1312 = vmatprep.subr.bf16.mxu0 0
      %1313 = vmatpush1.bf16.msra.mxu0 0
      %1314 = vmatprep.subr.bf16.mxu0 0
      %1315 = vmatpush1.bf16.msra.mxu0 0
      %1316 = vmatprep.subr.bf16.mxu0 0
      %1317 = vmatpush1.bf16.msra.mxu0 0
      %1318 = vmatprep.subr.bf16.mxu0 0
      %1319 = vmatpush1.bf16.msra.mxu0 0
      %1320 = vmatprep.subr.bf16.mxu0 0
      %1321 = vmatpush1.bf16.msra.mxu0 0
      %1322 = vmatprep.subr.bf16.mxu0 0
      %1323 = vmatpush1.bf16.msra.mxu0 0
      %1324 = vmatprep.subr.bf16.mxu0 0
      %1325 = vmatpush1.bf16.msra.mxu0 0
      %1326 = vmatprep.subr.bf16.mxu0 0
      %1327 = vmatpush1.bf16.msra.mxu0 0
      %1328 = vmatprep.subr.bf16.mxu0 0
      %1329 = vmatpush1.bf16.msra.mxu0 0
      %1330 = vmatprep.subr.bf16.mxu0 0
      %1331 = vmatpush1.bf16.msra.mxu0 0
      %1332 = vmatprep.mubr.bf16.mxu0 0
      %1333 = vmatmul.mubr.bf16.gmra.mrb[0].mxu0 %v1244
      %v1334 = vpop.f32.mrb[0].mxu0
      %v1335 = vadd.f32 0.0, %v1334
      %v1336 = vpop.f32.mrb[0].mxu0
      %v1337 = vpop.f32.mrb[0].mxu0
      %v1338 = vadd.f32 0.0, %v1337
      %v1339 = vpop.f32.mrb[0].mxu0
      %1340 = vmatprep.mubr.bf16.mxu0 0
      %1341 = vmatmul.mubr.bf16.gmra.mrb[0].mxu0 %v1247
      %v1342 = vpop.f32.mrb[0].mxu0
      %v1343 = vadd.f32 0.0, %v1342
      %v1344 = vpop.f32.mrb[0].mxu0
      %v1345 = vpop.f32.mrb[0].mxu0
      %v1346 = vadd.f32 0.0, %v1345
      %v1347 = vpop.f32.mrb[0].mxu0
      %1348 = vmatprep.mubr.bf16.mxu0 0
      %1349 = vmatmul.mubr.bf16.gmra.mrb[0].mxu0 %v1250
      %v1350 = vpop.f32.mrb[0].mxu0
      %v1351 = vadd.f32 0.0, %v1350
      %v1352 = vpop.f32.mrb[0].mxu0
      %v1353 = vpop.f32.mrb[0].mxu0
      %v1354 = vadd.f32 0.0, %v1353
      %v1355 = vpop.f32.mrb[0].mxu0
      %1356 = vmatprep.mubr.bf16.mxu0 0
      %1357 = vmatmul.mubr.bf16.gmra.mrb[0].mxu0 %v1253
      %v1358 = vpop.f32.mrb[0].mxu0
      %v1359 = vadd.f32 0.0, %v1358
      %v1360 = vpop.f32.mrb[0].mxu0
      %v1361 = vpop.f32.mrb[0].mxu0
      %v1362 = vadd.f32 0.0, %v1361
      %v1363 = vpop.f32.mrb[0].mxu0
      %1364 = vmatprep.mubr.bf16.mxu0 0
      %1365 = vmatmul.mubr.bf16.gmra.mrb[0].mxu0 %v1256
      %v1366 = vpop.f32.mrb[0].mxu0
      %v1367 = vadd.f32 0.0, %v1366
      %v1368 = vpop.f32.mrb[0].mxu0
      %v1369 = vpop.f32.mrb[0].mxu0
      %v1370 = vadd.f32 0.0, %v1369
      %v1371 = vpop.f32.mrb[0].mxu0
      %1372 = vmatprep.mubr.bf16.mxu0 0
      %1373 = vmatmul.mubr.bf16.gmra.mrb[0].mxu0 %v1259
      %v1374 = vpop.f32.mrb[0].mxu0
      %v1375 = vadd.f32 0.0, %v1374
      %v1376 = vpop.f32.mrb[0].mxu0
      %v1377 = vpop.f32.mrb[0].mxu0
      %v1378 = vadd.f32 0.0, %v1377
      %v1379 = vpop.f32.mrb[0].mxu0
      %1380 = vmatprep.mubr.bf16.mxu0 0
      %1381 = vmatmul.mubr.bf16.gmra.mrb[0].mxu0 %v1262
      %v1382 = vpop.f32.mrb[0].mxu0
      %v1383 = vadd.f32 0.0, %v1382
      %v1384 = vpop.f32.mrb[0].mxu0
      %v1385 = vpop.f32.mrb[0].mxu0
      %v1386 = vadd.f32 0.0, %v1385
      %v1387 = vpop.f32.mrb[0].mxu0
      %1388 = vmatprep.mubr.bf16.mxu0 0
      %1389 = vmatmul.mubr.bf16.gmra.mrb[0].mxu0 %v1265
      %v1390 = vpop.f32.mrb[0].mxu0
      %v1391 = vadd.f32 0.0, %v1390
      %v1392 = vpop.f32.mrb[0].mxu0
      %v1393 = vpop.f32.mrb[0].mxu0
      %v1394 = vadd.f32 0.0, %v1393
      %v1395 = vpop.f32.mrb[0].mxu0
      %1396 = vmatprep.mubr.bf16.mxu0 0
      %1397 = vmatmul.mubr.bf16.gmra.mrb[0].mxu0 %v1268
      %v1398 = vpop.f32.mrb[0].mxu0
      %v1399 = vadd.f32 0.0, %v1398
      %v1400 = vpop.f32.mrb[0].mxu0
      %v1401 = vpop.f32.mrb[0].mxu0
      %v1402 = vadd.f32 0.0, %v1401
      %v1403 = vpop.f32.mrb[0].mxu0
      %1404 = vmatprep.mubr.bf16.mxu0 0
      %1405 = vmatmul.mubr.bf16.gmra.mrb[0].mxu0 %v1271
      %v1406 = vpop.f32.mrb[0].mxu0
      %v1407 = vadd.f32 0.0, %v1406
      %v1408 = vpop.f32.mrb[0].mxu0
      %v1409 = vpop.f32.mrb[0].mxu0
      %v1410 = vadd.f32 0.0, %v1409
      %v1411 = vpop.f32.mrb[0].mxu0
      %1412 = vmatprep.mubr.bf16.mxu0 0
      %1413 = vmatmul.mubr.bf16.gmra.mrb[0].mxu0 %v1274
      %v1414 = vpop.f32.mrb[0].mxu0
      %v1415 = vadd.f32 0.0, %v1414
      %v1416 = vpop.f32.mrb[0].mxu0
      %v1417 = vpop.f32.mrb[0].mxu0
      %v1418 = vadd.f32 0.0, %v1417
      %v1419 = vpop.f32.mrb[0].mxu0
      %1420 = vmatprep.mubr.bf16.mxu0 0
      %1421 = vmatmul.mubr.bf16.gmra.mrb[0].mxu0 %v1277
      %v1422 = vpop.f32.mrb[0].mxu0
      %v1423 = vadd.f32 0.0, %v1422
      %v1424 = vpop.f32.mrb[0].mxu0
      %v1425 = vpop.f32.mrb[0].mxu0
      %v1426 = vadd.f32 0.0, %v1425
      %v1427 = vpop.f32.mrb[0].mxu0
      %1428 = vmatprep.mubr.bf16.mxu0 0
      %1429 = vmatmul.mubr.bf16.gmra.mrb[0].mxu0 %v1280
      %v1430 = vpop.f32.mrb[0].mxu0
      %v1431 = vadd.f32 0.0, %v1430
      %v1432 = vpop.f32.mrb[0].mxu0
      %v1433 = vpop.f32.mrb[0].mxu0
      %v1434 = vadd.f32 0.0, %v1433
      %v1435 = vpop.f32.mrb[0].mxu0
      %1436 = vmatprep.mubr.bf16.mxu0 0
      %1437 = vmatmul.mubr.bf16.gmra.mrb[0].mxu0 %v1283
      %v1438 = vpop.f32.mrb[0].mxu0
      %v1439 = vadd.f32 0.0, %v1438
      %v1440 = vpop.f32.mrb[0].mxu0
      %v1441 = vpop.f32.mrb[0].mxu0
      %v1442 = vadd.f32 0.0, %v1441
      %v1443 = vpop.f32.mrb[0].mxu0
      %1444 = vmatprep.mubr.bf16.mxu0 0
      %1445 = vmatmul.mubr.bf16.gmra.mrb[0].mxu0 %v1286
      %v1446 = vpop.f32.mrb[0].mxu0
      %v1447 = vadd.f32 0.0, %v1446
      %v1448 = vpop.f32.mrb[0].mxu0
      %v1449 = vpop.f32.mrb[0].mxu0
      %v1450 = vadd.f32 0.0, %v1449
      %v1451 = vpop.f32.mrb[0].mxu0
      %1452 = vmatprep.mubr.bf16.mxu0 0
      %1453 = vmatmul.mubr.bf16.gmra.mrb[0].mxu0 %v1289
      %v1454 = vpop.f32.mrb[0].mxu0
      %v1455 = vadd.f32 0.0, %v1454
      %v1456 = vpop.f32.mrb[0].mxu0
      %v1457 = vpop.f32.mrb[0].mxu0
      %v1458 = vadd.f32 0.0, %v1457
      %v1459 = vpop.f32.mrb[0].mxu0
      %1460 = vmatprep.mubr.bf16.mxu0 0
      %1461 = vmatmul.mubr.bf16.gmra.mrb[0].mxu0 %v1292
      %v1462 = vpop.f32.mrb[0].mxu0
      %v1463 = vadd.f32 0.0, %v1462
      %v1464 = vpop.f32.mrb[0].mxu0
      %v1465 = vpop.f32.mrb[0].mxu0
      %v1466 = vadd.f32 0.0, %v1465
      %v1467 = vpop.f32.mrb[0].mxu0
      %1468 = vmatprep.mubr.bf16.mxu0 0
      %1469 = vmatmul.mubr.bf16.gmra.mrb[0].mxu0 %v1295
      %v1470 = vpop.f32.mrb[0].mxu0
      %v1471 = vadd.f32 0.0, %v1470
      %v1472 = vpop.f32.mrb[0].mxu0
      %v1473 = vpop.f32.mrb[0].mxu0
      %v1474 = vadd.f32 0.0, %v1473
      %v1475 = vpop.f32.mrb[0].mxu0
      %1476 = vdwg.mxu0
      %v1477 = vadd.f32 %v1151, %v1335
      %v1478 = vadd.f32 %v1152, %v1338
      %v1479 = vadd.f32 %v1153, %v1343
      %v1480 = vadd.f32 %v1154, %v1346
      %v1481 = vadd.f32 %v1155, %v1351
      %v1482 = vadd.f32 %v1156, %v1354
      %v1483 = vadd.f32 %v1157, %v1359
      %v1484 = vadd.f32 %v1158, %v1362
      %v1485 = vadd.f32 %v1159, %v1367
      %v1486 = vadd.f32 %v1160, %v1370
      %v1487 = vadd.f32 %v1161, %v1375
      %v1488 = vadd.f32 %v1162, %v1378
      %v1489 = vadd.f32 %v1163, %v1383
      %v1490 = vadd.f32 %v1164, %v1386
      %v1491 = vadd.f32 %v1165, %v1391
      %v1492 = vadd.f32 %v1166, %v1394
      %v1493 = vadd.f32 %v1167, %v1399
      %v1494 = vadd.f32 %v1168, %v1402
      %v1495 = vadd.f32 %v1169, %v1407
      %v1496 = vadd.f32 %v1170, %v1410
      %v1497 = vadd.f32 %v1171, %v1415
      %v1498 = vadd.f32 %v1172, %v1418
      %v1499 = vadd.f32 %v1173, %v1423
      %v1500 = vadd.f32 %v1174, %v1426
      %v1501 = vadd.f32 %v1175, %v1431
      %v1502 = vadd.f32 %v1176, %v1434
      %v1503 = vadd.f32 %v1177, %v1439
      %v1504 = vadd.f32 %v1178, %v1442
      %v1505 = vadd.f32 %v1179, %v1447
      %v1506 = vadd.f32 %v1180, %v1450
      %v1507 = vadd.f32 %v1181, %v1455
      %v1508 = vadd.f32 %v1182, %v1458
      %v1509 = vadd.f32 %v1183, %v1463
      %v1510 = vadd.f32 %v1184, %v1466
      %v1511 = vadd.f32 %v1185, %v1471
      %v1512 = vadd.f32 %v1186, %v1474
      %v1513 = vld [vmem:[%s273 + $0x13] sm:$0xff]
      %v1514 = vld [vmem:[%s273 + $0x1b] sm:$0xff]
      %v1515 = vld [vmem:[%s273 + $0x23] sm:$0xff]
      %v1516 = vld [vmem:[%s273 + $0x2b] sm:$0xff]
      %v1517 = vld [vmem:[%s273 + $0x33] sm:$0xff]
      %v1518 = vld [vmem:[%s273 + $0x3b] sm:$0xff]
      %v1519 = vld [vmem:[%s273 + $0x43] sm:$0xff]
      %v1520 = vld [vmem:[%s273 + $0x4b] sm:$0xff]
      %v1521 = vld [vmem:[%s273 + $0x53] sm:$0xff]
      %v1522 = vld [vmem:[%s273 + $0x5b] sm:$0xff]
      %v1523 = vld [vmem:[%s273 + $0x63] sm:$0xff]
      %v1524 = vld [vmem:[%s273 + $0x6b] sm:$0xff]
      %v1525 = vld [vmem:[%s273 + $0x73] sm:$0xff]
      %v1526 = vld [vmem:[%s273 + $0x7b] sm:$0xff]
      %v1527 = vld [vmem:[%s273 + $0x83] sm:$0xff]
      %v1528 = vld [vmem:[%s273 + $0x8b] sm:$0xff]
      %v1529 = vld [vmem:[%s273 + $0x93] sm:$0xff]
      %v1530 = vld [vmem:[%s273 + $0x9b] sm:$0xff]
      %v1531 = vld [vmem:[%s273 + $0xa3] sm:$0xff]
      %v1532 = vld [vmem:[%s273 + $0xab] sm:$0xff]
      %v1533 = vld [vmem:[%s273 + $0xb3] sm:$0xff]
      %v1534 = vld [vmem:[%s273 + $0xbb] sm:$0xff]
      %v1535 = vld [vmem:[%s273 + $0xc3] sm:$0xff]
      %v1536 = vld [vmem:[%s273 + $0xcb] sm:$0xff]
      %v1537 = vld [vmem:[%s273 + $0xd3] sm:$0xff]
      %v1538 = vld [vmem:[%s273 + $0xdb] sm:$0xff]
      %v1539 = vld [vmem:[%s273 + $0xe3] sm:$0xff]
      %v1540 = vld [vmem:[%s273 + $0xeb] sm:$0xff]
      %v1541 = vld [vmem:[%s273 + $0xf3] sm:$0xff]
      %v1542 = vld [vmem:[%s273 + $0xfb] sm:$0xff]
      %v1543 = vld [vmem:[%s273 + $0x103] sm:$0xff]
      %v1544 = vld [vmem:[%s273 + $0x10b] sm:$0xff]
      %v1545 = vld [vmem:[%s273 + $0x113] sm:$0xff]
      %v1546 = vld [vmem:[%s273 + $0x11b] sm:$0xff]
      %v1547 = vld [vmem:[%s273 + $0x123] sm:$0xff]
      %v1548 = vld [vmem:[%s273 + $0x12b] sm:$0xff]
      %v1549 = vpack.c.bf16 %v1514, %v1513
      %v1550 = vpack.c.bf16 %v1516, %v1515
      %v1551 = vpack.c.bf16 %v1518, %v1517
      %v1552 = vpack.c.bf16 %v1520, %v1519
      %v1553 = vpack.c.bf16 %v1522, %v1521
      %v1554 = vpack.c.bf16 %v1524, %v1523
      %v1555 = vpack.c.bf16 %v1526, %v1525
      %v1556 = vpack.c.bf16 %v1528, %v1527
      %v1557 = vpack.c.bf16 %v1530, %v1529
      %v1558 = vpack.c.bf16 %v1532, %v1531
      %v1559 = vpack.c.bf16 %v1534, %v1533
      %v1560 = vpack.c.bf16 %v1536, %v1535
      %v1561 = vpack.c.bf16 %v1538, %v1537
      %v1562 = vpack.c.bf16 %v1540, %v1539
      %v1563 = vpack.c.bf16 %v1542, %v1541
      %v1564 = vpack.c.bf16 %v1544, %v1543
      %v1565 = vpack.c.bf16 %v1546, %v1545
      %v1566 = vpack.c.bf16 %v1548, %v1547
      %s1567 = scalar_lea.vmem %s1, 8
      %v1568 = vld [vmem:[%s1567] sm:$0x3]
      %v1570 = vsel %vm391, %v1549, 0
      %v1573 = vsel %vm391, %v1550, 0
      %v1576 = vsel %vm391, %v1551, 0
      %v1579 = vsel %vm391, %v1552, 0
      %v1582 = vsel %vm391, %v1553, 0
      %v1585 = vsel %vm391, %v1554, 0
      %v1588 = vsel %vm391, %v1555, 0
      %v1591 = vsel %vm391, %v1556, 0
      %v1594 = vsel %vm391, %v1557, 0
      %v1597 = vsel %vm391, %v1558, 0
      %v1600 = vsel %vm391, %v1559, 0
      %v1603 = vsel %vm391, %v1560, 0
      %v1606 = vsel %vm391, %v1561, 0
      %v1609 = vsel %vm391, %v1562, 0
      %v1612 = vsel %vm391, %v1563, 0
      %v1615 = vsel %vm391, %v1564, 0
      %v1618 = vsel %vm391, %v1565, 0
      %v1621 = vsel %vm391, %v1566, 0
      %v1624 = vsel %vm446, %v1568, 0
      %1626 = vmatprep.subr.bf16.mxu0 0
      %1627 = vmatpush1.bf16.msra.mxu0 %v1624
      %1628 = vmatprep.subr.bf16.mxu0 0
      %1629 = vmatpush1.bf16.msra.mxu0 0
      %1630 = vmatprep.subr.bf16.mxu0 0
      %1631 = vmatpush1.bf16.msra.mxu0 0
      %1632 = vmatprep.subr.bf16.mxu0 0
      %1633 = vmatpush1.bf16.msra.mxu0 0
      %1634 = vmatprep.subr.bf16.mxu0 0
      %1635 = vmatpush1.bf16.msra.mxu0 0
      %1636 = vmatprep.subr.bf16.mxu0 0
      %1637 = vmatpush1.bf16.msra.mxu0 0
      %1638 = vmatprep.subr.bf16.mxu0 0
      %1639 = vmatpush1.bf16.msra.mxu0 0
      %1640 = vmatprep.subr.bf16.mxu0 0
      %1641 = vmatpush1.bf16.msra.mxu0 0
      %1642 = vmatprep.subr.bf16.mxu0 0
      %1643 = vmatpush1.bf16.msra.mxu0 0
      %1644 = vmatprep.subr.bf16.mxu0 0
      %1645 = vmatpush1.bf16.msra.mxu0 0
      %1646 = vmatprep.subr.bf16.mxu0 0
      %1647 = vmatpush1.bf16.msra.mxu0 0
      %1648 = vmatprep.subr.bf16.mxu0 0
      %1649 = vmatpush1.bf16.msra.mxu0 0
      %1650 = vmatprep.subr.bf16.mxu0 0
      %1651 = vmatpush1.bf16.msra.mxu0 0
      %1652 = vmatprep.subr.bf16.mxu0 0
      %1653 = vmatpush1.bf16.msra.mxu0 0
      %1654 = vmatprep.subr.bf16.mxu0 0
      %1655 = vmatpush1.bf16.msra.mxu0 0
      %1656 = vmatprep.subr.bf16.mxu0 0
      %1657 = vmatpush1.bf16.msra.mxu0 0
      %1658 = vmatprep.mubr.bf16.mxu0 0
      %1659 = vmatmul.mubr.bf16.gmra.mrb[0].mxu0 %v1570
      %v1660 = vpop.f32.mrb[0].mxu0
      %v1661 = vadd.f32 0.0, %v1660
      %v1662 = vpop.f32.mrb[0].mxu0
      %v1663 = vpop.f32.mrb[0].mxu0
      %v1664 = vadd.f32 0.0, %v1663
      %v1665 = vpop.f32.mrb[0].mxu0
      %1666 = vmatprep.mubr.bf16.mxu0 0
      %1667 = vmatmul.mubr.bf16.gmra.mrb[0].mxu0 %v1573
      %v1668 = vpop.f32.mrb[0].mxu0
      %v1669 = vadd.f32 0.0, %v1668
      %v1670 = vpop.f32.mrb[0].mxu0
      %v1671 = vpop.f32.mrb[0].mxu0
      %v1672 = vadd.f32 0.0, %v1671
      %v1673 = vpop.f32.mrb[0].mxu0
      %1674 = vmatprep.mubr.bf16.mxu0 0
      %1675 = vmatmul.mubr.bf16.gmra.mrb[0].mxu0 %v1576
      %v1676 = vpop.f32.mrb[0].mxu0
      %v1677 = vadd.f32 0.0, %v1676
      %v1678 = vpop.f32.mrb[0].mxu0
      %v1679 = vpop.f32.mrb[0].mxu0
      %v1680 = vadd.f32 0.0, %v1679
      %v1681 = vpop.f32.mrb[0].mxu0
      %1682 = vmatprep.mubr.bf16.mxu0 0
      %1683 = vmatmul.mubr.bf16.gmra.mrb[0].mxu0 %v1579
      %v1684 = vpop.f32.mrb[0].mxu0
      %v1685 = vadd.f32 0.0, %v1684
      %v1686 = vpop.f32.mrb[0].mxu0
      %v1687 = vpop.f32.mrb[0].mxu0
      %v1688 = vadd.f32 0.0, %v1687
      %v1689 = vpop.f32.mrb[0].mxu0
      %1690 = vmatprep.mubr.bf16.mxu0 0
      %1691 = vmatmul.mubr.bf16.gmra.mrb[0].mxu0 %v1582
      %v1692 = vpop.f32.mrb[0].mxu0
      %v1693 = vadd.f32 0.0, %v1692
      %v1694 = vpop.f32.mrb[0].mxu0
      %v1695 = vpop.f32.mrb[0].mxu0
      %v1696 = vadd.f32 0.0, %v1695
      %v1697 = vpop.f32.mrb[0].mxu0
      %1698 = vmatprep.mubr.bf16.mxu0 0
      %1699 = vmatmul.mubr.bf16.gmra.mrb[0].mxu0 %v1585
      %v1700 = vpop.f32.mrb[0].mxu0
      %v1701 = vadd.f32 0.0, %v1700
      %v1702 = vpop.f32.mrb[0].mxu0
      %v1703 = vpop.f32.mrb[0].mxu0
      %v1704 = vadd.f32 0.0, %v1703
      %v1705 = vpop.f32.mrb[0].mxu0
      %1706 = vmatprep.mubr.bf16.mxu0 0
      %1707 = vmatmul.mubr.bf16.gmra.mrb[0].mxu0 %v1588
      %v1708 = vpop.f32.mrb[0].mxu0
      %v1709 = vadd.f32 0.0, %v1708
      %v1710 = vpop.f32.mrb[0].mxu0
      %v1711 = vpop.f32.mrb[0].mxu0
      %v1712 = vadd.f32 0.0, %v1711
      %v1713 = vpop.f32.mrb[0].mxu0
      %1714 = vmatprep.mubr.bf16.mxu0 0
      %1715 = vmatmul.mubr.bf16.gmra.mrb[0].mxu0 %v1591
      %v1716 = vpop.f32.mrb[0].mxu0
      %v1717 = vadd.f32 0.0, %v1716
      %v1718 = vpop.f32.mrb[0].mxu0
      %v1719 = vpop.f32.mrb[0].mxu0
      %v1720 = vadd.f32 0.0, %v1719
      %v1721 = vpop.f32.mrb[0].mxu0
      %1722 = vmatprep.mubr.bf16.mxu0 0
      %1723 = vmatmul.mubr.bf16.gmra.mrb[0].mxu0 %v1594
      %v1724 = vpop.f32.mrb[0].mxu0
      %v1725 = vadd.f32 0.0, %v1724
      %v1726 = vpop.f32.mrb[0].mxu0
      %v1727 = vpop.f32.mrb[0].mxu0
      %v1728 = vadd.f32 0.0, %v1727
      %v1729 = vpop.f32.mrb[0].mxu0
      %1730 = vmatprep.mubr.bf16.mxu0 0
      %1731 = vmatmul.mubr.bf16.gmra.mrb[0].mxu0 %v1597
      %v1732 = vpop.f32.mrb[0].mxu0
      %v1733 = vadd.f32 0.0, %v1732
      %v1734 = vpop.f32.mrb[0].mxu0
      %v1735 = vpop.f32.mrb[0].mxu0
      %v1736 = vadd.f32 0.0, %v1735
      %v1737 = vpop.f32.mrb[0].mxu0
      %1738 = vmatprep.mubr.bf16.mxu0 0
      %1739 = vmatmul.mubr.bf16.gmra.mrb[0].mxu0 %v1600
      %v1740 = vpop.f32.mrb[0].mxu0
      %v1741 = vadd.f32 0.0, %v1740
      %v1742 = vpop.f32.mrb[0].mxu0
      %v1743 = vpop.f32.mrb[0].mxu0
      %v1744 = vadd.f32 0.0, %v1743
      %v1745 = vpop.f32.mrb[0].mxu0
      %1746 = vmatprep.mubr.bf16.mxu0 0
      %1747 = vmatmul.mubr.bf16.gmra.mrb[0].mxu0 %v1603
      %v1748 = vpop.f32.mrb[0].mxu0
      %v1749 = vadd.f32 0.0, %v1748
      %v1750 = vpop.f32.mrb[0].mxu0
      %v1751 = vpop.f32.mrb[0].mxu0
      %v1752 = vadd.f32 0.0, %v1751
      %v1753 = vpop.f32.mrb[0].mxu0
      %1754 = vmatprep.mubr.bf16.mxu0 0
      %1755 = vmatmul.mubr.bf16.gmra.mrb[0].mxu0 %v1606
      %v1756 = vpop.f32.mrb[0].mxu0
      %v1757 = vadd.f32 0.0, %v1756
      %v1758 = vpop.f32.mrb[0].mxu0
      %v1759 = vpop.f32.mrb[0].mxu0
      %v1760 = vadd.f32 0.0, %v1759
      %v1761 = vpop.f32.mrb[0].mxu0
      %1762 = vmatprep.mubr.bf16.mxu0 0
      %1763 = vmatmul.mubr.bf16.gmra.mrb[0].mxu0 %v1609
      %v1764 = vpop.f32.mrb[0].mxu0
      %v1765 = vadd.f32 0.0, %v1764
      %v1766 = vpop.f32.mrb[0].mxu0
      %v1767 = vpop.f32.mrb[0].mxu0
      %v1768 = vadd.f32 0.0, %v1767
      %v1769 = vpop.f32.mrb[0].mxu0
      %1770 = vmatprep.mubr.bf16.mxu0 0
      %1771 = vmatmul.mubr.bf16.gmra.mrb[0].mxu0 %v1612
      %v1772 = vpop.f32.mrb[0].mxu0
      %v1773 = vadd.f32 0.0, %v1772
      %v1774 = vpop.f32.mrb[0].mxu0
      %v1775 = vpop.f32.mrb[0].mxu0
      %v1776 = vadd.f32 0.0, %v1775
      %v1777 = vpop.f32.mrb[0].mxu0
      %1778 = vmatprep.mubr.bf16.mxu0 0
      %1779 = vmatmul.mubr.bf16.gmra.mrb[0].mxu0 %v1615
      %v1780 = vpop.f32.mrb[0].mxu0
      %v1781 = vadd.f32 0.0, %v1780
      %v1782 = vpop.f32.mrb[0].mxu0
      %v1783 = vpop.f32.mrb[0].mxu0
      %v1784 = vadd.f32 0.0, %v1783
      %v1785 = vpop.f32.mrb[0].mxu0
      %1786 = vmatprep.mubr.bf16.mxu0 0
      %1787 = vmatmul.mubr.bf16.gmra.mrb[0].mxu0 %v1618
      %v1788 = vpop.f32.mrb[0].mxu0
      %v1789 = vadd.f32 0.0, %v1788
      %v1790 = vpop.f32.mrb[0].mxu0
      %v1791 = vpop.f32.mrb[0].mxu0
      %v1792 = vadd.f32 0.0, %v1791
      %v1793 = vpop.f32.mrb[0].mxu0
      %1794 = vmatprep.mubr.bf16.mxu0 0
      %1795 = vmatmul.mubr.bf16.gmra.mrb[0].mxu0 %v1621
      %v1796 = vpop.f32.mrb[0].mxu0
      %v1797 = vadd.f32 0.0, %v1796
      %v1798 = vpop.f32.mrb[0].mxu0
      %v1799 = vpop.f32.mrb[0].mxu0
      %v1800 = vadd.f32 0.0, %v1799
      %v1801 = vpop.f32.mrb[0].mxu0
      %1802 = vdwg.mxu0
      %v1803 = vadd.f32 %v1477, %v1661
      %v1804 = vadd.f32 %v1478, %v1664
      %v1805 = vadd.f32 %v1479, %v1669
      %v1806 = vadd.f32 %v1480, %v1672
      %v1807 = vadd.f32 %v1481, %v1677
      %v1808 = vadd.f32 %v1482, %v1680
      %v1809 = vadd.f32 %v1483, %v1685
      %v1810 = vadd.f32 %v1484, %v1688
      %v1811 = vadd.f32 %v1485, %v1693
      %v1812 = vadd.f32 %v1486, %v1696
      %v1813 = vadd.f32 %v1487, %v1701
      %v1814 = vadd.f32 %v1488, %v1704
      %v1815 = vadd.f32 %v1489, %v1709
      %v1816 = vadd.f32 %v1490, %v1712
      %v1817 = vadd.f32 %v1491, %v1717
      %v1818 = vadd.f32 %v1492, %v1720
      %v1819 = vadd.f32 %v1493, %v1725
      %v1820 = vadd.f32 %v1494, %v1728
      %v1821 = vadd.f32 %v1495, %v1733
      %v1822 = vadd.f32 %v1496, %v1736
      %v1823 = vadd.f32 %v1497, %v1741
      %v1824 = vadd.f32 %v1498, %v1744
      %v1825 = vadd.f32 %v1499, %v1749
      %v1826 = vadd.f32 %v1500, %v1752
      %v1827 = vadd.f32 %v1501, %v1757
      %v1828 = vadd.f32 %v1502, %v1760
      %v1829 = vadd.f32 %v1503, %v1765
      %v1830 = vadd.f32 %v1504, %v1768
      %v1831 = vadd.f32 %v1505, %v1773
      %v1832 = vadd.f32 %v1506, %v1776
      %v1833 = vadd.f32 %v1507, %v1781
      %v1834 = vadd.f32 %v1508, %v1784
      %v1835 = vadd.f32 %v1509, %v1789
      %v1836 = vadd.f32 %v1510, %v1792
      %v1837 = vadd.f32 %v1511, %v1797
      %v1838 = vadd.f32 %v1512, %v1800
      %v1839 = vld [vmem:[%s273 + $0x14] sm:$0xff]
      %v1840 = vld [vmem:[%s273 + $0x1c] sm:$0xff]
      %v1841 = vld [vmem:[%s273 + $0x24] sm:$0xff]
      %v1842 = vld [vmem:[%s273 + $0x2c] sm:$0xff]
      %v1843 = vld [vmem:[%s273 + $0x34] sm:$0xff]
      %v1844 = vld [vmem:[%s273 + $0x3c] sm:$0xff]
      %v1845 = vld [vmem:[%s273 + $0x44] sm:$0xff]
      %v1846 = vld [vmem:[%s273 + $0x4c] sm:$0xff]
      %v1847 = vld [vmem:[%s273 + $0x54] sm:$0xff]
      %v1848 = vld [vmem:[%s273 + $0x5c] sm:$0xff]
      %v1849 = vld [vmem:[%s273 + $0x64] sm:$0xff]
      %v1850 = vld [vmem:[%s273 + $0x6c] sm:$0xff]
      %v1851 = vld [vmem:[%s273 + $0x74] sm:$0xff]
      %v1852 = vld [vmem:[%s273 + $0x7c] sm:$0xff]
      %v1853 = vld [vmem:[%s273 + $0x84] sm:$0xff]
      %v1854 = vld [vmem:[%s273 + $0x8c] sm:$0xff]
      %v1855 = vld [vmem:[%s273 + $0x94] sm:$0xff]
      %v1856 = vld [vmem:[%s273 + $0x9c] sm:$0xff]
      %v1857 = vld [vmem:[%s273 + $0xa4] sm:$0xff]
      %v1858 = vld [vmem:[%s273 + $0xac] sm:$0xff]
      %v1859 = vld [vmem:[%s273 + $0xb4] sm:$0xff]
      %v1860 = vld [vmem:[%s273 + $0xbc] sm:$0xff]
      %v1861 = vld [vmem:[%s273 + $0xc4] sm:$0xff]
      %v1862 = vld [vmem:[%s273 + $0xcc] sm:$0xff]
      %v1863 = vld [vmem:[%s273 + $0xd4] sm:$0xff]
      %v1864 = vld [vmem:[%s273 + $0xdc] sm:$0xff]
      %v1865 = vld [vmem:[%s273 + $0xe4] sm:$0xff]
      %v1866 = vld [vmem:[%s273 + $0xec] sm:$0xff]
      %v1867 = vld [vmem:[%s273 + $0xf4] sm:$0xff]
      %v1868 = vld [vmem:[%s273 + $0xfc] sm:$0xff]
      %v1869 = vld [vmem:[%s273 + $0x104] sm:$0xff]
      %v1870 = vld [vmem:[%s273 + $0x10c] sm:$0xff]
      %v1871 = vld [vmem:[%s273 + $0x114] sm:$0xff]
      %v1872 = vld [vmem:[%s273 + $0x11c] sm:$0xff]
      %v1873 = vld [vmem:[%s273 + $0x124] sm:$0xff]
      %v1874 = vld [vmem:[%s273 + $0x12c] sm:$0xff]
      %v1875 = vpack.c.bf16 %v1840, %v1839
      %v1876 = vpack.c.bf16 %v1842, %v1841
      %v1877 = vpack.c.bf16 %v1844, %v1843
      %v1878 = vpack.c.bf16 %v1846, %v1845
      %v1879 = vpack.c.bf16 %v1848, %v1847
      %v1880 = vpack.c.bf16 %v1850, %v1849
      %v1881 = vpack.c.bf16 %v1852, %v1851
      %v1882 = vpack.c.bf16 %v1854, %v1853
      %v1883 = vpack.c.bf16 %v1856, %v1855
      %v1884 = vpack.c.bf16 %v1858, %v1857
      %v1885 = vpack.c.bf16 %v1860, %v1859
      %v1886 = vpack.c.bf16 %v1862, %v1861
      %v1887 = vpack.c.bf16 %v1864, %v1863
      %v1888 = vpack.c.bf16 %v1866, %v1865
      %v1889 = vpack.c.bf16 %v1868, %v1867
      %v1890 = vpack.c.bf16 %v1870, %v1869
      %v1891 = vpack.c.bf16 %v1872, %v1871
      %v1892 = vpack.c.bf16 %v1874, %v1873
      %s1893 = scalar_lea.vmem %s1, 10
      %v1894 = vld [vmem:[%s1893] sm:$0x3]
      %v1896 = vsel %vm391, %v1875, 0
      %v1899 = vsel %vm391, %v1876, 0
      %v1902 = vsel %vm391, %v1877, 0
      %v1905 = vsel %vm391, %v1878, 0
      %v1908 = vsel %vm391, %v1879, 0
      %v1911 = vsel %vm391, %v1880, 0
      %v1914 = vsel %vm391, %v1881, 0
      %v1917 = vsel %vm391, %v1882, 0
      %v1920 = vsel %vm391, %v1883, 0
      %v1923 = vsel %vm391, %v1884, 0
      %v1926 = vsel %vm391, %v1885, 0
      %v1929 = vsel %vm391, %v1886, 0
      %v1932 = vsel %vm391, %v1887, 0
      %v1935 = vsel %vm391, %v1888, 0
      %v1938 = vsel %vm391, %v1889, 0
      %v1941 = vsel %vm391, %v1890, 0
      %v1944 = vsel %vm391, %v1891, 0
      %v1947 = vsel %vm391, %v1892, 0
      %v1950 = vsel %vm446, %v1894, 0
      %1952 = vmatprep.subr.bf16.mxu0 0
      %1953 = vmatpush1.bf16.msra.mxu0 %v1950
      %1954 = vmatprep.subr.bf16.mxu0 0
      %1955 = vmatpush1.bf16.msra.mxu0 0
      %1956 = vmatprep.subr.bf16.mxu0 0
      %1957 = vmatpush1.bf16.msra.mxu0 0
      %1958 = vmatprep.subr.bf16.mxu0 0
      %1959 = vmatpush1.bf16.msra.mxu0 0
      %1960 = vmatprep.subr.bf16.mxu0 0
      %1961 = vmatpush1.bf16.msra.mxu0 0
      %1962 = vmatprep.subr.bf16.mxu0 0
      %1963 = vmatpush1.bf16.msra.mxu0 0
      %1964 = vmatprep.subr.bf16.mxu0 0
      %1965 = vmatpush1.bf16.msra.mxu0 0
      %1966 = vmatprep.subr.bf16.mxu0 0
      %1967 = vmatpush1.bf16.msra.mxu0 0
      %1968 = vmatprep.subr.bf16.mxu0 0
      %1969 = vmatpush1.bf16.msra.mxu0 0
      %1970 = vmatprep.subr.bf16.mxu0 0
      %1971 = vmatpush1.bf16.msra.mxu0 0
      %1972 = vmatprep.subr.bf16.mxu0 0
      %1973 = vmatpush1.bf16.msra.mxu0 0
      %1974 = vmatprep.subr.bf16.mxu0 0
      %1975 = vmatpush1.bf16.msra.mxu0 0
      %1976 = vmatprep.subr.bf16.mxu0 0
      %1977 = vmatpush1.bf16.msra.mxu0 0
      %1978 = vmatprep.subr.bf16.mxu0 0
      %1979 = vmatpush1.bf16.msra.mxu0 0
      %1980 = vmatprep.subr.bf16.mxu0 0
      %1981 = vmatpush1.bf16.msra.mxu0 0
      %1982 = vmatprep.subr.bf16.mxu0 0
      %1983 = vmatpush1.bf16.msra.mxu0 0
      %1984 = vmatprep.mubr.bf16.mxu0 0
      %1985 = vmatmul.mubr.bf16.gmra.mrb[0].mxu0 %v1896
      %v1986 = vpop.f32.mrb[0].mxu0
      %v1987 = vadd.f32 0.0, %v1986
      %v1988 = vpop.f32.mrb[0].mxu0
      %v1989 = vpop.f32.mrb[0].mxu0
      %v1990 = vadd.f32 0.0, %v1989
      %v1991 = vpop.f32.mrb[0].mxu0
      %1992 = vmatprep.mubr.bf16.mxu0 0
      %1993 = vmatmul.mubr.bf16.gmra.mrb[0].mxu0 %v1899
      %v1994 = vpop.f32.mrb[0].mxu0
      %v1995 = vadd.f32 0.0, %v1994
      %v1996 = vpop.f32.mrb[0].mxu0
      %v1997 = vpop.f32.mrb[0].mxu0
      %v1998 = vadd.f32 0.0, %v1997
      %v1999 = vpop.f32.mrb[0].mxu0
      %2000 = vmatprep.mubr.bf16.mxu0 0
      %2001 = vmatmul.mubr.bf16.gmra.mrb[0].mxu0 %v1902
      %v2002 = vpop.f32.mrb[0].mxu0
      %v2003 = vadd.f32 0.0, %v2002
      %v2004 = vpop.f32.mrb[0].mxu0
      %v2005 = vpop.f32.mrb[0].mxu0
      %v2006 = vadd.f32 0.0, %v2005
      %v2007 = vpop.f32.mrb[0].mxu0
      %2008 = vmatprep.mubr.bf16.mxu0 0
      %2009 = vmatmul.mubr.bf16.gmra.mrb[0].mxu0 %v1905
      %v2010 = vpop.f32.mrb[0].mxu0
      %v2011 = vadd.f32 0.0, %v2010
      %v2012 = vpop.f32.mrb[0].mxu0
      %v2013 = vpop.f32.mrb[0].mxu0
      %v2014 = vadd.f32 0.0, %v2013
      %v2015 = vpop.f32.mrb[0].mxu0
      %2016 = vmatprep.mubr.bf16.mxu0 0
      %2017 = vmatmul.mubr.bf16.gmra.mrb[0].mxu0 %v1908
      %v2018 = vpop.f32.mrb[0].mxu0
      %v2019 = vadd.f32 0.0, %v2018
      %v2020 = vpop.f32.mrb[0].mxu0
      %v2021 = vpop.f32.mrb[0].mxu0
      %v2022 = vadd.f32 0.0, %v2021
      %v2023 = vpop.f32.mrb[0].mxu0
      %2024 = vmatprep.mubr.bf16.mxu0 0
      %2025 = vmatmul.mubr.bf16.gmra.mrb[0].mxu0 %v1911
      %v2026 = vpop.f32.mrb[0].mxu0
      %v2027 = vadd.f32 0.0, %v2026
      %v2028 = vpop.f32.mrb[0].mxu0
      %v2029 = vpop.f32.mrb[0].mxu0
      %v2030 = vadd.f32 0.0, %v2029
      %v2031 = vpop.f32.mrb[0].mxu0
      %2032 = vmatprep.mubr.bf16.mxu0 0
      %2033 = vmatmul.mubr.bf16.gmra.mrb[0].mxu0 %v1914
      %v2034 = vpop.f32.mrb[0].mxu0
      %v2035 = vadd.f32 0.0, %v2034
      %v2036 = vpop.f32.mrb[0].mxu0
      %v2037 = vpop.f32.mrb[0].mxu0
      %v2038 = vadd.f32 0.0, %v2037
      %v2039 = vpop.f32.mrb[0].mxu0
      %2040 = vmatprep.mubr.bf16.mxu0 0
      %2041 = vmatmul.mubr.bf16.gmra.mrb[0].mxu0 %v1917
      %v2042 = vpop.f32.mrb[0].mxu0
      %v2043 = vadd.f32 0.0, %v2042
      %v2044 = vpop.f32.mrb[0].mxu0
      %v2045 = vpop.f32.mrb[0].mxu0
      %v2046 = vadd.f32 0.0, %v2045
      %v2047 = vpop.f32.mrb[0].mxu0
      %2048 = vmatprep.mubr.bf16.mxu0 0
      %2049 = vmatmul.mubr.bf16.gmra.mrb[0].mxu0 %v1920
      %v2050 = vpop.f32.mrb[0].mxu0
      %v2051 = vadd.f32 0.0, %v2050
      %v2052 = vpop.f32.mrb[0].mxu0
      %v2053 = vpop.f32.mrb[0].mxu0
      %v2054 = vadd.f32 0.0, %v2053
      %v2055 = vpop.f32.mrb[0].mxu0
      %2056 = vmatprep.mubr.bf16.mxu0 0
      %2057 = vmatmul.mubr.bf16.gmra.mrb[0].mxu0 %v1923
      %v2058 = vpop.f32.mrb[0].mxu0
      %v2059 = vadd.f32 0.0, %v2058
      %v2060 = vpop.f32.mrb[0].mxu0
      %v2061 = vpop.f32.mrb[0].mxu0
      %v2062 = vadd.f32 0.0, %v2061
      %v2063 = vpop.f32.mrb[0].mxu0
      %2064 = vmatprep.mubr.bf16.mxu0 0
      %2065 = vmatmul.mubr.bf16.gmra.mrb[0].mxu0 %v1926
      %v2066 = vpop.f32.mrb[0].mxu0
      %v2067 = vadd.f32 0.0, %v2066
      %v2068 = vpop.f32.mrb[0].mxu0
      %v2069 = vpop.f32.mrb[0].mxu0
      %v2070 = vadd.f32 0.0, %v2069
      %v2071 = vpop.f32.mrb[0].mxu0
      %2072 = vmatprep.mubr.bf16.mxu0 0
      %2073 = vmatmul.mubr.bf16.gmra.mrb[0].mxu0 %v1929
      %v2074 = vpop.f32.mrb[0].mxu0
      %v2075 = vadd.f32 0.0, %v2074
      %v2076 = vpop.f32.mrb[0].mxu0
      %v2077 = vpop.f32.mrb[0].mxu0
      %v2078 = vadd.f32 0.0, %v2077
      %v2079 = vpop.f32.mrb[0].mxu0
      %2080 = vmatprep.mubr.bf16.mxu0 0
      %2081 = vmatmul.mubr.bf16.gmra.mrb[0].mxu0 %v1932
      %v2082 = vpop.f32.mrb[0].mxu0
      %v2083 = vadd.f32 0.0, %v2082
      %v2084 = vpop.f32.mrb[0].mxu0
      %v2085 = vpop.f32.mrb[0].mxu0
      %v2086 = vadd.f32 0.0, %v2085
      %v2087 = vpop.f32.mrb[0].mxu0
      %2088 = vmatprep.mubr.bf16.mxu0 0
      %2089 = vmatmul.mubr.bf16.gmra.mrb[0].mxu0 %v1935
      %v2090 = vpop.f32.mrb[0].mxu0
      %v2091 = vadd.f32 0.0, %v2090
      %v2092 = vpop.f32.mrb[0].mxu0
      %v2093 = vpop.f32.mrb[0].mxu0
      %v2094 = vadd.f32 0.0, %v2093
      %v2095 = vpop.f32.mrb[0].mxu0
      %2096 = vmatprep.mubr.bf16.mxu0 0
      %2097 = vmatmul.mubr.bf16.gmra.mrb[0].mxu0 %v1938
      %v2098 = vpop.f32.mrb[0].mxu0
      %v2099 = vadd.f32 0.0, %v2098
      %v2100 = vpop.f32.mrb[0].mxu0
      %v2101 = vpop.f32.mrb[0].mxu0
      %v2102 = vadd.f32 0.0, %v2101
      %v2103 = vpop.f32.mrb[0].mxu0
      %2104 = vmatprep.mubr.bf16.mxu0 0
      %2105 = vmatmul.mubr.bf16.gmra.mrb[0].mxu0 %v1941
      %v2106 = vpop.f32.mrb[0].mxu0
      %v2107 = vadd.f32 0.0, %v2106
      %v2108 = vpop.f32.mrb[0].mxu0
      %v2109 = vpop.f32.mrb[0].mxu0
      %v2110 = vadd.f32 0.0, %v2109
      %v2111 = vpop.f32.mrb[0].mxu0
      %2112 = vmatprep.mubr.bf16.mxu0 0
      %2113 = vmatmul.mubr.bf16.gmra.mrb[0].mxu0 %v1944
      %v2114 = vpop.f32.mrb[0].mxu0
      %v2115 = vadd.f32 0.0, %v2114
      %v2116 = vpop.f32.mrb[0].mxu0
      %v2117 = vpop.f32.mrb[0].mxu0
      %v2118 = vadd.f32 0.0, %v2117
      %v2119 = vpop.f32.mrb[0].mxu0
      %2120 = vmatprep.mubr.bf16.mxu0 0
      %2121 = vmatmul.mubr.bf16.gmra.mrb[0].mxu0 %v1947
      %v2122 = vpop.f32.mrb[0].mxu0
      %v2123 = vadd.f32 0.0, %v2122
      %v2124 = vpop.f32.mrb[0].mxu0
      %v2125 = vpop.f32.mrb[0].mxu0
      %v2126 = vadd.f32 0.0, %v2125
      %v2127 = vpop.f32.mrb[0].mxu0
      %2128 = vdwg.mxu0
      %v2129 = vadd.f32 %v1803, %v1987
      %v2130 = vadd.f32 %v1804, %v1990
      %v2131 = vadd.f32 %v1805, %v1995
      %v2132 = vadd.f32 %v1806, %v1998
      %v2133 = vadd.f32 %v1807, %v2003
      %v2134 = vadd.f32 %v1808, %v2006
      %v2135 = vadd.f32 %v1809, %v2011
      %v2136 = vadd.f32 %v1810, %v2014
      %v2137 = vadd.f32 %v1811, %v2019
      %v2138 = vadd.f32 %v1812, %v2022
      %v2139 = vadd.f32 %v1813, %v2027
      %v2140 = vadd.f32 %v1814, %v2030
      %v2141 = vadd.f32 %v1815, %v2035
      %v2142 = vadd.f32 %v1816, %v2038
      %v2143 = vadd.f32 %v1817, %v2043
      %v2144 = vadd.f32 %v1818, %v2046
      %v2145 = vadd.f32 %v1819, %v2051
      %v2146 = vadd.f32 %v1820, %v2054
      %v2147 = vadd.f32 %v1821, %v2059
      %v2148 = vadd.f32 %v1822, %v2062
      %v2149 = vadd.f32 %v1823, %v2067
      %v2150 = vadd.f32 %v1824, %v2070
      %v2151 = vadd.f32 %v1825, %v2075
      %v2152 = vadd.f32 %v1826, %v2078
      %v2153 = vadd.f32 %v1827, %v2083
      %v2154 = vadd.f32 %v1828, %v2086
      %v2155 = vadd.f32 %v1829, %v2091
      %v2156 = vadd.f32 %v1830, %v2094
      %v2157 = vadd.f32 %v1831, %v2099
      %v2158 = vadd.f32 %v1832, %v2102
      %v2159 = vadd.f32 %v1833, %v2107
      %v2160 = vadd.f32 %v1834, %v2110
      %v2161 = vadd.f32 %v1835, %v2115
      %v2162 = vadd.f32 %v1836, %v2118
      %v2163 = vadd.f32 %v1837, %v2123
      %v2164 = vadd.f32 %v1838, %v2126
      %v2165 = vld [vmem:[%s273 + $0x24] sm:$0xff]
      %v2166 = vld [vmem:[%s273 + $0x2c] sm:$0xff]
      %v2167 = vld [vmem:[%s273 + $0x34] sm:$0xff]
      %v2168 = vld [vmem:[%s273 + $0x3c] sm:$0xff]
      %v2169 = vld [vmem:[%s273 + $0x44] sm:$0xff]
      %v2170 = vld [vmem:[%s273 + $0x4c] sm:$0xff]
      %v2171 = vld [vmem:[%s273 + $0x54] sm:$0xff]
      %v2172 = vld [vmem:[%s273 + $0x5c] sm:$0xff]
      %v2173 = vld [vmem:[%s273 + $0x64] sm:$0xff]
      %v2174 = vld [vmem:[%s273 + $0x6c] sm:$0xff]
      %v2175 = vld [vmem:[%s273 + $0x74] sm:$0xff]
      %v2176 = vld [vmem:[%s273 + $0x7c] sm:$0xff]
      %v2177 = vld [vmem:[%s273 + $0x84] sm:$0xff]
      %v2178 = vld [vmem:[%s273 + $0x8c] sm:$0xff]
      %v2179 = vld [vmem:[%s273 + $0x94] sm:$0xff]
      %v2180 = vld [vmem:[%s273 + $0x9c] sm:$0xff]
      %v2181 = vld [vmem:[%s273 + $0xa4] sm:$0xff]
      %v2182 = vld [vmem:[%s273 + $0xac] sm:$0xff]
      %v2183 = vld [vmem:[%s273 + $0xb4] sm:$0xff]
      %v2184 = vld [vmem:[%s273 + $0xbc] sm:$0xff]
      %v2185 = vld [vmem:[%s273 + $0xc4] sm:$0xff]
      %v2186 = vld [vmem:[%s273 + $0xcc] sm:$0xff]
      %v2187 = vld [vmem:[%s273 + $0xd4] sm:$0xff]
      %v2188 = vld [vmem:[%s273 + $0xdc] sm:$0xff]
      %v2189 = vld [vmem:[%s273 + $0xe4] sm:$0xff]
      %v2190 = vld [vmem:[%s273 + $0xec] sm:$0xff]
      %v2191 = vld [vmem:[%s273 + $0xf4] sm:$0xff]
      %v2192 = vld [vmem:[%s273 + $0xfc] sm:$0xff]
      %v2193 = vld [vmem:[%s273 + $0x104] sm:$0xff]
      %v2194 = vld [vmem:[%s273 + $0x10c] sm:$0xff]
      %v2195 = vld [vmem:[%s273 + $0x114] sm:$0xff]
      %v2196 = vld [vmem:[%s273 + $0x11c] sm:$0xff]
      %v2197 = vld [vmem:[%s273 + $0x124] sm:$0xff]
      %v2198 = vld [vmem:[%s273 + $0x12c] sm:$0xff]
      %v2199 = vld [vmem:[%s273 + $0x134] sm:$0xff]
      %v2200 = vld [vmem:[%s273 + $0x13c] sm:$0xff]
      %v2201 = vpack.c.bf16 %v2166, %v2165
      %v2202 = vpack.c.bf16 %v2168, %v2167
      %v2203 = vpack.c.bf16 %v2170, %v2169
      %v2204 = vpack.c.bf16 %v2172, %v2171
      %v2205 = vpack.c.bf16 %v2174, %v2173
      %v2206 = vpack.c.bf16 %v2176, %v2175
      %v2207 = vpack.c.bf16 %v2178, %v2177
      %v2208 = vpack.c.bf16 %v2180, %v2179
      %v2209 = vpack.c.bf16 %v2182, %v2181
      %v2210 = vpack.c.bf16 %v2184, %v2183
      %v2211 = vpack.c.bf16 %v2186, %v2185
      %v2212 = vpack.c.bf16 %v2188, %v2187
      %v2213 = vpack.c.bf16 %v2190, %v2189
      %v2214 = vpack.c.bf16 %v2192, %v2191
      %v2215 = vpack.c.bf16 %v2194, %v2193
      %v2216 = vpack.c.bf16 %v2196, %v2195
      %v2217 = vpack.c.bf16 %v2198, %v2197
      %v2218 = vpack.c.bf16 %v2200, %v2199
      %s2219 = scalar_lea.vmem %s1, 12
      %v2220 = vld [vmem:[%s2219] sm:$0x3]
      %v2222 = vsel %vm391, %v2201, 0
      %v2225 = vsel %vm391, %v2202, 0
      %v2228 = vsel %vm391, %v2203, 0
      %v2231 = vsel %vm391, %v2204, 0
      %v2234 = vsel %vm391, %v2205, 0
      %v2237 = vsel %vm391, %v2206, 0
      %v2240 = vsel %vm391, %v2207, 0
      %v2243 = vsel %vm391, %v2208, 0
      %v2246 = vsel %vm391, %v2209, 0
      %v2249 = vsel %vm391, %v2210, 0
      %v2252 = vsel %vm391, %v2211, 0
      %v2255 = vsel %vm391, %v2212, 0
      %v2258 = vsel %vm391, %v2213, 0
      %v2261 = vsel %vm391, %v2214, 0
      %v2264 = vsel %vm391, %v2215, 0
      %v2267 = vsel %vm391, %v2216, 0
      %v2270 = vsel %vm391, %v2217, 0
      %v2273 = vsel %vm391, %v2218, 0
      %v2276 = vsel %vm446, %v2220, 0
      %2278 = vmatprep.subr.bf16.mxu0 0
      %2279 = vmatpush1.bf16.msra.mxu0 %v2276
      %2280 = vmatprep.subr.bf16.mxu0 0
      %2281 = vmatpush1.bf16.msra.mxu0 0
      %2282 = vmatprep.subr.bf16.mxu0 0
      %2283 = vmatpush1.bf16.msra.mxu0 0
      %2284 = vmatprep.subr.bf16.mxu0 0
      %2285 = vmatpush1.bf16.msra.mxu0 0
      %2286 = vmatprep.subr.bf16.mxu0 0
      %2287 = vmatpush1.bf16.msra.mxu0 0
      %2288 = vmatprep.subr.bf16.mxu0 0
      %2289 = vmatpush1.bf16.msra.mxu0 0
      %2290 = vmatprep.subr.bf16.mxu0 0
      %2291 = vmatpush1.bf16.msra.mxu0 0
      %2292 = vmatprep.subr.bf16.mxu0 0
      %2293 = vmatpush1.bf16.msra.mxu0 0
      %2294 = vmatprep.subr.bf16.mxu0 0
      %2295 = vmatpush1.bf16.msra.mxu0 0
      %2296 = vmatprep.subr.bf16.mxu0 0
      %2297 = vmatpush1.bf16.msra.mxu0 0
      %2298 = vmatprep.subr.bf16.mxu0 0
      %2299 = vmatpush1.bf16.msra.mxu0 0
      %2300 = vmatprep.subr.bf16.mxu0 0
      %2301 = vmatpush1.bf16.msra.mxu0 0
      %2302 = vmatprep.subr.bf16.mxu0 0
      %2303 = vmatpush1.bf16.msra.mxu0 0
      %2304 = vmatprep.subr.bf16.mxu0 0
      %2305 = vmatpush1.bf16.msra.mxu0 0
      %2306 = vmatprep.subr.bf16.mxu0 0
      %2307 = vmatpush1.bf16.msra.mxu0 0
      %2308 = vmatprep.subr.bf16.mxu0 0
      %2309 = vmatpush1.bf16.msra.mxu0 0
      %2310 = vmatprep.mubr.bf16.mxu0 0
      %2311 = vmatmul.mubr.bf16.gmra.mrb[0].mxu0 %v2222
      %v2312 = vpop.f32.mrb[0].mxu0
      %v2313 = vadd.f32 0.0, %v2312
      %v2314 = vpop.f32.mrb[0].mxu0
      %v2315 = vpop.f32.mrb[0].mxu0
      %v2316 = vadd.f32 0.0, %v2315
      %v2317 = vpop.f32.mrb[0].mxu0
      %2318 = vmatprep.mubr.bf16.mxu0 0
      %2319 = vmatmul.mubr.bf16.gmra.mrb[0].mxu0 %v2225
      %v2320 = vpop.f32.mrb[0].mxu0
      %v2321 = vadd.f32 0.0, %v2320
      %v2322 = vpop.f32.mrb[0].mxu0
      %v2323 = vpop.f32.mrb[0].mxu0
      %v2324 = vadd.f32 0.0, %v2323
      %v2325 = vpop.f32.mrb[0].mxu0
      %2326 = vmatprep.mubr.bf16.mxu0 0
      %2327 = vmatmul.mubr.bf16.gmra.mrb[0].mxu0 %v2228
      %v2328 = vpop.f32.mrb[0].mxu0
      %v2329 = vadd.f32 0.0, %v2328
      %v2330 = vpop.f32.mrb[0].mxu0
      %v2331 = vpop.f32.mrb[0].mxu0
      %v2332 = vadd.f32 0.0, %v2331
      %v2333 = vpop.f32.mrb[0].mxu0
      %2334 = vmatprep.mubr.bf16.mxu0 0
      %2335 = vmatmul.mubr.bf16.gmra.mrb[0].mxu0 %v2231
      %v2336 = vpop.f32.mrb[0].mxu0
      %v2337 = vadd.f32 0.0, %v2336
      %v2338 = vpop.f32.mrb[0].mxu0
      %v2339 = vpop.f32.mrb[0].mxu0
      %v2340 = vadd.f32 0.0, %v2339
      %v2341 = vpop.f32.mrb[0].mxu0
      %2342 = vmatprep.mubr.bf16.mxu0 0
      %2343 = vmatmul.mubr.bf16.gmra.mrb[0].mxu0 %v2234
      %v2344 = vpop.f32.mrb[0].mxu0
      %v2345 = vadd.f32 0.0, %v2344
      %v2346 = vpop.f32.mrb[0].mxu0
      %v2347 = vpop.f32.mrb[0].mxu0
      %v2348 = vadd.f32 0.0, %v2347
      %v2349 = vpop.f32.mrb[0].mxu0
      %2350 = vmatprep.mubr.bf16.mxu0 0
      %2351 = vmatmul.mubr.bf16.gmra.mrb[0].mxu0 %v2237
      %v2352 = vpop.f32.mrb[0].mxu0
      %v2353 = vadd.f32 0.0, %v2352
      %v2354 = vpop.f32.mrb[0].mxu0
      %v2355 = vpop.f32.mrb[0].mxu0
      %v2356 = vadd.f32 0.0, %v2355
      %v2357 = vpop.f32.mrb[0].mxu0
      %2358 = vmatprep.mubr.bf16.mxu0 0
      %2359 = vmatmul.mubr.bf16.gmra.mrb[0].mxu0 %v2240
      %v2360 = vpop.f32.mrb[0].mxu0
      %v2361 = vadd.f32 0.0, %v2360
      %v2362 = vpop.f32.mrb[0].mxu0
      %v2363 = vpop.f32.mrb[0].mxu0
      %v2364 = vadd.f32 0.0, %v2363
      %v2365 = vpop.f32.mrb[0].mxu0
      %2366 = vmatprep.mubr.bf16.mxu0 0
      %2367 = vmatmul.mubr.bf16.gmra.mrb[0].mxu0 %v2243
      %v2368 = vpop.f32.mrb[0].mxu0
      %v2369 = vadd.f32 0.0, %v2368
      %v2370 = vpop.f32.mrb[0].mxu0
      %v2371 = vpop.f32.mrb[0].mxu0
      %v2372 = vadd.f32 0.0, %v2371
      %v2373 = vpop.f32.mrb[0].mxu0
      %2374 = vmatprep.mubr.bf16.mxu0 0
      %2375 = vmatmul.mubr.bf16.gmra.mrb[0].mxu0 %v2246
      %v2376 = vpop.f32.mrb[0].mxu0
      %v2377 = vadd.f32 0.0, %v2376
      %v2378 = vpop.f32.mrb[0].mxu0
      %v2379 = vpop.f32.mrb[0].mxu0
      %v2380 = vadd.f32 0.0, %v2379
      %v2381 = vpop.f32.mrb[0].mxu0
      %2382 = vmatprep.mubr.bf16.mxu0 0
      %2383 = vmatmul.mubr.bf16.gmra.mrb[0].mxu0 %v2249
      %v2384 = vpop.f32.mrb[0].mxu0
      %v2385 = vadd.f32 0.0, %v2384
      %v2386 = vpop.f32.mrb[0].mxu0
      %v2387 = vpop.f32.mrb[0].mxu0
      %v2388 = vadd.f32 0.0, %v2387
      %v2389 = vpop.f32.mrb[0].mxu0
      %2390 = vmatprep.mubr.bf16.mxu0 0
      %2391 = vmatmul.mubr.bf16.gmra.mrb[0].mxu0 %v2252
      %v2392 = vpop.f32.mrb[0].mxu0
      %v2393 = vadd.f32 0.0, %v2392
      %v2394 = vpop.f32.mrb[0].mxu0
      %v2395 = vpop.f32.mrb[0].mxu0
      %v2396 = vadd.f32 0.0, %v2395
      %v2397 = vpop.f32.mrb[0].mxu0
      %2398 = vmatprep.mubr.bf16.mxu0 0
      %2399 = vmatmul.mubr.bf16.gmra.mrb[0].mxu0 %v2255
      %v2400 = vpop.f32.mrb[0].mxu0
      %v2401 = vadd.f32 0.0, %v2400
      %v2402 = vpop.f32.mrb[0].mxu0
      %v2403 = vpop.f32.mrb[0].mxu0
      %v2404 = vadd.f32 0.0, %v2403
      %v2405 = vpop.f32.mrb[0].mxu0
      %2406 = vmatprep.mubr.bf16.mxu0 0
      %2407 = vmatmul.mubr.bf16.gmra.mrb[0].mxu0 %v2258
      %v2408 = vpop.f32.mrb[0].mxu0
      %v2409 = vadd.f32 0.0, %v2408
      %v2410 = vpop.f32.mrb[0].mxu0
      %v2411 = vpop.f32.mrb[0].mxu0
      %v2412 = vadd.f32 0.0, %v2411
      %v2413 = vpop.f32.mrb[0].mxu0
      %2414 = vmatprep.mubr.bf16.mxu0 0
      %2415 = vmatmul.mubr.bf16.gmra.mrb[0].mxu0 %v2261
      %v2416 = vpop.f32.mrb[0].mxu0
      %v2417 = vadd.f32 0.0, %v2416
      %v2418 = vpop.f32.mrb[0].mxu0
      %v2419 = vpop.f32.mrb[0].mxu0
      %v2420 = vadd.f32 0.0, %v2419
      %v2421 = vpop.f32.mrb[0].mxu0
      %2422 = vmatprep.mubr.bf16.mxu0 0
      %2423 = vmatmul.mubr.bf16.gmra.mrb[0].mxu0 %v2264
      %v2424 = vpop.f32.mrb[0].mxu0
      %v2425 = vadd.f32 0.0, %v2424
      %v2426 = vpop.f32.mrb[0].mxu0
      %v2427 = vpop.f32.mrb[0].mxu0
      %v2428 = vadd.f32 0.0, %v2427
      %v2429 = vpop.f32.mrb[0].mxu0
      %2430 = vmatprep.mubr.bf16.mxu0 0
      %2431 = vmatmul.mubr.bf16.gmra.mrb[0].mxu0 %v2267
      %v2432 = vpop.f32.mrb[0].mxu0
      %v2433 = vadd.f32 0.0, %v2432
      %v2434 = vpop.f32.mrb[0].mxu0
      %v2435 = vpop.f32.mrb[0].mxu0
      %v2436 = vadd.f32 0.0, %v2435
      %v2437 = vpop.f32.mrb[0].mxu0
      %2438 = vmatprep.mubr.bf16.mxu0 0
      %2439 = vmatmul.mubr.bf16.gmra.mrb[0].mxu0 %v2270
      %v2440 = vpop.f32.mrb[0].mxu0
      %v2441 = vadd.f32 0.0, %v2440
      %v2442 = vpop.f32.mrb[0].mxu0
      %v2443 = vpop.f32.mrb[0].mxu0
      %v2444 = vadd.f32 0.0, %v2443
      %v2445 = vpop.f32.mrb[0].mxu0
      %2446 = vmatprep.mubr.bf16.mxu0 0
      %2447 = vmatmul.mubr.bf16.gmra.mrb[0].mxu0 %v2273
      %v2448 = vpop.f32.mrb[0].mxu0
      %v2449 = vadd.f32 0.0, %v2448
      %v2450 = vpop.f32.mrb[0].mxu0
      %v2451 = vpop.f32.mrb[0].mxu0
      %v2452 = vadd.f32 0.0, %v2451
      %v2453 = vpop.f32.mrb[0].mxu0
      %2454 = vdwg.mxu0
      %v2455 = vadd.f32 %v2129, %v2313
      %v2456 = vadd.f32 %v2130, %v2316
      %v2457 = vadd.f32 %v2131, %v2321
      %v2458 = vadd.f32 %v2132, %v2324
      %v2459 = vadd.f32 %v2133, %v2329
      %v2460 = vadd.f32 %v2134, %v2332
      %v2461 = vadd.f32 %v2135, %v2337
      %v2462 = vadd.f32 %v2136, %v2340
      %v2463 = vadd.f32 %v2137, %v2345
      %v2464 = vadd.f32 %v2138, %v2348
      %v2465 = vadd.f32 %v2139, %v2353
      %v2466 = vadd.f32 %v2140, %v2356
      %v2467 = vadd.f32 %v2141, %v2361
      %v2468 = vadd.f32 %v2142, %v2364
      %v2469 = vadd.f32 %v2143, %v2369
      %v2470 = vadd.f32 %v2144, %v2372
      %v2471 = vadd.f32 %v2145, %v2377
      %v2472 = vadd.f32 %v2146, %v2380
      %v2473 = vadd.f32 %v2147, %v2385
      %v2474 = vadd.f32 %v2148, %v2388
      %v2475 = vadd.f32 %v2149, %v2393
      %v2476 = vadd.f32 %v2150, %v2396
      %v2477 = vadd.f32 %v2151, %v2401
      %v2478 = vadd.f32 %v2152, %v2404
      %v2479 = vadd.f32 %v2153, %v2409
      %v2480 = vadd.f32 %v2154, %v2412
      %v2481 = vadd.f32 %v2155, %v2417
      %v2482 = vadd.f32 %v2156, %v2420
      %v2483 = vadd.f32 %v2157, %v2425
      %v2484 = vadd.f32 %v2158, %v2428
      %v2485 = vadd.f32 %v2159, %v2433
      %v2486 = vadd.f32 %v2160, %v2436
      %v2487 = vadd.f32 %v2161, %v2441
      %v2488 = vadd.f32 %v2162, %v2444
      %v2489 = vadd.f32 %v2163, %v2449
      %v2490 = vadd.f32 %v2164, %v2452
      %v2491 = vld [vmem:[%s273 + $0x25] sm:$0xff]
      %v2492 = vld [vmem:[%s273 + $0x2d] sm:$0xff]
      %v2493 = vld [vmem:[%s273 + $0x35] sm:$0xff]
      %v2494 = vld [vmem:[%s273 + $0x3d] sm:$0xff]
      %v2495 = vld [vmem:[%s273 + $0x45] sm:$0xff]
      %v2496 = vld [vmem:[%s273 + $0x4d] sm:$0xff]
      %v2497 = vld [vmem:[%s273 + $0x55] sm:$0xff]
      %v2498 = vld [vmem:[%s273 + $0x5d] sm:$0xff]
      %v2499 = vld [vmem:[%s273 + $0x65] sm:$0xff]
      %v2500 = vld [vmem:[%s273 + $0x6d] sm:$0xff]
      %v2501 = vld [vmem:[%s273 + $0x75] sm:$0xff]
      %v2502 = vld [vmem:[%s273 + $0x7d] sm:$0xff]
      %v2503 = vld [vmem:[%s273 + $0x85] sm:$0xff]
      %v2504 = vld [vmem:[%s273 + $0x8d] sm:$0xff]
      %v2505 = vld [vmem:[%s273 + $0x95] sm:$0xff]
      %v2506 = vld [vmem:[%s273 + $0x9d] sm:$0xff]
      %v2507 = vld [vmem:[%s273 + $0xa5] sm:$0xff]
      %v2508 = vld [vmem:[%s273 + $0xad] sm:$0xff]
      %v2509 = vld [vmem:[%s273 + $0xb5] sm:$0xff]
      %v2510 = vld [vmem:[%s273 + $0xbd] sm:$0xff]
      %v2511 = vld [vmem:[%s273 + $0xc5] sm:$0xff]
      %v2512 = vld [vmem:[%s273 + $0xcd] sm:$0xff]
      %v2513 = vld [vmem:[%s273 + $0xd5] sm:$0xff]
      %v2514 = vld [vmem:[%s273 + $0xdd] sm:$0xff]
      %v2515 = vld [vmem:[%s273 + $0xe5] sm:$0xff]
      %v2516 = vld [vmem:[%s273 + $0xed] sm:$0xff]
      %v2517 = vld [vmem:[%s273 + $0xf5] sm:$0xff]
      %v2518 = vld [vmem:[%s273 + $0xfd] sm:$0xff]
      %v2519 = vld [vmem:[%s273 + $0x105] sm:$0xff]
      %v2520 = vld [vmem:[%s273 + $0x10d] sm:$0xff]
      %v2521 = vld [vmem:[%s273 + $0x115] sm:$0xff]
      %v2522 = vld [vmem:[%s273 + $0x11d] sm:$0xff]
      %v2523 = vld [vmem:[%s273 + $0x125] sm:$0xff]
      %v2524 = vld [vmem:[%s273 + $0x12d] sm:$0xff]
      %v2525 = vld [vmem:[%s273 + $0x135] sm:$0xff]
      %v2526 = vld [vmem:[%s273 + $0x13d] sm:$0xff]
      %v2527 = vpack.c.bf16 %v2492, %v2491
      %v2528 = vpack.c.bf16 %v2494, %v2493
      %v2529 = vpack.c.bf16 %v2496, %v2495
      %v2530 = vpack.c.bf16 %v2498, %v2497
      %v2531 = vpack.c.bf16 %v2500, %v2499
      %v2532 = vpack.c.bf16 %v2502, %v2501
      %v2533 = vpack.c.bf16 %v2504, %v2503
      %v2534 = vpack.c.bf16 %v2506, %v2505
      %v2535 = vpack.c.bf16 %v2508, %v2507
      %v2536 = vpack.c.bf16 %v2510, %v2509
      %v2537 = vpack.c.bf16 %v2512, %v2511
      %v2538 = vpack.c.bf16 %v2514, %v2513
      %v2539 = vpack.c.bf16 %v2516, %v2515
      %v2540 = vpack.c.bf16 %v2518, %v2517
      %v2541 = vpack.c.bf16 %v2520, %v2519
      %v2542 = vpack.c.bf16 %v2522, %v2521
      %v2543 = vpack.c.bf16 %v2524, %v2523
      %v2544 = vpack.c.bf16 %v2526, %v2525
      %s2545 = scalar_lea.vmem %s1, 14
      %v2546 = vld [vmem:[%s2545] sm:$0x3]
      %v2548 = vsel %vm391, %v2527, 0
      %v2551 = vsel %vm391, %v2528, 0
      %v2554 = vsel %vm391, %v2529, 0
      %v2557 = vsel %vm391, %v2530, 0
      %v2560 = vsel %vm391, %v2531, 0
      %v2563 = vsel %vm391, %v2532, 0
      %v2566 = vsel %vm391, %v2533, 0
      %v2569 = vsel %vm391, %v2534, 0
      %v2572 = vsel %vm391, %v2535, 0
      %v2575 = vsel %vm391, %v2536, 0
      %v2578 = vsel %vm391, %v2537, 0
      %v2581 = vsel %vm391, %v2538, 0
      %v2584 = vsel %vm391, %v2539, 0
      %v2587 = vsel %vm391, %v2540, 0
      %v2590 = vsel %vm391, %v2541, 0
      %v2593 = vsel %vm391, %v2542, 0
      %v2596 = vsel %vm391, %v2543, 0
      %v2599 = vsel %vm391, %v2544, 0
      %v2602 = vsel %vm446, %v2546, 0
      %2604 = vmatprep.subr.bf16.mxu0 0
      %2605 = vmatpush1.bf16.msra.mxu0 %v2602
      %2606 = vmatprep.subr.bf16.mxu0 0
      %2607 = vmatpush1.bf16.msra.mxu0 0
      %2608 = vmatprep.subr.bf16.mxu0 0
      %2609 = vmatpush1.bf16.msra.mxu0 0
      %2610 = vmatprep.subr.bf16.mxu0 0
      %2611 = vmatpush1.bf16.msra.mxu0 0
      %2612 = vmatprep.subr.bf16.mxu0 0
      %2613 = vmatpush1.bf16.msra.mxu0 0
      %2614 = vmatprep.subr.bf16.mxu0 0
      %2615 = vmatpush1.bf16.msra.mxu0 0
      %2616 = vmatprep.subr.bf16.mxu0 0
      %2617 = vmatpush1.bf16.msra.mxu0 0
      %2618 = vmatprep.subr.bf16.mxu0 0
      %2619 = vmatpush1.bf16.msra.mxu0 0
      %2620 = vmatprep.subr.bf16.mxu0 0
      %2621 = vmatpush1.bf16.msra.mxu0 0
      %2622 = vmatprep.subr.bf16.mxu0 0
      %2623 = vmatpush1.bf16.msra.mxu0 0
      %2624 = vmatprep.subr.bf16.mxu0 0
      %2625 = vmatpush1.bf16.msra.mxu0 0
      %2626 = vmatprep.subr.bf16.mxu0 0
      %2627 = vmatpush1.bf16.msra.mxu0 0
      %2628 = vmatprep.subr.bf16.mxu0 0
      %2629 = vmatpush1.bf16.msra.mxu0 0
      %2630 = vmatprep.subr.bf16.mxu0 0
      %2631 = vmatpush1.bf16.msra.mxu0 0
      %2632 = vmatprep.subr.bf16.mxu0 0
      %2633 = vmatpush1.bf16.msra.mxu0 0
      %2634 = vmatprep.subr.bf16.mxu0 0
      %2635 = vmatpush1.bf16.msra.mxu0 0
      %2636 = vmatprep.mubr.bf16.mxu0 0
      %2637 = vmatmul.mubr.bf16.gmra.mrb[0].mxu0 %v2548
      %v2638 = vpop.f32.mrb[0].mxu0
      %v2639 = vadd.f32 0.0, %v2638
      %v2640 = vpop.f32.mrb[0].mxu0
      %v2641 = vpop.f32.mrb[0].mxu0
      %v2642 = vadd.f32 0.0, %v2641
      %v2643 = vpop.f32.mrb[0].mxu0
      %2644 = vmatprep.mubr.bf16.mxu0 0
      %2645 = vmatmul.mubr.bf16.gmra.mrb[0].mxu0 %v2551
      %v2646 = vpop.f32.mrb[0].mxu0
      %v2647 = vadd.f32 0.0, %v2646
      %v2648 = vpop.f32.mrb[0].mxu0
      %v2649 = vpop.f32.mrb[0].mxu0
      %v2650 = vadd.f32 0.0, %v2649
      %v2651 = vpop.f32.mrb[0].mxu0
      %2652 = vmatprep.mubr.bf16.mxu0 0
      %2653 = vmatmul.mubr.bf16.gmra.mrb[0].mxu0 %v2554
      %v2654 = vpop.f32.mrb[0].mxu0
      %v2655 = vadd.f32 0.0, %v2654
      %v2656 = vpop.f32.mrb[0].mxu0
      %v2657 = vpop.f32.mrb[0].mxu0
      %v2658 = vadd.f32 0.0, %v2657
      %v2659 = vpop.f32.mrb[0].mxu0
      %2660 = vmatprep.mubr.bf16.mxu0 0
      %2661 = vmatmul.mubr.bf16.gmra.mrb[0].mxu0 %v2557
      %v2662 = vpop.f32.mrb[0].mxu0
      %v2663 = vadd.f32 0.0, %v2662
      %v2664 = vpop.f32.mrb[0].mxu0
      %v2665 = vpop.f32.mrb[0].mxu0
      %v2666 = vadd.f32 0.0, %v2665
      %v2667 = vpop.f32.mrb[0].mxu0
      %2668 = vmatprep.mubr.bf16.mxu0 0
      %2669 = vmatmul.mubr.bf16.gmra.mrb[0].mxu0 %v2560
      %v2670 = vpop.f32.mrb[0].mxu0
      %v2671 = vadd.f32 0.0, %v2670
      %v2672 = vpop.f32.mrb[0].mxu0
      %v2673 = vpop.f32.mrb[0].mxu0
      %v2674 = vadd.f32 0.0, %v2673
      %v2675 = vpop.f32.mrb[0].mxu0
      %2676 = vmatprep.mubr.bf16.mxu0 0
      %2677 = vmatmul.mubr.bf16.gmra.mrb[0].mxu0 %v2563
      %v2678 = vpop.f32.mrb[0].mxu0
      %v2679 = vadd.f32 0.0, %v2678
      %v2680 = vpop.f32.mrb[0].mxu0
      %v2681 = vpop.f32.mrb[0].mxu0
      %v2682 = vadd.f32 0.0, %v2681
      %v2683 = vpop.f32.mrb[0].mxu0
      %2684 = vmatprep.mubr.bf16.mxu0 0
      %2685 = vmatmul.mubr.bf16.gmra.mrb[0].mxu0 %v2566
      %v2686 = vpop.f32.mrb[0].mxu0
      %v2687 = vadd.f32 0.0, %v2686
      %v2688 = vpop.f32.mrb[0].mxu0
      %v2689 = vpop.f32.mrb[0].mxu0
      %v2690 = vadd.f32 0.0, %v2689
      %v2691 = vpop.f32.mrb[0].mxu0
      %2692 = vmatprep.mubr.bf16.mxu0 0
      %2693 = vmatmul.mubr.bf16.gmra.mrb[0].mxu0 %v2569
      %v2694 = vpop.f32.mrb[0].mxu0
      %v2695 = vadd.f32 0.0, %v2694
      %v2696 = vpop.f32.mrb[0].mxu0
      %v2697 = vpop.f32.mrb[0].mxu0
      %v2698 = vadd.f32 0.0, %v2697
      %v2699 = vpop.f32.mrb[0].mxu0
      %2700 = vmatprep.mubr.bf16.mxu0 0
      %2701 = vmatmul.mubr.bf16.gmra.mrb[0].mxu0 %v2572
      %v2702 = vpop.f32.mrb[0].mxu0
      %v2703 = vadd.f32 0.0, %v2702
      %v2704 = vpop.f32.mrb[0].mxu0
      %v2705 = vpop.f32.mrb[0].mxu0
      %v2706 = vadd.f32 0.0, %v2705
      %v2707 = vpop.f32.mrb[0].mxu0
      %2708 = vmatprep.mubr.bf16.mxu0 0
      %2709 = vmatmul.mubr.bf16.gmra.mrb[0].mxu0 %v2575
      %v2710 = vpop.f32.mrb[0].mxu0
      %v2711 = vadd.f32 0.0, %v2710
      %v2712 = vpop.f32.mrb[0].mxu0
      %v2713 = vpop.f32.mrb[0].mxu0
      %v2714 = vadd.f32 0.0, %v2713
      %v2715 = vpop.f32.mrb[0].mxu0
      %2716 = vmatprep.mubr.bf16.mxu0 0
      %2717 = vmatmul.mubr.bf16.gmra.mrb[0].mxu0 %v2578
      %v2718 = vpop.f32.mrb[0].mxu0
      %v2719 = vadd.f32 0.0, %v2718
      %v2720 = vpop.f32.mrb[0].mxu0
      %v2721 = vpop.f32.mrb[0].mxu0
      %v2722 = vadd.f32 0.0, %v2721
      %v2723 = vpop.f32.mrb[0].mxu0
      %2724 = vmatprep.mubr.bf16.mxu0 0
      %2725 = vmatmul.mubr.bf16.gmra.mrb[0].mxu0 %v2581
      %v2726 = vpop.f32.mrb[0].mxu0
      %v2727 = vadd.f32 0.0, %v2726
      %v2728 = vpop.f32.mrb[0].mxu0
      %v2729 = vpop.f32.mrb[0].mxu0
      %v2730 = vadd.f32 0.0, %v2729
      %v2731 = vpop.f32.mrb[0].mxu0
      %2732 = vmatprep.mubr.bf16.mxu0 0
      %2733 = vmatmul.mubr.bf16.gmra.mrb[0].mxu0 %v2584
      %v2734 = vpop.f32.mrb[0].mxu0
      %v2735 = vadd.f32 0.0, %v2734
      %v2736 = vpop.f32.mrb[0].mxu0
      %v2737 = vpop.f32.mrb[0].mxu0
      %v2738 = vadd.f32 0.0, %v2737
      %v2739 = vpop.f32.mrb[0].mxu0
      %2740 = vmatprep.mubr.bf16.mxu0 0
      %2741 = vmatmul.mubr.bf16.gmra.mrb[0].mxu0 %v2587
      %v2742 = vpop.f32.mrb[0].mxu0
      %v2743 = vadd.f32 0.0, %v2742
      %v2744 = vpop.f32.mrb[0].mxu0
      %v2745 = vpop.f32.mrb[0].mxu0
      %v2746 = vadd.f32 0.0, %v2745
      %v2747 = vpop.f32.mrb[0].mxu0
      %2748 = vmatprep.mubr.bf16.mxu0 0
      %2749 = vmatmul.mubr.bf16.gmra.mrb[0].mxu0 %v2590
      %v2750 = vpop.f32.mrb[0].mxu0
      %v2751 = vadd.f32 0.0, %v2750
      %v2752 = vpop.f32.mrb[0].mxu0
      %v2753 = vpop.f32.mrb[0].mxu0
      %v2754 = vadd.f32 0.0, %v2753
      %v2755 = vpop.f32.mrb[0].mxu0
      %2756 = vmatprep.mubr.bf16.mxu0 0
      %2757 = vmatmul.mubr.bf16.gmra.mrb[0].mxu0 %v2593
      %v2758 = vpop.f32.mrb[0].mxu0
      %v2759 = vadd.f32 0.0, %v2758
      %v2760 = vpop.f32.mrb[0].mxu0
      %v2761 = vpop.f32.mrb[0].mxu0
      %v2762 = vadd.f32 0.0, %v2761
      %v2763 = vpop.f32.mrb[0].mxu0
      %2764 = vmatprep.mubr.bf16.mxu0 0
      %2765 = vmatmul.mubr.bf16.gmra.mrb[0].mxu0 %v2596
      %v2766 = vpop.f32.mrb[0].mxu0
      %v2767 = vadd.f32 0.0, %v2766
      %v2768 = vpop.f32.mrb[0].mxu0
      %v2769 = vpop.f32.mrb[0].mxu0
      %v2770 = vadd.f32 0.0, %v2769
      %v2771 = vpop.f32.mrb[0].mxu0
      %2772 = vmatprep.mubr.bf16.mxu0 0
      %2773 = vmatmul.mubr.bf16.gmra.mrb[0].mxu0 %v2599
      %v2774 = vpop.f32.mrb[0].mxu0
      %v2775 = vadd.f32 0.0, %v2774
      %v2776 = vpop.f32.mrb[0].mxu0
      %v2777 = vpop.f32.mrb[0].mxu0
      %v2778 = vadd.f32 0.0, %v2777
      %v2779 = vpop.f32.mrb[0].mxu0
      %2780 = vdwg.mxu0
      %v2781 = vadd.f32 %v2455, %v2639
      %v2782 = vadd.f32 %v2456, %v2642
      %v2783 = vadd.f32 %v2457, %v2647
      %v2784 = vadd.f32 %v2458, %v2650
      %v2785 = vadd.f32 %v2459, %v2655
      %v2786 = vadd.f32 %v2460, %v2658
      %v2787 = vadd.f32 %v2461, %v2663
      %v2788 = vadd.f32 %v2462, %v2666
      %v2789 = vadd.f32 %v2463, %v2671
      %v2790 = vadd.f32 %v2464, %v2674
      %v2791 = vadd.f32 %v2465, %v2679
      %v2792 = vadd.f32 %v2466, %v2682
      %v2793 = vadd.f32 %v2467, %v2687
      %v2794 = vadd.f32 %v2468, %v2690
      %v2795 = vadd.f32 %v2469, %v2695
      %v2796 = vadd.f32 %v2470, %v2698
      %v2797 = vadd.f32 %v2471, %v2703
      %v2798 = vadd.f32 %v2472, %v2706
      %v2799 = vadd.f32 %v2473, %v2711
      %v2800 = vadd.f32 %v2474, %v2714
      %v2801 = vadd.f32 %v2475, %v2719
      %v2802 = vadd.f32 %v2476, %v2722
      %v2803 = vadd.f32 %v2477, %v2727
      %v2804 = vadd.f32 %v2478, %v2730
      %v2805 = vadd.f32 %v2479, %v2735
      %v2806 = vadd.f32 %v2480, %v2738
      %v2807 = vadd.f32 %v2481, %v2743
      %v2808 = vadd.f32 %v2482, %v2746
      %v2809 = vadd.f32 %v2483, %v2751
      %v2810 = vadd.f32 %v2484, %v2754
      %v2811 = vadd.f32 %v2485, %v2759
      %v2812 = vadd.f32 %v2486, %v2762
      %v2813 = vadd.f32 %v2487, %v2767
      %v2814 = vadd.f32 %v2488, %v2770
      %v2815 = vadd.f32 %v2489, %v2775
      %v2816 = vadd.f32 %v2490, %v2778
      %v2817 = vld [vmem:[%s273 + $0x26] sm:$0xff]
      %v2818 = vld [vmem:[%s273 + $0x2e] sm:$0xff]
      %v2819 = vld [vmem:[%s273 + $0x36] sm:$0xff]
      %v2820 = vld [vmem:[%s273 + $0x3e] sm:$0xff]
      %v2821 = vld [vmem:[%s273 + $0x46] sm:$0xff]
      %v2822 = vld [vmem:[%s273 + $0x4e] sm:$0xff]
      %v2823 = vld [vmem:[%s273 + $0x56] sm:$0xff]
      %v2824 = vld [vmem:[%s273 + $0x5e] sm:$0xff]
      %v2825 = vld [vmem:[%s273 + $0x66] sm:$0xff]
      %v2826 = vld [vmem:[%s273 + $0x6e] sm:$0xff]
      %v2827 = vld [vmem:[%s273 + $0x76] sm:$0xff]
      %v2828 = vld [vmem:[%s273 + $0x7e] sm:$0xff]
      %v2829 = vld [vmem:[%s273 + $0x86] sm:$0xff]
      %v2830 = vld [vmem:[%s273 + $0x8e] sm:$0xff]
      %v2831 = vld [vmem:[%s273 + $0x96] sm:$0xff]
      %v2832 = vld [vmem:[%s273 + $0x9e] sm:$0xff]
      %v2833 = vld [vmem:[%s273 + $0xa6] sm:$0xff]
      %v2834 = vld [vmem:[%s273 + $0xae] sm:$0xff]
      %v2835 = vld [vmem:[%s273 + $0xb6] sm:$0xff]
      %v2836 = vld [vmem:[%s273 + $0xbe] sm:$0xff]
      %v2837 = vld [vmem:[%s273 + $0xc6] sm:$0xff]
      %v2838 = vld [vmem:[%s273 + $0xce] sm:$0xff]
      %v2839 = vld [vmem:[%s273 + $0xd6] sm:$0xff]
      %v2840 = vld [vmem:[%s273 + $0xde] sm:$0xff]
      %v2841 = vld [vmem:[%s273 + $0xe6] sm:$0xff]
      %v2842 = vld [vmem:[%s273 + $0xee] sm:$0xff]
      %v2843 = vld [vmem:[%s273 + $0xf6] sm:$0xff]
      %v2844 = vld [vmem:[%s273 + $0xfe] sm:$0xff]
      %v2845 = vld [vmem:[%s273 + $0x106] sm:$0xff]
      %v2846 = vld [vmem:[%s273 + $0x10e] sm:$0xff]
      %v2847 = vld [vmem:[%s273 + $0x116] sm:$0xff]
      %v2848 = vld [vmem:[%s273 + $0x11e] sm:$0xff]
      %v2849 = vld [vmem:[%s273 + $0x126] sm:$0xff]
      %v2850 = vld [vmem:[%s273 + $0x12e] sm:$0xff]
      %v2851 = vld [vmem:[%s273 + $0x136] sm:$0xff]
      %v2852 = vld [vmem:[%s273 + $0x13e] sm:$0xff]
      %v2853 = vpack.c.bf16 %v2818, %v2817
      %v2854 = vpack.c.bf16 %v2820, %v2819
      %v2855 = vpack.c.bf16 %v2822, %v2821
      %v2856 = vpack.c.bf16 %v2824, %v2823
      %v2857 = vpack.c.bf16 %v2826, %v2825
      %v2858 = vpack.c.bf16 %v2828, %v2827
      %v2859 = vpack.c.bf16 %v2830, %v2829
      %v2860 = vpack.c.bf16 %v2832, %v2831
      %v2861 = vpack.c.bf16 %v2834, %v2833
      %v2862 = vpack.c.bf16 %v2836, %v2835
      %v2863 = vpack.c.bf16 %v2838, %v2837
      %v2864 = vpack.c.bf16 %v2840, %v2839
      %v2865 = vpack.c.bf16 %v2842, %v2841
      %v2866 = vpack.c.bf16 %v2844, %v2843
      %v2867 = vpack.c.bf16 %v2846, %v2845
      %v2868 = vpack.c.bf16 %v2848, %v2847
      %v2869 = vpack.c.bf16 %v2850, %v2849
      %v2870 = vpack.c.bf16 %v2852, %v2851
      %s2871 = scalar_lea.vmem %s1, 16
      %v2872 = vld [vmem:[%s2871] sm:$0x3]
      %v2874 = vsel %vm391, %v2853, 0
      %v2877 = vsel %vm391, %v2854, 0
      %v2880 = vsel %vm391, %v2855, 0
      %v2883 = vsel %vm391, %v2856, 0
      %v2886 = vsel %vm391, %v2857, 0
      %v2889 = vsel %vm391, %v2858, 0
      %v2892 = vsel %vm391, %v2859, 0
      %v2895 = vsel %vm391, %v2860, 0
      %v2898 = vsel %vm391, %v2861, 0
      %v2901 = vsel %vm391, %v2862, 0
      %v2904 = vsel %vm391, %v2863, 0
      %v2907 = vsel %vm391, %v2864, 0
      %v2910 = vsel %vm391, %v2865, 0
      %v2913 = vsel %vm391, %v2866, 0
      %v2916 = vsel %vm391, %v2867, 0
      %v2919 = vsel %vm391, %v2868, 0
      %v2922 = vsel %vm391, %v2869, 0
      %v2925 = vsel %vm391, %v2870, 0
      %v2928 = vsel %vm446, %v2872, 0
      %2930 = vmatprep.subr.bf16.mxu0 0
      %2931 = vmatpush1.bf16.msra.mxu0 %v2928
      %2932 = vmatprep.subr.bf16.mxu0 0
      %2933 = vmatpush1.bf16.msra.mxu0 0
      %2934 = vmatprep.subr.bf16.mxu0 0
      %2935 = vmatpush1.bf16.msra.mxu0 0
      %2936 = vmatprep.subr.bf16.mxu0 0
      %2937 = vmatpush1.bf16.msra.mxu0 0
      %2938 = vmatprep.subr.bf16.mxu0 0
      %2939 = vmatpush1.bf16.msra.mxu0 0
      %2940 = vmatprep.subr.bf16.mxu0 0
      %2941 = vmatpush1.bf16.msra.mxu0 0
      %2942 = vmatprep.subr.bf16.mxu0 0
      %2943 = vmatpush1.bf16.msra.mxu0 0
      %2944 = vmatprep.subr.bf16.mxu0 0
      %2945 = vmatpush1.bf16.msra.mxu0 0
      %2946 = vmatprep.subr.bf16.mxu0 0
      %2947 = vmatpush1.bf16.msra.mxu0 0
      %2948 = vmatprep.subr.bf16.mxu0 0
      %2949 = vmatpush1.bf16.msra.mxu0 0
      %2950 = vmatprep.subr.bf16.mxu0 0
      %2951 = vmatpush1.bf16.msra.mxu0 0
      %2952 = vmatprep.subr.bf16.mxu0 0
      %2953 = vmatpush1.bf16.msra.mxu0 0
      %2954 = vmatprep.subr.bf16.mxu0 0
      %2955 = vmatpush1.bf16.msra.mxu0 0
      %2956 = vmatprep.subr.bf16.mxu0 0
      %2957 = vmatpush1.bf16.msra.mxu0 0
      %2958 = vmatprep.subr.bf16.mxu0 0
      %2959 = vmatpush1.bf16.msra.mxu0 0
      %2960 = vmatprep.subr.bf16.mxu0 0
      %2961 = vmatpush1.bf16.msra.mxu0 0
      %2962 = vmatprep.mubr.bf16.mxu0 0
      %2963 = vmatmul.mubr.bf16.gmra.mrb[0].mxu0 %v2874
      %v2964 = vpop.f32.mrb[0].mxu0
      %v2965 = vadd.f32 0.0, %v2964
      %v2966 = vpop.f32.mrb[0].mxu0
      %v2967 = vpop.f32.mrb[0].mxu0
      %v2968 = vadd.f32 0.0, %v2967
      %v2969 = vpop.f32.mrb[0].mxu0
      %2970 = vmatprep.mubr.bf16.mxu0 0
      %2971 = vmatmul.mubr.bf16.gmra.mrb[0].mxu0 %v2877
      %v2972 = vpop.f32.mrb[0].mxu0
      %v2973 = vadd.f32 0.0, %v2972
      %v2974 = vpop.f32.mrb[0].mxu0
      %v2975 = vpop.f32.mrb[0].mxu0
      %v2976 = vadd.f32 0.0, %v2975
      %v2977 = vpop.f32.mrb[0].mxu0
      %2978 = vmatprep.mubr.bf16.mxu0 0
      %2979 = vmatmul.mubr.bf16.gmra.mrb[0].mxu0 %v2880
      %v2980 = vpop.f32.mrb[0].mxu0
      %v2981 = vadd.f32 0.0, %v2980
      %v2982 = vpop.f32.mrb[0].mxu0
      %v2983 = vpop.f32.mrb[0].mxu0
      %v2984 = vadd.f32 0.0, %v2983
      %v2985 = vpop.f32.mrb[0].mxu0
      %2986 = vmatprep.mubr.bf16.mxu0 0
      %2987 = vmatmul.mubr.bf16.gmra.mrb[0].mxu0 %v2883
      %v2988 = vpop.f32.mrb[0].mxu0
      %v2989 = vadd.f32 0.0, %v2988
      %v2990 = vpop.f32.mrb[0].mxu0
      %v2991 = vpop.f32.mrb[0].mxu0
      %v2992 = vadd.f32 0.0, %v2991
      %v2993 = vpop.f32.mrb[0].mxu0
      %2994 = vmatprep.mubr.bf16.mxu0 0
      %2995 = vmatmul.mubr.bf16.gmra.mrb[0].mxu0 %v2886
      %v2996 = vpop.f32.mrb[0].mxu0
      %v2997 = vadd.f32 0.0, %v2996
      %v2998 = vpop.f32.mrb[0].mxu0
      %v2999 = vpop.f32.mrb[0].mxu0
      %v3000 = vadd.f32 0.0, %v2999
      %v3001 = vpop.f32.mrb[0].mxu0
      %3002 = vmatprep.mubr.bf16.mxu0 0
      %3003 = vmatmul.mubr.bf16.gmra.mrb[0].mxu0 %v2889
      %v3004 = vpop.f32.mrb[0].mxu0
      %v3005 = vadd.f32 0.0, %v3004
      %v3006 = vpop.f32.mrb[0].mxu0
      %v3007 = vpop.f32.mrb[0].mxu0
      %v3008 = vadd.f32 0.0, %v3007
      %v3009 = vpop.f32.mrb[0].mxu0
      %3010 = vmatprep.mubr.bf16.mxu0 0
      %3011 = vmatmul.mubr.bf16.gmra.mrb[0].mxu0 %v2892
      %v3012 = vpop.f32.mrb[0].mxu0
      %v3013 = vadd.f32 0.0, %v3012
      %v3014 = vpop.f32.mrb[0].mxu0
      %v3015 = vpop.f32.mrb[0].mxu0
      %v3016 = vadd.f32 0.0, %v3015
      %v3017 = vpop.f32.mrb[0].mxu0
      %3018 = vmatprep.mubr.bf16.mxu0 0
      %3019 = vmatmul.mubr.bf16.gmra.mrb[0].mxu0 %v2895
      %v3020 = vpop.f32.mrb[0].mxu0
      %v3021 = vadd.f32 0.0, %v3020
      %v3022 = vpop.f32.mrb[0].mxu0
      %v3023 = vpop.f32.mrb[0].mxu0
      %v3024 = vadd.f32 0.0, %v3023
      %v3025 = vpop.f32.mrb[0].mxu0
      %3026 = vmatprep.mubr.bf16.mxu0 0
      %3027 = vmatmul.mubr.bf16.gmra.mrb[0].mxu0 %v2898
      %v3028 = vpop.f32.mrb[0].mxu0
      %v3029 = vadd.f32 0.0, %v3028
      %v3030 = vpop.f32.mrb[0].mxu0
      %v3031 = vpop.f32.mrb[0].mxu0
      %v3032 = vadd.f32 0.0, %v3031
      %v3033 = vpop.f32.mrb[0].mxu0
      %3034 = vmatprep.mubr.bf16.mxu0 0
      %3035 = vmatmul.mubr.bf16.gmra.mrb[0].mxu0 %v2901
      %v3036 = vpop.f32.mrb[0].mxu0
      %v3037 = vadd.f32 0.0, %v3036
      %v3038 = vpop.f32.mrb[0].mxu0
      %v3039 = vpop.f32.mrb[0].mxu0
      %v3040 = vadd.f32 0.0, %v3039
      %v3041 = vpop.f32.mrb[0].mxu0
      %3042 = vmatprep.mubr.bf16.mxu0 0
      %3043 = vmatmul.mubr.bf16.gmra.mrb[0].mxu0 %v2904
      %v3044 = vpop.f32.mrb[0].mxu0
      %v3045 = vadd.f32 0.0, %v3044
      %v3046 = vpop.f32.mrb[0].mxu0
      %v3047 = vpop.f32.mrb[0].mxu0
      %v3048 = vadd.f32 0.0, %v3047
      %v3049 = vpop.f32.mrb[0].mxu0
      %3050 = vmatprep.mubr.bf16.mxu0 0
      %3051 = vmatmul.mubr.bf16.gmra.mrb[0].mxu0 %v2907
      %v3052 = vpop.f32.mrb[0].mxu0
      %v3053 = vadd.f32 0.0, %v3052
      %v3054 = vpop.f32.mrb[0].mxu0
      %v3055 = vpop.f32.mrb[0].mxu0
      %v3056 = vadd.f32 0.0, %v3055
      %v3057 = vpop.f32.mrb[0].mxu0
      %3058 = vmatprep.mubr.bf16.mxu0 0
      %3059 = vmatmul.mubr.bf16.gmra.mrb[0].mxu0 %v2910
      %v3060 = vpop.f32.mrb[0].mxu0
      %v3061 = vadd.f32 0.0, %v3060
      %v3062 = vpop.f32.mrb[0].mxu0
      %v3063 = vpop.f32.mrb[0].mxu0
      %v3064 = vadd.f32 0.0, %v3063
      %v3065 = vpop.f32.mrb[0].mxu0
      %3066 = vmatprep.mubr.bf16.mxu0 0
      %3067 = vmatmul.mubr.bf16.gmra.mrb[0].mxu0 %v2913
      %v3068 = vpop.f32.mrb[0].mxu0
      %v3069 = vadd.f32 0.0, %v3068
      %v3070 = vpop.f32.mrb[0].mxu0
      %v3071 = vpop.f32.mrb[0].mxu0
      %v3072 = vadd.f32 0.0, %v3071
      %v3073 = vpop.f32.mrb[0].mxu0
      %3074 = vmatprep.mubr.bf16.mxu0 0
      %3075 = vmatmul.mubr.bf16.gmra.mrb[0].mxu0 %v2916
      %v3076 = vpop.f32.mrb[0].mxu0
      %v3077 = vadd.f32 0.0, %v3076
      %v3078 = vpop.f32.mrb[0].mxu0
      %v3079 = vpop.f32.mrb[0].mxu0
      %v3080 = vadd.f32 0.0, %v3079
      %v3081 = vpop.f32.mrb[0].mxu0
      %3082 = vmatprep.mubr.bf16.mxu0 0
      %3083 = vmatmul.mubr.bf16.gmra.mrb[0].mxu0 %v2919
      %v3084 = vpop.f32.mrb[0].mxu0
      %v3085 = vadd.f32 0.0, %v3084
      %v3086 = vpop.f32.mrb[0].mxu0
      %v3087 = vpop.f32.mrb[0].mxu0
      %v3088 = vadd.f32 0.0, %v3087
      %v3089 = vpop.f32.mrb[0].mxu0
      %3090 = vmatprep.mubr.bf16.mxu0 0
      %3091 = vmatmul.mubr.bf16.gmra.mrb[0].mxu0 %v2922
      %v3092 = vpop.f32.mrb[0].mxu0
      %v3093 = vadd.f32 0.0, %v3092
      %v3094 = vpop.f32.mrb[0].mxu0
      %v3095 = vpop.f32.mrb[0].mxu0
      %v3096 = vadd.f32 0.0, %v3095
      %v3097 = vpop.f32.mrb[0].mxu0
      %3098 = vmatprep.mubr.bf16.mxu0 0
      %3099 = vmatmul.mubr.bf16.gmra.mrb[0].mxu0 %v2925
      %v3100 = vpop.f32.mrb[0].mxu0
      %v3101 = vadd.f32 0.0, %v3100
      %v3102 = vpop.f32.mrb[0].mxu0
      %v3103 = vpop.f32.mrb[0].mxu0
      %v3104 = vadd.f32 0.0, %v3103
      %v3105 = vpop.f32.mrb[0].mxu0
      %3106 = vdwg.mxu0
      %v3107 = vadd.f32 %v2781, %v2965
      %v3108 = vadd.f32 %v2782, %v2968
      %v3109 = vadd.f32 %v2783, %v2973
      %v3110 = vadd.f32 %v2784, %v2976
      %v3111 = vadd.f32 %v2785, %v2981
      %v3112 = vadd.f32 %v2786, %v2984
      %v3113 = vadd.f32 %v2787, %v2989
      %v3114 = vadd.f32 %v2788, %v2992
      %v3115 = vadd.f32 %v2789, %v2997
      %v3116 = vadd.f32 %v2790, %v3000
      %v3117 = vadd.f32 %v2791, %v3005
      %v3118 = vadd.f32 %v2792, %v3008
      %v3119 = vadd.f32 %v2793, %v3013
      %v3120 = vadd.f32 %v2794, %v3016
      %v3121 = vadd.f32 %v2795, %v3021
      %v3122 = vadd.f32 %v2796, %v3024
      %v3123 = vadd.f32 %v2797, %v3029
      %v3124 = vadd.f32 %v2798, %v3032
      %v3125 = vadd.f32 %v2799, %v3037
      %v3126 = vadd.f32 %v2800, %v3040
      %v3127 = vadd.f32 %v2801, %v3045
      %v3128 = vadd.f32 %v2802, %v3048
      %v3129 = vadd.f32 %v2803, %v3053
      %v3130 = vadd.f32 %v2804, %v3056
      %v3131 = vadd.f32 %v2805, %v3061
      %v3132 = vadd.f32 %v2806, %v3064
      %v3133 = vadd.f32 %v2807, %v3069
      %v3134 = vadd.f32 %v2808, %v3072
      %v3135 = vadd.f32 %v2809, %v3077
      %v3136 = vadd.f32 %v2810, %v3080
      %v3137 = vadd.f32 %v2811, %v3085
      %v3138 = vadd.f32 %v2812, %v3088
      %v3139 = vadd.f32 %v2813, %v3093
      %v3140 = vadd.f32 %v2814, %v3096
      %v3141 = vadd.f32 %v2815, %v3101
      %v3142 = vadd.f32 %v2816, %v3104
      %v3143 = vld [vmem:[%s2] sm:$0x1]
      %v3145 = vlaneseq
      %v3146 = vshrl.u32 %v3145, 7
      %v3147 = vsub.s32 0, %v3146
      %v3148 = vrot.slane %v3143, %v3147
      %v3150 = vmul.f32 %v3107, %v3148
      %v3151 = vmul.f32 %v3108, %v3148
      %v3152 = vmul.f32 %v3109, %v3148
      %v3153 = vmul.f32 %v3110, %v3148
      %v3154 = vmul.f32 %v3111, %v3148
      %v3155 = vmul.f32 %v3112, %v3148
      %v3156 = vmul.f32 %v3113, %v3148
      %v3157 = vmul.f32 %v3114, %v3148
      %v3158 = vmul.f32 %v3115, %v3148
      %v3159 = vmul.f32 %v3116, %v3148
      %v3160 = vmul.f32 %v3117, %v3148
      %v3161 = vmul.f32 %v3118, %v3148
      %v3162 = vmul.f32 %v3119, %v3148
      %v3163 = vmul.f32 %v3120, %v3148
      %v3164 = vmul.f32 %v3121, %v3148
      %v3165 = vmul.f32 %v3122, %v3148
      %v3166 = vmul.f32 %v3123, %v3148
      %v3167 = vmul.f32 %v3124, %v3148
      %v3168 = vmul.f32 %v3125, %v3148
      %v3169 = vmul.f32 %v3126, %v3148
      %v3170 = vmul.f32 %v3127, %v3148
      %v3171 = vmul.f32 %v3128, %v3148
      %v3172 = vmul.f32 %v3129, %v3148
      %v3173 = vmul.f32 %v3130, %v3148
      %v3174 = vmul.f32 %v3131, %v3148
      %v3175 = vmul.f32 %v3132, %v3148
      %v3176 = vmul.f32 %v3133, %v3148
      %v3177 = vmul.f32 %v3134, %v3148
      %v3178 = vmul.f32 %v3135, %v3148
      %v3179 = vmul.f32 %v3136, %v3148
      %v3180 = vmul.f32 %v3137, %v3148
      %v3181 = vmul.f32 %v3138, %v3148
      %v3182 = vmul.f32 %v3139, %v3148
      %v3183 = vmul.f32 %v3140, %v3148
      %v3184 = vmul.f32 %v3141, %v3148
      %v3185 = vmul.f32 %v3142, %v3148
      %v3186 = vld [vmem:[%s3] sm:$0x1]
      %v3188 = vlaneseq
      %v3189 = vshrl.u32 %v3188, 7
      %v3190 = vsub.s32 0, %v3189
      %v3191 = vrot.slane %v3186, %v3190
      %v3193 = vadd.f32 %v3150, %v3191
      %v3194 = vadd.f32 %v3151, %v3191
      %v3195 = vadd.f32 %v3152, %v3191
      %v3196 = vadd.f32 %v3153, %v3191
      %v3197 = vadd.f32 %v3154, %v3191
      %v3198 = vadd.f32 %v3155, %v3191
      %v3199 = vadd.f32 %v3156, %v3191
      %v3200 = vadd.f32 %v3157, %v3191
      %v3201 = vadd.f32 %v3158, %v3191
      %v3202 = vadd.f32 %v3159, %v3191
      %v3203 = vadd.f32 %v3160, %v3191
      %v3204 = vadd.f32 %v3161, %v3191
      %v3205 = vadd.f32 %v3162, %v3191
      %v3206 = vadd.f32 %v3163, %v3191
      %v3207 = vadd.f32 %v3164, %v3191
      %v3208 = vadd.f32 %v3165, %v3191
      %v3209 = vadd.f32 %v3166, %v3191
      %v3210 = vadd.f32 %v3167, %v3191
      %v3211 = vadd.f32 %v3168, %v3191
      %v3212 = vadd.f32 %v3169, %v3191
      %v3213 = vadd.f32 %v3170, %v3191
      %v3214 = vadd.f32 %v3171, %v3191
      %v3215 = vadd.f32 %v3172, %v3191
      %v3216 = vadd.f32 %v3173, %v3191
      %v3217 = vadd.f32 %v3174, %v3191
      %v3218 = vadd.f32 %v3175, %v3191
      %v3219 = vadd.f32 %v3176, %v3191
      %v3220 = vadd.f32 %v3177, %v3191
      %v3221 = vadd.f32 %v3178, %v3191
      %v3222 = vadd.f32 %v3179, %v3191
      %v3223 = vadd.f32 %v3180, %v3191
      %v3224 = vadd.f32 %v3181, %v3191
      %v3225 = vadd.f32 %v3182, %v3191
      %v3226 = vadd.f32 %v3183, %v3191
      %v3227 = vadd.f32 %v3184, %v3191
      %v3228 = vadd.f32 %v3185, %v3191
      %v3229 = vmax.f32 %v3193, 0.0
      %v3230 = vmax.f32 %v3194, 0.0
      %v3231 = vmax.f32 %v3195, 0.0
      %v3232 = vmax.f32 %v3196, 0.0
      %v3233 = vmax.f32 %v3197, 0.0
      %v3234 = vmax.f32 %v3198, 0.0
      %v3235 = vmax.f32 %v3199, 0.0
      %v3236 = vmax.f32 %v3200, 0.0
      %v3237 = vmax.f32 %v3201, 0.0
      %v3238 = vmax.f32 %v3202, 0.0
      %v3239 = vmax.f32 %v3203, 0.0
      %v3240 = vmax.f32 %v3204, 0.0
      %v3241 = vmax.f32 %v3205, 0.0
      %v3242 = vmax.f32 %v3206, 0.0
      %v3243 = vmax.f32 %v3207, 0.0
      %v3244 = vmax.f32 %v3208, 0.0
      %v3245 = vmax.f32 %v3209, 0.0
      %v3246 = vmax.f32 %v3210, 0.0
      %v3247 = vmax.f32 %v3211, 0.0
      %v3248 = vmax.f32 %v3212, 0.0
      %v3249 = vmax.f32 %v3213, 0.0
      %v3250 = vmax.f32 %v3214, 0.0
      %v3251 = vmax.f32 %v3215, 0.0
      %v3252 = vmax.f32 %v3216, 0.0
      %v3253 = vmax.f32 %v3217, 0.0
      %v3254 = vmax.f32 %v3218, 0.0
      %v3255 = vmax.f32 %v3219, 0.0
      %v3256 = vmax.f32 %v3220, 0.0
      %v3257 = vmax.f32 %v3221, 0.0
      %v3258 = vmax.f32 %v3222, 0.0
      %v3259 = vmax.f32 %v3223, 0.0
      %v3260 = vmax.f32 %v3224, 0.0
      %v3261 = vmax.f32 %v3225, 0.0
      %v3262 = vmax.f32 %v3226, 0.0
      %v3263 = vmax.f32 %v3227, 0.0
      %v3264 = vmax.f32 %v3228, 0.0
      %v3265 = vlaneseq
      %v3266 = vshrl.u32 %v3265, 7
      %v3267 = vadd.s32 %v3266, 8
      %v3268 = vadd.s32 %v3266, 16
      %v3269 = vadd.s32 %v3266, 24
      %v3270 = vadd.s32 %v3266, 32
      %v3271 = vadd.s32 %v3266, 40
      %v3272 = vadd.s32 %v3266, 48
      %v3273 = vadd.s32 %v3266, 56
      %v3274 = vadd.s32 %v3266, 64
      %v3275 = vadd.s32 %v3266, 72
      %v3276 = vadd.s32 %v3266, 80
      %v3277 = vadd.s32 %v3266, 88
      %v3278 = vadd.s32 %v3266, 96
      %v3279 = vadd.s32 %v3266, 104
      %v3280 = vadd.s32 %v3266, 112
      %v3281 = vadd.s32 %v3266, 120
      %v3282 = vadd.s32 %v3266, 128
      %v3283 = vadd.s32 %v3266, 136
      %v3284 = vadd.s32 %v3266, 144
      %v3285 = vadd.s32 %v3266, 152
      %v3286 = vadd.s32 %v3266, 160
      %v3287 = vadd.s32 %v3266, 168
      %v3288 = vadd.s32 %v3266, 176
      %v3289 = vadd.s32 %v3266, 184
      %v3290 = vadd.s32 %v3266, 192
      %v3291 = vadd.s32 %v3266, 200
      %v3292 = vadd.s32 %v3266, 208
      %v3293 = vadd.s32 %v3266, 216
      %v3294 = vadd.s32 %v3266, 224
      %v3295 = vadd.s32 %v3266, 232
      %v3296 = vadd.s32 %v3266, 240
      %v3297 = vadd.s32 %v3266, 248
      %v3298 = vadd.s32 %v3266, 256
      %v3299 = vadd.s32 %v3266, 264
      %v3300 = vadd.s32 %v3266, 272
      %v3301 = vadd.s32 %v3266, 280
      %vm3302 = vcmp.lt.s32.totalorder %v3266, 0
      %v3303 = vsub.s32 0, %v3266
      %v3304 = vsel %vm3302, %v3303, %v3266
      %v3305 = vmul.u32.u64.compose %v3304, 3817748708
      %v3306 = vextract.low.u32 %v3305
      %v3307 = vextract.high.u32 %v3305
      %v3308 = vshrl.u32 %v3307, 4
      %v3309 = vmul.u32 %v3308, 18
      %v3310 = vsub.s32 %v3304, %v3309
      %v3311 = vsub.s32 0, %v3310
      %v3312 = vsel %vm3302, %v3311, %v3310
      %vm3313 = vcmp.lt.s32.totalorder %v3267, 0
      %v3314 = vsub.s32 0, %v3267
      %v3315 = vsel %vm3313, %v3314, %v3267
      %v3316 = vmul.u32.u64.compose %v3315, 3817748708
      %v3317 = vextract.low.u32 %v3316
      %v3318 = vextract.high.u32 %v3316
      %v3319 = vshrl.u32 %v3318, 4
      %v3320 = vmul.u32 %v3319, 18
      %v3321 = vsub.s32 %v3315, %v3320
      %v3322 = vsub.s32 0, %v3321
      %v3323 = vsel %vm3313, %v3322, %v3321
      %vm3324 = vcmp.lt.s32.totalorder %v3268, 0
      %v3325 = vsub.s32 0, %v3268
      %v3326 = vsel %vm3324, %v3325, %v3268
      %v3327 = vmul.u32.u64.compose %v3326, 3817748708
      %v3328 = vextract.low.u32 %v3327
      %v3329 = vextract.high.u32 %v3327
      %v3330 = vshrl.u32 %v3329, 4
      %v3331 = vmul.u32 %v3330, 18
      %v3332 = vsub.s32 %v3326, %v3331
      %v3333 = vsub.s32 0, %v3332
      %v3334 = vsel %vm3324, %v3333, %v3332
      %vm3335 = vcmp.lt.s32.totalorder %v3269, 0
      %v3336 = vsub.s32 0, %v3269
      %v3337 = vsel %vm3335, %v3336, %v3269
      %v3338 = vmul.u32.u64.compose %v3337, 3817748708
      %v3339 = vextract.low.u32 %v3338
      %v3340 = vextract.high.u32 %v3338
      %v3341 = vshrl.u32 %v3340, 4
      %v3342 = vmul.u32 %v3341, 18
      %v3343 = vsub.s32 %v3337, %v3342
      %v3344 = vsub.s32 0, %v3343
      %v3345 = vsel %vm3335, %v3344, %v3343
      %vm3346 = vcmp.lt.s32.totalorder %v3270, 0
      %v3347 = vsub.s32 0, %v3270
      %v3348 = vsel %vm3346, %v3347, %v3270
      %v3349 = vmul.u32.u64.compose %v3348, 3817748708
      %v3350 = vextract.low.u32 %v3349
      %v3351 = vextract.high.u32 %v3349
      %v3352 = vshrl.u32 %v3351, 4
      %v3353 = vmul.u32 %v3352, 18
      %v3354 = vsub.s32 %v3348, %v3353
      %v3355 = vsub.s32 0, %v3354
      %v3356 = vsel %vm3346, %v3355, %v3354
      %vm3357 = vcmp.lt.s32.totalorder %v3271, 0
      %v3358 = vsub.s32 0, %v3271
      %v3359 = vsel %vm3357, %v3358, %v3271
      %v3360 = vmul.u32.u64.compose %v3359, 3817748708
      %v3361 = vextract.low.u32 %v3360
      %v3362 = vextract.high.u32 %v3360
      %v3363 = vshrl.u32 %v3362, 4
      %v3364 = vmul.u32 %v3363, 18
      %v3365 = vsub.s32 %v3359, %v3364
      %v3366 = vsub.s32 0, %v3365
      %v3367 = vsel %vm3357, %v3366, %v3365
      %vm3368 = vcmp.lt.s32.totalorder %v3272, 0
      %v3369 = vsub.s32 0, %v3272
      %v3370 = vsel %vm3368, %v3369, %v3272
      %v3371 = vmul.u32.u64.compose %v3370, 3817748708
      %v3372 = vextract.low.u32 %v3371
      %v3373 = vextract.high.u32 %v3371
      %v3374 = vshrl.u32 %v3373, 4
      %v3375 = vmul.u32 %v3374, 18
      %v3376 = vsub.s32 %v3370, %v3375
      %v3377 = vsub.s32 0, %v3376
      %v3378 = vsel %vm3368, %v3377, %v3376
      %vm3379 = vcmp.lt.s32.totalorder %v3273, 0
      %v3380 = vsub.s32 0, %v3273
      %v3381 = vsel %vm3379, %v3380, %v3273
      %v3382 = vmul.u32.u64.compose %v3381, 3817748708
      %v3383 = vextract.low.u32 %v3382
      %v3384 = vextract.high.u32 %v3382
      %v3385 = vshrl.u32 %v3384, 4
      %v3386 = vmul.u32 %v3385, 18
      %v3387 = vsub.s32 %v3381, %v3386
      %v3388 = vsub.s32 0, %v3387
      %v3389 = vsel %vm3379, %v3388, %v3387
      %vm3390 = vcmp.lt.s32.totalorder %v3274, 0
      %v3391 = vsub.s32 0, %v3274
      %v3392 = vsel %vm3390, %v3391, %v3274
      %v3393 = vmul.u32.u64.compose %v3392, 3817748708
      %v3394 = vextract.low.u32 %v3393
      %v3395 = vextract.high.u32 %v3393
      %v3396 = vshrl.u32 %v3395, 4
      %v3397 = vmul.u32 %v3396, 18
      %v3398 = vsub.s32 %v3392, %v3397
      %v3399 = vsub.s32 0, %v3398
      %v3400 = vsel %vm3390, %v3399, %v3398
      %vm3401 = vcmp.lt.s32.totalorder %v3275, 0
      %v3402 = vsub.s32 0, %v3275
      %v3403 = vsel %vm3401, %v3402, %v3275
      %v3404 = vmul.u32.u64.compose %v3403, 3817748708
      %v3405 = vextract.low.u32 %v3404
      %v3406 = vextract.high.u32 %v3404
      %v3407 = vshrl.u32 %v3406, 4
      %v3408 = vmul.u32 %v3407, 18
      %v3409 = vsub.s32 %v3403, %v3408
      %v3410 = vsub.s32 0, %v3409
      %v3411 = vsel %vm3401, %v3410, %v3409
      %vm3412 = vcmp.lt.s32.totalorder %v3276, 0
      %v3413 = vsub.s32 0, %v3276
      %v3414 = vsel %vm3412, %v3413, %v3276
      %v3415 = vmul.u32.u64.compose %v3414, 3817748708
      %v3416 = vextract.low.u32 %v3415
      %v3417 = vextract.high.u32 %v3415
      %v3418 = vshrl.u32 %v3417, 4
      %v3419 = vmul.u32 %v3418, 18
      %v3420 = vsub.s32 %v3414, %v3419
      %v3421 = vsub.s32 0, %v3420
      %v3422 = vsel %vm3412, %v3421, %v3420
      %vm3423 = vcmp.lt.s32.totalorder %v3277, 0
      %v3424 = vsub.s32 0, %v3277
      %v3425 = vsel %vm3423, %v3424, %v3277
      %v3426 = vmul.u32.u64.compose %v3425, 3817748708
      %v3427 = vextract.low.u32 %v3426
      %v3428 = vextract.high.u32 %v3426
      %v3429 = vshrl.u32 %v3428, 4
      %v3430 = vmul.u32 %v3429, 18
      %v3431 = vsub.s32 %v3425, %v3430
      %v3432 = vsub.s32 0, %v3431
      %v3433 = vsel %vm3423, %v3432, %v3431
      %vm3434 = vcmp.lt.s32.totalorder %v3278, 0
      %v3435 = vsub.s32 0, %v3278
      %v3436 = vsel %vm3434, %v3435, %v3278
      %v3437 = vmul.u32.u64.compose %v3436, 3817748708
      %v3438 = vextract.low.u32 %v3437
      %v3439 = vextract.high.u32 %v3437
      %v3440 = vshrl.u32 %v3439, 4
      %v3441 = vmul.u32 %v3440, 18
      %v3442 = vsub.s32 %v3436, %v3441
      %v3443 = vsub.s32 0, %v3442
      %v3444 = vsel %vm3434, %v3443, %v3442
      %vm3445 = vcmp.lt.s32.totalorder %v3279, 0
      %v3446 = vsub.s32 0, %v3279
      %v3447 = vsel %vm3445, %v3446, %v3279
      %v3448 = vmul.u32.u64.compose %v3447, 3817748708
      %v3449 = vextract.low.u32 %v3448
      %v3450 = vextract.high.u32 %v3448
      %v3451 = vshrl.u32 %v3450, 4
      %v3452 = vmul.u32 %v3451, 18
      %v3453 = vsub.s32 %v3447, %v3452
      %v3454 = vsub.s32 0, %v3453
      %v3455 = vsel %vm3445, %v3454, %v3453
      %vm3456 = vcmp.lt.s32.totalorder %v3280, 0
      %v3457 = vsub.s32 0, %v3280
      %v3458 = vsel %vm3456, %v3457, %v3280
      %v3459 = vmul.u32.u64.compose %v3458, 3817748708
      %v3460 = vextract.low.u32 %v3459
      %v3461 = vextract.high.u32 %v3459
      %v3462 = vshrl.u32 %v3461, 4
      %v3463 = vmul.u32 %v3462, 18
      %v3464 = vsub.s32 %v3458, %v3463
      %v3465 = vsub.s32 0, %v3464
      %v3466 = vsel %vm3456, %v3465, %v3464
      %vm3467 = vcmp.lt.s32.totalorder %v3281, 0
      %v3468 = vsub.s32 0, %v3281
      %v3469 = vsel %vm3467, %v3468, %v3281
      %v3470 = vmul.u32.u64.compose %v3469, 3817748708
      %v3471 = vextract.low.u32 %v3470
      %v3472 = vextract.high.u32 %v3470
      %v3473 = vshrl.u32 %v3472, 4
      %v3474 = vmul.u32 %v3473, 18
      %v3475 = vsub.s32 %v3469, %v3474
      %v3476 = vsub.s32 0, %v3475
      %v3477 = vsel %vm3467, %v3476, %v3475
      %vm3478 = vcmp.lt.s32.totalorder %v3282, 0
      %v3479 = vsub.s32 0, %v3282
      %v3480 = vsel %vm3478, %v3479, %v3282
      %v3481 = vmul.u32.u64.compose %v3480, 3817748708
      %v3482 = vextract.low.u32 %v3481
      %v3483 = vextract.high.u32 %v3481
      %v3484 = vshrl.u32 %v3483, 4
      %v3485 = vmul.u32 %v3484, 18
      %v3486 = vsub.s32 %v3480, %v3485
      %v3487 = vsub.s32 0, %v3486
      %v3488 = vsel %vm3478, %v3487, %v3486
      %vm3489 = vcmp.lt.s32.totalorder %v3283, 0
      %v3490 = vsub.s32 0, %v3283
      %v3491 = vsel %vm3489, %v3490, %v3283
      %v3492 = vmul.u32.u64.compose %v3491, 3817748708
      %v3493 = vextract.low.u32 %v3492
      %v3494 = vextract.high.u32 %v3492
      %v3495 = vshrl.u32 %v3494, 4
      %v3496 = vmul.u32 %v3495, 18
      %v3497 = vsub.s32 %v3491, %v3496
      %v3498 = vsub.s32 0, %v3497
      %v3499 = vsel %vm3489, %v3498, %v3497
      %vm3500 = vcmp.lt.s32.totalorder %v3284, 0
      %v3501 = vsub.s32 0, %v3284
      %v3502 = vsel %vm3500, %v3501, %v3284
      %v3503 = vmul.u32.u64.compose %v3502, 3817748708
      %v3504 = vextract.low.u32 %v3503
      %v3505 = vextract.high.u32 %v3503
      %v3506 = vshrl.u32 %v3505, 4
      %v3507 = vmul.u32 %v3506, 18
      %v3508 = vsub.s32 %v3502, %v3507
      %v3509 = vsub.s32 0, %v3508
      %v3510 = vsel %vm3500, %v3509, %v3508
      %vm3511 = vcmp.lt.s32.totalorder %v3285, 0
      %v3512 = vsub.s32 0, %v3285
      %v3513 = vsel %vm3511, %v3512, %v3285
      %v3514 = vmul.u32.u64.compose %v3513, 3817748708
      %v3515 = vextract.low.u32 %v3514
      %v3516 = vextract.high.u32 %v3514
      %v3517 = vshrl.u32 %v3516, 4
      %v3518 = vmul.u32 %v3517, 18
      %v3519 = vsub.s32 %v3513, %v3518
      %v3520 = vsub.s32 0, %v3519
      %v3521 = vsel %vm3511, %v3520, %v3519
      %vm3522 = vcmp.lt.s32.totalorder %v3286, 0
      %v3523 = vsub.s32 0, %v3286
      %v3524 = vsel %vm3522, %v3523, %v3286
      %v3525 = vmul.u32.u64.compose %v3524, 3817748708
      %v3526 = vextract.low.u32 %v3525
      %v3527 = vextract.high.u32 %v3525
      %v3528 = vshrl.u32 %v3527, 4
      %v3529 = vmul.u32 %v3528, 18
      %v3530 = vsub.s32 %v3524, %v3529
      %v3531 = vsub.s32 0, %v3530
      %v3532 = vsel %vm3522, %v3531, %v3530
      %vm3533 = vcmp.lt.s32.totalorder %v3287, 0
      %v3534 = vsub.s32 0, %v3287
      %v3535 = vsel %vm3533, %v3534, %v3287
      %v3536 = vmul.u32.u64.compose %v3535, 3817748708
      %v3537 = vextract.low.u32 %v3536
      %v3538 = vextract.high.u32 %v3536
      %v3539 = vshrl.u32 %v3538, 4
      %v3540 = vmul.u32 %v3539, 18
      %v3541 = vsub.s32 %v3535, %v3540
      %v3542 = vsub.s32 0, %v3541
      %v3543 = vsel %vm3533, %v3542, %v3541
      %vm3544 = vcmp.lt.s32.totalorder %v3288, 0
      %v3545 = vsub.s32 0, %v3288
      %v3546 = vsel %vm3544, %v3545, %v3288
      %v3547 = vmul.u32.u64.compose %v3546, 3817748708
      %v3548 = vextract.low.u32 %v3547
      %v3549 = vextract.high.u32 %v3547
      %v3550 = vshrl.u32 %v3549, 4
      %v3551 = vmul.u32 %v3550, 18
      %v3552 = vsub.s32 %v3546, %v3551
      %v3553 = vsub.s32 0, %v3552
      %v3554 = vsel %vm3544, %v3553, %v3552
      %vm3555 = vcmp.lt.s32.totalorder %v3289, 0
      %v3556 = vsub.s32 0, %v3289
      %v3557 = vsel %vm3555, %v3556, %v3289
      %v3558 = vmul.u32.u64.compose %v3557, 3817748708
      %v3559 = vextract.low.u32 %v3558
      %v3560 = vextract.high.u32 %v3558
      %v3561 = vshrl.u32 %v3560, 4
      %v3562 = vmul.u32 %v3561, 18
      %v3563 = vsub.s32 %v3557, %v3562
      %v3564 = vsub.s32 0, %v3563
      %v3565 = vsel %vm3555, %v3564, %v3563
      %vm3566 = vcmp.lt.s32.totalorder %v3290, 0
      %v3567 = vsub.s32 0, %v3290
      %v3568 = vsel %vm3566, %v3567, %v3290
      %v3569 = vmul.u32.u64.compose %v3568, 3817748708
      %v3570 = vextract.low.u32 %v3569
      %v3571 = vextract.high.u32 %v3569
      %v3572 = vshrl.u32 %v3571, 4
      %v3573 = vmul.u32 %v3572, 18
      %v3574 = vsub.s32 %v3568, %v3573
      %v3575 = vsub.s32 0, %v3574
      %v3576 = vsel %vm3566, %v3575, %v3574
      %vm3577 = vcmp.lt.s32.totalorder %v3291, 0
      %v3578 = vsub.s32 0, %v3291
      %v3579 = vsel %vm3577, %v3578, %v3291
      %v3580 = vmul.u32.u64.compose %v3579, 3817748708
      %v3581 = vextract.low.u32 %v3580
      %v3582 = vextract.high.u32 %v3580
      %v3583 = vshrl.u32 %v3582, 4
      %v3584 = vmul.u32 %v3583, 18
      %v3585 = vsub.s32 %v3579, %v3584
      %v3586 = vsub.s32 0, %v3585
      %v3587 = vsel %vm3577, %v3586, %v3585
      %vm3588 = vcmp.lt.s32.totalorder %v3292, 0
      %v3589 = vsub.s32 0, %v3292
      %v3590 = vsel %vm3588, %v3589, %v3292
      %v3591 = vmul.u32.u64.compose %v3590, 3817748708
      %v3592 = vextract.low.u32 %v3591
      %v3593 = vextract.high.u32 %v3591
      %v3594 = vshrl.u32 %v3593, 4
      %v3595 = vmul.u32 %v3594, 18
      %v3596 = vsub.s32 %v3590, %v3595
      %v3597 = vsub.s32 0, %v3596
      %v3598 = vsel %vm3588, %v3597, %v3596
      %vm3599 = vcmp.lt.s32.totalorder %v3293, 0
      %v3600 = vsub.s32 0, %v3293
      %v3601 = vsel %vm3599, %v3600, %v3293
      %v3602 = vmul.u32.u64.compose %v3601, 3817748708
      %v3603 = vextract.low.u32 %v3602
      %v3604 = vextract.high.u32 %v3602
      %v3605 = vshrl.u32 %v3604, 4
      %v3606 = vmul.u32 %v3605, 18
      %v3607 = vsub.s32 %v3601, %v3606
      %v3608 = vsub.s32 0, %v3607
      %v3609 = vsel %vm3599, %v3608, %v3607
      %vm3610 = vcmp.lt.s32.totalorder %v3294, 0
      %v3611 = vsub.s32 0, %v3294
      %v3612 = vsel %vm3610, %v3611, %v3294
      %v3613 = vmul.u32.u64.compose %v3612, 3817748708
      %v3614 = vextract.low.u32 %v3613
      %v3615 = vextract.high.u32 %v3613
      %v3616 = vshrl.u32 %v3615, 4
      %v3617 = vmul.u32 %v3616, 18
      %v3618 = vsub.s32 %v3612, %v3617
      %v3619 = vsub.s32 0, %v3618
      %v3620 = vsel %vm3610, %v3619, %v3618
      %vm3621 = vcmp.lt.s32.totalorder %v3295, 0
      %v3622 = vsub.s32 0, %v3295
      %v3623 = vsel %vm3621, %v3622, %v3295
      %v3624 = vmul.u32.u64.compose %v3623, 3817748708
      %v3625 = vextract.low.u32 %v3624
      %v3626 = vextract.high.u32 %v3624
      %v3627 = vshrl.u32 %v3626, 4
      %v3628 = vmul.u32 %v3627, 18
      %v3629 = vsub.s32 %v3623, %v3628
      %v3630 = vsub.s32 0, %v3629
      %v3631 = vsel %vm3621, %v3630, %v3629
      %vm3632 = vcmp.lt.s32.totalorder %v3296, 0
      %v3633 = vsub.s32 0, %v3296
      %v3634 = vsel %vm3632, %v3633, %v3296
      %v3635 = vmul.u32.u64.compose %v3634, 3817748708
      %v3636 = vextract.low.u32 %v3635
      %v3637 = vextract.high.u32 %v3635
      %v3638 = vshrl.u32 %v3637, 4
      %v3639 = vmul.u32 %v3638, 18
      %v3640 = vsub.s32 %v3634, %v3639
      %v3641 = vsub.s32 0, %v3640
      %v3642 = vsel %vm3632, %v3641, %v3640
      %vm3643 = vcmp.lt.s32.totalorder %v3297, 0
      %v3644 = vsub.s32 0, %v3297
      %v3645 = vsel %vm3643, %v3644, %v3297
      %v3646 = vmul.u32.u64.compose %v3645, 3817748708
      %v3647 = vextract.low.u32 %v3646
      %v3648 = vextract.high.u32 %v3646
      %v3649 = vshrl.u32 %v3648, 4
      %v3650 = vmul.u32 %v3649, 18
      %v3651 = vsub.s32 %v3645, %v3650
      %v3652 = vsub.s32 0, %v3651
      %v3653 = vsel %vm3643, %v3652, %v3651
      %vm3654 = vcmp.lt.s32.totalorder %v3298, 0
      %v3655 = vsub.s32 0, %v3298
      %v3656 = vsel %vm3654, %v3655, %v3298
      %v3657 = vmul.u32.u64.compose %v3656, 3817748708
      %v3658 = vextract.low.u32 %v3657
      %v3659 = vextract.high.u32 %v3657
      %v3660 = vshrl.u32 %v3659, 4
      %v3661 = vmul.u32 %v3660, 18
      %v3662 = vsub.s32 %v3656, %v3661
      %v3663 = vsub.s32 0, %v3662
      %v3664 = vsel %vm3654, %v3663, %v3662
      %vm3665 = vcmp.lt.s32.totalorder %v3299, 0
      %v3666 = vsub.s32 0, %v3299
      %v3667 = vsel %vm3665, %v3666, %v3299
      %v3668 = vmul.u32.u64.compose %v3667, 3817748708
      %v3669 = vextract.low.u32 %v3668
      %v3670 = vextract.high.u32 %v3668
      %v3671 = vshrl.u32 %v3670, 4
      %v3672 = vmul.u32 %v3671, 18
      %v3673 = vsub.s32 %v3667, %v3672
      %v3674 = vsub.s32 0, %v3673
      %v3675 = vsel %vm3665, %v3674, %v3673
      %vm3676 = vcmp.lt.s32.totalorder %v3300, 0
      %v3677 = vsub.s32 0, %v3300
      %v3678 = vsel %vm3676, %v3677, %v3300
      %v3679 = vmul.u32.u64.compose %v3678, 3817748708
      %v3680 = vextract.low.u32 %v3679
      %v3681 = vextract.high.u32 %v3679
      %v3682 = vshrl.u32 %v3681, 4
      %v3683 = vmul.u32 %v3682, 18
      %v3684 = vsub.s32 %v3678, %v3683
      %v3685 = vsub.s32 0, %v3684
      %v3686 = vsel %vm3676, %v3685, %v3684
      %vm3687 = vcmp.lt.s32.totalorder %v3301, 0
      %v3688 = vsub.s32 0, %v3301
      %v3689 = vsel %vm3687, %v3688, %v3301
      %v3690 = vmul.u32.u64.compose %v3689, 3817748708
      %v3691 = vextract.low.u32 %v3690
      %v3692 = vextract.high.u32 %v3690
      %v3693 = vshrl.u32 %v3692, 4
      %v3694 = vmul.u32 %v3693, 18
      %v3695 = vsub.s32 %v3689, %v3694
      %v3696 = vsub.s32 0, %v3695
      %v3697 = vsel %vm3687, %v3696, %v3695
      %vm3698 = vcmp.ne.s32.totalorder %v3312, 0
      %vm3699 = vcmp.ne.s32.totalorder %v3323, 0
      %vm3700 = vcmp.ne.s32.totalorder %v3334, 0
      %vm3701 = vcmp.ne.s32.totalorder %v3345, 0
      %vm3702 = vcmp.ne.s32.totalorder %v3356, 0
      %vm3703 = vcmp.ne.s32.totalorder %v3367, 0
      %vm3704 = vcmp.ne.s32.totalorder %v3378, 0
      %vm3705 = vcmp.ne.s32.totalorder %v3389, 0
      %vm3706 = vcmp.ne.s32.totalorder %v3400, 0
      %vm3707 = vcmp.ne.s32.totalorder %v3411, 0
      %vm3708 = vcmp.ne.s32.totalorder %v3422, 0
      %vm3709 = vcmp.ne.s32.totalorder %v3433, 0
      %vm3710 = vcmp.ne.s32.totalorder %v3444, 0
      %vm3711 = vcmp.ne.s32.totalorder %v3455, 0
      %vm3712 = vcmp.ne.s32.totalorder %v3466, 0
      %vm3713 = vcmp.ne.s32.totalorder %v3477, 0
      %vm3714 = vcmp.ne.s32.totalorder %v3488, 0
      %vm3715 = vcmp.ne.s32.totalorder %v3499, 0
      %vm3716 = vcmp.ne.s32.totalorder %v3510, 0
      %vm3717 = vcmp.ne.s32.totalorder %v3521, 0
      %vm3718 = vcmp.ne.s32.totalorder %v3532, 0
      %vm3719 = vcmp.ne.s32.totalorder %v3543, 0
      %vm3720 = vcmp.ne.s32.totalorder %v3554, 0
      %vm3721 = vcmp.ne.s32.totalorder %v3565, 0
      %vm3722 = vcmp.ne.s32.totalorder %v3576, 0
      %vm3723 = vcmp.ne.s32.totalorder %v3587, 0
      %vm3724 = vcmp.ne.s32.totalorder %v3598, 0
      %vm3725 = vcmp.ne.s32.totalorder %v3609, 0
      %vm3726 = vcmp.ne.s32.totalorder %v3620, 0
      %vm3727 = vcmp.ne.s32.totalorder %v3631, 0
      %vm3728 = vcmp.ne.s32.totalorder %v3642, 0
      %vm3729 = vcmp.ne.s32.totalorder %v3653, 0
      %vm3730 = vcmp.ne.s32.totalorder %v3664, 0
      %vm3731 = vcmp.ne.s32.totalorder %v3675, 0
      %vm3732 = vcmp.ne.s32.totalorder %v3686, 0
      %vm3733 = vcmp.ne.s32.totalorder %v3697, 0
      %vm3734 = vcmp.lt.s32.totalorder %v3312, 0
      %vm3735 = vcmp.lt.s32.totalorder %v3323, 0
      %vm3736 = vcmp.lt.s32.totalorder %v3334, 0
      %vm3737 = vcmp.lt.s32.totalorder %v3345, 0
      %vm3738 = vcmp.lt.s32.totalorder %v3356, 0
      %vm3739 = vcmp.lt.s32.totalorder %v3367, 0
      %vm3740 = vcmp.lt.s32.totalorder %v3378, 0
      %vm3741 = vcmp.lt.s32.totalorder %v3389, 0
      %vm3742 = vcmp.lt.s32.totalorder %v3400, 0
      %vm3743 = vcmp.lt.s32.totalorder %v3411, 0
      %vm3744 = vcmp.lt.s32.totalorder %v3422, 0
      %vm3745 = vcmp.lt.s32.totalorder %v3433, 0
      %vm3746 = vcmp.lt.s32.totalorder %v3444, 0
      %vm3747 = vcmp.lt.s32.totalorder %v3455, 0
      %vm3748 = vcmp.lt.s32.totalorder %v3466, 0
      %vm3749 = vcmp.lt.s32.totalorder %v3477, 0
      %vm3750 = vcmp.lt.s32.totalorder %v3488, 0
      %vm3751 = vcmp.lt.s32.totalorder %v3499, 0
      %vm3752 = vcmp.lt.s32.totalorder %v3510, 0
      %vm3753 = vcmp.lt.s32.totalorder %v3521, 0
      %vm3754 = vcmp.lt.s32.totalorder %v3532, 0
      %vm3755 = vcmp.lt.s32.totalorder %v3543, 0
      %vm3756 = vcmp.lt.s32.totalorder %v3554, 0
      %vm3757 = vcmp.lt.s32.totalorder %v3565, 0
      %vm3758 = vcmp.lt.s32.totalorder %v3576, 0
      %vm3759 = vcmp.lt.s32.totalorder %v3587, 0
      %vm3760 = vcmp.lt.s32.totalorder %v3598, 0
      %vm3761 = vcmp.lt.s32.totalorder %v3609, 0
      %vm3762 = vcmp.lt.s32.totalorder %v3620, 0
      %vm3763 = vcmp.lt.s32.totalorder %v3631, 0
      %vm3764 = vcmp.lt.s32.totalorder %v3642, 0
      %vm3765 = vcmp.lt.s32.totalorder %v3653, 0
      %vm3766 = vcmp.lt.s32.totalorder %v3664, 0
      %vm3767 = vcmp.lt.s32.totalorder %v3675, 0
      %vm3768 = vcmp.lt.s32.totalorder %v3686, 0
      %vm3769 = vcmp.lt.s32.totalorder %v3697, 0
      %vm3770 = vmand %vm3734, %vm3698
      %vm3771 = vmand %vm3735, %vm3699
      %vm3772 = vmand %vm3736, %vm3700
      %vm3773 = vmand %vm3737, %vm3701
      %vm3774 = vmand %vm3738, %vm3702
      %vm3775 = vmand %vm3739, %vm3703
      %vm3776 = vmand %vm3740, %vm3704
      %vm3777 = vmand %vm3741, %vm3705
      %vm3778 = vmand %vm3742, %vm3706
      %vm3779 = vmand %vm3743, %vm3707
      %vm3780 = vmand %vm3744, %vm3708
      %vm3781 = vmand %vm3745, %vm3709
      %vm3782 = vmand %vm3746, %vm3710
      %vm3783 = vmand %vm3747, %vm3711
      %vm3784 = vmand %vm3748, %vm3712
      %vm3785 = vmand %vm3749, %vm3713
      %vm3786 = vmand %vm3750, %vm3714
      %vm3787 = vmand %vm3751, %vm3715
      %vm3788 = vmand %vm3752, %vm3716
      %vm3789 = vmand %vm3753, %vm3717
      %vm3790 = vmand %vm3754, %vm3718
      %vm3791 = vmand %vm3755, %vm3719
      %vm3792 = vmand %vm3756, %vm3720
      %vm3793 = vmand %vm3757, %vm3721
      %vm3794 = vmand %vm3758, %vm3722
      %vm3795 = vmand %vm3759, %vm3723
      %vm3796 = vmand %vm3760, %vm3724
      %vm3797 = vmand %vm3761, %vm3725
      %vm3798 = vmand %vm3762, %vm3726
      %vm3799 = vmand %vm3763, %vm3727
      %vm3800 = vmand %vm3764, %vm3728
      %vm3801 = vmand %vm3765, %vm3729
      %vm3802 = vmand %vm3766, %vm3730
      %vm3803 = vmand %vm3767, %vm3731
      %vm3804 = vmand %vm3768, %vm3732
      %vm3805 = vmand %vm3769, %vm3733
      %v3806 = vadd.s32 %v3312, 18
      %v3807 = vadd.s32 %v3323, 18
      %v3808 = vadd.s32 %v3334, 18
      %v3809 = vadd.s32 %v3345, 18
      %v3810 = vadd.s32 %v3356, 18
      %v3811 = vadd.s32 %v3367, 18
      %v3812 = vadd.s32 %v3378, 18
      %v3813 = vadd.s32 %v3389, 18
      %v3814 = vadd.s32 %v3400, 18
      %v3815 = vadd.s32 %v3411, 18
      %v3816 = vadd.s32 %v3422, 18
      %v3817 = vadd.s32 %v3433, 18
      %v3818 = vadd.s32 %v3444, 18
      %v3819 = vadd.s32 %v3455, 18
      %v3820 = vadd.s32 %v3466, 18
      %v3821 = vadd.s32 %v3477, 18
      %v3822 = vadd.s32 %v3488, 18
      %v3823 = vadd.s32 %v3499, 18
      %v3824 = vadd.s32 %v3510, 18
      %v3825 = vadd.s32 %v3521, 18
      %v3826 = vadd.s32 %v3532, 18
      %v3827 = vadd.s32 %v3543, 18
      %v3828 = vadd.s32 %v3554, 18
      %v3829 = vadd.s32 %v3565, 18
      %v3830 = vadd.s32 %v3576, 18
      %v3831 = vadd.s32 %v3587, 18
      %v3832 = vadd.s32 %v3598, 18
      %v3833 = vadd.s32 %v3609, 18
      %v3834 = vadd.s32 %v3620, 18
      %v3835 = vadd.s32 %v3631, 18
      %v3836 = vadd.s32 %v3642, 18
      %v3837 = vadd.s32 %v3653, 18
      %v3838 = vadd.s32 %v3664, 18
      %v3839 = vadd.s32 %v3675, 18
      %v3840 = vadd.s32 %v3686, 18
      %v3841 = vadd.s32 %v3697, 18
      %v3842 = vsel %vm3770, %v3806, %v3312
      %v3843 = vsel %vm3771, %v3807, %v3323
      %v3844 = vsel %vm3772, %v3808, %v3334
      %v3845 = vsel %vm3773, %v3809, %v3345
      %v3846 = vsel %vm3774, %v3810, %v3356
      %v3847 = vsel %vm3775, %v3811, %v3367
      %v3848 = vsel %vm3776, %v3812, %v3378
      %v3849 = vsel %vm3777, %v3813, %v3389
      %v3850 = vsel %vm3778, %v3814, %v3400
      %v3851 = vsel %vm3779, %v3815, %v3411
      %v3852 = vsel %vm3780, %v3816, %v3422
      %v3853 = vsel %vm3781, %v3817, %v3433
      %v3854 = vsel %vm3782, %v3818, %v3444
      %v3855 = vsel %vm3783, %v3819, %v3455
      %v3856 = vsel %vm3784, %v3820, %v3466
      %v3857 = vsel %vm3785, %v3821, %v3477
      %v3858 = vsel %vm3786, %v3822, %v3488
      %v3859 = vsel %vm3787, %v3823, %v3499
      %v3860 = vsel %vm3788, %v3824, %v3510
      %v3861 = vsel %vm3789, %v3825, %v3521
      %v3862 = vsel %vm3790, %v3826, %v3532
      %v3863 = vsel %vm3791, %v3827, %v3543
      %v3864 = vsel %vm3792, %v3828, %v3554
      %v3865 = vsel %vm3793, %v3829, %v3565
      %v3866 = vsel %vm3794, %v3830, %v3576
      %v3867 = vsel %vm3795, %v3831, %v3587
      %v3868 = vsel %vm3796, %v3832, %v3598
      %v3869 = vsel %vm3797, %v3833, %v3609
      %v3870 = vsel %vm3798, %v3834, %v3620
      %v3871 = vsel %vm3799, %v3835, %v3631
      %v3872 = vsel %vm3800, %v3836, %v3642
      %v3873 = vsel %vm3801, %v3837, %v3653
      %v3874 = vsel %vm3802, %v3838, %v3664
      %v3875 = vsel %vm3803, %v3839, %v3675
      %v3876 = vsel %vm3804, %v3840, %v3686
      %v3877 = vsel %vm3805, %v3841, %v3697
      %vm3878 = vcmp.lt.s32.totalorder %v3842, 16
      %vm3879 = vcmp.lt.s32.totalorder %v3843, 16
      %vm3880 = vcmp.lt.s32.totalorder %v3844, 16
      %vm3881 = vcmp.lt.s32.totalorder %v3845, 16
      %vm3882 = vcmp.lt.s32.totalorder %v3846, 16
      %vm3883 = vcmp.lt.s32.totalorder %v3847, 16
      %vm3884 = vcmp.lt.s32.totalorder %v3848, 16
      %vm3885 = vcmp.lt.s32.totalorder %v3849, 16
      %vm3886 = vcmp.lt.s32.totalorder %v3850, 16
      %vm3887 = vcmp.lt.s32.totalorder %v3851, 16
      %vm3888 = vcmp.lt.s32.totalorder %v3852, 16
      %vm3889 = vcmp.lt.s32.totalorder %v3853, 16
      %vm3890 = vcmp.lt.s32.totalorder %v3854, 16
      %vm3891 = vcmp.lt.s32.totalorder %v3855, 16
      %vm3892 = vcmp.lt.s32.totalorder %v3856, 16
      %vm3893 = vcmp.lt.s32.totalorder %v3857, 16
      %vm3894 = vcmp.lt.s32.totalorder %v3858, 16
      %vm3895 = vcmp.lt.s32.totalorder %v3859, 16
      %vm3896 = vcmp.lt.s32.totalorder %v3860, 16
      %vm3897 = vcmp.lt.s32.totalorder %v3861, 16
      %vm3898 = vcmp.lt.s32.totalorder %v3862, 16
      %vm3899 = vcmp.lt.s32.totalorder %v3863, 16
      %vm3900 = vcmp.lt.s32.totalorder %v3864, 16
      %vm3901 = vcmp.lt.s32.totalorder %v3865, 16
      %vm3902 = vcmp.lt.s32.totalorder %v3866, 16
      %vm3903 = vcmp.lt.s32.totalorder %v3867, 16
      %vm3904 = vcmp.lt.s32.totalorder %v3868, 16
      %vm3905 = vcmp.lt.s32.totalorder %v3869, 16
      %vm3906 = vcmp.lt.s32.totalorder %v3870, 16
      %vm3907 = vcmp.lt.s32.totalorder %v3871, 16
      %vm3908 = vcmp.lt.s32.totalorder %v3872, 16
      %vm3909 = vcmp.lt.s32.totalorder %v3873, 16
      %vm3910 = vcmp.lt.s32.totalorder %v3874, 16
      %vm3911 = vcmp.lt.s32.totalorder %v3875, 16
      %vm3912 = vcmp.lt.s32.totalorder %v3876, 16
      %vm3913 = vcmp.lt.s32.totalorder %v3877, 16
      %v3914 = vsel %vm3878, %v3229, 0.0
      %v3915 = vsel %vm3879, %v3230, 0.0
      %v3916 = vsel %vm3880, %v3231, 0.0
      %v3917 = vsel %vm3881, %v3232, 0.0
      %v3918 = vsel %vm3882, %v3233, 0.0
      %v3919 = vsel %vm3883, %v3234, 0.0
      %v3920 = vsel %vm3884, %v3235, 0.0
      %v3921 = vsel %vm3885, %v3236, 0.0
      %v3922 = vsel %vm3886, %v3237, 0.0
      %v3923 = vsel %vm3887, %v3238, 0.0
      %v3924 = vsel %vm3888, %v3239, 0.0
      %v3925 = vsel %vm3889, %v3240, 0.0
      %v3926 = vsel %vm3890, %v3241, 0.0
      %v3927 = vsel %vm3891, %v3242, 0.0
      %v3928 = vsel %vm3892, %v3243, 0.0
      %v3929 = vsel %vm3893, %v3244, 0.0
      %v3930 = vsel %vm3894, %v3245, 0.0
      %v3931 = vsel %vm3895, %v3246, 0.0
      %v3932 = vsel %vm3896, %v3247, 0.0
      %v3933 = vsel %vm3897, %v3248, 0.0
      %v3934 = vsel %vm3898, %v3249, 0.0
      %v3935 = vsel %vm3899, %v3250, 0.0
      %v3936 = vsel %vm3900, %v3251, 0.0
      %v3937 = vsel %vm3901, %v3252, 0.0
      %v3938 = vsel %vm3902, %v3253, 0.0
      %v3939 = vsel %vm3903, %v3254, 0.0
      %v3940 = vsel %vm3904, %v3255, 0.0
      %v3941 = vsel %vm3905, %v3256, 0.0
      %v3942 = vsel %vm3906, %v3257, 0.0
      %v3943 = vsel %vm3907, %v3258, 0.0
      %v3944 = vsel %vm3908, %v3259, 0.0
      %v3945 = vsel %vm3909, %v3260, 0.0
      %v3946 = vsel %vm3910, %v3261, 0.0
      %v3947 = vsel %vm3911, %v3262, 0.0
      %v3948 = vsel %vm3912, %v3263, 0.0
      %v3949 = vsel %vm3913, %v3264, 0.0
      %3950 = vst.msk [vmem:[#allocation2] sm:$0xff] %vm391, 0.0
      %3951 = vst.msk [vmem:[#allocation2 + $0x8] sm:$0xff] %vm391, 0.0
      %vm3952 = vcmask 26624
      %3953 = vst.msk [vmem:[#allocation2 + $0x10] sm:$0x7] %vm3952, 0.0
      %3954 = vst.msk [vmem:[#allocation2 + $0x13] sm:$0xff] %vm391, %v3914
      %3955 = vst.msk [vmem:[#allocation2 + $0x1b] sm:$0xff] %vm391, %v3915
      %3956 = vst.msk [vmem:[#allocation2 + $0x23] sm:$0xff] %vm391, %v3916
      %3957 = vst.msk [vmem:[#allocation2 + $0x2b] sm:$0xff] %vm391, %v3917
      %3958 = vst.msk [vmem:[#allocation2 + $0x33] sm:$0xff] %vm391, %v3918
      %3959 = vst.msk [vmem:[#allocation2 + $0x3b] sm:$0xff] %vm391, %v3919
      %3960 = vst.msk [vmem:[#allocation2 + $0x43] sm:$0xff] %vm391, %v3920
      %3961 = vst.msk [vmem:[#allocation2 + $0x4b] sm:$0xff] %vm391, %v3921
      %3962 = vst.msk [vmem:[#allocation2 + $0x53] sm:$0xff] %vm391, %v3922
      %3963 = vst.msk [vmem:[#allocation2 + $0x5b] sm:$0xff] %vm391, %v3923
      %3964 = vst.msk [vmem:[#allocation2 + $0x63] sm:$0xff] %vm391, %v3924
      %3965 = vst.msk [vmem:[#allocation2 + $0x6b] sm:$0xff] %vm391, %v3925
      %3966 = vst.msk [vmem:[#allocation2 + $0x73] sm:$0xff] %vm391, %v3926
      %3967 = vst.msk [vmem:[#allocation2 + $0x7b] sm:$0xff] %vm391, %v3927
      %3968 = vst.msk [vmem:[#allocation2 + $0x83] sm:$0xff] %vm391, %v3928
      %3969 = vst.msk [vmem:[#allocation2 + $0x8b] sm:$0xff] %vm391, %v3929
      %3970 = vst.msk [vmem:[#allocation2 + $0x93] sm:$0xff] %vm391, %v3930
      %3971 = vst.msk [vmem:[#allocation2 + $0x9b] sm:$0xff] %vm391, %v3931
      %3972 = vst.msk [vmem:[#allocation2 + $0xa3] sm:$0xff] %vm391, %v3932
      %3973 = vst.msk [vmem:[#allocation2 + $0xab] sm:$0xff] %vm391, %v3933
      %3974 = vst.msk [vmem:[#allocation2 + $0xb3] sm:$0xff] %vm391, %v3934
      %3975 = vst.msk [vmem:[#allocation2 + $0xbb] sm:$0xff] %vm391, %v3935
      %3976 = vst.msk [vmem:[#allocation2 + $0xc3] sm:$0xff] %vm391, %v3936
      %3977 = vst.msk [vmem:[#allocation2 + $0xcb] sm:$0xff] %vm391, %v3937
      %3978 = vst.msk [vmem:[#allocation2 + $0xd3] sm:$0xff] %vm391, %v3938
      %3979 = vst.msk [vmem:[#allocation2 + $0xdb] sm:$0xff] %vm391, %v3939
      %3980 = vst.msk [vmem:[#allocation2 + $0xe3] sm:$0xff] %vm391, %v3940
      %3981 = vst.msk [vmem:[#allocation2 + $0xeb] sm:$0xff] %vm391, %v3941
      %3982 = vst.msk [vmem:[#allocation2 + $0xf3] sm:$0xff] %vm391, %v3942
      %3983 = vst.msk [vmem:[#allocation2 + $0xfb] sm:$0xff] %vm391, %v3943
      %3984 = vst.msk [vmem:[#allocation2 + $0x103] sm:$0xff] %vm391, %v3944
      %3985 = vst.msk [vmem:[#allocation2 + $0x10b] sm:$0xff] %vm391, %v3945
      %3986 = vst.msk [vmem:[#allocation2 + $0x113] sm:$0xff] %vm391, %v3946
      %3987 = vst.msk [vmem:[#allocation2 + $0x11b] sm:$0xff] %vm391, %v3947
      %3988 = vst.msk [vmem:[#allocation2 + $0x123] sm:$0xff] %vm391, %v3948
      %3989 = vst.msk [vmem:[#allocation2 + $0x12b] sm:$0xff] %vm391, %v3949
      %3990 = vst.msk [vmem:[#allocation2 + $0x133] sm:$0xff] %vm391, 0.0
      %3991 = vst.msk [vmem:[#allocation2 + $0x13b] sm:$0xff] %vm391, 0.0
      %vm3992 = vcmask 28672
      %3993 = vst.msk [vmem:[#allocation2 + $0x143] sm:$0x1f] %vm3992, 0.0
      %v3994 = vld [vmem:[#allocation2] sm:$0xff]
      %v3995 = vld [vmem:[#allocation2 + $0x8] sm:$0xff]
      %v3996 = vld [vmem:[#allocation2 + $0x10] sm:$0xff]
      %v3997 = vld [vmem:[#allocation2 + $0x18] sm:$0xff]
      %v3998 = vld [vmem:[#allocation2 + $0x20] sm:$0xff]
      %v3999 = vld [vmem:[#allocation2 + $0x28] sm:$0xff]
      %v4000 = vld [vmem:[#allocation2 + $0x30] sm:$0xff]
      %v4001 = vld [vmem:[#allocation2 + $0x38] sm:$0xff]
      %v4002 = vld [vmem:[#allocation2 + $0x40] sm:$0xff]
      %v4003 = vld [vmem:[#allocation2 + $0x48] sm:$0xff]
      %v4004 = vld [vmem:[#allocation2 + $0x50] sm:$0xff]
      %v4005 = vld [vmem:[#allocation2 + $0x58] sm:$0xff]
      %v4006 = vld [vmem:[#allocation2 + $0x60] sm:$0xff]
      %v4007 = vld [vmem:[#allocation2 + $0x68] sm:$0xff]
      %v4008 = vld [vmem:[#allocation2 + $0x70] sm:$0xff]
      %v4009 = vld [vmem:[#allocation2 + $0x78] sm:$0xff]
      %v4010 = vld [vmem:[#allocation2 + $0x80] sm:$0xff]
      %v4011 = vld [vmem:[#allocation2 + $0x88] sm:$0xff]
      %v4012 = vld [vmem:[#allocation2 + $0x90] sm:$0xff]
      %v4013 = vld [vmem:[#allocation2 + $0x98] sm:$0xff]
      %v4014 = vld [vmem:[#allocation2 + $0xa0] sm:$0xff]
      %v4015 = vld [vmem:[#allocation2 + $0xa8] sm:$0xff]
      %v4016 = vld [vmem:[#allocation2 + $0xb0] sm:$0xff]
      %v4017 = vld [vmem:[#allocation2 + $0xb8] sm:$0xff]
      %v4018 = vld [vmem:[#allocation2 + $0xc0] sm:$0xff]
      %v4019 = vld [vmem:[#allocation2 + $0xc8] sm:$0xff]
      %v4020 = vld [vmem:[#allocation2 + $0xd0] sm:$0xff]
      %v4021 = vld [vmem:[#allocation2 + $0xd8] sm:$0xff]
      %v4022 = vld [vmem:[#allocation2 + $0xe0] sm:$0xff]
      %v4023 = vld [vmem:[#allocation2 + $0xe8] sm:$0xff]
      %v4024 = vld [vmem:[#allocation2 + $0xf0] sm:$0xff]
      %v4025 = vld [vmem:[#allocation2 + $0xf8] sm:$0xff]
      %v4026 = vld [vmem:[#allocation2 + $0x100] sm:$0xff]
      %v4027 = vld [vmem:[#allocation2 + $0x108] sm:$0xff]
      %v4028 = vld [vmem:[#allocation2 + $0x110] sm:$0xff]
      %v4029 = vld [vmem:[#allocation2 + $0x118] sm:$0xff]
      %v4030 = vpack.c.bf16 %v3995, %v3994
      %v4031 = vpack.c.bf16 %v3997, %v3996
      %v4032 = vpack.c.bf16 %v3999, %v3998
      %v4033 = vpack.c.bf16 %v4001, %v4000
      %v4034 = vpack.c.bf16 %v4003, %v4002
      %v4035 = vpack.c.bf16 %v4005, %v4004
      %v4036 = vpack.c.bf16 %v4007, %v4006
      %v4037 = vpack.c.bf16 %v4009, %v4008
      %v4038 = vpack.c.bf16 %v4011, %v4010
      %v4039 = vpack.c.bf16 %v4013, %v4012
      %v4040 = vpack.c.bf16 %v4015, %v4014
      %v4041 = vpack.c.bf16 %v4017, %v4016
      %v4042 = vpack.c.bf16 %v4019, %v4018
      %v4043 = vpack.c.bf16 %v4021, %v4020
      %v4044 = vpack.c.bf16 %v4023, %v4022
      %v4045 = vpack.c.bf16 %v4025, %v4024
      %v4046 = vpack.c.bf16 %v4027, %v4026
      %v4047 = vpack.c.bf16 %v4029, %v4028
      %v4048 = vld [vmem:[%s4] sm:$0x3]
      %v4049 = vld [vmem:[#allocation2 + $0x1] sm:$0xff]
      %v4050 = vld [vmem:[#allocation2 + $0x9] sm:$0xff]
      %v4051 = vld [vmem:[#allocation2 + $0x11] sm:$0xff]
      %v4052 = vld [vmem:[#allocation2 + $0x19] sm:$0xff]
      %v4053 = vld [vmem:[#allocation2 + $0x21] sm:$0xff]
      %v4054 = vld [vmem:[#allocation2 + $0x29] sm:$0xff]
      %v4055 = vld [vmem:[#allocation2 + $0x31] sm:$0xff]
      %v4056 = vld [vmem:[#allocation2 + $0x39] sm:$0xff]
      %v4057 = vld [vmem:[#allocation2 + $0x41] sm:$0xff]
      %v4058 = vld [vmem:[#allocation2 + $0x49] sm:$0xff]
      %v4059 = vld [vmem:[#allocation2 + $0x51] sm:$0xff]
      %v4060 = vld [vmem:[#allocation2 + $0x59] sm:$0xff]
      %v4061 = vld [vmem:[#allocation2 + $0x61] sm:$0xff]
      %v4062 = vld [vmem:[#allocation2 + $0x69] sm:$0xff]
      %v4063 = vld [vmem:[#allocation2 + $0x71] sm:$0xff]
      %v4064 = vld [vmem:[#allocation2 + $0x79] sm:$0xff]
      %v4065 = vld [vmem:[#allocation2 + $0x81] sm:$0xff]
      %v4066 = vld [vmem:[#allocation2 + $0x89] sm:$0xff]
      %v4067 = vld [vmem:[#allocation2 + $0x91] sm:$0xff]
      %v4068 = vld [vmem:[#allocation2 + $0x99] sm:$0xff]
      %v4069 = vld [vmem:[#allocation2 + $0xa1] sm:$0xff]
      %v4070 = vld [vmem:[#allocation2 + $0xa9] sm:$0xff]
      %v4071 = vld [vmem:[#allocation2 + $0xb1] sm:$0xff]
      %v4072 = vld [vmem:[#allocation2 + $0xb9] sm:$0xff]
      %v4073 = vld [vmem:[#allocation2 + $0xc1] sm:$0xff]
      %v4074 = vld [vmem:[#allocation2 + $0xc9] sm:$0xff]
      %v4075 = vld [vmem:[#allocation2 + $0xd1] sm:$0xff]
      %v4076 = vld [vmem:[#allocation2 + $0xd9] sm:$0xff]
      %v4077 = vld [vmem:[#allocation2 + $0xe1] sm:$0xff]
      %v4078 = vld [vmem:[#allocation2 + $0xe9] sm:$0xff]
      %v4079 = vld [vmem:[#allocation2 + $0xf1] sm:$0xff]
      %v4080 = vld [vmem:[#allocation2 + $0xf9] sm:$0xff]
      %v4081 = vld [vmem:[#allocation2 + $0x101] sm:$0xff]
      %v4082 = vld [vmem:[#allocation2 + $0x109] sm:$0xff]
      %v4083 = vld [vmem:[#allocation2 + $0x111] sm:$0xff]
      %v4084 = vld [vmem:[#allocation2 + $0x119] sm:$0xff]
      %v4085 = vpack.c.bf16 %v4050, %v4049
      %v4086 = vpack.c.bf16 %v4052, %v4051
      %v4087 = vpack.c.bf16 %v4054, %v4053
      %v4088 = vpack.c.bf16 %v4056, %v4055
      %v4089 = vpack.c.bf16 %v4058, %v4057
      %v4090 = vpack.c.bf16 %v4060, %v4059
      %v4091 = vpack.c.bf16 %v4062, %v4061
      %v4092 = vpack.c.bf16 %v4064, %v4063
      %v4093 = vpack.c.bf16 %v4066, %v4065
      %v4094 = vpack.c.bf16 %v4068, %v4067
      %v4095 = vpack.c.bf16 %v4070, %v4069
      %v4096 = vpack.c.bf16 %v4072, %v4071
      %v4097 = vpack.c.bf16 %v4074, %v4073
      %v4098 = vpack.c.bf16 %v4076, %v4075
      %v4099 = vpack.c.bf16 %v4078, %v4077
      %v4100 = vpack.c.bf16 %v4080, %v4079
      %v4101 = vpack.c.bf16 %v4082, %v4081
      %v4102 = vpack.c.bf16 %v4084, %v4083
      %s4103 = scalar_lea.vmem %s4, 2
      %v4104 = vld [vmem:[%s4103] sm:$0x3]
      %v4106 = vsel %vm391, %v4085, 0
      %v4109 = vsel %vm391, %v4086, 0
      %v4112 = vsel %vm391, %v4087, 0
      %v4115 = vsel %vm391, %v4088, 0
      %v4118 = vsel %vm391, %v4089, 0
      %v4121 = vsel %vm391, %v4090, 0
      %v4124 = vsel %vm391, %v4091, 0
      %v4127 = vsel %vm391, %v4092, 0
      %v4130 = vsel %vm391, %v4093, 0
      %v4133 = vsel %vm391, %v4094, 0
      %v4136 = vsel %vm391, %v4095, 0
      %v4139 = vsel %vm391, %v4096, 0
      %v4142 = vsel %vm391, %v4097, 0
      %v4145 = vsel %vm391, %v4098, 0
      %v4148 = vsel %vm391, %v4099, 0
      %v4151 = vsel %vm391, %v4100, 0
      %v4154 = vsel %vm391, %v4101, 0
      %v4157 = vsel %vm391, %v4102, 0
      %v4160 = vsel %vm446, %v4104, 0
      %4162 = vmatprep.subr.bf16.mxu0 0
      %4163 = vmatpush1.bf16.msra.mxu0 %v4160
      %4164 = vmatprep.subr.bf16.mxu0 0
      %4165 = vmatpush1.bf16.msra.mxu0 0
      %4166 = vmatprep.subr.bf16.mxu0 0
      %4167 = vmatpush1.bf16.msra.mxu0 0
      %4168 = vmatprep.subr.bf16.mxu0 0
      %4169 = vmatpush1.bf16.msra.mxu0 0
      %4170 = vmatprep.subr.bf16.mxu0 0
      %4171 = vmatpush1.bf16.msra.mxu0 0
      %4172 = vmatprep.subr.bf16.mxu0 0
      %4173 = vmatpush1.bf16.msra.mxu0 0
      %4174 = vmatprep.subr.bf16.mxu0 0
      %4175 = vmatpush1.bf16.msra.mxu0 0
      %4176 = vmatprep.subr.bf16.mxu0 0
      %4177 = vmatpush1.bf16.msra.mxu0 0
      %4178 = vmatprep.subr.bf16.mxu0 0
      %4179 = vmatpush1.bf16.msra.mxu0 0
      %4180 = vmatprep.subr.bf16.mxu0 0
      %4181 = vmatpush1.bf16.msra.mxu0 0
      %4182 = vmatprep.subr.bf16.mxu0 0
      %4183 = vmatpush1.bf16.msra.mxu0 0
      %4184 = vmatprep.subr.bf16.mxu0 0
      %4185 = vmatpush1.bf16.msra.mxu0 0
      %4186 = vmatprep.subr.bf16.mxu0 0
      %4187 = vmatpush1.bf16.msra.mxu0 0
      %4188 = vmatprep.subr.bf16.mxu0 0
      %4189 = vmatpush1.bf16.msra.mxu0 0
      %4190 = vmatprep.subr.bf16.mxu0 0
      %4191 = vmatpush1.bf16.msra.mxu0 0
      %4192 = vmatprep.subr.bf16.mxu0 0
      %4193 = vmatpush1.bf16.msra.mxu0 0
      %4194 = vmatprep.mubr.bf16.mxu0 0
      %4195 = vmatmul.mubr.bf16.gmra.mrb[0].mxu0 %v4106
      %v4196 = vpop.f32.mrb[0].mxu0
      %v4197 = vadd.f32 0.0, %v4196
      %v4198 = vpop.f32.mrb[0].mxu0
      %v4199 = vpop.f32.mrb[0].mxu0
      %v4200 = vadd.f32 0.0, %v4199
      %v4201 = vpop.f32.mrb[0].mxu0
      %4202 = vmatprep.mubr.bf16.mxu0 0
      %4203 = vmatmul.mubr.bf16.gmra.mrb[0].mxu0 %v4109
      %v4204 = vpop.f32.mrb[0].mxu0
      %v4205 = vadd.f32 0.0, %v4204
      %v4206 = vpop.f32.mrb[0].mxu0
      %v4207 = vpop.f32.mrb[0].mxu0
      %v4208 = vadd.f32 0.0, %v4207
      %v4209 = vpop.f32.mrb[0].mxu0
      %4210 = vmatprep.mubr.bf16.mxu0 0
      %4211 = vmatmul.mubr.bf16.gmra.mrb[0].mxu0 %v4112
      %v4212 = vpop.f32.mrb[0].mxu0
      %v4213 = vadd.f32 0.0, %v4212
      %v4214 = vpop.f32.mrb[0].mxu0
      %v4215 = vpop.f32.mrb[0].mxu0
      %v4216 = vadd.f32 0.0, %v4215
      %v4217 = vpop.f32.mrb[0].mxu0
      %4218 = vmatprep.mubr.bf16.mxu0 0
      %4219 = vmatmul.mubr.bf16.gmra.mrb[0].mxu0 %v4115
      %v4220 = vpop.f32.mrb[0].mxu0
      %v4221 = vadd.f32 0.0, %v4220
      %v4222 = vpop.f32.mrb[0].mxu0
      %v4223 = vpop.f32.mrb[0].mxu0
      %v4224 = vadd.f32 0.0, %v4223
      %v4225 = vpop.f32.mrb[0].mxu0
      %4226 = vmatprep.mubr.bf16.mxu0 0
      %4227 = vmatmul.mubr.bf16.gmra.mrb[0].mxu0 %v4118
      %v4228 = vpop.f32.mrb[0].mxu0
      %v4229 = vadd.f32 0.0, %v4228
      %v4230 = vpop.f32.mrb[0].mxu0
      %v4231 = vpop.f32.mrb[0].mxu0
      %v4232 = vadd.f32 0.0, %v4231
      %v4233 = vpop.f32.mrb[0].mxu0
      %4234 = vmatprep.mubr.bf16.mxu0 0
      %4235 = vmatmul.mubr.bf16.gmra.mrb[0].mxu0 %v4121
      %v4236 = vpop.f32.mrb[0].mxu0
      %v4237 = vadd.f32 0.0, %v4236
      %v4238 = vpop.f32.mrb[0].mxu0
      %v4239 = vpop.f32.mrb[0].mxu0
      %v4240 = vadd.f32 0.0, %v4239
      %v4241 = vpop.f32.mrb[0].mxu0
      %4242 = vmatprep.mubr.bf16.mxu0 0
      %4243 = vmatmul.mubr.bf16.gmra.mrb[0].mxu0 %v4124
      %v4244 = vpop.f32.mrb[0].mxu0
      %v4245 = vadd.f32 0.0, %v4244
      %v4246 = vpop.f32.mrb[0].mxu0
      %v4247 = vpop.f32.mrb[0].mxu0
      %v4248 = vadd.f32 0.0, %v4247
      %v4249 = vpop.f32.mrb[0].mxu0
      %4250 = vmatprep.mubr.bf16.mxu0 0
      %4251 = vmatmul.mubr.bf16.gmra.mrb[0].mxu0 %v4127
      %v4252 = vpop.f32.mrb[0].mxu0
      %v4253 = vadd.f32 0.0, %v4252
      %v4254 = vpop.f32.mrb[0].mxu0
      %v4255 = vpop.f32.mrb[0].mxu0
      %v4256 = vadd.f32 0.0, %v4255
      %v4257 = vpop.f32.mrb[0].mxu0
      %4258 = vmatprep.mubr.bf16.mxu0 0
      %4259 = vmatmul.mubr.bf16.gmra.mrb[0].mxu0 %v4130
      %v4260 = vpop.f32.mrb[0].mxu0
      %v4261 = vadd.f32 0.0, %v4260
      %v4262 = vpop.f32.mrb[0].mxu0
      %v4263 = vpop.f32.mrb[0].mxu0
      %v4264 = vadd.f32 0.0, %v4263
      %v4265 = vpop.f32.mrb[0].mxu0
      %4266 = vmatprep.mubr.bf16.mxu0 0
      %4267 = vmatmul.mubr.bf16.gmra.mrb[0].mxu0 %v4133
      %v4268 = vpop.f32.mrb[0].mxu0
      %v4269 = vadd.f32 0.0, %v4268
      %v4270 = vpop.f32.mrb[0].mxu0
      %v4271 = vpop.f32.mrb[0].mxu0
      %v4272 = vadd.f32 0.0, %v4271
      %v4273 = vpop.f32.mrb[0].mxu0
      %4274 = vmatprep.mubr.bf16.mxu0 0
      %4275 = vmatmul.mubr.bf16.gmra.mrb[0].mxu0 %v4136
      %v4276 = vpop.f32.mrb[0].mxu0
      %v4277 = vadd.f32 0.0, %v4276
      %v4278 = vpop.f32.mrb[0].mxu0
      %v4279 = vpop.f32.mrb[0].mxu0
      %v4280 = vadd.f32 0.0, %v4279
      %v4281 = vpop.f32.mrb[0].mxu0
      %4282 = vmatprep.mubr.bf16.mxu0 0
      %4283 = vmatmul.mubr.bf16.gmra.mrb[0].mxu0 %v4139
      %v4284 = vpop.f32.mrb[0].mxu0
      %v4285 = vadd.f32 0.0, %v4284
      %v4286 = vpop.f32.mrb[0].mxu0
      %v4287 = vpop.f32.mrb[0].mxu0
      %v4288 = vadd.f32 0.0, %v4287
      %v4289 = vpop.f32.mrb[0].mxu0
      %4290 = vmatprep.mubr.bf16.mxu0 0
      %4291 = vmatmul.mubr.bf16.gmra.mrb[0].mxu0 %v4142
      %v4292 = vpop.f32.mrb[0].mxu0
      %v4293 = vadd.f32 0.0, %v4292
      %v4294 = vpop.f32.mrb[0].mxu0
      %v4295 = vpop.f32.mrb[0].mxu0
      %v4296 = vadd.f32 0.0, %v4295
      %v4297 = vpop.f32.mrb[0].mxu0
      %4298 = vmatprep.mubr.bf16.mxu0 0
      %4299 = vmatmul.mubr.bf16.gmra.mrb[0].mxu0 %v4145
      %v4300 = vpop.f32.mrb[0].mxu0
      %v4301 = vadd.f32 0.0, %v4300
      %v4302 = vpop.f32.mrb[0].mxu0
      %v4303 = vpop.f32.mrb[0].mxu0
      %v4304 = vadd.f32 0.0, %v4303
      %v4305 = vpop.f32.mrb[0].mxu0
      %4306 = vmatprep.mubr.bf16.mxu0 0
      %4307 = vmatmul.mubr.bf16.gmra.mrb[0].mxu0 %v4148
      %v4308 = vpop.f32.mrb[0].mxu0
      %v4309 = vadd.f32 0.0, %v4308
      %v4310 = vpop.f32.mrb[0].mxu0
      %v4311 = vpop.f32.mrb[0].mxu0
      %v4312 = vadd.f32 0.0, %v4311
      %v4313 = vpop.f32.mrb[0].mxu0
      %4314 = vmatprep.mubr.bf16.mxu0 0
      %4315 = vmatmul.mubr.bf16.gmra.mrb[0].mxu0 %v4151
      %v4316 = vpop.f32.mrb[0].mxu0
      %v4317 = vadd.f32 0.0, %v4316
      %v4318 = vpop.f32.mrb[0].mxu0
      %v4319 = vpop.f32.mrb[0].mxu0
      %v4320 = vadd.f32 0.0, %v4319
      %v4321 = vpop.f32.mrb[0].mxu0
      %4322 = vmatprep.mubr.bf16.mxu0 0
      %4323 = vmatmul.mubr.bf16.gmra.mrb[0].mxu0 %v4154
      %v4324 = vpop.f32.mrb[0].mxu0
      %v4325 = vadd.f32 0.0, %v4324
      %v4326 = vpop.f32.mrb[0].mxu0
      %v4327 = vpop.f32.mrb[0].mxu0
      %v4328 = vadd.f32 0.0, %v4327
      %v4329 = vpop.f32.mrb[0].mxu0
      %4330 = vmatprep.mubr.bf16.mxu0 0
      %4331 = vmatmul.mubr.bf16.gmra.mrb[0].mxu0 %v4157
      %v4332 = vpop.f32.mrb[0].mxu0
      %v4333 = vadd.f32 0.0, %v4332
      %v4334 = vpop.f32.mrb[0].mxu0
      %v4335 = vpop.f32.mrb[0].mxu0
      %v4336 = vadd.f32 0.0, %v4335
      %v4337 = vpop.f32.mrb[0].mxu0
      %4338 = vdwg.mxu0
      %v4340 = vsel %vm391, %v4030, 0
      %v4343 = vsel %vm391, %v4031, 0
      %v4346 = vsel %vm391, %v4032, 0
      %v4349 = vsel %vm391, %v4033, 0
      %v4352 = vsel %vm391, %v4034, 0
      %v4355 = vsel %vm391, %v4035, 0
      %v4358 = vsel %vm391, %v4036, 0
      %v4361 = vsel %vm391, %v4037, 0
      %v4364 = vsel %vm391, %v4038, 0
      %v4367 = vsel %vm391, %v4039, 0
      %v4370 = vsel %vm391, %v4040, 0
      %v4373 = vsel %vm391, %v4041, 0
      %v4376 = vsel %vm391, %v4042, 0
      %v4379 = vsel %vm391, %v4043, 0
      %v4382 = vsel %vm391, %v4044, 0
      %v4385 = vsel %vm391, %v4045, 0
      %v4388 = vsel %vm391, %v4046, 0
      %v4391 = vsel %vm391, %v4047, 0
      %v4394 = vsel %vm446, %v4048, 0
      %4396 = vmatprep.subr.bf16.mxu0 0
      %4397 = vmatpush1.bf16.msra.mxu0 %v4394
      %4398 = vmatprep.subr.bf16.mxu0 0
      %4399 = vmatpush1.bf16.msra.mxu0 0
      %4400 = vmatprep.subr.bf16.mxu0 0
      %4401 = vmatpush1.bf16.msra.mxu0 0
      %4402 = vmatprep.subr.bf16.mxu0 0
      %4403 = vmatpush1.bf16.msra.mxu0 0
      %4404 = vmatprep.subr.bf16.mxu0 0
      %4405 = vmatpush1.bf16.msra.mxu0 0
      %4406 = vmatprep.subr.bf16.mxu0 0
      %4407 = vmatpush1.bf16.msra.mxu0 0
      %4408 = vmatprep.subr.bf16.mxu0 0
      %4409 = vmatpush1.bf16.msra.mxu0 0
      %4410 = vmatprep.subr.bf16.mxu0 0
      %4411 = vmatpush1.bf16.msra.mxu0 0
      %4412 = vmatprep.subr.bf16.mxu0 0
      %4413 = vmatpush1.bf16.msra.mxu0 0
      %4414 = vmatprep.subr.bf16.mxu0 0
      %4415 = vmatpush1.bf16.msra.mxu0 0
      %4416 = vmatprep.subr.bf16.mxu0 0
      %4417 = vmatpush1.bf16.msra.mxu0 0
      %4418 = vmatprep.subr.bf16.mxu0 0
      %4419 = vmatpush1.bf16.msra.mxu0 0
      %4420 = vmatprep.subr.bf16.mxu0 0
      %4421 = vmatpush1.bf16.msra.mxu0 0
      %4422 = vmatprep.subr.bf16.mxu0 0
      %4423 = vmatpush1.bf16.msra.mxu0 0
      %4424 = vmatprep.subr.bf16.mxu0 0
      %4425 = vmatpush1.bf16.msra.mxu0 0
      %4426 = vmatprep.subr.bf16.mxu0 0
      %4427 = vmatpush1.bf16.msra.mxu0 0
      %4428 = vmatprep.mubr.bf16.mxu0 0
      %4429 = vmatmul.mubr.bf16.gmra.mrb[0].mxu0 %v4340
      %v4430 = vpop.f32.mrb[0].mxu0
      %v4431 = vadd.f32 %v4197, %v4430
      %v4432 = vpop.f32.mrb[0].mxu0
      %v4433 = vpop.f32.mrb[0].mxu0
      %v4434 = vadd.f32 %v4200, %v4433
      %v4435 = vpop.f32.mrb[0].mxu0
      %4436 = vmatprep.mubr.bf16.mxu0 0
      %4437 = vmatmul.mubr.bf16.gmra.mrb[0].mxu0 %v4343
      %v4438 = vpop.f32.mrb[0].mxu0
      %v4439 = vadd.f32 %v4205, %v4438
      %v4440 = vpop.f32.mrb[0].mxu0
      %v4441 = vpop.f32.mrb[0].mxu0
      %v4442 = vadd.f32 %v4208, %v4441
      %v4443 = vpop.f32.mrb[0].mxu0
      %4444 = vmatprep.mubr.bf16.mxu0 0
      %4445 = vmatmul.mubr.bf16.gmra.mrb[0].mxu0 %v4346
      %v4446 = vpop.f32.mrb[0].mxu0
      %v4447 = vadd.f32 %v4213, %v4446
      %v4448 = vpop.f32.mrb[0].mxu0
      %v4449 = vpop.f32.mrb[0].mxu0
      %v4450 = vadd.f32 %v4216, %v4449
      %v4451 = vpop.f32.mrb[0].mxu0
      %4452 = vmatprep.mubr.bf16.mxu0 0
      %4453 = vmatmul.mubr.bf16.gmra.mrb[0].mxu0 %v4349
      %v4454 = vpop.f32.mrb[0].mxu0
      %v4455 = vadd.f32 %v4221, %v4454
      %v4456 = vpop.f32.mrb[0].mxu0
      %v4457 = vpop.f32.mrb[0].mxu0
      %v4458 = vadd.f32 %v4224, %v4457
      %v4459 = vpop.f32.mrb[0].mxu0
      %4460 = vmatprep.mubr.bf16.mxu0 0
      %4461 = vmatmul.mubr.bf16.gmra.mrb[0].mxu0 %v4352
      %v4462 = vpop.f32.mrb[0].mxu0
      %v4463 = vadd.f32 %v4229, %v4462
      %v4464 = vpop.f32.mrb[0].mxu0
      %v4465 = vpop.f32.mrb[0].mxu0
      %v4466 = vadd.f32 %v4232, %v4465
      %v4467 = vpop.f32.mrb[0].mxu0
      %4468 = vmatprep.mubr.bf16.mxu0 0
      %4469 = vmatmul.mubr.bf16.gmra.mrb[0].mxu0 %v4355
      %v4470 = vpop.f32.mrb[0].mxu0
      %v4471 = vadd.f32 %v4237, %v4470
      %v4472 = vpop.f32.mrb[0].mxu0
      %v4473 = vpop.f32.mrb[0].mxu0
      %v4474 = vadd.f32 %v4240, %v4473
      %v4475 = vpop.f32.mrb[0].mxu0
      %4476 = vmatprep.mubr.bf16.mxu0 0
      %4477 = vmatmul.mubr.bf16.gmra.mrb[0].mxu0 %v4358
      %v4478 = vpop.f32.mrb[0].mxu0
      %v4479 = vadd.f32 %v4245, %v4478
      %v4480 = vpop.f32.mrb[0].mxu0
      %v4481 = vpop.f32.mrb[0].mxu0
      %v4482 = vadd.f32 %v4248, %v4481
      %v4483 = vpop.f32.mrb[0].mxu0
      %4484 = vmatprep.mubr.bf16.mxu0 0
      %4485 = vmatmul.mubr.bf16.gmra.mrb[0].mxu0 %v4361
      %v4486 = vpop.f32.mrb[0].mxu0
      %v4487 = vadd.f32 %v4253, %v4486
      %v4488 = vpop.f32.mrb[0].mxu0
      %v4489 = vpop.f32.mrb[0].mxu0
      %v4490 = vadd.f32 %v4256, %v4489
      %v4491 = vpop.f32.mrb[0].mxu0
      %4492 = vmatprep.mubr.bf16.mxu0 0
      %4493 = vmatmul.mubr.bf16.gmra.mrb[0].mxu0 %v4364
      %v4494 = vpop.f32.mrb[0].mxu0
      %v4495 = vadd.f32 %v4261, %v4494
      %v4496 = vpop.f32.mrb[0].mxu0
      %v4497 = vpop.f32.mrb[0].mxu0
      %v4498 = vadd.f32 %v4264, %v4497
      %v4499 = vpop.f32.mrb[0].mxu0
      %4500 = vmatprep.mubr.bf16.mxu0 0
      %4501 = vmatmul.mubr.bf16.gmra.mrb[0].mxu0 %v4367
      %v4502 = vpop.f32.mrb[0].mxu0
      %v4503 = vadd.f32 %v4269, %v4502
      %v4504 = vpop.f32.mrb[0].mxu0
      %v4505 = vpop.f32.mrb[0].mxu0
      %v4506 = vadd.f32 %v4272, %v4505
      %v4507 = vpop.f32.mrb[0].mxu0
      %4508 = vmatprep.mubr.bf16.mxu0 0
      %4509 = vmatmul.mubr.bf16.gmra.mrb[0].mxu0 %v4370
      %v4510 = vpop.f32.mrb[0].mxu0
      %v4511 = vadd.f32 %v4277, %v4510
      %v4512 = vpop.f32.mrb[0].mxu0
      %v4513 = vpop.f32.mrb[0].mxu0
      %v4514 = vadd.f32 %v4280, %v4513
      %v4515 = vpop.f32.mrb[0].mxu0
      %4516 = vmatprep.mubr.bf16.mxu0 0
      %4517 = vmatmul.mubr.bf16.gmra.mrb[0].mxu0 %v4373
      %v4518 = vpop.f32.mrb[0].mxu0
      %v4519 = vadd.f32 %v4285, %v4518
      %v4520 = vpop.f32.mrb[0].mxu0
      %v4521 = vpop.f32.mrb[0].mxu0
      %v4522 = vadd.f32 %v4288, %v4521
      %v4523 = vpop.f32.mrb[0].mxu0
      %4524 = vmatprep.mubr.bf16.mxu0 0
      %4525 = vmatmul.mubr.bf16.gmra.mrb[0].mxu0 %v4376
      %v4526 = vpop.f32.mrb[0].mxu0
      %v4527 = vadd.f32 %v4293, %v4526
      %v4528 = vpop.f32.mrb[0].mxu0
      %v4529 = vpop.f32.mrb[0].mxu0
      %v4530 = vadd.f32 %v4296, %v4529
      %v4531 = vpop.f32.mrb[0].mxu0
      %4532 = vmatprep.mubr.bf16.mxu0 0
      %4533 = vmatmul.mubr.bf16.gmra.mrb[0].mxu0 %v4379
      %v4534 = vpop.f32.mrb[0].mxu0
      %v4535 = vadd.f32 %v4301, %v4534
      %v4536 = vpop.f32.mrb[0].mxu0
      %v4537 = vpop.f32.mrb[0].mxu0
      %v4538 = vadd.f32 %v4304, %v4537
      %v4539 = vpop.f32.mrb[0].mxu0
      %4540 = vmatprep.mubr.bf16.mxu0 0
      %4541 = vmatmul.mubr.bf16.gmra.mrb[0].mxu0 %v4382
      %v4542 = vpop.f32.mrb[0].mxu0
      %v4543 = vadd.f32 %v4309, %v4542
      %v4544 = vpop.f32.mrb[0].mxu0
      %v4545 = vpop.f32.mrb[0].mxu0
      %v4546 = vadd.f32 %v4312, %v4545
      %v4547 = vpop.f32.mrb[0].mxu0
      %4548 = vmatprep.mubr.bf16.mxu0 0
      %4549 = vmatmul.mubr.bf16.gmra.mrb[0].mxu0 %v4385
      %v4550 = vpop.f32.mrb[0].mxu0
      %v4551 = vadd.f32 %v4317, %v4550
      %v4552 = vpop.f32.mrb[0].mxu0
      %v4553 = vpop.f32.mrb[0].mxu0
      %v4554 = vadd.f32 %v4320, %v4553
      %v4555 = vpop.f32.mrb[0].mxu0
      %4556 = vmatprep.mubr.bf16.mxu0 0
      %4557 = vmatmul.mubr.bf16.gmra.mrb[0].mxu0 %v4388
      %v4558 = vpop.f32.mrb[0].mxu0
      %v4559 = vadd.f32 %v4325, %v4558
      %v4560 = vpop.f32.mrb[0].mxu0
      %v4561 = vpop.f32.mrb[0].mxu0
      %v4562 = vadd.f32 %v4328, %v4561
      %v4563 = vpop.f32.mrb[0].mxu0
      %4564 = vmatprep.mubr.bf16.mxu0 0
      %4565 = vmatmul.mubr.bf16.gmra.mrb[0].mxu0 %v4391
      %v4566 = vpop.f32.mrb[0].mxu0
      %v4567 = vadd.f32 %v4333, %v4566
      %v4568 = vpop.f32.mrb[0].mxu0
      %v4569 = vpop.f32.mrb[0].mxu0
      %v4570 = vadd.f32 %v4336, %v4569
      %v4571 = vpop.f32.mrb[0].mxu0
      %4572 = vdwg.mxu0
      %v4573 = vld [vmem:[#allocation2 + $0x2] sm:$0xff]
      %v4574 = vld [vmem:[#allocation2 + $0xa] sm:$0xff]
      %v4575 = vld [vmem:[#allocation2 + $0x12] sm:$0xff]
      %v4576 = vld [vmem:[#allocation2 + $0x1a] sm:$0xff]
      %v4577 = vld [vmem:[#allocation2 + $0x22] sm:$0xff]
      %v4578 = vld [vmem:[#allocation2 + $0x2a] sm:$0xff]
      %v4579 = vld [vmem:[#allocation2 + $0x32] sm:$0xff]
      %v4580 = vld [vmem:[#allocation2 + $0x3a] sm:$0xff]
      %v4581 = vld [vmem:[#allocation2 + $0x42] sm:$0xff]
      %v4582 = vld [vmem:[#allocation2 + $0x4a] sm:$0xff]
      %v4583 = vld [vmem:[#allocation2 + $0x52] sm:$0xff]
      %v4584 = vld [vmem:[#allocation2 + $0x5a] sm:$0xff]
      %v4585 = vld [vmem:[#allocation2 + $0x62] sm:$0xff]
      %v4586 = vld [vmem:[#allocation2 + $0x6a] sm:$0xff]
      %v4587 = vld [vmem:[#allocation2 + $0x72] sm:$0xff]
      %v4588 = vld [vmem:[#allocation2 + $0x7a] sm:$0xff]
      %v4589 = vld [vmem:[#allocation2 + $0x82] sm:$0xff]
      %v4590 = vld [vmem:[#allocation2 + $0x8a] sm:$0xff]
      %v4591 = vld [vmem:[#allocation2 + $0x92] sm:$0xff]
      %v4592 = vld [vmem:[#allocation2 + $0x9a] sm:$0xff]
      %v4593 = vld [vmem:[#allocation2 + $0xa2] sm:$0xff]
      %v4594 = vld [vmem:[#allocation2 + $0xaa] sm:$0xff]
      %v4595 = vld [vmem:[#allocation2 + $0xb2] sm:$0xff]
      %v4596 = vld [vmem:[#allocation2 + $0xba] sm:$0xff]
      %v4597 = vld [vmem:[#allocation2 + $0xc2] sm:$0xff]
      %v4598 = vld [vmem:[#allocation2 + $0xca] sm:$0xff]
      %v4599 = vld [vmem:[#allocation2 + $0xd2] sm:$0xff]
      %v4600 = vld [vmem:[#allocation2 + $0xda] sm:$0xff]
      %v4601 = vld [vmem:[#allocation2 + $0xe2] sm:$0xff]
      %v4602 = vld [vmem:[#allocation2 + $0xea] sm:$0xff]
      %v4603 = vld [vmem:[#allocation2 + $0xf2] sm:$0xff]
      %v4604 = vld [vmem:[#allocation2 + $0xfa] sm:$0xff]
      %v4605 = vld [vmem:[#allocation2 + $0x102] sm:$0xff]
      %v4606 = vld [vmem:[#allocation2 + $0x10a] sm:$0xff]
      %v4607 = vld [vmem:[#allocation2 + $0x112] sm:$0xff]
      %v4608 = vld [vmem:[#allocation2 + $0x11a] sm:$0xff]
      %v4609 = vpack.c.bf16 %v4574, %v4573
      %v4610 = vpack.c.bf16 %v4576, %v4575
      %v4611 = vpack.c.bf16 %v4578, %v4577
      %v4612 = vpack.c.bf16 %v4580, %v4579
      %v4613 = vpack.c.bf16 %v4582, %v4581
      %v4614 = vpack.c.bf16 %v4584, %v4583
      %v4615 = vpack.c.bf16 %v4586, %v4585
      %v4616 = vpack.c.bf16 %v4588, %v4587
      %v4617 = vpack.c.bf16 %v4590, %v4589
      %v4618 = vpack.c.bf16 %v4592, %v4591
      %v4619 = vpack.c.bf16 %v4594, %v4593
      %v4620 = vpack.c.bf16 %v4596, %v4595
      %v4621 = vpack.c.bf16 %v4598, %v4597
      %v4622 = vpack.c.bf16 %v4600, %v4599
      %v4623 = vpack.c.bf16 %v4602, %v4601
      %v4624 = vpack.c.bf16 %v4604, %v4603
      %v4625 = vpack.c.bf16 %v4606, %v4605
      %v4626 = vpack.c.bf16 %v4608, %v4607
      %s4627 = scalar_lea.vmem %s4, 4
      %v4628 = vld [vmem:[%s4627] sm:$0x3]
      %v4630 = vsel %vm391, %v4609, 0
      %v4633 = vsel %vm391, %v4610, 0
      %v4636 = vsel %vm391, %v4611, 0
      %v4639 = vsel %vm391, %v4612, 0
      %v4642 = vsel %vm391, %v4613, 0
      %v4645 = vsel %vm391, %v4614, 0
      %v4648 = vsel %vm391, %v4615, 0
      %v4651 = vsel %vm391, %v4616, 0
      %v4654 = vsel %vm391, %v4617, 0
      %v4657 = vsel %vm391, %v4618, 0
      %v4660 = vsel %vm391, %v4619, 0
      %v4663 = vsel %vm391, %v4620, 0
      %v4666 = vsel %vm391, %v4621, 0
      %v4669 = vsel %vm391, %v4622, 0
      %v4672 = vsel %vm391, %v4623, 0
      %v4675 = vsel %vm391, %v4624, 0
      %v4678 = vsel %vm391, %v4625, 0
      %v4681 = vsel %vm391, %v4626, 0
      %v4684 = vsel %vm446, %v4628, 0
      %4686 = vmatprep.subr.bf16.mxu0 0
      %4687 = vmatpush1.bf16.msra.mxu0 %v4684
      %4688 = vmatprep.subr.bf16.mxu0 0
      %4689 = vmatpush1.bf16.msra.mxu0 0
      %4690 = vmatprep.subr.bf16.mxu0 0
      %4691 = vmatpush1.bf16.msra.mxu0 0
      %4692 = vmatprep.subr.bf16.mxu0 0
      %4693 = vmatpush1.bf16.msra.mxu0 0
      %4694 = vmatprep.subr.bf16.mxu0 0
      %4695 = vmatpush1.bf16.msra.mxu0 0
      %4696 = vmatprep.subr.bf16.mxu0 0
      %4697 = vmatpush1.bf16.msra.mxu0 0
      %4698 = vmatprep.subr.bf16.mxu0 0
      %4699 = vmatpush1.bf16.msra.mxu0 0
      %4700 = vmatprep.subr.bf16.mxu0 0
      %4701 = vmatpush1.bf16.msra.mxu0 0
      %4702 = vmatprep.subr.bf16.mxu0 0
      %4703 = vmatpush1.bf16.msra.mxu0 0
      %4704 = vmatprep.subr.bf16.mxu0 0
      %4705 = vmatpush1.bf16.msra.mxu0 0
      %4706 = vmatprep.subr.bf16.mxu0 0
      %4707 = vmatpush1.bf16.msra.mxu0 0
      %4708 = vmatprep.subr.bf16.mxu0 0
      %4709 = vmatpush1.bf16.msra.mxu0 0
      %4710 = vmatprep.subr.bf16.mxu0 0
      %4711 = vmatpush1.bf16.msra.mxu0 0
      %4712 = vmatprep.subr.bf16.mxu0 0
      %4713 = vmatpush1.bf16.msra.mxu0 0
      %4714 = vmatprep.subr.bf16.mxu0 0
      %4715 = vmatpush1.bf16.msra.mxu0 0
      %4716 = vmatprep.subr.bf16.mxu0 0
      %4717 = vmatpush1.bf16.msra.mxu0 0
      %4718 = vmatprep.mubr.bf16.mxu0 0
      %4719 = vmatmul.mubr.bf16.gmra.mrb[0].mxu0 %v4630
      %v4720 = vpop.f32.mrb[0].mxu0
      %v4721 = vadd.f32 0.0, %v4720
      %v4722 = vpop.f32.mrb[0].mxu0
      %v4723 = vpop.f32.mrb[0].mxu0
      %v4724 = vadd.f32 0.0, %v4723
      %v4725 = vpop.f32.mrb[0].mxu0
      %4726 = vmatprep.mubr.bf16.mxu0 0
      %4727 = vmatmul.mubr.bf16.gmra.mrb[0].mxu0 %v4633
      %v4728 = vpop.f32.mrb[0].mxu0
      %v4729 = vadd.f32 0.0, %v4728
      %v4730 = vpop.f32.mrb[0].mxu0
      %v4731 = vpop.f32.mrb[0].mxu0
      %v4732 = vadd.f32 0.0, %v4731
      %v4733 = vpop.f32.mrb[0].mxu0
      %4734 = vmatprep.mubr.bf16.mxu0 0
      %4735 = vmatmul.mubr.bf16.gmra.mrb[0].mxu0 %v4636
      %v4736 = vpop.f32.mrb[0].mxu0
      %v4737 = vadd.f32 0.0, %v4736
      %v4738 = vpop.f32.mrb[0].mxu0
      %v4739 = vpop.f32.mrb[0].mxu0
      %v4740 = vadd.f32 0.0, %v4739
      %v4741 = vpop.f32.mrb[0].mxu0
      %4742 = vmatprep.mubr.bf16.mxu0 0
      %4743 = vmatmul.mubr.bf16.gmra.mrb[0].mxu0 %v4639
      %v4744 = vpop.f32.mrb[0].mxu0
      %v4745 = vadd.f32 0.0, %v4744
      %v4746 = vpop.f32.mrb[0].mxu0
      %v4747 = vpop.f32.mrb[0].mxu0
      %v4748 = vadd.f32 0.0, %v4747
      %v4749 = vpop.f32.mrb[0].mxu0
      %4750 = vmatprep.mubr.bf16.mxu0 0
      %4751 = vmatmul.mubr.bf16.gmra.mrb[0].mxu0 %v4642
      %v4752 = vpop.f32.mrb[0].mxu0
      %v4753 = vadd.f32 0.0, %v4752
      %v4754 = vpop.f32.mrb[0].mxu0
      %v4755 = vpop.f32.mrb[0].mxu0
      %v4756 = vadd.f32 0.0, %v4755
      %v4757 = vpop.f32.mrb[0].mxu0
      %4758 = vmatprep.mubr.bf16.mxu0 0
      %4759 = vmatmul.mubr.bf16.gmra.mrb[0].mxu0 %v4645
      %v4760 = vpop.f32.mrb[0].mxu0
      %v4761 = vadd.f32 0.0, %v4760
      %v4762 = vpop.f32.mrb[0].mxu0
      %v4763 = vpop.f32.mrb[0].mxu0
      %v4764 = vadd.f32 0.0, %v4763
      %v4765 = vpop.f32.mrb[0].mxu0
      %4766 = vmatprep.mubr.bf16.mxu0 0
      %4767 = vmatmul.mubr.bf16.gmra.mrb[0].mxu0 %v4648
      %v4768 = vpop.f32.mrb[0].mxu0
      %v4769 = vadd.f32 0.0, %v4768
      %v4770 = vpop.f32.mrb[0].mxu0
      %v4771 = vpop.f32.mrb[0].mxu0
      %v4772 = vadd.f32 0.0, %v4771
      %v4773 = vpop.f32.mrb[0].mxu0
      %4774 = vmatprep.mubr.bf16.mxu0 0
      %4775 = vmatmul.mubr.bf16.gmra.mrb[0].mxu0 %v4651
      %v4776 = vpop.f32.mrb[0].mxu0
      %v4777 = vadd.f32 0.0, %v4776
      %v4778 = vpop.f32.mrb[0].mxu0
      %v4779 = vpop.f32.mrb[0].mxu0
      %v4780 = vadd.f32 0.0, %v4779
      %v4781 = vpop.f32.mrb[0].mxu0
      %4782 = vmatprep.mubr.bf16.mxu0 0
      %4783 = vmatmul.mubr.bf16.gmra.mrb[0].mxu0 %v4654
      %v4784 = vpop.f32.mrb[0].mxu0
      %v4785 = vadd.f32 0.0, %v4784
      %v4786 = vpop.f32.mrb[0].mxu0
      %v4787 = vpop.f32.mrb[0].mxu0
      %v4788 = vadd.f32 0.0, %v4787
      %v4789 = vpop.f32.mrb[0].mxu0
      %4790 = vmatprep.mubr.bf16.mxu0 0
      %4791 = vmatmul.mubr.bf16.gmra.mrb[0].mxu0 %v4657
      %v4792 = vpop.f32.mrb[0].mxu0
      %v4793 = vadd.f32 0.0, %v4792
      %v4794 = vpop.f32.mrb[0].mxu0
      %v4795 = vpop.f32.mrb[0].mxu0
      %v4796 = vadd.f32 0.0, %v4795
      %v4797 = vpop.f32.mrb[0].mxu0
      %4798 = vmatprep.mubr.bf16.mxu0 0
      %4799 = vmatmul.mubr.bf16.gmra.mrb[0].mxu0 %v4660
      %v4800 = vpop.f32.mrb[0].mxu0
      %v4801 = vadd.f32 0.0, %v4800
      %v4802 = vpop.f32.mrb[0].mxu0
      %v4803 = vpop.f32.mrb[0].mxu0
      %v4804 = vadd.f32 0.0, %v4803
      %v4805 = vpop.f32.mrb[0].mxu0
      %4806 = vmatprep.mubr.bf16.mxu0 0
      %4807 = vmatmul.mubr.bf16.gmra.mrb[0].mxu0 %v4663
      %v4808 = vpop.f32.mrb[0].mxu0
      %v4809 = vadd.f32 0.0, %v4808
      %v4810 = vpop.f32.mrb[0].mxu0
      %v4811 = vpop.f32.mrb[0].mxu0
      %v4812 = vadd.f32 0.0, %v4811
      %v4813 = vpop.f32.mrb[0].mxu0
      %4814 = vmatprep.mubr.bf16.mxu0 0
      %4815 = vmatmul.mubr.bf16.gmra.mrb[0].mxu0 %v4666
      %v4816 = vpop.f32.mrb[0].mxu0
      %v4817 = vadd.f32 0.0, %v4816
      %v4818 = vpop.f32.mrb[0].mxu0
      %v4819 = vpop.f32.mrb[0].mxu0
      %v4820 = vadd.f32 0.0, %v4819
      %v4821 = vpop.f32.mrb[0].mxu0
      %4822 = vmatprep.mubr.bf16.mxu0 0
      %4823 = vmatmul.mubr.bf16.gmra.mrb[0].mxu0 %v4669
      %v4824 = vpop.f32.mrb[0].mxu0
      %v4825 = vadd.f32 0.0, %v4824
      %v4826 = vpop.f32.mrb[0].mxu0
      %v4827 = vpop.f32.mrb[0].mxu0
      %v4828 = vadd.f32 0.0, %v4827
      %v4829 = vpop.f32.mrb[0].mxu0
      %4830 = vmatprep.mubr.bf16.mxu0 0
      %4831 = vmatmul.mubr.bf16.gmra.mrb[0].mxu0 %v4672
      %v4832 = vpop.f32.mrb[0].mxu0
      %v4833 = vadd.f32 0.0, %v4832
      %v4834 = vpop.f32.mrb[0].mxu0
      %v4835 = vpop.f32.mrb[0].mxu0
      %v4836 = vadd.f32 0.0, %v4835
      %v4837 = vpop.f32.mrb[0].mxu0
      %4838 = vmatprep.mubr.bf16.mxu0 0
      %4839 = vmatmul.mubr.bf16.gmra.mrb[0].mxu0 %v4675
      %v4840 = vpop.f32.mrb[0].mxu0
      %v4841 = vadd.f32 0.0, %v4840
      %v4842 = vpop.f32.mrb[0].mxu0
      %v4843 = vpop.f32.mrb[0].mxu0
      %v4844 = vadd.f32 0.0, %v4843
      %v4845 = vpop.f32.mrb[0].mxu0
      %4846 = vmatprep.mubr.bf16.mxu0 0
      %4847 = vmatmul.mubr.bf16.gmra.mrb[0].mxu0 %v4678
      %v4848 = vpop.f32.mrb[0].mxu0
      %v4849 = vadd.f32 0.0, %v4848
      %v4850 = vpop.f32.mrb[0].mxu0
      %v4851 = vpop.f32.mrb[0].mxu0
      %v4852 = vadd.f32 0.0, %v4851
      %v4853 = vpop.f32.mrb[0].mxu0
      %4854 = vmatprep.mubr.bf16.mxu0 0
      %4855 = vmatmul.mubr.bf16.gmra.mrb[0].mxu0 %v4681
      %v4856 = vpop.f32.mrb[0].mxu0
      %v4857 = vadd.f32 0.0, %v4856
      %v4858 = vpop.f32.mrb[0].mxu0
      %v4859 = vpop.f32.mrb[0].mxu0
      %v4860 = vadd.f32 0.0, %v4859
      %v4861 = vpop.f32.mrb[0].mxu0
      %4862 = vdwg.mxu0
      %v4863 = vadd.f32 %v4431, %v4721
      %v4864 = vadd.f32 %v4434, %v4724
      %v4865 = vadd.f32 %v4439, %v4729
      %v4866 = vadd.f32 %v4442, %v4732
      %v4867 = vadd.f32 %v4447, %v4737
      %v4868 = vadd.f32 %v4450, %v4740
      %v4869 = vadd.f32 %v4455, %v4745
      %v4870 = vadd.f32 %v4458, %v4748
      %v4871 = vadd.f32 %v4463, %v4753
      %v4872 = vadd.f32 %v4466, %v4756
      %v4873 = vadd.f32 %v4471, %v4761
      %v4874 = vadd.f32 %v4474, %v4764
      %v4875 = vadd.f32 %v4479, %v4769
      %v4876 = vadd.f32 %v4482, %v4772
      %v4877 = vadd.f32 %v4487, %v4777
      %v4878 = vadd.f32 %v4490, %v4780
      %v4879 = vadd.f32 %v4495, %v4785
      %v4880 = vadd.f32 %v4498, %v4788
      %v4881 = vadd.f32 %v4503, %v4793
      %v4882 = vadd.f32 %v4506, %v4796
      %v4883 = vadd.f32 %v4511, %v4801
      %v4884 = vadd.f32 %v4514, %v4804
      %v4885 = vadd.f32 %v4519, %v4809
      %v4886 = vadd.f32 %v4522, %v4812
      %v4887 = vadd.f32 %v4527, %v4817
      %v4888 = vadd.f32 %v4530, %v4820
      %v4889 = vadd.f32 %v4535, %v4825
      %v4890 = vadd.f32 %v4538, %v4828
      %v4891 = vadd.f32 %v4543, %v4833
      %v4892 = vadd.f32 %v4546, %v4836
      %v4893 = vadd.f32 %v4551, %v4841
      %v4894 = vadd.f32 %v4554, %v4844
      %v4895 = vadd.f32 %v4559, %v4849
      %v4896 = vadd.f32 %v4562, %v4852
      %v4897 = vadd.f32 %v4567, %v4857
      %v4898 = vadd.f32 %v4570, %v4860
      %v4899 = vld [vmem:[#allocation2 + $0x12] sm:$0xff]
      %v4900 = vld [vmem:[#allocation2 + $0x1a] sm:$0xff]
      %v4901 = vld [vmem:[#allocation2 + $0x22] sm:$0xff]
      %v4902 = vld [vmem:[#allocation2 + $0x2a] sm:$0xff]
      %v4903 = vld [vmem:[#allocation2 + $0x32] sm:$0xff]
      %v4904 = vld [vmem:[#allocation2 + $0x3a] sm:$0xff]
      %v4905 = vld [vmem:[#allocation2 + $0x42] sm:$0xff]
      %v4906 = vld [vmem:[#allocation2 + $0x4a] sm:$0xff]
      %v4907 = vld [vmem:[#allocation2 + $0x52] sm:$0xff]
      %v4908 = vld [vmem:[#allocation2 + $0x5a] sm:$0xff]
      %v4909 = vld [vmem:[#allocation2 + $0x62] sm:$0xff]
      %v4910 = vld [vmem:[#allocation2 + $0x6a] sm:$0xff]
      %v4911 = vld [vmem:[#allocation2 + $0x72] sm:$0xff]
      %v4912 = vld [vmem:[#allocation2 + $0x7a] sm:$0xff]
      %v4913 = vld [vmem:[#allocation2 + $0x82] sm:$0xff]
      %v4914 = vld [vmem:[#allocation2 + $0x8a] sm:$0xff]
      %v4915 = vld [vmem:[#allocation2 + $0x92] sm:$0xff]
      %v4916 = vld [vmem:[#allocation2 + $0x9a] sm:$0xff]
      %v4917 = vld [vmem:[#allocation2 + $0xa2] sm:$0xff]
      %v4918 = vld [vmem:[#allocation2 + $0xaa] sm:$0xff]
      %v4919 = vld [vmem:[#allocation2 + $0xb2] sm:$0xff]
      %v4920 = vld [vmem:[#allocation2 + $0xba] sm:$0xff]
      %v4921 = vld [vmem:[#allocation2 + $0xc2] sm:$0xff]
      %v4922 = vld [vmem:[#allocation2 + $0xca] sm:$0xff]
      %v4923 = vld [vmem:[#allocation2 + $0xd2] sm:$0xff]
      %v4924 = vld [vmem:[#allocation2 + $0xda] sm:$0xff]
      %v4925 = vld [vmem:[#allocation2 + $0xe2] sm:$0xff]
      %v4926 = vld [vmem:[#allocation2 + $0xea] sm:$0xff]
      %v4927 = vld [vmem:[#allocation2 + $0xf2] sm:$0xff]
      %v4928 = vld [vmem:[#allocation2 + $0xfa] sm:$0xff]
      %v4929 = vld [vmem:[#allocation2 + $0x102] sm:$0xff]
      %v4930 = vld [vmem:[#allocation2 + $0x10a] sm:$0xff]
      %v4931 = vld [vmem:[#allocation2 + $0x112] sm:$0xff]
      %v4932 = vld [vmem:[#allocation2 + $0x11a] sm:$0xff]
      %v4933 = vld [vmem:[#allocation2 + $0x122] sm:$0xff]
      %v4934 = vld [vmem:[#allocation2 + $0x12a] sm:$0xff]
      %v4935 = vpack.c.bf16 %v4900, %v4899
      %v4936 = vpack.c.bf16 %v4902, %v4901
      %v4937 = vpack.c.bf16 %v4904, %v4903
      %v4938 = vpack.c.bf16 %v4906, %v4905
      %v4939 = vpack.c.bf16 %v4908, %v4907
      %v4940 = vpack.c.bf16 %v4910, %v4909
      %v4941 = vpack.c.bf16 %v4912, %v4911
      %v4942 = vpack.c.bf16 %v4914, %v4913
      %v4943 = vpack.c.bf16 %v4916, %v4915
      %v4944 = vpack.c.bf16 %v4918, %v4917
      %v4945 = vpack.c.bf16 %v4920, %v4919
      %v4946 = vpack.c.bf16 %v4922, %v4921
      %v4947 = vpack.c.bf16 %v4924, %v4923
      %v4948 = vpack.c.bf16 %v4926, %v4925
      %v4949 = vpack.c.bf16 %v4928, %v4927
      %v4950 = vpack.c.bf16 %v4930, %v4929
      %v4951 = vpack.c.bf16 %v4932, %v4931
      %v4952 = vpack.c.bf16 %v4934, %v4933
      %s4953 = scalar_lea.vmem %s4, 6
      %v4954 = vld [vmem:[%s4953] sm:$0x3]
      %v4956 = vsel %vm391, %v4935, 0
      %v4959 = vsel %vm391, %v4936, 0
      %v4962 = vsel %vm391, %v4937, 0
      %v4965 = vsel %vm391, %v4938, 0
      %v4968 = vsel %vm391, %v4939, 0
      %v4971 = vsel %vm391, %v4940, 0
      %v4974 = vsel %vm391, %v4941, 0
      %v4977 = vsel %vm391, %v4942, 0
      %v4980 = vsel %vm391, %v4943, 0
      %v4983 = vsel %vm391, %v4944, 0
      %v4986 = vsel %vm391, %v4945, 0
      %v4989 = vsel %vm391, %v4946, 0
      %v4992 = vsel %vm391, %v4947, 0
      %v4995 = vsel %vm391, %v4948, 0
      %v4998 = vsel %vm391, %v4949, 0
      %v5001 = vsel %vm391, %v4950, 0
      %v5004 = vsel %vm391, %v4951, 0
      %v5007 = vsel %vm391, %v4952, 0
      %v5010 = vsel %vm446, %v4954, 0
      %5012 = vmatprep.subr.bf16.mxu0 0
      %5013 = vmatpush1.bf16.msra.mxu0 %v5010
      %5014 = vmatprep.subr.bf16.mxu0 0
      %5015 = vmatpush1.bf16.msra.mxu0 0
      %5016 = vmatprep.subr.bf16.mxu0 0
      %5017 = vmatpush1.bf16.msra.mxu0 0
      %5018 = vmatprep.subr.bf16.mxu0 0
      %5019 = vmatpush1.bf16.msra.mxu0 0
      %5020 = vmatprep.subr.bf16.mxu0 0
      %5021 = vmatpush1.bf16.msra.mxu0 0
      %5022 = vmatprep.subr.bf16.mxu0 0
      %5023 = vmatpush1.bf16.msra.mxu0 0
      %5024 = vmatprep.subr.bf16.mxu0 0
      %5025 = vmatpush1.bf16.msra.mxu0 0
      %5026 = vmatprep.subr.bf16.mxu0 0
      %5027 = vmatpush1.bf16.msra.mxu0 0
      %5028 = vmatprep.subr.bf16.mxu0 0
      %5029 = vmatpush1.bf16.msra.mxu0 0
      %5030 = vmatprep.subr.bf16.mxu0 0
      %5031 = vmatpush1.bf16.msra.mxu0 0
      %5032 = vmatprep.subr.bf16.mxu0 0
      %5033 = vmatpush1.bf16.msra.mxu0 0
      %5034 = vmatprep.subr.bf16.mxu0 0
      %5035 = vmatpush1.bf16.msra.mxu0 0
      %5036 = vmatprep.subr.bf16.mxu0 0
      %5037 = vmatpush1.bf16.msra.mxu0 0
      %5038 = vmatprep.subr.bf16.mxu0 0
      %5039 = vmatpush1.bf16.msra.mxu0 0
      %5040 = vmatprep.subr.bf16.mxu0 0
      %5041 = vmatpush1.bf16.msra.mxu0 0
      %5042 = vmatprep.subr.bf16.mxu0 0
      %5043 = vmatpush1.bf16.msra.mxu0 0
      %5044 = vmatprep.mubr.bf16.mxu0 0
      %5045 = vmatmul.mubr.bf16.gmra.mrb[0].mxu0 %v4956
      %v5046 = vpop.f32.mrb[0].mxu0
      %v5047 = vadd.f32 0.0, %v5046
      %v5048 = vpop.f32.mrb[0].mxu0
      %v5049 = vpop.f32.mrb[0].mxu0
      %v5050 = vadd.f32 0.0, %v5049
      %v5051 = vpop.f32.mrb[0].mxu0
      %5052 = vmatprep.mubr.bf16.mxu0 0
      %5053 = vmatmul.mubr.bf16.gmra.mrb[0].mxu0 %v4959
      %v5054 = vpop.f32.mrb[0].mxu0
      %v5055 = vadd.f32 0.0, %v5054
      %v5056 = vpop.f32.mrb[0].mxu0
      %v5057 = vpop.f32.mrb[0].mxu0
      %v5058 = vadd.f32 0.0, %v5057
      %v5059 = vpop.f32.mrb[0].mxu0
      %5060 = vmatprep.mubr.bf16.mxu0 0
      %5061 = vmatmul.mubr.bf16.gmra.mrb[0].mxu0 %v4962
      %v5062 = vpop.f32.mrb[0].mxu0
      %v5063 = vadd.f32 0.0, %v5062
      %v5064 = vpop.f32.mrb[0].mxu0
      %v5065 = vpop.f32.mrb[0].mxu0
      %v5066 = vadd.f32 0.0, %v5065
      %v5067 = vpop.f32.mrb[0].mxu0
      %5068 = vmatprep.mubr.bf16.mxu0 0
      %5069 = vmatmul.mubr.bf16.gmra.mrb[0].mxu0 %v4965
      %v5070 = vpop.f32.mrb[0].mxu0
      %v5071 = vadd.f32 0.0, %v5070
      %v5072 = vpop.f32.mrb[0].mxu0
      %v5073 = vpop.f32.mrb[0].mxu0
      %v5074 = vadd.f32 0.0, %v5073
      %v5075 = vpop.f32.mrb[0].mxu0
      %5076 = vmatprep.mubr.bf16.mxu0 0
      %5077 = vmatmul.mubr.bf16.gmra.mrb[0].mxu0 %v4968
      %v5078 = vpop.f32.mrb[0].mxu0
      %v5079 = vadd.f32 0.0, %v5078
      %v5080 = vpop.f32.mrb[0].mxu0
      %v5081 = vpop.f32.mrb[0].mxu0
      %v5082 = vadd.f32 0.0, %v5081
      %v5083 = vpop.f32.mrb[0].mxu0
      %5084 = vmatprep.mubr.bf16.mxu0 0
      %5085 = vmatmul.mubr.bf16.gmra.mrb[0].mxu0 %v4971
      %v5086 = vpop.f32.mrb[0].mxu0
      %v5087 = vadd.f32 0.0, %v5086
      %v5088 = vpop.f32.mrb[0].mxu0
      %v5089 = vpop.f32.mrb[0].mxu0
      %v5090 = vadd.f32 0.0, %v5089
      %v5091 = vpop.f32.mrb[0].mxu0
      %5092 = vmatprep.mubr.bf16.mxu0 0
      %5093 = vmatmul.mubr.bf16.gmra.mrb[0].mxu0 %v4974
      %v5094 = vpop.f32.mrb[0].mxu0
      %v5095 = vadd.f32 0.0, %v5094
      %v5096 = vpop.f32.mrb[0].mxu0
      %v5097 = vpop.f32.mrb[0].mxu0
      %v5098 = vadd.f32 0.0, %v5097
      %v5099 = vpop.f32.mrb[0].mxu0
      %5100 = vmatprep.mubr.bf16.mxu0 0
      %5101 = vmatmul.mubr.bf16.gmra.mrb[0].mxu0 %v4977
      %v5102 = vpop.f32.mrb[0].mxu0
      %v5103 = vadd.f32 0.0, %v5102
      %v5104 = vpop.f32.mrb[0].mxu0
      %v5105 = vpop.f32.mrb[0].mxu0
      %v5106 = vadd.f32 0.0, %v5105
      %v5107 = vpop.f32.mrb[0].mxu0
      %5108 = vmatprep.mubr.bf16.mxu0 0
      %5109 = vmatmul.mubr.bf16.gmra.mrb[0].mxu0 %v4980
      %v5110 = vpop.f32.mrb[0].mxu0
      %v5111 = vadd.f32 0.0, %v5110
      %v5112 = vpop.f32.mrb[0].mxu0
      %v5113 = vpop.f32.mrb[0].mxu0
      %v5114 = vadd.f32 0.0, %v5113
      %v5115 = vpop.f32.mrb[0].mxu0
      %5116 = vmatprep.mubr.bf16.mxu0 0
      %5117 = vmatmul.mubr.bf16.gmra.mrb[0].mxu0 %v4983
      %v5118 = vpop.f32.mrb[0].mxu0
      %v5119 = vadd.f32 0.0, %v5118
      %v5120 = vpop.f32.mrb[0].mxu0
      %v5121 = vpop.f32.mrb[0].mxu0
      %v5122 = vadd.f32 0.0, %v5121
      %v5123 = vpop.f32.mrb[0].mxu0
      %5124 = vmatprep.mubr.bf16.mxu0 0
      %5125 = vmatmul.mubr.bf16.gmra.mrb[0].mxu0 %v4986
      %v5126 = vpop.f32.mrb[0].mxu0
      %v5127 = vadd.f32 0.0, %v5126
      %v5128 = vpop.f32.mrb[0].mxu0
      %v5129 = vpop.f32.mrb[0].mxu0
      %v5130 = vadd.f32 0.0, %v5129
      %v5131 = vpop.f32.mrb[0].mxu0
      %5132 = vmatprep.mubr.bf16.mxu0 0
      %5133 = vmatmul.mubr.bf16.gmra.mrb[0].mxu0 %v4989
      %v5134 = vpop.f32.mrb[0].mxu0
      %v5135 = vadd.f32 0.0, %v5134
      %v5136 = vpop.f32.mrb[0].mxu0
      %v5137 = vpop.f32.mrb[0].mxu0
      %v5138 = vadd.f32 0.0, %v5137
      %v5139 = vpop.f32.mrb[0].mxu0
      %5140 = vmatprep.mubr.bf16.mxu0 0
      %5141 = vmatmul.mubr.bf16.gmra.mrb[0].mxu0 %v4992
      %v5142 = vpop.f32.mrb[0].mxu0
      %v5143 = vadd.f32 0.0, %v5142
      %v5144 = vpop.f32.mrb[0].mxu0
      %v5145 = vpop.f32.mrb[0].mxu0
      %v5146 = vadd.f32 0.0, %v5145
      %v5147 = vpop.f32.mrb[0].mxu0
      %5148 = vmatprep.mubr.bf16.mxu0 0
      %5149 = vmatmul.mubr.bf16.gmra.mrb[0].mxu0 %v4995
      %v5150 = vpop.f32.mrb[0].mxu0
      %v5151 = vadd.f32 0.0, %v5150
      %v5152 = vpop.f32.mrb[0].mxu0
      %v5153 = vpop.f32.mrb[0].mxu0
      %v5154 = vadd.f32 0.0, %v5153
      %v5155 = vpop.f32.mrb[0].mxu0
      %5156 = vmatprep.mubr.bf16.mxu0 0
      %5157 = vmatmul.mubr.bf16.gmra.mrb[0].mxu0 %v4998
      %v5158 = vpop.f32.mrb[0].mxu0
      %v5159 = vadd.f32 0.0, %v5158
      %v5160 = vpop.f32.mrb[0].mxu0
      %v5161 = vpop.f32.mrb[0].mxu0
      %v5162 = vadd.f32 0.0, %v5161
      %v5163 = vpop.f32.mrb[0].mxu0
      %5164 = vmatprep.mubr.bf16.mxu0 0
      %5165 = vmatmul.mubr.bf16.gmra.mrb[0].mxu0 %v5001
      %v5166 = vpop.f32.mrb[0].mxu0
      %v5167 = vadd.f32 0.0, %v5166
      %v5168 = vpop.f32.mrb[0].mxu0
      %v5169 = vpop.f32.mrb[0].mxu0
      %v5170 = vadd.f32 0.0, %v5169
      %v5171 = vpop.f32.mrb[0].mxu0
      %5172 = vmatprep.mubr.bf16.mxu0 0
      %5173 = vmatmul.mubr.bf16.gmra.mrb[0].mxu0 %v5004
      %v5174 = vpop.f32.mrb[0].mxu0
      %v5175 = vadd.f32 0.0, %v5174
      %v5176 = vpop.f32.mrb[0].mxu0
      %v5177 = vpop.f32.mrb[0].mxu0
      %v5178 = vadd.f32 0.0, %v5177
      %v5179 = vpop.f32.mrb[0].mxu0
      %5180 = vmatprep.mubr.bf16.mxu0 0
      %5181 = vmatmul.mubr.bf16.gmra.mrb[0].mxu0 %v5007
      %v5182 = vpop.f32.mrb[0].mxu0
      %v5183 = vadd.f32 0.0, %v5182
      %v5184 = vpop.f32.mrb[0].mxu0
      %v5185 = vpop.f32.mrb[0].mxu0
      %v5186 = vadd.f32 0.0, %v5185
      %v5187 = vpop.f32.mrb[0].mxu0
      %5188 = vdwg.mxu0
      %v5189 = vadd.f32 %v4863, %v5047
      %v5190 = vadd.f32 %v4864, %v5050
      %v5191 = vadd.f32 %v4865, %v5055
      %v5192 = vadd.f32 %v4866, %v5058
      %v5193 = vadd.f32 %v4867, %v5063
      %v5194 = vadd.f32 %v4868, %v5066
      %v5195 = vadd.f32 %v4869, %v5071
      %v5196 = vadd.f32 %v4870, %v5074
      %v5197 = vadd.f32 %v4871, %v5079
      %v5198 = vadd.f32 %v4872, %v5082
      %v5199 = vadd.f32 %v4873, %v5087
      %v5200 = vadd.f32 %v4874, %v5090
      %v5201 = vadd.f32 %v4875, %v5095
      %v5202 = vadd.f32 %v4876, %v5098
      %v5203 = vadd.f32 %v4877, %v5103
      %v5204 = vadd.f32 %v4878, %v5106
      %v5205 = vadd.f32 %v4879, %v5111
      %v5206 = vadd.f32 %v4880, %v5114
      %v5207 = vadd.f32 %v4881, %v5119
      %v5208 = vadd.f32 %v4882, %v5122
      %v5209 = vadd.f32 %v4883, %v5127
      %v5210 = vadd.f32 %v4884, %v5130
      %v5211 = vadd.f32 %v4885, %v5135
      %v5212 = vadd.f32 %v4886, %v5138
      %v5213 = vadd.f32 %v4887, %v5143
      %v5214 = vadd.f32 %v4888, %v5146
      %v5215 = vadd.f32 %v4889, %v5151
      %v5216 = vadd.f32 %v4890, %v5154
      %v5217 = vadd.f32 %v4891, %v5159
      %v5218 = vadd.f32 %v4892, %v5162
      %v5219 = vadd.f32 %v4893, %v5167
      %v5220 = vadd.f32 %v4894, %v5170
      %v5221 = vadd.f32 %v4895, %v5175
      %v5222 = vadd.f32 %v4896, %v5178
      %v5223 = vadd.f32 %v4897, %v5183
      %v5224 = vadd.f32 %v4898, %v5186
      %v5225 = vld [vmem:[#allocation2 + $0x13] sm:$0xff]
      %v5226 = vld [vmem:[#allocation2 + $0x1b] sm:$0xff]
      %v5227 = vld [vmem:[#allocation2 + $0x23] sm:$0xff]
      %v5228 = vld [vmem:[#allocation2 + $0x2b] sm:$0xff]
      %v5229 = vld [vmem:[#allocation2 + $0x33] sm:$0xff]
      %v5230 = vld [vmem:[#allocation2 + $0x3b] sm:$0xff]
      %v5231 = vld [vmem:[#allocation2 + $0x43] sm:$0xff]
      %v5232 = vld [vmem:[#allocation2 + $0x4b] sm:$0xff]
      %v5233 = vld [vmem:[#allocation2 + $0x53] sm:$0xff]
      %v5234 = vld [vmem:[#allocation2 + $0x5b] sm:$0xff]
      %v5235 = vld [vmem:[#allocation2 + $0x63] sm:$0xff]
      %v5236 = vld [vmem:[#allocation2 + $0x6b] sm:$0xff]
      %v5237 = vld [vmem:[#allocation2 + $0x73] sm:$0xff]
      %v5238 = vld [vmem:[#allocation2 + $0x7b] sm:$0xff]
      %v5239 = vld [vmem:[#allocation2 + $0x83] sm:$0xff]
      %v5240 = vld [vmem:[#allocation2 + $0x8b] sm:$0xff]
      %v5241 = vld [vmem:[#allocation2 + $0x93] sm:$0xff]
      %v5242 = vld [vmem:[#allocation2 + $0x9b] sm:$0xff]
      %v5243 = vld [vmem:[#allocation2 + $0xa3] sm:$0xff]
      %v5244 = vld [vmem:[#allocation2 + $0xab] sm:$0xff]
      %v5245 = vld [vmem:[#allocation2 + $0xb3] sm:$0xff]
      %v5246 = vld [vmem:[#allocation2 + $0xbb] sm:$0xff]
      %v5247 = vld [vmem:[#allocation2 + $0xc3] sm:$0xff]
      %v5248 = vld [vmem:[#allocation2 + $0xcb] sm:$0xff]
      %v5249 = vld [vmem:[#allocation2 + $0xd3] sm:$0xff]
      %v5250 = vld [vmem:[#allocation2 + $0xdb] sm:$0xff]
      %v5251 = vld [vmem:[#allocation2 + $0xe3] sm:$0xff]
      %v5252 = vld [vmem:[#allocation2 + $0xeb] sm:$0xff]
      %v5253 = vld [vmem:[#allocation2 + $0xf3] sm:$0xff]
      %v5254 = vld [vmem:[#allocation2 + $0xfb] sm:$0xff]
      %v5255 = vld [vmem:[#allocation2 + $0x103] sm:$0xff]
      %v5256 = vld [vmem:[#allocation2 + $0x10b] sm:$0xff]
      %v5257 = vld [vmem:[#allocation2 + $0x113] sm:$0xff]
      %v5258 = vld [vmem:[#allocation2 + $0x11b] sm:$0xff]
      %v5259 = vld [vmem:[#allocation2 + $0x123] sm:$0xff]
      %v5260 = vld [vmem:[#allocation2 + $0x12b] sm:$0xff]
      %v5261 = vpack.c.bf16 %v5226, %v5225
      %v5262 = vpack.c.bf16 %v5228, %v5227
      %v5263 = vpack.c.bf16 %v5230, %v5229
      %v5264 = vpack.c.bf16 %v5232, %v5231
      %v5265 = vpack.c.bf16 %v5234, %v5233
      %v5266 = vpack.c.bf16 %v5236, %v5235
      %v5267 = vpack.c.bf16 %v5238, %v5237
      %v5268 = vpack.c.bf16 %v5240, %v5239
      %v5269 = vpack.c.bf16 %v5242, %v5241
      %v5270 = vpack.c.bf16 %v5244, %v5243
      %v5271 = vpack.c.bf16 %v5246, %v5245
      %v5272 = vpack.c.bf16 %v5248, %v5247
      %v5273 = vpack.c.bf16 %v5250, %v5249
      %v5274 = vpack.c.bf16 %v5252, %v5251
      %v5275 = vpack.c.bf16 %v5254, %v5253
      %v5276 = vpack.c.bf16 %v5256, %v5255
      %v5277 = vpack.c.bf16 %v5258, %v5257
      %v5278 = vpack.c.bf16 %v5260, %v5259
      %s5279 = scalar_lea.vmem %s4, 8
      %v5280 = vld [vmem:[%s5279] sm:$0x3]
      %v5282 = vsel %vm391, %v5261, 0
      %v5285 = vsel %vm391, %v5262, 0
      %v5288 = vsel %vm391, %v5263, 0
      %v5291 = vsel %vm391, %v5264, 0
      %v5294 = vsel %vm391, %v5265, 0
      %v5297 = vsel %vm391, %v5266, 0
      %v5300 = vsel %vm391, %v5267, 0
      %v5303 = vsel %vm391, %v5268, 0
      %v5306 = vsel %vm391, %v5269, 0
      %v5309 = vsel %vm391, %v5270, 0
      %v5312 = vsel %vm391, %v5271, 0
      %v5315 = vsel %vm391, %v5272, 0
      %v5318 = vsel %vm391, %v5273, 0
      %v5321 = vsel %vm391, %v5274, 0
      %v5324 = vsel %vm391, %v5275, 0
      %v5327 = vsel %vm391, %v5276, 0
      %v5330 = vsel %vm391, %v5277, 0
      %v5333 = vsel %vm391, %v5278, 0
      %v5336 = vsel %vm446, %v5280, 0
      %5338 = vmatprep.subr.bf16.mxu0 0
      %5339 = vmatpush1.bf16.msra.mxu0 %v5336
      %5340 = vmatprep.subr.bf16.mxu0 0
      %5341 = vmatpush1.bf16.msra.mxu0 0
      %5342 = vmatprep.subr.bf16.mxu0 0
      %5343 = vmatpush1.bf16.msra.mxu0 0
      %5344 = vmatprep.subr.bf16.mxu0 0
      %5345 = vmatpush1.bf16.msra.mxu0 0
      %5346 = vmatprep.subr.bf16.mxu0 0
      %5347 = vmatpush1.bf16.msra.mxu0 0
      %5348 = vmatprep.subr.bf16.mxu0 0
      %5349 = vmatpush1.bf16.msra.mxu0 0
      %5350 = vmatprep.subr.bf16.mxu0 0
      %5351 = vmatpush1.bf16.msra.mxu0 0
      %5352 = vmatprep.subr.bf16.mxu0 0
      %5353 = vmatpush1.bf16.msra.mxu0 0
      %5354 = vmatprep.subr.bf16.mxu0 0
      %5355 = vmatpush1.bf16.msra.mxu0 0
      %5356 = vmatprep.subr.bf16.mxu0 0
      %5357 = vmatpush1.bf16.msra.mxu0 0
      %5358 = vmatprep.subr.bf16.mxu0 0
      %5359 = vmatpush1.bf16.msra.mxu0 0
      %5360 = vmatprep.subr.bf16.mxu0 0
      %5361 = vmatpush1.bf16.msra.mxu0 0
      %5362 = vmatprep.subr.bf16.mxu0 0
      %5363 = vmatpush1.bf16.msra.mxu0 0
      %5364 = vmatprep.subr.bf16.mxu0 0
      %5365 = vmatpush1.bf16.msra.mxu0 0
      %5366 = vmatprep.subr.bf16.mxu0 0
      %5367 = vmatpush1.bf16.msra.mxu0 0
      %5368 = vmatprep.subr.bf16.mxu0 0
      %5369 = vmatpush1.bf16.msra.mxu0 0
      %5370 = vmatprep.mubr.bf16.mxu0 0
      %5371 = vmatmul.mubr.bf16.gmra.mrb[0].mxu0 %v5282
      %v5372 = vpop.f32.mrb[0].mxu0
      %v5373 = vadd.f32 0.0, %v5372
      %v5374 = vpop.f32.mrb[0].mxu0
      %v5375 = vpop.f32.mrb[0].mxu0
      %v5376 = vadd.f32 0.0, %v5375
      %v5377 = vpop.f32.mrb[0].mxu0
      %5378 = vmatprep.mubr.bf16.mxu0 0
      %5379 = vmatmul.mubr.bf16.gmra.mrb[0].mxu0 %v5285
      %v5380 = vpop.f32.mrb[0].mxu0
      %v5381 = vadd.f32 0.0, %v5380
      %v5382 = vpop.f32.mrb[0].mxu0
      %v5383 = vpop.f32.mrb[0].mxu0
      %v5384 = vadd.f32 0.0, %v5383
      %v5385 = vpop.f32.mrb[0].mxu0
      %5386 = vmatprep.mubr.bf16.mxu0 0
      %5387 = vmatmul.mubr.bf16.gmra.mrb[0].mxu0 %v5288
      %v5388 = vpop.f32.mrb[0].mxu0
      %v5389 = vadd.f32 0.0, %v5388
      %v5390 = vpop.f32.mrb[0].mxu0
      %v5391 = vpop.f32.mrb[0].mxu0
      %v5392 = vadd.f32 0.0, %v5391
      %v5393 = vpop.f32.mrb[0].mxu0
      %5394 = vmatprep.mubr.bf16.mxu0 0
      %5395 = vmatmul.mubr.bf16.gmra.mrb[0].mxu0 %v5291
      %v5396 = vpop.f32.mrb[0].mxu0
      %v5397 = vadd.f32 0.0, %v5396
      %v5398 = vpop.f32.mrb[0].mxu0
      %v5399 = vpop.f32.mrb[0].mxu0
      %v5400 = vadd.f32 0.0, %v5399
      %v5401 = vpop.f32.mrb[0].mxu0
      %5402 = vmatprep.mubr.bf16.mxu0 0
      %5403 = vmatmul.mubr.bf16.gmra.mrb[0].mxu0 %v5294
      %v5404 = vpop.f32.mrb[0].mxu0
      %v5405 = vadd.f32 0.0, %v5404
      %v5406 = vpop.f32.mrb[0].mxu0
      %v5407 = vpop.f32.mrb[0].mxu0
      %v5408 = vadd.f32 0.0, %v5407
      %v5409 = vpop.f32.mrb[0].mxu0
      %5410 = vmatprep.mubr.bf16.mxu0 0
      %5411 = vmatmul.mubr.bf16.gmra.mrb[0].mxu0 %v5297
      %v5412 = vpop.f32.mrb[0].mxu0
      %v5413 = vadd.f32 0.0, %v5412
      %v5414 = vpop.f32.mrb[0].mxu0
      %v5415 = vpop.f32.mrb[0].mxu0
      %v5416 = vadd.f32 0.0, %v5415
      %v5417 = vpop.f32.mrb[0].mxu0
      %5418 = vmatprep.mubr.bf16.mxu0 0
      %5419 = vmatmul.mubr.bf16.gmra.mrb[0].mxu0 %v5300
      %v5420 = vpop.f32.mrb[0].mxu0
      %v5421 = vadd.f32 0.0, %v5420
      %v5422 = vpop.f32.mrb[0].mxu0
      %v5423 = vpop.f32.mrb[0].mxu0
      %v5424 = vadd.f32 0.0, %v5423
      %v5425 = vpop.f32.mrb[0].mxu0
      %5426 = vmatprep.mubr.bf16.mxu0 0
      %5427 = vmatmul.mubr.bf16.gmra.mrb[0].mxu0 %v5303
      %v5428 = vpop.f32.mrb[0].mxu0
      %v5429 = vadd.f32 0.0, %v5428
      %v5430 = vpop.f32.mrb[0].mxu0
      %v5431 = vpop.f32.mrb[0].mxu0
      %v5432 = vadd.f32 0.0, %v5431
      %v5433 = vpop.f32.mrb[0].mxu0
      %5434 = vmatprep.mubr.bf16.mxu0 0
      %5435 = vmatmul.mubr.bf16.gmra.mrb[0].mxu0 %v5306
      %v5436 = vpop.f32.mrb[0].mxu0
      %v5437 = vadd.f32 0.0, %v5436
      %v5438 = vpop.f32.mrb[0].mxu0
      %v5439 = vpop.f32.mrb[0].mxu0
      %v5440 = vadd.f32 0.0, %v5439
      %v5441 = vpop.f32.mrb[0].mxu0
      %5442 = vmatprep.mubr.bf16.mxu0 0
      %5443 = vmatmul.mubr.bf16.gmra.mrb[0].mxu0 %v5309
      %v5444 = vpop.f32.mrb[0].mxu0
      %v5445 = vadd.f32 0.0, %v5444
      %v5446 = vpop.f32.mrb[0].mxu0
      %v5447 = vpop.f32.mrb[0].mxu0
      %v5448 = vadd.f32 0.0, %v5447
      %v5449 = vpop.f32.mrb[0].mxu0
      %5450 = vmatprep.mubr.bf16.mxu0 0
      %5451 = vmatmul.mubr.bf16.gmra.mrb[0].mxu0 %v5312
      %v5452 = vpop.f32.mrb[0].mxu0
      %v5453 = vadd.f32 0.0, %v5452
      %v5454 = vpop.f32.mrb[0].mxu0
      %v5455 = vpop.f32.mrb[0].mxu0
      %v5456 = vadd.f32 0.0, %v5455
      %v5457 = vpop.f32.mrb[0].mxu0
      %5458 = vmatprep.mubr.bf16.mxu0 0
      %5459 = vmatmul.mubr.bf16.gmra.mrb[0].mxu0 %v5315
      %v5460 = vpop.f32.mrb[0].mxu0
      %v5461 = vadd.f32 0.0, %v5460
      %v5462 = vpop.f32.mrb[0].mxu0
      %v5463 = vpop.f32.mrb[0].mxu0
      %v5464 = vadd.f32 0.0, %v5463
      %v5465 = vpop.f32.mrb[0].mxu0
      %5466 = vmatprep.mubr.bf16.mxu0 0
      %5467 = vmatmul.mubr.bf16.gmra.mrb[0].mxu0 %v5318
      %v5468 = vpop.f32.mrb[0].mxu0
      %v5469 = vadd.f32 0.0, %v5468
      %v5470 = vpop.f32.mrb[0].mxu0
      %v5471 = vpop.f32.mrb[0].mxu0
      %v5472 = vadd.f32 0.0, %v5471
      %v5473 = vpop.f32.mrb[0].mxu0
      %5474 = vmatprep.mubr.bf16.mxu0 0
      %5475 = vmatmul.mubr.bf16.gmra.mrb[0].mxu0 %v5321
      %v5476 = vpop.f32.mrb[0].mxu0
      %v5477 = vadd.f32 0.0, %v5476
      %v5478 = vpop.f32.mrb[0].mxu0
      %v5479 = vpop.f32.mrb[0].mxu0
      %v5480 = vadd.f32 0.0, %v5479
      %v5481 = vpop.f32.mrb[0].mxu0
      %5482 = vmatprep.mubr.bf16.mxu0 0
      %5483 = vmatmul.mubr.bf16.gmra.mrb[0].mxu0 %v5324
      %v5484 = vpop.f32.mrb[0].mxu0
      %v5485 = vadd.f32 0.0, %v5484
      %v5486 = vpop.f32.mrb[0].mxu0
      %v5487 = vpop.f32.mrb[0].mxu0
      %v5488 = vadd.f32 0.0, %v5487
      %v5489 = vpop.f32.mrb[0].mxu0
      %5490 = vmatprep.mubr.bf16.mxu0 0
      %5491 = vmatmul.mubr.bf16.gmra.mrb[0].mxu0 %v5327
      %v5492 = vpop.f32.mrb[0].mxu0
      %v5493 = vadd.f32 0.0, %v5492
      %v5494 = vpop.f32.mrb[0].mxu0
      %v5495 = vpop.f32.mrb[0].mxu0
      %v5496 = vadd.f32 0.0, %v5495
      %v5497 = vpop.f32.mrb[0].mxu0
      %5498 = vmatprep.mubr.bf16.mxu0 0
      %5499 = vmatmul.mubr.bf16.gmra.mrb[0].mxu0 %v5330
      %v5500 = vpop.f32.mrb[0].mxu0
      %v5501 = vadd.f32 0.0, %v5500
      %v5502 = vpop.f32.mrb[0].mxu0
      %v5503 = vpop.f32.mrb[0].mxu0
      %v5504 = vadd.f32 0.0, %v5503
      %v5505 = vpop.f32.mrb[0].mxu0
      %5506 = vmatprep.mubr.bf16.mxu0 0
      %5507 = vmatmul.mubr.bf16.gmra.mrb[0].mxu0 %v5333
      %v5508 = vpop.f32.mrb[0].mxu0
      %v5509 = vadd.f32 0.0, %v5508
      %v5510 = vpop.f32.mrb[0].mxu0
      %v5511 = vpop.f32.mrb[0].mxu0
      %v5512 = vadd.f32 0.0, %v5511
      %v5513 = vpop.f32.mrb[0].mxu0
      %5514 = vdwg.mxu0
      %v5515 = vadd.f32 %v5189, %v5373
      %v5516 = vadd.f32 %v5190, %v5376
      %v5517 = vadd.f32 %v5191, %v5381
      %v5518 = vadd.f32 %v5192, %v5384
      %v5519 = vadd.f32 %v5193, %v5389
      %v5520 = vadd.f32 %v5194, %v5392
      %v5521 = vadd.f32 %v5195, %v5397
      %v5522 = vadd.f32 %v5196, %v5400
      %v5523 = vadd.f32 %v5197, %v5405
      %v5524 = vadd.f32 %v5198, %v5408
      %v5525 = vadd.f32 %v5199, %v5413
      %v5526 = vadd.f32 %v5200, %v5416
      %v5527 = vadd.f32 %v5201, %v5421
      %v5528 = vadd.f32 %v5202, %v5424
      %v5529 = vadd.f32 %v5203, %v5429
      %v5530 = vadd.f32 %v5204, %v5432
      %v5531 = vadd.f32 %v5205, %v5437
      %v5532 = vadd.f32 %v5206, %v5440
      %v5533 = vadd.f32 %v5207, %v5445
      %v5534 = vadd.f32 %v5208, %v5448
      %v5535 = vadd.f32 %v5209, %v5453
      %v5536 = vadd.f32 %v5210, %v5456
      %v5537 = vadd.f32 %v5211, %v5461
      %v5538 = vadd.f32 %v5212, %v5464
      %v5539 = vadd.f32 %v5213, %v5469
      %v5540 = vadd.f32 %v5214, %v5472
      %v5541 = vadd.f32 %v5215, %v5477
      %v5542 = vadd.f32 %v5216, %v5480
      %v5543 = vadd.f32 %v5217, %v5485
      %v5544 = vadd.f32 %v5218, %v5488
      %v5545 = vadd.f32 %v5219, %v5493
      %v5546 = vadd.f32 %v5220, %v5496
      %v5547 = vadd.f32 %v5221, %v5501
      %v5548 = vadd.f32 %v5222, %v5504
      %v5549 = vadd.f32 %v5223, %v5509
      %v5550 = vadd.f32 %v5224, %v5512
      %v5551 = vld [vmem:[#allocation2 + $0x14] sm:$0xff]
      %v5552 = vld [vmem:[#allocation2 + $0x1c] sm:$0xff]
      %v5553 = vld [vmem:[#allocation2 + $0x24] sm:$0xff]
      %v5554 = vld [vmem:[#allocation2 + $0x2c] sm:$0xff]
      %v5555 = vld [vmem:[#allocation2 + $0x34] sm:$0xff]
      %v5556 = vld [vmem:[#allocation2 + $0x3c] sm:$0xff]
      %v5557 = vld [vmem:[#allocation2 + $0x44] sm:$0xff]
      %v5558 = vld [vmem:[#allocation2 + $0x4c] sm:$0xff]
      %v5559 = vld [vmem:[#allocation2 + $0x54] sm:$0xff]
      %v5560 = vld [vmem:[#allocation2 + $0x5c] sm:$0xff]
      %v5561 = vld [vmem:[#allocation2 + $0x64] sm:$0xff]
      %v5562 = vld [vmem:[#allocation2 + $0x6c] sm:$0xff]
      %v5563 = vld [vmem:[#allocation2 + $0x74] sm:$0xff]
      %v5564 = vld [vmem:[#allocation2 + $0x7c] sm:$0xff]
      %v5565 = vld [vmem:[#allocation2 + $0x84] sm:$0xff]
      %v5566 = vld [vmem:[#allocation2 + $0x8c] sm:$0xff]
      %v5567 = vld [vmem:[#allocation2 + $0x94] sm:$0xff]
      %v5568 = vld [vmem:[#allocation2 + $0x9c] sm:$0xff]
      %v5569 = vld [vmem:[#allocation2 + $0xa4] sm:$0xff]
      %v5570 = vld [vmem:[#allocation2 + $0xac] sm:$0xff]
      %v5571 = vld [vmem:[#allocation2 + $0xb4] sm:$0xff]
      %v5572 = vld [vmem:[#allocation2 + $0xbc] sm:$0xff]
      %v5573 = vld [vmem:[#allocation2 + $0xc4] sm:$0xff]
      %v5574 = vld [vmem:[#allocation2 + $0xcc] sm:$0xff]
      %v5575 = vld [vmem:[#allocation2 + $0xd4] sm:$0xff]
      %v5576 = vld [vmem:[#allocation2 + $0xdc] sm:$0xff]
      %v5577 = vld [vmem:[#allocation2 + $0xe4] sm:$0xff]
      %v5578 = vld [vmem:[#allocation2 + $0xec] sm:$0xff]
      %v5579 = vld [vmem:[#allocation2 + $0xf4] sm:$0xff]
      %v5580 = vld [vmem:[#allocation2 + $0xfc] sm:$0xff]
      %v5581 = vld [vmem:[#allocation2 + $0x104] sm:$0xff]
      %v5582 = vld [vmem:[#allocation2 + $0x10c] sm:$0xff]
      %v5583 = vld [vmem:[#allocation2 + $0x114] sm:$0xff]
      %v5584 = vld [vmem:[#allocation2 + $0x11c] sm:$0xff]
      %v5585 = vld [vmem:[#allocation2 + $0x124] sm:$0xff]
      %v5586 = vld [vmem:[#allocation2 + $0x12c] sm:$0xff]
      %v5587 = vpack.c.bf16 %v5552, %v5551
      %v5588 = vpack.c.bf16 %v5554, %v5553
      %v5589 = vpack.c.bf16 %v5556, %v5555
      %v5590 = vpack.c.bf16 %v5558, %v5557
      %v5591 = vpack.c.bf16 %v5560, %v5559
      %v5592 = vpack.c.bf16 %v5562, %v5561
      %v5593 = vpack.c.bf16 %v5564, %v5563
      %v5594 = vpack.c.bf16 %v5566, %v5565
      %v5595 = vpack.c.bf16 %v5568, %v5567
      %v5596 = vpack.c.bf16 %v5570, %v5569
      %v5597 = vpack.c.bf16 %v5572, %v5571
      %v5598 = vpack.c.bf16 %v5574, %v5573
      %v5599 = vpack.c.bf16 %v5576, %v5575
      %v5600 = vpack.c.bf16 %v5578, %v5577
      %v5601 = vpack.c.bf16 %v5580, %v5579
      %v5602 = vpack.c.bf16 %v5582, %v5581
      %v5603 = vpack.c.bf16 %v5584, %v5583
      %v5604 = vpack.c.bf16 %v5586, %v5585
      %s5605 = scalar_lea.vmem %s4, 10
      %v5606 = vld [vmem:[%s5605] sm:$0x3]
      %v5608 = vsel %vm391, %v5587, 0
      %v5611 = vsel %vm391, %v5588, 0
      %v5614 = vsel %vm391, %v5589, 0
      %v5617 = vsel %vm391, %v5590, 0
      %v5620 = vsel %vm391, %v5591, 0
      %v5623 = vsel %vm391, %v5592, 0
      %v5626 = vsel %vm391, %v5593, 0
      %v5629 = vsel %vm391, %v5594, 0
      %v5632 = vsel %vm391, %v5595, 0
      %v5635 = vsel %vm391, %v5596, 0
      %v5638 = vsel %vm391, %v5597, 0
      %v5641 = vsel %vm391, %v5598, 0
      %v5644 = vsel %vm391, %v5599, 0
      %v5647 = vsel %vm391, %v5600, 0
      %v5650 = vsel %vm391, %v5601, 0
      %v5653 = vsel %vm391, %v5602, 0
      %v5656 = vsel %vm391, %v5603, 0
      %v5659 = vsel %vm391, %v5604, 0
      %v5662 = vsel %vm446, %v5606, 0
      %5664 = vmatprep.subr.bf16.mxu0 0
      %5665 = vmatpush1.bf16.msra.mxu0 %v5662
      %5666 = vmatprep.subr.bf16.mxu0 0
      %5667 = vmatpush1.bf16.msra.mxu0 0
      %5668 = vmatprep.subr.bf16.mxu0 0
      %5669 = vmatpush1.bf16.msra.mxu0 0
      %5670 = vmatprep.subr.bf16.mxu0 0
      %5671 = vmatpush1.bf16.msra.mxu0 0
      %5672 = vmatprep.subr.bf16.mxu0 0
      %5673 = vmatpush1.bf16.msra.mxu0 0
      %5674 = vmatprep.subr.bf16.mxu0 0
      %5675 = vmatpush1.bf16.msra.mxu0 0
      %5676 = vmatprep.subr.bf16.mxu0 0
      %5677 = vmatpush1.bf16.msra.mxu0 0
      %5678 = vmatprep.subr.bf16.mxu0 0
      %5679 = vmatpush1.bf16.msra.mxu0 0
      %5680 = vmatprep.subr.bf16.mxu0 0
      %5681 = vmatpush1.bf16.msra.mxu0 0
      %5682 = vmatprep.subr.bf16.mxu0 0
      %5683 = vmatpush1.bf16.msra.mxu0 0
      %5684 = vmatprep.subr.bf16.mxu0 0
      %5685 = vmatpush1.bf16.msra.mxu0 0
      %5686 = vmatprep.subr.bf16.mxu0 0
      %5687 = vmatpush1.bf16.msra.mxu0 0
      %5688 = vmatprep.subr.bf16.mxu0 0
      %5689 = vmatpush1.bf16.msra.mxu0 0
      %5690 = vmatprep.subr.bf16.mxu0 0
      %5691 = vmatpush1.bf16.msra.mxu0 0
      %5692 = vmatprep.subr.bf16.mxu0 0
      %5693 = vmatpush1.bf16.msra.mxu0 0
      %5694 = vmatprep.subr.bf16.mxu0 0
      %5695 = vmatpush1.bf16.msra.mxu0 0
      %5696 = vmatprep.mubr.bf16.mxu0 0
      %5697 = vmatmul.mubr.bf16.gmra.mrb[0].mxu0 %v5608
      %v5698 = vpop.f32.mrb[0].mxu0
      %v5699 = vadd.f32 0.0, %v5698
      %v5700 = vpop.f32.mrb[0].mxu0
      %v5701 = vpop.f32.mrb[0].mxu0
      %v5702 = vadd.f32 0.0, %v5701
      %v5703 = vpop.f32.mrb[0].mxu0
      %5704 = vmatprep.mubr.bf16.mxu0 0
      %5705 = vmatmul.mubr.bf16.gmra.mrb[0].mxu0 %v5611
      %v5706 = vpop.f32.mrb[0].mxu0
      %v5707 = vadd.f32 0.0, %v5706
      %v5708 = vpop.f32.mrb[0].mxu0
      %v5709 = vpop.f32.mrb[0].mxu0
      %v5710 = vadd.f32 0.0, %v5709
      %v5711 = vpop.f32.mrb[0].mxu0
      %5712 = vmatprep.mubr.bf16.mxu0 0
      %5713 = vmatmul.mubr.bf16.gmra.mrb[0].mxu0 %v5614
      %v5714 = vpop.f32.mrb[0].mxu0
      %v5715 = vadd.f32 0.0, %v5714
      %v5716 = vpop.f32.mrb[0].mxu0
      %v5717 = vpop.f32.mrb[0].mxu0
      %v5718 = vadd.f32 0.0, %v5717
      %v5719 = vpop.f32.mrb[0].mxu0
      %5720 = vmatprep.mubr.bf16.mxu0 0
      %5721 = vmatmul.mubr.bf16.gmra.mrb[0].mxu0 %v5617
      %v5722 = vpop.f32.mrb[0].mxu0
      %v5723 = vadd.f32 0.0, %v5722
      %v5724 = vpop.f32.mrb[0].mxu0
      %v5725 = vpop.f32.mrb[0].mxu0
      %v5726 = vadd.f32 0.0, %v5725
      %v5727 = vpop.f32.mrb[0].mxu0
      %5728 = vmatprep.mubr.bf16.mxu0 0
      %5729 = vmatmul.mubr.bf16.gmra.mrb[0].mxu0 %v5620
      %v5730 = vpop.f32.mrb[0].mxu0
      %v5731 = vadd.f32 0.0, %v5730
      %v5732 = vpop.f32.mrb[0].mxu0
      %v5733 = vpop.f32.mrb[0].mxu0
      %v5734 = vadd.f32 0.0, %v5733
      %v5735 = vpop.f32.mrb[0].mxu0
      %5736 = vmatprep.mubr.bf16.mxu0 0
      %5737 = vmatmul.mubr.bf16.gmra.mrb[0].mxu0 %v5623
      %v5738 = vpop.f32.mrb[0].mxu0
      %v5739 = vadd.f32 0.0, %v5738
      %v5740 = vpop.f32.mrb[0].mxu0
      %v5741 = vpop.f32.mrb[0].mxu0
      %v5742 = vadd.f32 0.0, %v5741
      %v5743 = vpop.f32.mrb[0].mxu0
      %5744 = vmatprep.mubr.bf16.mxu0 0
      %5745 = vmatmul.mubr.bf16.gmra.mrb[0].mxu0 %v5626
      %v5746 = vpop.f32.mrb[0].mxu0
      %v5747 = vadd.f32 0.0, %v5746
      %v5748 = vpop.f32.mrb[0].mxu0
      %v5749 = vpop.f32.mrb[0].mxu0
      %v5750 = vadd.f32 0.0, %v5749
      %v5751 = vpop.f32.mrb[0].mxu0
      %5752 = vmatprep.mubr.bf16.mxu0 0
      %5753 = vmatmul.mubr.bf16.gmra.mrb[0].mxu0 %v5629
      %v5754 = vpop.f32.mrb[0].mxu0
      %v5755 = vadd.f32 0.0, %v5754
      %v5756 = vpop.f32.mrb[0].mxu0
      %v5757 = vpop.f32.mrb[0].mxu0
      %v5758 = vadd.f32 0.0, %v5757
      %v5759 = vpop.f32.mrb[0].mxu0
      %5760 = vmatprep.mubr.bf16.mxu0 0
      %5761 = vmatmul.mubr.bf16.gmra.mrb[0].mxu0 %v5632
      %v5762 = vpop.f32.mrb[0].mxu0
      %v5763 = vadd.f32 0.0, %v5762
      %v5764 = vpop.f32.mrb[0].mxu0
      %v5765 = vpop.f32.mrb[0].mxu0
      %v5766 = vadd.f32 0.0, %v5765
      %v5767 = vpop.f32.mrb[0].mxu0
      %5768 = vmatprep.mubr.bf16.mxu0 0
      %5769 = vmatmul.mubr.bf16.gmra.mrb[0].mxu0 %v5635
      %v5770 = vpop.f32.mrb[0].mxu0
      %v5771 = vadd.f32 0.0, %v5770
      %v5772 = vpop.f32.mrb[0].mxu0
      %v5773 = vpop.f32.mrb[0].mxu0
      %v5774 = vadd.f32 0.0, %v5773
      %v5775 = vpop.f32.mrb[0].mxu0
      %5776 = vmatprep.mubr.bf16.mxu0 0
      %5777 = vmatmul.mubr.bf16.gmra.mrb[0].mxu0 %v5638
      %v5778 = vpop.f32.mrb[0].mxu0
      %v5779 = vadd.f32 0.0, %v5778
      %v5780 = vpop.f32.mrb[0].mxu0
      %v5781 = vpop.f32.mrb[0].mxu0
      %v5782 = vadd.f32 0.0, %v5781
      %v5783 = vpop.f32.mrb[0].mxu0
      %5784 = vmatprep.mubr.bf16.mxu0 0
      %5785 = vmatmul.mubr.bf16.gmra.mrb[0].mxu0 %v5641
      %v5786 = vpop.f32.mrb[0].mxu0
      %v5787 = vadd.f32 0.0, %v5786
      %v5788 = vpop.f32.mrb[0].mxu0
      %v5789 = vpop.f32.mrb[0].mxu0
      %v5790 = vadd.f32 0.0, %v5789
      %v5791 = vpop.f32.mrb[0].mxu0
      %5792 = vmatprep.mubr.bf16.mxu0 0
      %5793 = vmatmul.mubr.bf16.gmra.mrb[0].mxu0 %v5644
      %v5794 = vpop.f32.mrb[0].mxu0
      %v5795 = vadd.f32 0.0, %v5794
      %v5796 = vpop.f32.mrb[0].mxu0
      %v5797 = vpop.f32.mrb[0].mxu0
      %v5798 = vadd.f32 0.0, %v5797
      %v5799 = vpop.f32.mrb[0].mxu0
      %5800 = vmatprep.mubr.bf16.mxu0 0
      %5801 = vmatmul.mubr.bf16.gmra.mrb[0].mxu0 %v5647
      %v5802 = vpop.f32.mrb[0].mxu0
      %v5803 = vadd.f32 0.0, %v5802
      %v5804 = vpop.f32.mrb[0].mxu0
      %v5805 = vpop.f32.mrb[0].mxu0
      %v5806 = vadd.f32 0.0, %v5805
      %v5807 = vpop.f32.mrb[0].mxu0
      %5808 = vmatprep.mubr.bf16.mxu0 0
      %5809 = vmatmul.mubr.bf16.gmra.mrb[0].mxu0 %v5650
      %v5810 = vpop.f32.mrb[0].mxu0
      %v5811 = vadd.f32 0.0, %v5810
      %v5812 = vpop.f32.mrb[0].mxu0
      %v5813 = vpop.f32.mrb[0].mxu0
      %v5814 = vadd.f32 0.0, %v5813
      %v5815 = vpop.f32.mrb[0].mxu0
      %5816 = vmatprep.mubr.bf16.mxu0 0
      %5817 = vmatmul.mubr.bf16.gmra.mrb[0].mxu0 %v5653
      %v5818 = vpop.f32.mrb[0].mxu0
      %v5819 = vadd.f32 0.0, %v5818
      %v5820 = vpop.f32.mrb[0].mxu0
      %v5821 = vpop.f32.mrb[0].mxu0
      %v5822 = vadd.f32 0.0, %v5821
      %v5823 = vpop.f32.mrb[0].mxu0
      %5824 = vmatprep.mubr.bf16.mxu0 0
      %5825 = vmatmul.mubr.bf16.gmra.mrb[0].mxu0 %v5656
      %v5826 = vpop.f32.mrb[0].mxu0
      %v5827 = vadd.f32 0.0, %v5826
      %v5828 = vpop.f32.mrb[0].mxu0
      %v5829 = vpop.f32.mrb[0].mxu0
      %v5830 = vadd.f32 0.0, %v5829
      %v5831 = vpop.f32.mrb[0].mxu0
      %5832 = vmatprep.mubr.bf16.mxu0 0
      %5833 = vmatmul.mubr.bf16.gmra.mrb[0].mxu0 %v5659
      %v5834 = vpop.f32.mrb[0].mxu0
      %v5835 = vadd.f32 0.0, %v5834
      %v5836 = vpop.f32.mrb[0].mxu0
      %v5837 = vpop.f32.mrb[0].mxu0
      %v5838 = vadd.f32 0.0, %v5837
      %v5839 = vpop.f32.mrb[0].mxu0
      %5840 = vdwg.mxu0
      %v5841 = vadd.f32 %v5515, %v5699
      %v5842 = vadd.f32 %v5516, %v5702
      %v5843 = vadd.f32 %v5517, %v5707
      %v5844 = vadd.f32 %v5518, %v5710
      %v5845 = vadd.f32 %v5519, %v5715
      %v5846 = vadd.f32 %v5520, %v5718
      %v5847 = vadd.f32 %v5521, %v5723
      %v5848 = vadd.f32 %v5522, %v5726
      %v5849 = vadd.f32 %v5523, %v5731
      %v5850 = vadd.f32 %v5524, %v5734
      %v5851 = vadd.f32 %v5525, %v5739
      %v5852 = vadd.f32 %v5526, %v5742
      %v5853 = vadd.f32 %v5527, %v5747
      %v5854 = vadd.f32 %v5528, %v5750
      %v5855 = vadd.f32 %v5529, %v5755
      %v5856 = vadd.f32 %v5530, %v5758
      %v5857 = vadd.f32 %v5531, %v5763
      %v5858 = vadd.f32 %v5532, %v5766
      %v5859 = vadd.f32 %v5533, %v5771
      %v5860 = vadd.f32 %v5534, %v5774
      %v5861 = vadd.f32 %v5535, %v5779
      %v5862 = vadd.f32 %v5536, %v5782
      %v5863 = vadd.f32 %v5537, %v5787
      %v5864 = vadd.f32 %v5538, %v5790
      %v5865 = vadd.f32 %v5539, %v5795
      %v5866 = vadd.f32 %v5540, %v5798
      %v5867 = vadd.f32 %v5541, %v5803
      %v5868 = vadd.f32 %v5542, %v5806
      %v5869 = vadd.f32 %v5543, %v5811
      %v5870 = vadd.f32 %v5544, %v5814
      %v5871 = vadd.f32 %v5545, %v5819
      %v5872 = vadd.f32 %v5546, %v5822
      %v5873 = vadd.f32 %v5547, %v5827
      %v5874 = vadd.f32 %v5548, %v5830
      %v5875 = vadd.f32 %v5549, %v5835
      %v5876 = vadd.f32 %v5550, %v5838
      %v5877 = vld [vmem:[#allocation2 + $0x24] sm:$0xff]
      %v5878 = vld [vmem:[#allocation2 + $0x2c] sm:$0xff]
      %v5879 = vld [vmem:[#allocation2 + $0x34] sm:$0xff]
      %v5880 = vld [vmem:[#allocation2 + $0x3c] sm:$0xff]
      %v5881 = vld [vmem:[#allocation2 + $0x44] sm:$0xff]
      %v5882 = vld [vmem:[#allocation2 + $0x4c] sm:$0xff]
      %v5883 = vld [vmem:[#allocation2 + $0x54] sm:$0xff]
      %v5884 = vld [vmem:[#allocation2 + $0x5c] sm:$0xff]
      %v5885 = vld [vmem:[#allocation2 + $0x64] sm:$0xff]
      %v5886 = vld [vmem:[#allocation2 + $0x6c] sm:$0xff]
      %v5887 = vld [vmem:[#allocation2 + $0x74] sm:$0xff]
      %v5888 = vld [vmem:[#allocation2 + $0x7c] sm:$0xff]
      %v5889 = vld [vmem:[#allocation2 + $0x84] sm:$0xff]
      %v5890 = vld [vmem:[#allocation2 + $0x8c] sm:$0xff]
      %v5891 = vld [vmem:[#allocation2 + $0x94] sm:$0xff]
      %v5892 = vld [vmem:[#allocation2 + $0x9c] sm:$0xff]
      %v5893 = vld [vmem:[#allocation2 + $0xa4] sm:$0xff]
      %v5894 = vld [vmem:[#allocation2 + $0xac] sm:$0xff]
      %v5895 = vld [vmem:[#allocation2 + $0xb4] sm:$0xff]
      %v5896 = vld [vmem:[#allocation2 + $0xbc] sm:$0xff]
      %v5897 = vld [vmem:[#allocation2 + $0xc4] sm:$0xff]
      %v5898 = vld [vmem:[#allocation2 + $0xcc] sm:$0xff]
      %v5899 = vld [vmem:[#allocation2 + $0xd4] sm:$0xff]
      %v5900 = vld [vmem:[#allocation2 + $0xdc] sm:$0xff]
      %v5901 = vld [vmem:[#allocation2 + $0xe4] sm:$0xff]
      %v5902 = vld [vmem:[#allocation2 + $0xec] sm:$0xff]
      %v5903 = vld [vmem:[#allocation2 + $0xf4] sm:$0xff]
      %v5904 = vld [vmem:[#allocation2 + $0xfc] sm:$0xff]
      %v5905 = vld [vmem:[#allocation2 + $0x104] sm:$0xff]
      %v5906 = vld [vmem:[#allocation2 + $0x10c] sm:$0xff]
      %v5907 = vld [vmem:[#allocation2 + $0x114] sm:$0xff]
      %v5908 = vld [vmem:[#allocation2 + $0x11c] sm:$0xff]
      %v5909 = vld [vmem:[#allocation2 + $0x124] sm:$0xff]
      %v5910 = vld [vmem:[#allocation2 + $0x12c] sm:$0xff]
      %v5911 = vld [vmem:[#allocation2 + $0x134] sm:$0xff]
      %v5912 = vld [vmem:[#allocation2 + $0x13c] sm:$0xff]
      %v5913 = vpack.c.bf16 %v5878, %v5877
      %v5914 = vpack.c.bf16 %v5880, %v5879
      %v5915 = vpack.c.bf16 %v5882, %v5881
      %v5916 = vpack.c.bf16 %v5884, %v5883
      %v5917 = vpack.c.bf16 %v5886, %v5885
      %v5918 = vpack.c.bf16 %v5888, %v5887
      %v5919 = vpack.c.bf16 %v5890, %v5889
      %v5920 = vpack.c.bf16 %v5892, %v5891
      %v5921 = vpack.c.bf16 %v5894, %v5893
      %v5922 = vpack.c.bf16 %v5896, %v5895
      %v5923 = vpack.c.bf16 %v5898, %v5897
      %v5924 = vpack.c.bf16 %v5900, %v5899
      %v5925 = vpack.c.bf16 %v5902, %v5901
      %v5926 = vpack.c.bf16 %v5904, %v5903
      %v5927 = vpack.c.bf16 %v5906, %v5905
      %v5928 = vpack.c.bf16 %v5908, %v5907
      %v5929 = vpack.c.bf16 %v5910, %v5909
      %v5930 = vpack.c.bf16 %v5912, %v5911
      %s5931 = scalar_lea.vmem %s4, 12
      %v5932 = vld [vmem:[%s5931] sm:$0x3]
      %v5934 = vsel %vm391, %v5913, 0
      %v5937 = vsel %vm391, %v5914, 0
      %v5940 = vsel %vm391, %v5915, 0
      %v5943 = vsel %vm391, %v5916, 0
      %v5946 = vsel %vm391, %v5917, 0
      %v5949 = vsel %vm391, %v5918, 0
      %v5952 = vsel %vm391, %v5919, 0
      %v5955 = vsel %vm391, %v5920, 0
      %v5958 = vsel %vm391, %v5921, 0
      %v5961 = vsel %vm391, %v5922, 0
      %v5964 = vsel %vm391, %v5923, 0
      %v5967 = vsel %vm391, %v5924, 0
      %v5970 = vsel %vm391, %v5925, 0
      %v5973 = vsel %vm391, %v5926, 0
      %v5976 = vsel %vm391, %v5927, 0
      %v5979 = vsel %vm391, %v5928, 0
      %v5982 = vsel %vm391, %v5929, 0
      %v5985 = vsel %vm391, %v5930, 0
      %v5988 = vsel %vm446, %v5932, 0
      %5990 = vmatprep.subr.bf16.mxu0 0
      %5991 = vmatpush1.bf16.msra.mxu0 %v5988
      %5992 = vmatprep.subr.bf16.mxu0 0
      %5993 = vmatpush1.bf16.msra.mxu0 0
      %5994 = vmatprep.subr.bf16.mxu0 0
      %5995 = vmatpush1.bf16.msra.mxu0 0
      %5996 = vmatprep.subr.bf16.mxu0 0
      %5997 = vmatpush1.bf16.msra.mxu0 0
      %5998 = vmatprep.subr.bf16.mxu0 0
      %5999 = vmatpush1.bf16.msra.mxu0 0
      %6000 = vmatprep.subr.bf16.mxu0 0
      %6001 = vmatpush1.bf16.msra.mxu0 0
      %6002 = vmatprep.subr.bf16.mxu0 0
      %6003 = vmatpush1.bf16.msra.mxu0 0
      %6004 = vmatprep.subr.bf16.mxu0 0
      %6005 = vmatpush1.bf16.msra.mxu0 0
      %6006 = vmatprep.subr.bf16.mxu0 0
      %6007 = vmatpush1.bf16.msra.mxu0 0
      %6008 = vmatprep.subr.bf16.mxu0 0
      %6009 = vmatpush1.bf16.msra.mxu0 0
      %6010 = vmatprep.subr.bf16.mxu0 0
      %6011 = vmatpush1.bf16.msra.mxu0 0
      %6012 = vmatprep.subr.bf16.mxu0 0
      %6013 = vmatpush1.bf16.msra.mxu0 0
      %6014 = vmatprep.subr.bf16.mxu0 0
      %6015 = vmatpush1.bf16.msra.mxu0 0
      %6016 = vmatprep.subr.bf16.mxu0 0
      %6017 = vmatpush1.bf16.msra.mxu0 0
      %6018 = vmatprep.subr.bf16.mxu0 0
      %6019 = vmatpush1.bf16.msra.mxu0 0
      %6020 = vmatprep.subr.bf16.mxu0 0
      %6021 = vmatpush1.bf16.msra.mxu0 0
      %6022 = vmatprep.mubr.bf16.mxu0 0
      %6023 = vmatmul.mubr.bf16.gmra.mrb[0].mxu0 %v5934
      %v6024 = vpop.f32.mrb[0].mxu0
      %v6025 = vadd.f32 0.0, %v6024
      %v6026 = vpop.f32.mrb[0].mxu0
      %v6027 = vpop.f32.mrb[0].mxu0
      %v6028 = vadd.f32 0.0, %v6027
      %v6029 = vpop.f32.mrb[0].mxu0
      %6030 = vmatprep.mubr.bf16.mxu0 0
      %6031 = vmatmul.mubr.bf16.gmra.mrb[0].mxu0 %v5937
      %v6032 = vpop.f32.mrb[0].mxu0
      %v6033 = vadd.f32 0.0, %v6032
      %v6034 = vpop.f32.mrb[0].mxu0
      %v6035 = vpop.f32.mrb[0].mxu0
      %v6036 = vadd.f32 0.0, %v6035
      %v6037 = vpop.f32.mrb[0].mxu0
      %6038 = vmatprep.mubr.bf16.mxu0 0
      %6039 = vmatmul.mubr.bf16.gmra.mrb[0].mxu0 %v5940
      %v6040 = vpop.f32.mrb[0].mxu0
      %v6041 = vadd.f32 0.0, %v6040
      %v6042 = vpop.f32.mrb[0].mxu0
      %v6043 = vpop.f32.mrb[0].mxu0
      %v6044 = vadd.f32 0.0, %v6043
      %v6045 = vpop.f32.mrb[0].mxu0
      %6046 = vmatprep.mubr.bf16.mxu0 0
      %6047 = vmatmul.mubr.bf16.gmra.mrb[0].mxu0 %v5943
      %v6048 = vpop.f32.mrb[0].mxu0
      %v6049 = vadd.f32 0.0, %v6048
      %v6050 = vpop.f32.mrb[0].mxu0
      %v6051 = vpop.f32.mrb[0].mxu0
      %v6052 = vadd.f32 0.0, %v6051
      %v6053 = vpop.f32.mrb[0].mxu0
      %6054 = vmatprep.mubr.bf16.mxu0 0
      %6055 = vmatmul.mubr.bf16.gmra.mrb[0].mxu0 %v5946
      %v6056 = vpop.f32.mrb[0].mxu0
      %v6057 = vadd.f32 0.0, %v6056
      %v6058 = vpop.f32.mrb[0].mxu0
      %v6059 = vpop.f32.mrb[0].mxu0
      %v6060 = vadd.f32 0.0, %v6059
      %v6061 = vpop.f32.mrb[0].mxu0
      %6062 = vmatprep.mubr.bf16.mxu0 0
      %6063 = vmatmul.mubr.bf16.gmra.mrb[0].mxu0 %v5949
      %v6064 = vpop.f32.mrb[0].mxu0
      %v6065 = vadd.f32 0.0, %v6064
      %v6066 = vpop.f32.mrb[0].mxu0
      %v6067 = vpop.f32.mrb[0].mxu0
      %v6068 = vadd.f32 0.0, %v6067
      %v6069 = vpop.f32.mrb[0].mxu0
      %6070 = vmatprep.mubr.bf16.mxu0 0
      %6071 = vmatmul.mubr.bf16.gmra.mrb[0].mxu0 %v5952
      %v6072 = vpop.f32.mrb[0].mxu0
      %v6073 = vadd.f32 0.0, %v6072
      %v6074 = vpop.f32.mrb[0].mxu0
      %v6075 = vpop.f32.mrb[0].mxu0
      %v6076 = vadd.f32 0.0, %v6075
      %v6077 = vpop.f32.mrb[0].mxu0
      %6078 = vmatprep.mubr.bf16.mxu0 0
      %6079 = vmatmul.mubr.bf16.gmra.mrb[0].mxu0 %v5955
      %v6080 = vpop.f32.mrb[0].mxu0
      %v6081 = vadd.f32 0.0, %v6080
      %v6082 = vpop.f32.mrb[0].mxu0
      %v6083 = vpop.f32.mrb[0].mxu0
      %v6084 = vadd.f32 0.0, %v6083
      %v6085 = vpop.f32.mrb[0].mxu0
      %6086 = vmatprep.mubr.bf16.mxu0 0
      %6087 = vmatmul.mubr.bf16.gmra.mrb[0].mxu0 %v5958
      %v6088 = vpop.f32.mrb[0].mxu0
      %v6089 = vadd.f32 0.0, %v6088
      %v6090 = vpop.f32.mrb[0].mxu0
      %v6091 = vpop.f32.mrb[0].mxu0
      %v6092 = vadd.f32 0.0, %v6091
      %v6093 = vpop.f32.mrb[0].mxu0
      %6094 = vmatprep.mubr.bf16.mxu0 0
      %6095 = vmatmul.mubr.bf16.gmra.mrb[0].mxu0 %v5961
      %v6096 = vpop.f32.mrb[0].mxu0
      %v6097 = vadd.f32 0.0, %v6096
      %v6098 = vpop.f32.mrb[0].mxu0
      %v6099 = vpop.f32.mrb[0].mxu0
      %v6100 = vadd.f32 0.0, %v6099
      %v6101 = vpop.f32.mrb[0].mxu0
      %6102 = vmatprep.mubr.bf16.mxu0 0
      %6103 = vmatmul.mubr.bf16.gmra.mrb[0].mxu0 %v5964
      %v6104 = vpop.f32.mrb[0].mxu0
      %v6105 = vadd.f32 0.0, %v6104
      %v6106 = vpop.f32.mrb[0].mxu0
      %v6107 = vpop.f32.mrb[0].mxu0
      %v6108 = vadd.f32 0.0, %v6107
      %v6109 = vpop.f32.mrb[0].mxu0
      %6110 = vmatprep.mubr.bf16.mxu0 0
      %6111 = vmatmul.mubr.bf16.gmra.mrb[0].mxu0 %v5967
      %v6112 = vpop.f32.mrb[0].mxu0
      %v6113 = vadd.f32 0.0, %v6112
      %v6114 = vpop.f32.mrb[0].mxu0
      %v6115 = vpop.f32.mrb[0].mxu0
      %v6116 = vadd.f32 0.0, %v6115
      %v6117 = vpop.f32.mrb[0].mxu0
      %6118 = vmatprep.mubr.bf16.mxu0 0
      %6119 = vmatmul.mubr.bf16.gmra.mrb[0].mxu0 %v5970
      %v6120 = vpop.f32.mrb[0].mxu0
      %v6121 = vadd.f32 0.0, %v6120
      %v6122 = vpop.f32.mrb[0].mxu0
      %v6123 = vpop.f32.mrb[0].mxu0
      %v6124 = vadd.f32 0.0, %v6123
      %v6125 = vpop.f32.mrb[0].mxu0
      %6126 = vmatprep.mubr.bf16.mxu0 0
      %6127 = vmatmul.mubr.bf16.gmra.mrb[0].mxu0 %v5973
      %v6128 = vpop.f32.mrb[0].mxu0
      %v6129 = vadd.f32 0.0, %v6128
      %v6130 = vpop.f32.mrb[0].mxu0
      %v6131 = vpop.f32.mrb[0].mxu0
      %v6132 = vadd.f32 0.0, %v6131
      %v6133 = vpop.f32.mrb[0].mxu0
      %6134 = vmatprep.mubr.bf16.mxu0 0
      %6135 = vmatmul.mubr.bf16.gmra.mrb[0].mxu0 %v5976
      %v6136 = vpop.f32.mrb[0].mxu0
      %v6137 = vadd.f32 0.0, %v6136
      %v6138 = vpop.f32.mrb[0].mxu0
      %v6139 = vpop.f32.mrb[0].mxu0
      %v6140 = vadd.f32 0.0, %v6139
      %v6141 = vpop.f32.mrb[0].mxu0
      %6142 = vmatprep.mubr.bf16.mxu0 0
      %6143 = vmatmul.mubr.bf16.gmra.mrb[0].mxu0 %v5979
      %v6144 = vpop.f32.mrb[0].mxu0
      %v6145 = vadd.f32 0.0, %v6144
      %v6146 = vpop.f32.mrb[0].mxu0
      %v6147 = vpop.f32.mrb[0].mxu0
      %v6148 = vadd.f32 0.0, %v6147
      %v6149 = vpop.f32.mrb[0].mxu0
      %6150 = vmatprep.mubr.bf16.mxu0 0
      %6151 = vmatmul.mubr.bf16.gmra.mrb[0].mxu0 %v5982
      %v6152 = vpop.f32.mrb[0].mxu0
      %v6153 = vadd.f32 0.0, %v6152
      %v6154 = vpop.f32.mrb[0].mxu0
      %v6155 = vpop.f32.mrb[0].mxu0
      %v6156 = vadd.f32 0.0, %v6155
      %v6157 = vpop.f32.mrb[0].mxu0
      %6158 = vmatprep.mubr.bf16.mxu0 0
      %6159 = vmatmul.mubr.bf16.gmra.mrb[0].mxu0 %v5985
      %v6160 = vpop.f32.mrb[0].mxu0
      %v6161 = vadd.f32 0.0, %v6160
      %v6162 = vpop.f32.mrb[0].mxu0
      %v6163 = vpop.f32.mrb[0].mxu0
      %v6164 = vadd.f32 0.0, %v6163
      %v6165 = vpop.f32.mrb[0].mxu0
      %6166 = vdwg.mxu0
      %v6167 = vadd.f32 %v5841, %v6025
      %v6168 = vadd.f32 %v5842, %v6028
      %v6169 = vadd.f32 %v5843, %v6033
      %v6170 = vadd.f32 %v5844, %v6036
      %v6171 = vadd.f32 %v5845, %v6041
      %v6172 = vadd.f32 %v5846, %v6044
      %v6173 = vadd.f32 %v5847, %v6049
      %v6174 = vadd.f32 %v5848, %v6052
      %v6175 = vadd.f32 %v5849, %v6057
      %v6176 = vadd.f32 %v5850, %v6060
      %v6177 = vadd.f32 %v5851, %v6065
      %v6178 = vadd.f32 %v5852, %v6068
      %v6179 = vadd.f32 %v5853, %v6073
      %v6180 = vadd.f32 %v5854, %v6076
      %v6181 = vadd.f32 %v5855, %v6081
      %v6182 = vadd.f32 %v5856, %v6084
      %v6183 = vadd.f32 %v5857, %v6089
      %v6184 = vadd.f32 %v5858, %v6092
      %v6185 = vadd.f32 %v5859, %v6097
      %v6186 = vadd.f32 %v5860, %v6100
      %v6187 = vadd.f32 %v5861, %v6105
      %v6188 = vadd.f32 %v5862, %v6108
      %v6189 = vadd.f32 %v5863, %v6113
      %v6190 = vadd.f32 %v5864, %v6116
      %v6191 = vadd.f32 %v5865, %v6121
      %v6192 = vadd.f32 %v5866, %v6124
      %v6193 = vadd.f32 %v5867, %v6129
      %v6194 = vadd.f32 %v5868, %v6132
      %v6195 = vadd.f32 %v5869, %v6137
      %v6196 = vadd.f32 %v5870, %v6140
      %v6197 = vadd.f32 %v5871, %v6145
      %v6198 = vadd.f32 %v5872, %v6148
      %v6199 = vadd.f32 %v5873, %v6153
      %v6200 = vadd.f32 %v5874, %v6156
      %v6201 = vadd.f32 %v5875, %v6161
      %v6202 = vadd.f32 %v5876, %v6164
      %v6203 = vld [vmem:[#allocation2 + $0x25] sm:$0xff]
      %v6204 = vld [vmem:[#allocation2 + $0x2d] sm:$0xff]
      %v6205 = vld [vmem:[#allocation2 + $0x35] sm:$0xff]
      %v6206 = vld [vmem:[#allocation2 + $0x3d] sm:$0xff]
      %v6207 = vld [vmem:[#allocation2 + $0x45] sm:$0xff]
      %v6208 = vld [vmem:[#allocation2 + $0x4d] sm:$0xff]
      %v6209 = vld [vmem:[#allocation2 + $0x55] sm:$0xff]
      %v6210 = vld [vmem:[#allocation2 + $0x5d] sm:$0xff]
      %v6211 = vld [vmem:[#allocation2 + $0x65] sm:$0xff]
      %v6212 = vld [vmem:[#allocation2 + $0x6d] sm:$0xff]
      %v6213 = vld [vmem:[#allocation2 + $0x75] sm:$0xff]
      %v6214 = vld [vmem:[#allocation2 + $0x7d] sm:$0xff]
      %v6215 = vld [vmem:[#allocation2 + $0x85] sm:$0xff]
      %v6216 = vld [vmem:[#allocation2 + $0x8d] sm:$0xff]
      %v6217 = vld [vmem:[#allocation2 + $0x95] sm:$0xff]
      %v6218 = vld [vmem:[#allocation2 + $0x9d] sm:$0xff]
      %v6219 = vld [vmem:[#allocation2 + $0xa5] sm:$0xff]
      %v6220 = vld [vmem:[#allocation2 + $0xad] sm:$0xff]
      %v6221 = vld [vmem:[#allocation2 + $0xb5] sm:$0xff]
      %v6222 = vld [vmem:[#allocation2 + $0xbd] sm:$0xff]
      %v6223 = vld [vmem:[#allocation2 + $0xc5] sm:$0xff]
      %v6224 = vld [vmem:[#allocation2 + $0xcd] sm:$0xff]
      %v6225 = vld [vmem:[#allocation2 + $0xd5] sm:$0xff]
      %v6226 = vld [vmem:[#allocation2 + $0xdd] sm:$0xff]
      %v6227 = vld [vmem:[#allocation2 + $0xe5] sm:$0xff]
      %v6228 = vld [vmem:[#allocation2 + $0xed] sm:$0xff]
      %v6229 = vld [vmem:[#allocation2 + $0xf5] sm:$0xff]
      %v6230 = vld [vmem:[#allocation2 + $0xfd] sm:$0xff]
      %v6231 = vld [vmem:[#allocation2 + $0x105] sm:$0xff]
      %v6232 = vld [vmem:[#allocation2 + $0x10d] sm:$0xff]
      %v6233 = vld [vmem:[#allocation2 + $0x115] sm:$0xff]
      %v6234 = vld [vmem:[#allocation2 + $0x11d] sm:$0xff]
      %v6235 = vld [vmem:[#allocation2 + $0x125] sm:$0xff]
      %v6236 = vld [vmem:[#allocation2 + $0x12d] sm:$0xff]
      %v6237 = vld [vmem:[#allocation2 + $0x135] sm:$0xff]
      %v6238 = vld [vmem:[#allocation2 + $0x13d] sm:$0xff]
      %v6239 = vpack.c.bf16 %v6204, %v6203
      %v6240 = vpack.c.bf16 %v6206, %v6205
      %v6241 = vpack.c.bf16 %v6208, %v6207
      %v6242 = vpack.c.bf16 %v6210, %v6209
      %v6243 = vpack.c.bf16 %v6212, %v6211
      %v6244 = vpack.c.bf16 %v6214, %v6213
      %v6245 = vpack.c.bf16 %v6216, %v6215
      %v6246 = vpack.c.bf16 %v6218, %v6217
      %v6247 = vpack.c.bf16 %v6220, %v6219
      %v6248 = vpack.c.bf16 %v6222, %v6221
      %v6249 = vpack.c.bf16 %v6224, %v6223
      %v6250 = vpack.c.bf16 %v6226, %v6225
      %v6251 = vpack.c.bf16 %v6228, %v6227
      %v6252 = vpack.c.bf16 %v6230, %v6229
      %v6253 = vpack.c.bf16 %v6232, %v6231
      %v6254 = vpack.c.bf16 %v6234, %v6233
      %v6255 = vpack.c.bf16 %v6236, %v6235
      %v6256 = vpack.c.bf16 %v6238, %v6237
      %s6257 = scalar_lea.vmem %s4, 14
      %v6258 = vld [vmem:[%s6257] sm:$0x3]
      %v6260 = vsel %vm391, %v6239, 0
      %v6263 = vsel %vm391, %v6240, 0
      %v6266 = vsel %vm391, %v6241, 0
      %v6269 = vsel %vm391, %v6242, 0
      %v6272 = vsel %vm391, %v6243, 0
      %v6275 = vsel %vm391, %v6244, 0
      %v6278 = vsel %vm391, %v6245, 0
      %v6281 = vsel %vm391, %v6246, 0
      %v6284 = vsel %vm391, %v6247, 0
      %v6287 = vsel %vm391, %v6248, 0
      %v6290 = vsel %vm391, %v6249, 0
      %v6293 = vsel %vm391, %v6250, 0
      %v6296 = vsel %vm391, %v6251, 0
      %v6299 = vsel %vm391, %v6252, 0
      %v6302 = vsel %vm391, %v6253, 0
      %v6305 = vsel %vm391, %v6254, 0
      %v6308 = vsel %vm391, %v6255, 0
      %v6311 = vsel %vm391, %v6256, 0
      %v6314 = vsel %vm446, %v6258, 0
      %6316 = vmatprep.subr.bf16.mxu0 0
      %6317 = vmatpush1.bf16.msra.mxu0 %v6314
      %6318 = vmatprep.subr.bf16.mxu0 0
      %6319 = vmatpush1.bf16.msra.mxu0 0
      %6320 = vmatprep.subr.bf16.mxu0 0
      %6321 = vmatpush1.bf16.msra.mxu0 0
      %6322 = vmatprep.subr.bf16.mxu0 0
      %6323 = vmatpush1.bf16.msra.mxu0 0
      %6324 = vmatprep.subr.bf16.mxu0 0
      %6325 = vmatpush1.bf16.msra.mxu0 0
      %6326 = vmatprep.subr.bf16.mxu0 0
      %6327 = vmatpush1.bf16.msra.mxu0 0
      %6328 = vmatprep.subr.bf16.mxu0 0
      %6329 = vmatpush1.bf16.msra.mxu0 0
      %6330 = vmatprep.subr.bf16.mxu0 0
      %6331 = vmatpush1.bf16.msra.mxu0 0
      %6332 = vmatprep.subr.bf16.mxu0 0
      %6333 = vmatpush1.bf16.msra.mxu0 0
      %6334 = vmatprep.subr.bf16.mxu0 0
      %6335 = vmatpush1.bf16.msra.mxu0 0
      %6336 = vmatprep.subr.bf16.mxu0 0
      %6337 = vmatpush1.bf16.msra.mxu0 0
      %6338 = vmatprep.subr.bf16.mxu0 0
      %6339 = vmatpush1.bf16.msra.mxu0 0
      %6340 = vmatprep.subr.bf16.mxu0 0
      %6341 = vmatpush1.bf16.msra.mxu0 0
      %6342 = vmatprep.subr.bf16.mxu0 0
      %6343 = vmatpush1.bf16.msra.mxu0 0
      %6344 = vmatprep.subr.bf16.mxu0 0
      %6345 = vmatpush1.bf16.msra.mxu0 0
      %6346 = vmatprep.subr.bf16.mxu0 0
      %6347 = vmatpush1.bf16.msra.mxu0 0
      %6348 = vmatprep.mubr.bf16.mxu0 0
      %6349 = vmatmul.mubr.bf16.gmra.mrb[0].mxu0 %v6260
      %v6350 = vpop.f32.mrb[0].mxu0
      %v6351 = vadd.f32 0.0, %v6350
      %v6352 = vpop.f32.mrb[0].mxu0
      %v6353 = vpop.f32.mrb[0].mxu0
      %v6354 = vadd.f32 0.0, %v6353
      %v6355 = vpop.f32.mrb[0].mxu0
      %6356 = vmatprep.mubr.bf16.mxu0 0
      %6357 = vmatmul.mubr.bf16.gmra.mrb[0].mxu0 %v6263
      %v6358 = vpop.f32.mrb[0].mxu0
      %v6359 = vadd.f32 0.0, %v6358
      %v6360 = vpop.f32.mrb[0].mxu0
      %v6361 = vpop.f32.mrb[0].mxu0
      %v6362 = vadd.f32 0.0, %v6361
      %v6363 = vpop.f32.mrb[0].mxu0
      %6364 = vmatprep.mubr.bf16.mxu0 0
      %6365 = vmatmul.mubr.bf16.gmra.mrb[0].mxu0 %v6266
      %v6366 = vpop.f32.mrb[0].mxu0
      %v6367 = vadd.f32 0.0, %v6366
      %v6368 = vpop.f32.mrb[0].mxu0
      %v6369 = vpop.f32.mrb[0].mxu0
      %v6370 = vadd.f32 0.0, %v6369
      %v6371 = vpop.f32.mrb[0].mxu0
      %6372 = vmatprep.mubr.bf16.mxu0 0
      %6373 = vmatmul.mubr.bf16.gmra.mrb[0].mxu0 %v6269
      %v6374 = vpop.f32.mrb[0].mxu0
      %v6375 = vadd.f32 0.0, %v6374
      %v6376 = vpop.f32.mrb[0].mxu0
      %v6377 = vpop.f32.mrb[0].mxu0
      %v6378 = vadd.f32 0.0, %v6377
      %v6379 = vpop.f32.mrb[0].mxu0
      %6380 = vmatprep.mubr.bf16.mxu0 0
      %6381 = vmatmul.mubr.bf16.gmra.mrb[0].mxu0 %v6272
      %v6382 = vpop.f32.mrb[0].mxu0
      %v6383 = vadd.f32 0.0, %v6382
      %v6384 = vpop.f32.mrb[0].mxu0
      %v6385 = vpop.f32.mrb[0].mxu0
      %v6386 = vadd.f32 0.0, %v6385
      %v6387 = vpop.f32.mrb[0].mxu0
      %6388 = vmatprep.mubr.bf16.mxu0 0
      %6389 = vmatmul.mubr.bf16.gmra.mrb[0].mxu0 %v6275
      %v6390 = vpop.f32.mrb[0].mxu0
      %v6391 = vadd.f32 0.0, %v6390
      %v6392 = vpop.f32.mrb[0].mxu0
      %v6393 = vpop.f32.mrb[0].mxu0
      %v6394 = vadd.f32 0.0, %v6393
      %v6395 = vpop.f32.mrb[0].mxu0
      %6396 = vmatprep.mubr.bf16.mxu0 0
      %6397 = vmatmul.mubr.bf16.gmra.mrb[0].mxu0 %v6278
      %v6398 = vpop.f32.mrb[0].mxu0
      %v6399 = vadd.f32 0.0, %v6398
      %v6400 = vpop.f32.mrb[0].mxu0
      %v6401 = vpop.f32.mrb[0].mxu0
      %v6402 = vadd.f32 0.0, %v6401
      %v6403 = vpop.f32.mrb[0].mxu0
      %6404 = vmatprep.mubr.bf16.mxu0 0
      %6405 = vmatmul.mubr.bf16.gmra.mrb[0].mxu0 %v6281
      %v6406 = vpop.f32.mrb[0].mxu0
      %v6407 = vadd.f32 0.0, %v6406
      %v6408 = vpop.f32.mrb[0].mxu0
      %v6409 = vpop.f32.mrb[0].mxu0
      %v6410 = vadd.f32 0.0, %v6409
      %v6411 = vpop.f32.mrb[0].mxu0
      %6412 = vmatprep.mubr.bf16.mxu0 0
      %6413 = vmatmul.mubr.bf16.gmra.mrb[0].mxu0 %v6284
      %v6414 = vpop.f32.mrb[0].mxu0
      %v6415 = vadd.f32 0.0, %v6414
      %v6416 = vpop.f32.mrb[0].mxu0
      %v6417 = vpop.f32.mrb[0].mxu0
      %v6418 = vadd.f32 0.0, %v6417
      %v6419 = vpop.f32.mrb[0].mxu0
      %6420 = vmatprep.mubr.bf16.mxu0 0
      %6421 = vmatmul.mubr.bf16.gmra.mrb[0].mxu0 %v6287
      %v6422 = vpop.f32.mrb[0].mxu0
      %v6423 = vadd.f32 0.0, %v6422
      %v6424 = vpop.f32.mrb[0].mxu0
      %v6425 = vpop.f32.mrb[0].mxu0
      %v6426 = vadd.f32 0.0, %v6425
      %v6427 = vpop.f32.mrb[0].mxu0
      %6428 = vmatprep.mubr.bf16.mxu0 0
      %6429 = vmatmul.mubr.bf16.gmra.mrb[0].mxu0 %v6290
      %v6430 = vpop.f32.mrb[0].mxu0
      %v6431 = vadd.f32 0.0, %v6430
      %v6432 = vpop.f32.mrb[0].mxu0
      %v6433 = vpop.f32.mrb[0].mxu0
      %v6434 = vadd.f32 0.0, %v6433
      %v6435 = vpop.f32.mrb[0].mxu0
      %6436 = vmatprep.mubr.bf16.mxu0 0
      %6437 = vmatmul.mubr.bf16.gmra.mrb[0].mxu0 %v6293
      %v6438 = vpop.f32.mrb[0].mxu0
      %v6439 = vadd.f32 0.0, %v6438
      %v6440 = vpop.f32.mrb[0].mxu0
      %v6441 = vpop.f32.mrb[0].mxu0
      %v6442 = vadd.f32 0.0, %v6441
      %v6443 = vpop.f32.mrb[0].mxu0
      %6444 = vmatprep.mubr.bf16.mxu0 0
      %6445 = vmatmul.mubr.bf16.gmra.mrb[0].mxu0 %v6296
      %v6446 = vpop.f32.mrb[0].mxu0
      %v6447 = vadd.f32 0.0, %v6446
      %v6448 = vpop.f32.mrb[0].mxu0
      %v6449 = vpop.f32.mrb[0].mxu0
      %v6450 = vadd.f32 0.0, %v6449
      %v6451 = vpop.f32.mrb[0].mxu0
      %6452 = vmatprep.mubr.bf16.mxu0 0
      %6453 = vmatmul.mubr.bf16.gmra.mrb[0].mxu0 %v6299
      %v6454 = vpop.f32.mrb[0].mxu0
      %v6455 = vadd.f32 0.0, %v6454
      %v6456 = vpop.f32.mrb[0].mxu0
      %v6457 = vpop.f32.mrb[0].mxu0
      %v6458 = vadd.f32 0.0, %v6457
      %v6459 = vpop.f32.mrb[0].mxu0
      %6460 = vmatprep.mubr.bf16.mxu0 0
      %6461 = vmatmul.mubr.bf16.gmra.mrb[0].mxu0 %v6302
      %v6462 = vpop.f32.mrb[0].mxu0
      %v6463 = vadd.f32 0.0, %v6462
      %v6464 = vpop.f32.mrb[0].mxu0
      %v6465 = vpop.f32.mrb[0].mxu0
      %v6466 = vadd.f32 0.0, %v6465
      %v6467 = vpop.f32.mrb[0].mxu0
      %6468 = vmatprep.mubr.bf16.mxu0 0
      %6469 = vmatmul.mubr.bf16.gmra.mrb[0].mxu0 %v6305
      %v6470 = vpop.f32.mrb[0].mxu0
      %v6471 = vadd.f32 0.0, %v6470
      %v6472 = vpop.f32.mrb[0].mxu0
      %v6473 = vpop.f32.mrb[0].mxu0
      %v6474 = vadd.f32 0.0, %v6473
      %v6475 = vpop.f32.mrb[0].mxu0
      %6476 = vmatprep.mubr.bf16.mxu0 0
      %6477 = vmatmul.mubr.bf16.gmra.mrb[0].mxu0 %v6308
      %v6478 = vpop.f32.mrb[0].mxu0
      %v6479 = vadd.f32 0.0, %v6478
      %v6480 = vpop.f32.mrb[0].mxu0
      %v6481 = vpop.f32.mrb[0].mxu0
      %v6482 = vadd.f32 0.0, %v6481
      %v6483 = vpop.f32.mrb[0].mxu0
      %6484 = vmatprep.mubr.bf16.mxu0 0
      %6485 = vmatmul.mubr.bf16.gmra.mrb[0].mxu0 %v6311
      %v6486 = vpop.f32.mrb[0].mxu0
      %v6487 = vadd.f32 0.0, %v6486
      %v6488 = vpop.f32.mrb[0].mxu0
      %v6489 = vpop.f32.mrb[0].mxu0
      %v6490 = vadd.f32 0.0, %v6489
      %v6491 = vpop.f32.mrb[0].mxu0
      %6492 = vdwg.mxu0
      %v6493 = vadd.f32 %v6167, %v6351
      %v6494 = vadd.f32 %v6168, %v6354
      %v6495 = vadd.f32 %v6169, %v6359
      %v6496 = vadd.f32 %v6170, %v6362
      %v6497 = vadd.f32 %v6171, %v6367
      %v6498 = vadd.f32 %v6172, %v6370
      %v6499 = vadd.f32 %v6173, %v6375
      %v6500 = vadd.f32 %v6174, %v6378
      %v6501 = vadd.f32 %v6175, %v6383
      %v6502 = vadd.f32 %v6176, %v6386
      %v6503 = vadd.f32 %v6177, %v6391
      %v6504 = vadd.f32 %v6178, %v6394
      %v6505 = vadd.f32 %v6179, %v6399
      %v6506 = vadd.f32 %v6180, %v6402
      %v6507 = vadd.f32 %v6181, %v6407
      %v6508 = vadd.f32 %v6182, %v6410
      %v6509 = vadd.f32 %v6183, %v6415
      %v6510 = vadd.f32 %v6184, %v6418
      %v6511 = vadd.f32 %v6185, %v6423
      %v6512 = vadd.f32 %v6186, %v6426
      %v6513 = vadd.f32 %v6187, %v6431
      %v6514 = vadd.f32 %v6188, %v6434
      %v6515 = vadd.f32 %v6189, %v6439
      %v6516 = vadd.f32 %v6190, %v6442
      %v6517 = vadd.f32 %v6191, %v6447
      %v6518 = vadd.f32 %v6192, %v6450
      %v6519 = vadd.f32 %v6193, %v6455
      %v6520 = vadd.f32 %v6194, %v6458
      %v6521 = vadd.f32 %v6195, %v6463
      %v6522 = vadd.f32 %v6196, %v6466
      %v6523 = vadd.f32 %v6197, %v6471
      %v6524 = vadd.f32 %v6198, %v6474
      %v6525 = vadd.f32 %v6199, %v6479
      %v6526 = vadd.f32 %v6200, %v6482
      %v6527 = vadd.f32 %v6201, %v6487
      %v6528 = vadd.f32 %v6202, %v6490
      %v6529 = vld [vmem:[#allocation2 + $0x26] sm:$0xff]
      %v6530 = vld [vmem:[#allocation2 + $0x2e] sm:$0xff]
      %v6531 = vld [vmem:[#allocation2 + $0x36] sm:$0xff]
      %v6532 = vld [vmem:[#allocation2 + $0x3e] sm:$0xff]
      %v6533 = vld [vmem:[#allocation2 + $0x46] sm:$0xff]
      %v6534 = vld [vmem:[#allocation2 + $0x4e] sm:$0xff]
      %v6535 = vld [vmem:[#allocation2 + $0x56] sm:$0xff]
      %v6536 = vld [vmem:[#allocation2 + $0x5e] sm:$0xff]
      %v6537 = vld [vmem:[#allocation2 + $0x66] sm:$0xff]
      %v6538 = vld [vmem:[#allocation2 + $0x6e] sm:$0xff]
      %v6539 = vld [vmem:[#allocation2 + $0x76] sm:$0xff]
      %v6540 = vld [vmem:[#allocation2 + $0x7e] sm:$0xff]
      %v6541 = vld [vmem:[#allocation2 + $0x86] sm:$0xff]
      %v6542 = vld [vmem:[#allocation2 + $0x8e] sm:$0xff]
      %v6543 = vld [vmem:[#allocation2 + $0x96] sm:$0xff]
      %v6544 = vld [vmem:[#allocation2 + $0x9e] sm:$0xff]
      %v6545 = vld [vmem:[#allocation2 + $0xa6] sm:$0xff]
      %v6546 = vld [vmem:[#allocation2 + $0xae] sm:$0xff]
      %v6547 = vld [vmem:[#allocation2 + $0xb6] sm:$0xff]
      %v6548 = vld [vmem:[#allocation2 + $0xbe] sm:$0xff]
      %v6549 = vld [vmem:[#allocation2 + $0xc6] sm:$0xff]
      %v6550 = vld [vmem:[#allocation2 + $0xce] sm:$0xff]
      %v6551 = vld [vmem:[#allocation2 + $0xd6] sm:$0xff]
      %v6552 = vld [vmem:[#allocation2 + $0xde] sm:$0xff]
      %v6553 = vld [vmem:[#allocation2 + $0xe6] sm:$0xff]
      %v6554 = vld [vmem:[#allocation2 + $0xee] sm:$0xff]
      %v6555 = vld [vmem:[#allocation2 + $0xf6] sm:$0xff]
      %v6556 = vld [vmem:[#allocation2 + $0xfe] sm:$0xff]
      %v6557 = vld [vmem:[#allocation2 + $0x106] sm:$0xff]
      %v6558 = vld [vmem:[#allocation2 + $0x10e] sm:$0xff]
      %v6559 = vld [vmem:[#allocation2 + $0x116] sm:$0xff]
      %v6560 = vld [vmem:[#allocation2 + $0x11e] sm:$0xff]
      %v6561 = vld [vmem:[#allocation2 + $0x126] sm:$0xff]
      %v6562 = vld [vmem:[#allocation2 + $0x12e] sm:$0xff]
      %v6563 = vld [vmem:[#allocation2 + $0x136] sm:$0xff]
      %v6564 = vld [vmem:[#allocation2 + $0x13e] sm:$0xff]
      %v6565 = vpack.c.bf16 %v6530, %v6529
      %v6566 = vpack.c.bf16 %v6532, %v6531
      %v6567 = vpack.c.bf16 %v6534, %v6533
      %v6568 = vpack.c.bf16 %v6536, %v6535
      %v6569 = vpack.c.bf16 %v6538, %v6537
      %v6570 = vpack.c.bf16 %v6540, %v6539
      %v6571 = vpack.c.bf16 %v6542, %v6541
      %v6572 = vpack.c.bf16 %v6544, %v6543
      %v6573 = vpack.c.bf16 %v6546, %v6545
      %v6574 = vpack.c.bf16 %v6548, %v6547
      %v6575 = vpack.c.bf16 %v6550, %v6549
      %v6576 = vpack.c.bf16 %v6552, %v6551
      %v6577 = vpack.c.bf16 %v6554, %v6553
      %v6578 = vpack.c.bf16 %v6556, %v6555
      %v6579 = vpack.c.bf16 %v6558, %v6557
      %v6580 = vpack.c.bf16 %v6560, %v6559
      %v6581 = vpack.c.bf16 %v6562, %v6561
      %v6582 = vpack.c.bf16 %v6564, %v6563
      %s6583 = scalar_lea.vmem %s4, 16
      %v6584 = vld [vmem:[%s6583] sm:$0x3]
      %v6586 = vsel %vm391, %v6565, 0
      %v6589 = vsel %vm391, %v6566, 0
      %v6592 = vsel %vm391, %v6567, 0
      %v6595 = vsel %vm391, %v6568, 0
      %v6598 = vsel %vm391, %v6569, 0
      %v6601 = vsel %vm391, %v6570, 0
      %v6604 = vsel %vm391, %v6571, 0
      %v6607 = vsel %vm391, %v6572, 0
      %v6610 = vsel %vm391, %v6573, 0
      %v6613 = vsel %vm391, %v6574, 0
      %v6616 = vsel %vm391, %v6575, 0
      %v6619 = vsel %vm391, %v6576, 0
      %v6622 = vsel %vm391, %v6577, 0
      %v6625 = vsel %vm391, %v6578, 0
      %v6628 = vsel %vm391, %v6579, 0
      %v6631 = vsel %vm391, %v6580, 0
      %v6634 = vsel %vm391, %v6581, 0
      %v6637 = vsel %vm391, %v6582, 0
      %v6640 = vsel %vm446, %v6584, 0
      %6642 = vmatprep.subr.bf16.mxu0 0
      %6643 = vmatpush1.bf16.msra.mxu0 %v6640
      %6644 = vmatprep.subr.bf16.mxu0 0
      %6645 = vmatpush1.bf16.msra.mxu0 0
      %6646 = vmatprep.subr.bf16.mxu0 0
      %6647 = vmatpush1.bf16.msra.mxu0 0
      %6648 = vmatprep.subr.bf16.mxu0 0
      %6649 = vmatpush1.bf16.msra.mxu0 0
      %6650 = vmatprep.subr.bf16.mxu0 0
      %6651 = vmatpush1.bf16.msra.mxu0 0
      %6652 = vmatprep.subr.bf16.mxu0 0
      %6653 = vmatpush1.bf16.msra.mxu0 0
      %6654 = vmatprep.subr.bf16.mxu0 0
      %6655 = vmatpush1.bf16.msra.mxu0 0
      %6656 = vmatprep.subr.bf16.mxu0 0
      %6657 = vmatpush1.bf16.msra.mxu0 0
      %6658 = vmatprep.subr.bf16.mxu0 0
      %6659 = vmatpush1.bf16.msra.mxu0 0
      %6660 = vmatprep.subr.bf16.mxu0 0
      %6661 = vmatpush1.bf16.msra.mxu0 0
      %6662 = vmatprep.subr.bf16.mxu0 0
      %6663 = vmatpush1.bf16.msra.mxu0 0
      %6664 = vmatprep.subr.bf16.mxu0 0
      %6665 = vmatpush1.bf16.msra.mxu0 0
      %6666 = vmatprep.subr.bf16.mxu0 0
      %6667 = vmatpush1.bf16.msra.mxu0 0
      %6668 = vmatprep.subr.bf16.mxu0 0
      %6669 = vmatpush1.bf16.msra.mxu0 0
      %6670 = vmatprep.subr.bf16.mxu0 0
      %6671 = vmatpush1.bf16.msra.mxu0 0
      %6672 = vmatprep.subr.bf16.mxu0 0
      %6673 = vmatpush1.bf16.msra.mxu0 0
      %6674 = vmatprep.mubr.bf16.mxu0 0
      %6675 = vmatmul.mubr.bf16.gmra.mrb[0].mxu0 %v6586
      %v6676 = vpop.f32.mrb[0].mxu0
      %v6677 = vadd.f32 0.0, %v6676
      %v6678 = vpop.f32.mrb[0].mxu0
      %v6679 = vpop.f32.mrb[0].mxu0
      %v6680 = vadd.f32 0.0, %v6679
      %v6681 = vpop.f32.mrb[0].mxu0
      %6682 = vmatprep.mubr.bf16.mxu0 0
      %6683 = vmatmul.mubr.bf16.gmra.mrb[0].mxu0 %v6589
      %v6684 = vpop.f32.mrb[0].mxu0
      %v6685 = vadd.f32 0.0, %v6684
      %v6686 = vpop.f32.mrb[0].mxu0
      %v6687 = vpop.f32.mrb[0].mxu0
      %v6688 = vadd.f32 0.0, %v6687
      %v6689 = vpop.f32.mrb[0].mxu0
      %6690 = vmatprep.mubr.bf16.mxu0 0
      %6691 = vmatmul.mubr.bf16.gmra.mrb[0].mxu0 %v6592
      %v6692 = vpop.f32.mrb[0].mxu0
      %v6693 = vadd.f32 0.0, %v6692
      %v6694 = vpop.f32.mrb[0].mxu0
      %v6695 = vpop.f32.mrb[0].mxu0
      %v6696 = vadd.f32 0.0, %v6695
      %v6697 = vpop.f32.mrb[0].mxu0
      %6698 = vmatprep.mubr.bf16.mxu0 0
      %6699 = vmatmul.mubr.bf16.gmra.mrb[0].mxu0 %v6595
      %v6700 = vpop.f32.mrb[0].mxu0
      %v6701 = vadd.f32 0.0, %v6700
      %v6702 = vpop.f32.mrb[0].mxu0
      %v6703 = vpop.f32.mrb[0].mxu0
      %v6704 = vadd.f32 0.0, %v6703
      %v6705 = vpop.f32.mrb[0].mxu0
      %6706 = vmatprep.mubr.bf16.mxu0 0
      %6707 = vmatmul.mubr.bf16.gmra.mrb[0].mxu0 %v6598
      %v6708 = vpop.f32.mrb[0].mxu0
      %v6709 = vadd.f32 0.0, %v6708
      %v6710 = vpop.f32.mrb[0].mxu0
      %v6711 = vpop.f32.mrb[0].mxu0
      %v6712 = vadd.f32 0.0, %v6711
      %v6713 = vpop.f32.mrb[0].mxu0
      %6714 = vmatprep.mubr.bf16.mxu0 0
      %6715 = vmatmul.mubr.bf16.gmra.mrb[0].mxu0 %v6601
      %v6716 = vpop.f32.mrb[0].mxu0
      %v6717 = vadd.f32 0.0, %v6716
      %v6718 = vpop.f32.mrb[0].mxu0
      %v6719 = vpop.f32.mrb[0].mxu0
      %v6720 = vadd.f32 0.0, %v6719
      %v6721 = vpop.f32.mrb[0].mxu0
      %6722 = vmatprep.mubr.bf16.mxu0 0
      %6723 = vmatmul.mubr.bf16.gmra.mrb[0].mxu0 %v6604
      %v6724 = vpop.f32.mrb[0].mxu0
      %v6725 = vadd.f32 0.0, %v6724
      %v6726 = vpop.f32.mrb[0].mxu0
      %v6727 = vpop.f32.mrb[0].mxu0
      %v6728 = vadd.f32 0.0, %v6727
      %v6729 = vpop.f32.mrb[0].mxu0
      %6730 = vmatprep.mubr.bf16.mxu0 0
      %6731 = vmatmul.mubr.bf16.gmra.mrb[0].mxu0 %v6607
      %v6732 = vpop.f32.mrb[0].mxu0
      %v6733 = vadd.f32 0.0, %v6732
      %v6734 = vpop.f32.mrb[0].mxu0
      %v6735 = vpop.f32.mrb[0].mxu0
      %v6736 = vadd.f32 0.0, %v6735
      %v6737 = vpop.f32.mrb[0].mxu0
      %6738 = vmatprep.mubr.bf16.mxu0 0
      %6739 = vmatmul.mubr.bf16.gmra.mrb[0].mxu0 %v6610
      %v6740 = vpop.f32.mrb[0].mxu0
      %v6741 = vadd.f32 0.0, %v6740
      %v6742 = vpop.f32.mrb[0].mxu0
      %v6743 = vpop.f32.mrb[0].mxu0
      %v6744 = vadd.f32 0.0, %v6743
      %v6745 = vpop.f32.mrb[0].mxu0
      %6746 = vmatprep.mubr.bf16.mxu0 0
      %6747 = vmatmul.mubr.bf16.gmra.mrb[0].mxu0 %v6613
      %v6748 = vpop.f32.mrb[0].mxu0
      %v6749 = vadd.f32 0.0, %v6748
      %v6750 = vpop.f32.mrb[0].mxu0
      %v6751 = vpop.f32.mrb[0].mxu0
      %v6752 = vadd.f32 0.0, %v6751
      %v6753 = vpop.f32.mrb[0].mxu0
      %6754 = vmatprep.mubr.bf16.mxu0 0
      %6755 = vmatmul.mubr.bf16.gmra.mrb[0].mxu0 %v6616
      %v6756 = vpop.f32.mrb[0].mxu0
      %v6757 = vadd.f32 0.0, %v6756
      %v6758 = vpop.f32.mrb[0].mxu0
      %v6759 = vpop.f32.mrb[0].mxu0
      %v6760 = vadd.f32 0.0, %v6759
      %v6761 = vpop.f32.mrb[0].mxu0
      %6762 = vmatprep.mubr.bf16.mxu0 0
      %6763 = vmatmul.mubr.bf16.gmra.mrb[0].mxu0 %v6619
      %v6764 = vpop.f32.mrb[0].mxu0
      %v6765 = vadd.f32 0.0, %v6764
      %v6766 = vpop.f32.mrb[0].mxu0
      %v6767 = vpop.f32.mrb[0].mxu0
      %v6768 = vadd.f32 0.0, %v6767
      %v6769 = vpop.f32.mrb[0].mxu0
      %6770 = vmatprep.mubr.bf16.mxu0 0
      %6771 = vmatmul.mubr.bf16.gmra.mrb[0].mxu0 %v6622
      %v6772 = vpop.f32.mrb[0].mxu0
      %v6773 = vadd.f32 0.0, %v6772
      %v6774 = vpop.f32.mrb[0].mxu0
      %v6775 = vpop.f32.mrb[0].mxu0
      %v6776 = vadd.f32 0.0, %v6775
      %v6777 = vpop.f32.mrb[0].mxu0
      %6778 = vmatprep.mubr.bf16.mxu0 0
      %6779 = vmatmul.mubr.bf16.gmra.mrb[0].mxu0 %v6625
      %v6780 = vpop.f32.mrb[0].mxu0
      %v6781 = vadd.f32 0.0, %v6780
      %v6782 = vpop.f32.mrb[0].mxu0
      %v6783 = vpop.f32.mrb[0].mxu0
      %v6784 = vadd.f32 0.0, %v6783
      %v6785 = vpop.f32.mrb[0].mxu0
      %6786 = vmatprep.mubr.bf16.mxu0 0
      %6787 = vmatmul.mubr.bf16.gmra.mrb[0].mxu0 %v6628
      %v6788 = vpop.f32.mrb[0].mxu0
      %v6789 = vadd.f32 0.0, %v6788
      %v6790 = vpop.f32.mrb[0].mxu0
      %v6791 = vpop.f32.mrb[0].mxu0
      %v6792 = vadd.f32 0.0, %v6791
      %v6793 = vpop.f32.mrb[0].mxu0
      %6794 = vmatprep.mubr.bf16.mxu0 0
      %6795 = vmatmul.mubr.bf16.gmra.mrb[0].mxu0 %v6631
      %v6796 = vpop.f32.mrb[0].mxu0
      %v6797 = vadd.f32 0.0, %v6796
      %v6798 = vpop.f32.mrb[0].mxu0
      %v6799 = vpop.f32.mrb[0].mxu0
      %v6800 = vadd.f32 0.0, %v6799
      %v6801 = vpop.f32.mrb[0].mxu0
      %6802 = vmatprep.mubr.bf16.mxu0 0
      %6803 = vmatmul.mubr.bf16.gmra.mrb[0].mxu0 %v6634
      %v6804 = vpop.f32.mrb[0].mxu0
      %v6805 = vadd.f32 0.0, %v6804
      %v6806 = vpop.f32.mrb[0].mxu0
      %v6807 = vpop.f32.mrb[0].mxu0
      %v6808 = vadd.f32 0.0, %v6807
      %v6809 = vpop.f32.mrb[0].mxu0
      %6810 = vmatprep.mubr.bf16.mxu0 0
      %6811 = vmatmul.mubr.bf16.gmra.mrb[0].mxu0 %v6637
      %v6812 = vpop.f32.mrb[0].mxu0
      %v6813 = vadd.f32 0.0, %v6812
      %v6814 = vpop.f32.mrb[0].mxu0
      %v6815 = vpop.f32.mrb[0].mxu0
      %v6816 = vadd.f32 0.0, %v6815
      %v6817 = vpop.f32.mrb[0].mxu0
      %6818 = vdwg.mxu0
      %v6819 = vadd.f32 %v6493, %v6677
      %v6820 = vadd.f32 %v6494, %v6680
      %v6821 = vadd.f32 %v6495, %v6685
      %v6822 = vadd.f32 %v6496, %v6688
      %v6823 = vadd.f32 %v6497, %v6693
      %v6824 = vadd.f32 %v6498, %v6696
      %v6825 = vadd.f32 %v6499, %v6701
      %v6826 = vadd.f32 %v6500, %v6704
      %v6827 = vadd.f32 %v6501, %v6709
      %v6828 = vadd.f32 %v6502, %v6712
      %v6829 = vadd.f32 %v6503, %v6717
      %v6830 = vadd.f32 %v6504, %v6720
      %v6831 = vadd.f32 %v6505, %v6725
      %v6832 = vadd.f32 %v6506, %v6728
      %v6833 = vadd.f32 %v6507, %v6733
      %v6834 = vadd.f32 %v6508, %v6736
      %v6835 = vadd.f32 %v6509, %v6741
      %v6836 = vadd.f32 %v6510, %v6744
      %v6837 = vadd.f32 %v6511, %v6749
      %v6838 = vadd.f32 %v6512, %v6752
      %v6839 = vadd.f32 %v6513, %v6757
      %v6840 = vadd.f32 %v6514, %v6760
      %v6841 = vadd.f32 %v6515, %v6765
      %v6842 = vadd.f32 %v6516, %v6768
      %v6843 = vadd.f32 %v6517, %v6773
      %v6844 = vadd.f32 %v6518, %v6776
      %v6845 = vadd.f32 %v6519, %v6781
      %v6846 = vadd.f32 %v6520, %v6784
      %v6847 = vadd.f32 %v6521, %v6789
      %v6848 = vadd.f32 %v6522, %v6792
      %v6849 = vadd.f32 %v6523, %v6797
      %v6850 = vadd.f32 %v6524, %v6800
      %v6851 = vadd.f32 %v6525, %v6805
      %v6852 = vadd.f32 %v6526, %v6808
      %v6853 = vadd.f32 %v6527, %v6813
      %v6854 = vadd.f32 %v6528, %v6816
      %v6855 = vld [vmem:[%s273 + $0x13] sm:$0xff]
      %v6856 = vld [vmem:[%s273 + $0x1b] sm:$0xff]
      %v6857 = vld [vmem:[%s273 + $0x23] sm:$0xff]
      %v6858 = vld [vmem:[%s273 + $0x2b] sm:$0xff]
      %v6859 = vld [vmem:[%s273 + $0x33] sm:$0xff]
      %v6860 = vld [vmem:[%s273 + $0x3b] sm:$0xff]
      %v6861 = vld [vmem:[%s273 + $0x43] sm:$0xff]
      %v6862 = vld [vmem:[%s273 + $0x4b] sm:$0xff]
      %v6863 = vld [vmem:[%s273 + $0x53] sm:$0xff]
      %v6864 = vld [vmem:[%s273 + $0x5b] sm:$0xff]
      %v6865 = vld [vmem:[%s273 + $0x63] sm:$0xff]
      %v6866 = vld [vmem:[%s273 + $0x6b] sm:$0xff]
      %v6867 = vld [vmem:[%s273 + $0x73] sm:$0xff]
      %v6868 = vld [vmem:[%s273 + $0x7b] sm:$0xff]
      %v6869 = vld [vmem:[%s273 + $0x83] sm:$0xff]
      %v6870 = vld [vmem:[%s273 + $0x8b] sm:$0xff]
      %v6871 = vld [vmem:[%s273 + $0x93] sm:$0xff]
      %v6872 = vld [vmem:[%s273 + $0x9b] sm:$0xff]
      %v6873 = vld [vmem:[%s273 + $0xa3] sm:$0xff]
      %v6874 = vld [vmem:[%s273 + $0xab] sm:$0xff]
      %v6875 = vld [vmem:[%s273 + $0xb3] sm:$0xff]
      %v6876 = vld [vmem:[%s273 + $0xbb] sm:$0xff]
      %v6877 = vld [vmem:[%s273 + $0xc3] sm:$0xff]
      %v6878 = vld [vmem:[%s273 + $0xcb] sm:$0xff]
      %v6879 = vld [vmem:[%s273 + $0xd3] sm:$0xff]
      %v6880 = vld [vmem:[%s273 + $0xdb] sm:$0xff]
      %v6881 = vld [vmem:[%s273 + $0xe3] sm:$0xff]
      %v6882 = vld [vmem:[%s273 + $0xeb] sm:$0xff]
      %v6883 = vld [vmem:[%s273 + $0xf3] sm:$0xff]
      %v6884 = vld [vmem:[%s273 + $0xfb] sm:$0xff]
      %v6885 = vld [vmem:[%s273 + $0x103] sm:$0xff]
      %v6886 = vld [vmem:[%s273 + $0x10b] sm:$0xff]
      %v6887 = vld [vmem:[%s273 + $0x113] sm:$0xff]
      %v6888 = vld [vmem:[%s273 + $0x11b] sm:$0xff]
      %v6889 = vld [vmem:[%s273 + $0x123] sm:$0xff]
      %v6890 = vld [vmem:[%s273 + $0x12b] sm:$0xff]
      %v6891 = vld [vmem:[%s5] sm:$0x1]
      %v6893 = vlaneseq
      %v6894 = vshrl.u32 %v6893, 7
      %v6895 = vsub.s32 0, %v6894
      %v6896 = vrot.slane %v6891, %v6895
      %v6898 = vmul.f32 %v6819, %v6896
      %v6899 = vmul.f32 %v6820, %v6896
      %v6900 = vmul.f32 %v6821, %v6896
      %v6901 = vmul.f32 %v6822, %v6896
      %v6902 = vmul.f32 %v6823, %v6896
      %v6903 = vmul.f32 %v6824, %v6896
      %v6904 = vmul.f32 %v6825, %v6896
      %v6905 = vmul.f32 %v6826, %v6896
      %v6906 = vmul.f32 %v6827, %v6896
      %v6907 = vmul.f32 %v6828, %v6896
      %v6908 = vmul.f32 %v6829, %v6896
      %v6909 = vmul.f32 %v6830, %v6896
      %v6910 = vmul.f32 %v6831, %v6896
      %v6911 = vmul.f32 %v6832, %v6896
      %v6912 = vmul.f32 %v6833, %v6896
      %v6913 = vmul.f32 %v6834, %v6896
      %v6914 = vmul.f32 %v6835, %v6896
      %v6915 = vmul.f32 %v6836, %v6896
      %v6916 = vmul.f32 %v6837, %v6896
      %v6917 = vmul.f32 %v6838, %v6896
      %v6918 = vmul.f32 %v6839, %v6896
      %v6919 = vmul.f32 %v6840, %v6896
      %v6920 = vmul.f32 %v6841, %v6896
      %v6921 = vmul.f32 %v6842, %v6896
      %v6922 = vmul.f32 %v6843, %v6896
      %v6923 = vmul.f32 %v6844, %v6896
      %v6924 = vmul.f32 %v6845, %v6896
      %v6925 = vmul.f32 %v6846, %v6896
      %v6926 = vmul.f32 %v6847, %v6896
      %v6927 = vmul.f32 %v6848, %v6896
      %v6928 = vmul.f32 %v6849, %v6896
      %v6929 = vmul.f32 %v6850, %v6896
      %v6930 = vmul.f32 %v6851, %v6896
      %v6931 = vmul.f32 %v6852, %v6896
      %v6932 = vmul.f32 %v6853, %v6896
      %v6933 = vmul.f32 %v6854, %v6896
      %v6934 = vld [vmem:[%s6] sm:$0x1]
      %v6936 = vlaneseq
      %v6937 = vshrl.u32 %v6936, 7
      %v6938 = vsub.s32 0, %v6937
      %v6939 = vrot.slane %v6934, %v6938
      %v6941 = vadd.f32 %v6898, %v6939
      %v6942 = vadd.f32 %v6899, %v6939
      %v6943 = vadd.f32 %v6900, %v6939
      %v6944 = vadd.f32 %v6901, %v6939
      %v6945 = vadd.f32 %v6902, %v6939
      %v6946 = vadd.f32 %v6903, %v6939
      %v6947 = vadd.f32 %v6904, %v6939
      %v6948 = vadd.f32 %v6905, %v6939
      %v6949 = vadd.f32 %v6906, %v6939
      %v6950 = vadd.f32 %v6907, %v6939
      %v6951 = vadd.f32 %v6908, %v6939
      %v6952 = vadd.f32 %v6909, %v6939
      %v6953 = vadd.f32 %v6910, %v6939
      %v6954 = vadd.f32 %v6911, %v6939
      %v6955 = vadd.f32 %v6912, %v6939
      %v6956 = vadd.f32 %v6913, %v6939
      %v6957 = vadd.f32 %v6914, %v6939
      %v6958 = vadd.f32 %v6915, %v6939
      %v6959 = vadd.f32 %v6916, %v6939
      %v6960 = vadd.f32 %v6917, %v6939
      %v6961 = vadd.f32 %v6918, %v6939
      %v6962 = vadd.f32 %v6919, %v6939
      %v6963 = vadd.f32 %v6920, %v6939
      %v6964 = vadd.f32 %v6921, %v6939
      %v6965 = vadd.f32 %v6922, %v6939
      %v6966 = vadd.f32 %v6923, %v6939
      %v6967 = vadd.f32 %v6924, %v6939
      %v6968 = vadd.f32 %v6925, %v6939
      %v6969 = vadd.f32 %v6926, %v6939
      %v6970 = vadd.f32 %v6927, %v6939
      %v6971 = vadd.f32 %v6928, %v6939
      %v6972 = vadd.f32 %v6929, %v6939
      %v6973 = vadd.f32 %v6930, %v6939
      %v6974 = vadd.f32 %v6931, %v6939
      %v6975 = vadd.f32 %v6932, %v6939
      %v6976 = vadd.f32 %v6933, %v6939
      %v6977 = vadd.f32 %v6941, %v6855
      %v6978 = vadd.f32 %v6942, %v6856
      %v6979 = vadd.f32 %v6943, %v6857
      %v6980 = vadd.f32 %v6944, %v6858
      %v6981 = vadd.f32 %v6945, %v6859
      %v6982 = vadd.f32 %v6946, %v6860
      %v6983 = vadd.f32 %v6947, %v6861
      %v6984 = vadd.f32 %v6948, %v6862
      %v6985 = vadd.f32 %v6949, %v6863
      %v6986 = vadd.f32 %v6950, %v6864
      %v6987 = vadd.f32 %v6951, %v6865
      %v6988 = vadd.f32 %v6952, %v6866
      %v6989 = vadd.f32 %v6953, %v6867
      %v6990 = vadd.f32 %v6954, %v6868
      %v6991 = vadd.f32 %v6955, %v6869
      %v6992 = vadd.f32 %v6956, %v6870
      %v6993 = vadd.f32 %v6957, %v6871
      %v6994 = vadd.f32 %v6958, %v6872
      %v6995 = vadd.f32 %v6959, %v6873
      %v6996 = vadd.f32 %v6960, %v6874
      %v6997 = vadd.f32 %v6961, %v6875
      %v6998 = vadd.f32 %v6962, %v6876
      %v6999 = vadd.f32 %v6963, %v6877
      %v7000 = vadd.f32 %v6964, %v6878
      %v7001 = vadd.f32 %v6965, %v6879
      %v7002 = vadd.f32 %v6966, %v6880
      %v7003 = vadd.f32 %v6967, %v6881
      %v7004 = vadd.f32 %v6968, %v6882
      %v7005 = vadd.f32 %v6969, %v6883
      %v7006 = vadd.f32 %v6970, %v6884
      %v7007 = vadd.f32 %v6971, %v6885
      %v7008 = vadd.f32 %v6972, %v6886
      %v7009 = vadd.f32 %v6973, %v6887
      %v7010 = vadd.f32 %v6974, %v6888
      %v7011 = vadd.f32 %v6975, %v6889
      %v7012 = vadd.f32 %v6976, %v6890
      %7013 = vst.msk [vmem:[%s278] sm:$0xff] %vm391, %v6977
      %7014 = vst.msk [vmem:[%s278 + $0x8] sm:$0xff] %vm391, %v6978
      %7015 = vst.msk [vmem:[%s278 + $0x10] sm:$0xff] %vm391, %v6979
      %7016 = vst.msk [vmem:[%s278 + $0x18] sm:$0xff] %vm391, %v6980
      %7017 = vst.msk [vmem:[%s278 + $0x20] sm:$0xff] %vm391, %v6981
      %7018 = vst.msk [vmem:[%s278 + $0x28] sm:$0xff] %vm391, %v6982
      %7019 = vst.msk [vmem:[%s278 + $0x30] sm:$0xff] %vm391, %v6983
      %7020 = vst.msk [vmem:[%s278 + $0x38] sm:$0xff] %vm391, %v6984
      %7021 = vst.msk [vmem:[%s278 + $0x40] sm:$0xff] %vm391, %v6985
      %7022 = vst.msk [vmem:[%s278 + $0x48] sm:$0xff] %vm391, %v6986
      %7023 = vst.msk [vmem:[%s278 + $0x50] sm:$0xff] %vm391, %v6987
      %7024 = vst.msk [vmem:[%s278 + $0x58] sm:$0xff] %vm391, %v6988
      %7025 = vst.msk [vmem:[%s278 + $0x60] sm:$0xff] %vm391, %v6989
      %7026 = vst.msk [vmem:[%s278 + $0x68] sm:$0xff] %vm391, %v6990
      %7027 = vst.msk [vmem:[%s278 + $0x70] sm:$0xff] %vm391, %v6991
      %7028 = vst.msk [vmem:[%s278 + $0x78] sm:$0xff] %vm391, %v6992
      %7029 = vst.msk [vmem:[%s278 + $0x80] sm:$0xff] %vm391, %v6993
      %7030 = vst.msk [vmem:[%s278 + $0x88] sm:$0xff] %vm391, %v6994
      %7031 = vst.msk [vmem:[%s278 + $0x90] sm:$0xff] %vm391, %v6995
      %7032 = vst.msk [vmem:[%s278 + $0x98] sm:$0xff] %vm391, %v6996
      %7033 = vst.msk [vmem:[%s278 + $0xa0] sm:$0xff] %vm391, %v6997
      %7034 = vst.msk [vmem:[%s278 + $0xa8] sm:$0xff] %vm391, %v6998
      %7035 = vst.msk [vmem:[%s278 + $0xb0] sm:$0xff] %vm391, %v6999
      %7036 = vst.msk [vmem:[%s278 + $0xb8] sm:$0xff] %vm391, %v7000
      %7037 = vst.msk [vmem:[%s278 + $0xc0] sm:$0xff] %vm391, %v7001
      %7038 = vst.msk [vmem:[%s278 + $0xc8] sm:$0xff] %vm391, %v7002
      %7039 = vst.msk [vmem:[%s278 + $0xd0] sm:$0xff] %vm391, %v7003
      %7040 = vst.msk [vmem:[%s278 + $0xd8] sm:$0xff] %vm391, %v7004
      %7041 = vst.msk [vmem:[%s278 + $0xe0] sm:$0xff] %vm391, %v7005
      %7042 = vst.msk [vmem:[%s278 + $0xe8] sm:$0xff] %vm391, %v7006
      %7043 = vst.msk [vmem:[%s278 + $0xf0] sm:$0xff] %vm391, %v7007
      %7044 = vst.msk [vmem:[%s278 + $0xf8] sm:$0xff] %vm391, %v7008
      %7045 = vst.msk [vmem:[%s278 + $0x100] sm:$0xff] %vm391, %v7009
      %7046 = vst.msk [vmem:[%s278 + $0x108] sm:$0xff] %vm391, %v7010
      %7047 = vst.msk [vmem:[%s278 + $0x110] sm:$0xff] %vm391, %v7011
      %7048 = vst.msk [vmem:[%s278 + $0x118] sm:$0xff] %vm391, %v7012
      %p7049 = scmp.lt.s32.totalorder %s18, 1
      %s7050 = scalar_select %p7049, %s18, 1
      %s7051 = smul.addr %s7050, 36
      %s7052 = smul.addr %s7051, 8
      %s7053 = scalar_lea.vmem %s7, %s7052
      // Predicated region
      $region49: #{tpu_custom_call.1} parent=47 // pred_check
        %p7054 = pneg %p188
      $region50: #{tpu_custom_call.1} parent=47 // pred_check_branch
        %7056 = sbr.rel (%p7054) target = $region52
      $region51: #{tpu_custom_call.1} parent=47 // pred_region
        _
      $region52: #{tpu_custom_call.1} parent=47 // pred_fallthru
        _
    $region48: #{tpu_custom_call.1} parent=5 // pred_fallthru
      _
    %p7057 = scmp.le.s32.totalorder 2, %s13
    // Predicated region
    $region53: #{tpu_custom_call.1} parent=5 // pred_check
      %p7058 = pneg %p7057
    $region54: #{tpu_custom_call.1} parent=5 // pred_check_branch
      %7060 = sbr.rel (%p7058) target = $region56
    $region55: #{tpu_custom_call.1} parent=5 // pred_region
      %s7061 = ssub.s32 %s13, 2
      // Predicated region
      $region57: #{tpu_custom_call.1} parent=55 // pred_check
        %p7062 = pneg %p194
      $region58: #{tpu_custom_call.1} parent=55 // pred_check_branch
        %7064 = sbr.rel (%p7062) target = $region60
      $region59: #{tpu_custom_call.1} parent=55 // pred_region
        %p7065 = scmp.lt.s32.totalorder %s19, 1
        %s7066 = scalar_select %p7065, %s19, 1
        %s7067 = smul.addr %s7066, 36
        %s7068 = smul.addr %s7067, 8
        %s7069 = scalar_lea.vmem %s7, %s7068
      $region60: #{tpu_custom_call.1} parent=55 // pred_fallthru
        _
    $region56: #{tpu_custom_call.1} parent=5 // pred_fallthru
      _
  $region6: #{tpu_custom_call.1} parent=0 // loop_footer
    %s17 = sadd.s32 1, %s13
  $region7: #{tpu_custom_call.1} parent=0 // loop_footer_branch
    %12 = sbr.rel target = $region3
  $region8: #{tpu_custom_call.1} parent=0 // loop_exit
    _

</llo_original>
